<compile_context>
chip_gen: v7x
topology: tpu7x:2x2x1
jax: 0.10.0
libtpu: 0.0.40
codegen_flags: <defaults>
</compile_context>

<pallas_src>
import functools
import numpy as np
import jax
import jax.numpy as jnp
from jax import lax
from jax.experimental import pallas as pl
from jax.experimental.pallas import tpu as pltpu

# --------------------------------------------------------------------------- #
# Static geometry (kernel is specialised to 16x16 inputs).                     #
# --------------------------------------------------------------------------- #
HS = [16, 8, 4, 2]                            # spatial size per pyramid level
WPS = [h + 2 for h in HS]                     # zero-padded width (= height)
NRAW = [wp * wp for wp in WPS]                # flattened padded size per image
RPS = [-(-n // 128) * 128 for n in NRAW]      # lane-padded: [384, 128, 128, 128]
MOFF = [0, RPS[0], RPS[0] + RPS[1], RPS[0] + RPS[1] + RPS[2]]
DOFF = [0, RPS[1], RPS[1] + RPS[2]]           # column offsets of D0/D1/D2
WALIGN = 16                                   # bf16 packed-sublane alignment


def _cpad(c):
    return max(8, -(-c // 8) * 8)


def _mask_row(h, rp):
    """Interior (non-padding) mask of the flattened padded layout, length rp."""
    wp = h + 2
    m = np.zeros((rp,), np.float32)
    for i in range(h):
        base = (i + 1) * wp + 1
        m[base:base + h] = 1.0
    return m


def _mask_slab():
    return np.concatenate([_mask_row(h, rp) for h, rp in zip(HS, RPS)])[None, :]


def _down_slab():
    """0/1 matrices composing stride-2 selection + scatter into the next
    (zero-padded, lane-padded) layout, for levels 0->1, 1->2, 2->3."""
    d = np.zeros((RPS[0], RPS[1] + RPS[2] + RPS[3]), np.float32)
    for lvl in range(3):
        hout = HS[lvl + 1]
        wpi, wpo = WPS[lvl], WPS[lvl + 1]
        co = DOFF[lvl]
        for ho in range(hout):
            for wo in range(hout):
                d[(2 * ho + 1) * wpi + (2 * wo + 1),
                  co + (ho + 1) * wpo + (wo + 1)] = 1.0
    return d


# --------------------------------------------------------------------------- #
# Host-side parameter packing: one bf16 weight slab + one f32 vector slab.     #
# --------------------------------------------------------------------------- #
def _pack_w3(w, cinp, coutp):
    """(3,3,cin,cout) HWIO -> (coutp, 9*cinp), rows = Cout, K = tap-major."""
    _, _, cin, cout = w.shape
    wt = jnp.transpose(w, (3, 0, 1, 2)).reshape(cout, 9, cin)
    wt = jnp.pad(wt, ((0, coutp - cout), (0, 0), (0, cinp - cin)))
    return wt.reshape(coutp, 9 * cinp)


def _pack_w1(w, cinp, coutp):
    """(1,1,cin,cout) or (cin,cout) -> (coutp, cinp)   (i.e. W^T, zero-padded)."""
    w2 = w.reshape(w.shape[-2], w.shape[-1])
    cin, cout = w2.shape
    return jnp.pad(jnp.transpose(w2), ((0, coutp - cout), (0, cinp - cin)))


class _Packer:
    def __init__(self, vrows):
        self.vrows = vrows
        self.wmats, self.widx = [], {}
        self.vcols, self.vidx = [], {}

    def add_w(self, name, mat):
        self.wmats.append((name, mat))

    def add_v(self, name, vec, cp, fill=0.0):
        c = vec.shape[0]
        col = jnp.full((self.vrows,), fill, jnp.float32)
        col = col.at[:c].set(vec.astype(jnp.float32))
        self.vidx[name] = (len(self.vcols), int(cp))
        self.vcols.append(col)

    def finalize(self):
        kslab = -(-max(int(m.shape[1]) for _, m in self.wmats) // 128) * 128
        rows, off = [], 0
        for name, m in self.wmats:
            c, k = int(m.shape[0]), int(m.shape[1])
            self.widx[name] = (off, c, k)
            piece = jnp.pad(m.astype(jnp.float32),
                            ((0, (-c) % WALIGN), (0, kslab - k)))
            rows.append(piece)
            off += c + (-c) % WALIGN
        wslab = jnp.concatenate(rows, axis=0).astype(jnp.bfloat16)
        vslab = jnp.stack(self.vcols, axis=1)
        vslab = jnp.pad(vslab, ((0, 0), (0, (-vslab.shape[1]) % 128)))
        return wslab, vslab, self.widx, self.vidx


def _pack_params(params, N, M, level, alpha):
    NP, MP = _cpad(N), _cpad(M)
    NHP, MHP = _cpad(N // 2), _cpad(M // 2)
    CP0 = _cpad(3)
    pk = _Packer(vrows=max(NP, MP))

    def add_c3(name, p, cinp, coutp):
        pk.add_w(name, _pack_w3(p["w"], cinp, coutp))
        pk.add_v(name + "b", p["b"], coutp)

    def add_c1(name, p, cinp, coutp):
        pk.add_w(name, _pack_w1(p["w"], cinp, coutp))
        pk.add_v(name + "b", p["b"], coutp)

    def add_rbws(pref, p, cinp, coutp):
        add_c3(pref + ".c1", p["conv1"], cinp, coutp)
        add_c3(pref + ".c2", p["conv2"], coutp, coutp)
        c = p["gdn"]["gamma"].shape[0]
        pk.add_w(pref + ".g",
                 jnp.pad(p["gdn"]["gamma"], ((0, coutp - c), (0, coutp - c))))
        pk.add_v(pref + ".gb", p["gdn"]["beta"], coutp, fill=1.0)
        add_c1(pref + ".sk", p["skip"], cinp, coutp)

    def add_rb(pref, p, cp):
        add_c3(pref + ".c1", p["conv1"], cp, cp)
        add_c3(pref + ".c2", p["conv2"], cp, cp)

    def add_ru(pref, p, cp, hp):
        add_c1(pref + ".c1", p["conv1"], cp, hp)
        add_c3(pref + ".c2", p["conv2"], hp, hp)
        add_c1(pref + ".c3", p["conv3"], hp, cp)

    def add_ru1(pref, p, cp, hp):
        # On a 1x1 spatial map a zero-padded 3x3 conv is exactly its centre tap.
        add_c1(pref + ".c1", p["conv1"], cp, hp)
        pk.add_w(pref + ".c2", _pack_w1(p["conv2"]["w"][1, 1], hp, hp))
        pk.add_v(pref + ".c2b", p["conv2"]["b"], hp)
        add_c1(pref + ".c3", p["conv3"], hp, cp)

    def add_attn(pref, p, cp, hp, one_by_one):
        fn = add_ru1 if one_by_one else add_ru
        for i in range(3):
            fn(pref + ".a%d" % i, p["a"][i], cp, hp)
        for i in range(3):
            fn(pref + ".b%d" % i, p["b"][i], cp, hp)
        add_c1(pref + ".o", p["b_out"], cp, cp)

    add_rbws("rbws0", params["rbws0"], CP0, NP)
    add_rb("rb0", params["rb0"], NP)
    add_rbws("rbws1", params["rbws1"], NP, NP)
    add_attn("attn0", params["attn0"], NP, NHP, False)
    add_rb("rb1", params["rb1"], NP)
    add_rbws("rbws2", params["rbws2"], NP, NP)
    add_rb("rb2", params["rb2"], NP)
    add_c3("conv0", params["conv0"], NP, MP)
    add_attn("attn1", params["attn1"], MP, MHP, True)

    # ChannelModulator gains (assumed semantics -- see TODO at top of file).
    for i in range(5):
        tbl = params["cm%d" % i]["gain"]
        lo = tbl[level]
        hi = tbl[min(level + 1, tbl.shape[0] - 1)]
        pk.add_v("g%d" % i, (1.0 - alpha) * lo + alpha * hi, NP)

    return pk.finalize()


# --------------------------------------------------------------------------- #
# The single fused kernel (one image per grid step).                           #
# --------------------------------------------------------------------------- #
def _enc_kernel(widx, vidx, x_ref, w_ref, v_ref, m_ref, d_ref, o_ref):
    f32 = jnp.float32
    bf16 = jnp.bfloat16

    # ---- point-of-use parameter loads (static ref slices) -------------------
    def W(name):
        off, c, k = widx[name]
        return w_ref[off:off + c, 0:k]

    def V(name):
        col, c = vidx[name]
        return v_ref[0:c, col:col + 1]

    def mask(lvl):
        return m_ref[0:1, MOFF[lvl]:MOFF[lvl] + RPS[lvl]]

    # ---- primitives ----------------------------------------------------------
    def mm(name, x):                                   # (Cout,K)@(K,R), f32 acc
        return jnp.dot(W(name), x.astype(bf16), preferred_element_type=f32)

    def down(x, lvl):                                  # stride-2 select + re-pad
        d = d_ref[0:RPS[lvl], DOFF[lvl]:DOFF[lvl] + RPS[lvl + 1]]
        return jnp.dot(x.astype(bf16), d, preferred_element_type=f32)

    def lrelu(x):
        return jnp.where(x >= 0, x, 0.01 * x)

    def relu(x):
        return jnp.maximum(x, 0.0)

    def sigmoid(x):
        return pl.reciprocal(1.0 + jnp.exp(-x), approx=True)

    def conv3(x, lvl, name):
        """3x3 / stride-1 / pad-1 conv as ONE matmul: 9 lane-shifted copies of
        the masked input stacked along the contraction (sublane) axis.  Border
        and lane-pad columns of the result hold junk; they are re-masked or
        dropped by the next `mask` / `down`."""
        rp, wp = RPS[lvl], WPS[lvl]
        xm = x * mask(lvl)                             # enforce the zero padding
        taps = []
        for kh in range(3):
            for kw in range(3):
                dd = (kh - 1) * wp + (kw - 1)
                taps.append(xm if dd == 0
                            else pltpu.roll(xm, shift=(-dd) % rp, axis=1))
        xs = jnp.concatenate(taps, axis=0).astype(bf16)
        return jnp.dot(W(name), xs, preferred_element_type=f32) + V(name + "b")

    def gdn(x, pref):
        nrm = mm(pref + ".g", x * x) + V(pref + ".gb")
        return x * lax.rsqrt(nrm)

    # ---- fused blocks ---------------------------------------------------------
    def rbws(x, lvl, pref):       # conv3x3/s2 -> lrelu -> conv3x3 -> GDN, + 1x1/s2 skip
        t = lrelu(down(conv3(x, lvl, pref + ".c1"), lvl))
        t = gdn(conv3(t, lvl + 1, pref + ".c2"), pref)
        s = mm(pref + ".sk", down(x, lvl)) + V(pref + ".skb")
        return t + s

    def rb(x, lvl, pref):         # conv3x3 -> lrelu -> conv3x3 -> lrelu, + identity
        h = lrelu(conv3(x, lvl, pref + ".c1"))
        h = lrelu(conv3(h, lvl, pref + ".c2"))
        return h + x

    def runit(x, lvl, pref):      # AttentionBlock residual unit
        h = relu(mm(pref + ".c1", x) + V(pref + ".c1b"))
        h = relu(conv3(h, lvl, pref + ".c2"))
        h = mm(pref + ".c3", h) + V(pref + ".c3b")
        return relu(h + x)

    def runit1(x, pref):          # residual unit on a 1x1 spatial map
        h = relu(mm(pref + ".c1", x) + V(pref + ".c1b"))
        h = relu(mm(pref + ".c2", h) + V(pref + ".c2b"))
        h = mm(pref + ".c3", h) + V(pref + ".c3b")
        return relu(h + x)

    def attention(x, lvl, pref):
        a = x
        for i in range(3):
            a = runit(a, lvl, pref + ".a%d" % i)
        b = x
        for i in range(3):
            b = runit(b, lvl, pref + ".b%d" % i)
        b = mm(pref + ".o", b) + V(pref + ".ob")
        return a * sigmoid(b) + x

    def attention1(x, pref):
        a = x
        for i in range(3):
            a = runit1(a, pref + ".a%d" % i)
        b = x
        for i in range(3):
            b = runit1(b, pref + ".b%d" % i)
        b = mm(pref + ".o", b) + V(pref + ".ob")
        return a * sigmoid(b) + x

    # ---- forward pass ----------------------------------------------------------
    x = x_ref[0]                                   # (8, 384) f32, level-0 layout
    x = rbws(x, 0, "rbws0")                        # -> level-1 (N, 128)
    x = x * V("g0")                                # ChannelModulator0
    x = rb(x, 1, "rb0")                            # ResidualBlock0
    x = x * V("g1")                                # ChannelModulator1
    x = rbws(x, 1, "rbws1")                        # -> level-2
    x = attention(x, 2, "attn0")                   # AttentionBlock0
    x = rb(x, 2, "rb1")                            # ResidualBlock1
    x = x * V("g2")                                # ChannelModulator2
    x = rbws(x, 2, "rbws2")                        # -> level-3
    x = x * V("g3")                                # ChannelModulator3
    x = rb(x, 3, "rb2")                            # ResidualBlock2
    x = x * V("g4")                                # ChannelModulator4
    y = conv3(x, 3, "conv0")                       # conv0 (stride-2 -> 1x1 map);
    y = attention1(y, "attn1")                     #   real pixel = lane WPS[3]+1
    o_ref[0] = y


# --------------------------------------------------------------------------- #
# Forward wrapper.                                                             #
# --------------------------------------------------------------------------- #
def enc_forward(params, x_nhwc, level, alpha):
    """x_nhwc: (B, H, W, 3) channels-last (== PyTorch NCHW (B, 3, H, W)).
    Returns NHWC (B, 1, 1, M) (== PyTorch NCHW (B, M, 1, 1))."""
    B, H, W, Cin = x_nhwc.shape
    assert (H, W, Cin) == (16, 16, 3), "fused kernel is specialised for 16x16 RGB"
    N = params["rb0"]["conv1"]["b"].shape[0]
    M = params["conv0"]["b"].shape[0]
    CP0, MP = _cpad(3), _cpad(M)

    wslab, vslab, widx, vidx = _pack_params(params, N, M, level, alpha)
    mslab = jnp.asarray(_mask_slab())
    dslab = jnp.asarray(_down_slab()).astype(jnp.bfloat16)

    # Input: channels padded to 8 sublanes, spatial zero-padded, flattened
    # row-major onto the lane axis and lane-padded to a multiple of 128.
    xc = jnp.transpose(x_nhwc.astype(jnp.float32), (0, 3, 1, 2))
    xc = jnp.pad(xc, ((0, 0), (0, CP0 - Cin), (1, 1), (1, 1)))
    xp = xc.reshape(B, CP0, NRAW[0])
    xp = jnp.pad(xp, ((0, 0), (0, 0), (0, RPS[0] - NRAW[0])))

    out = pl.pallas_call(
        functools.partial(_enc_kernel, widx, vidx),
        grid=(B,),
        in_specs=[
            pl.BlockSpec((1, CP0, RPS[0]), lambda b: (b, 0, 0)),
            pl.BlockSpec(wslab.shape, lambda b: (0, 0)),
            pl.BlockSpec(vslab.shape, lambda b: (0, 0)),
            pl.BlockSpec(mslab.shape, lambda b: (0, 0)),
            pl.BlockSpec(dslab.shape, lambda b: (0, 0)),
        ],
        out_specs=pl.BlockSpec((1, MP, RPS[3]), lambda b: (b, 0, 0)),
        out_shape=jax.ShapeDtypeStruct((B, MP, RPS[3]), jnp.float32),
        compiler_params=pltpu.CompilerParams(
            dimension_semantics=("parallel",)),
    )(xp, wslab, vslab, mslab, dslab)

    y = out[:, :M, WPS[3] + 1]                     # the single real output pixel
    return y.reshape(B, 1, 1, M)                   # NHWC == PyTorch NCHW (B,M,1,1)


# --------------------------------------------------------------------------- #
# Parameter initialisation (structure mirrors the PyTorch module).             #
# --------------------------------------------------------------------------- #
def _init_conv(key, kh, kw, cin, cout):
    std = (2.0 / (kh * kw * cin)) ** 0.5
    return {"w": std * jax.random.normal(key, (kh, kw, cin, cout), jnp.float32),
            "b": jnp.zeros((cout,), jnp.float32)}


def _init_gdn(c):
    return {"gamma": 0.1 * jnp.eye(c, dtype=jnp.float32),
            "beta": jnp.ones((c,), jnp.float32)}


def _init_rbws(key, cin, cout):
    k1, k2, k3 = jax.random.split(key, 3)
    return {"conv1": _init_conv(k1, 3, 3, cin, cout),
            "conv2": _init_conv(k2, 3, 3, cout, cout),
            "gdn": _init_gdn(cout),
            "skip": _init_conv(k3, 1, 1, cin, cout)}


def _init_rb(key, cin, cout):
    k1, k2 = jax.random.split(key)
    return {"conv1": _init_conv(k1, 3, 3, cin, cout),
            "conv2": _init_conv(k2, 3, 3, cout, cout)}


def _init_ru(key, c):
    k1, k2, k3 = jax.random.split(key, 3)
    h = c // 2
    return {"conv1": _init_conv(k1, 1, 1, c, h),
            "conv2": _init_conv(k2, 3, 3, h, h),
            "conv3": _init_conv(k3, 1, 1, h, c)}


def _init_attn(key, c):
    ks = jax.random.split(key, 7)
    return {"a": [_init_ru(ks[i], c) for i in range(3)],
            "b": [_init_ru(ks[3 + i], c) for i in range(3)],
            "b_out": _init_conv(ks[6], 1, 1, c, c)}


def _init_cm(key, c, levels):
    return {"gain": 1.0 + 0.05 * jax.random.normal(key, (levels, c), jnp.float32)}


def init_params(key, N, M, levels):
    ks = jax.random.split(key, 14)
    return {"rbws0": _init_rbws(ks[0], 3, N),
            "cm0": _init_cm(ks[1], N, levels),
            "rb0": _init_rb(ks[2], N, N),
            "cm1": _init_cm(ks[3], N, levels),
            "rbws1": _init_rbws(ks[4], N, N),
            "attn0": _init_attn(ks[5], N),
            "rb1": _init_rb(ks[6], N, N),
            "cm2": _init_cm(ks[7], N, levels),
            "rbws2": _init_rbws(ks[8], N, N),
            "cm3": _init_cm(ks[9], N, levels),
            "rb2": _init_rb(ks[10], N, N),
            "cm4": _init_cm(ks[11], N, levels),
            "conv0": _init_conv(ks[12], 3, 3, N, M),
            "attn1": _init_attn(ks[13], M)}


# --------------------------------------------------------------------------- #
# Main.                                                                        #
# --------------------------------------------------------------------------- #
if __name__ == "__main__":
    N, M, levels = 8, 16, 4
    key = jax.random.PRNGKey(0)
    kx, kp = jax.random.split(key)

    # NHWC input (equivalent to PyTorch NCHW (2, 3, 16, 16))
    x = jax.random.normal(kx, (2, 16, 16, 3), jnp.float32)
    params = init_params(kp, N, M, levels)

    fwd = jax.jit(enc_forward, static_argnums=(2,))
    y = fwd(params, x, 1, jnp.float32(0.5))
    jax.block_until_ready(y)

    assert y.shape == (2, 1, 1, M), y.shape          # == PyTorch NCHW (2, M, 1, 1)
    assert bool(jnp.all(jnp.isfinite(y)))
    print("KERNEL_OK")
</pallas_src>

<mosaic_0001>
module attributes {stable_mosaic.version = 11 : i64} {
  func.func @_enc_kernel(%arg0: i32, %arg1: memref<1x8x384xf32, #tpu.memory_space<vmem>>, %arg2: memref<912x128xbf16, #tpu.memory_space<vmem>>, %arg3: memref<16x128xf32, #tpu.memory_space<vmem>>, %arg4: memref<1x768xf32, #tpu.memory_space<vmem>>, %arg5: memref<384x384xbf16, #tpu.memory_space<vmem>>, %arg6: memref<1x16x128xf32, #tpu.memory_space<vmem>>) attributes {dimension_semantics = [#tpu.dimension_semantics<parallel>], iteration_bounds = array<i64: 2>, scalar_prefetch = 0 : i64, scratch_operands = 0 : i64, tpu.core_type = #tpu.core_type<tc>, window_params = [{transform_indices = @transform_0, window_bounds = array<i64: 1, 8, 384>}, {pipeline_mode = #tpu.pipeline_mode<synchronous>, transform_indices = @transform_1, window_bounds = array<i64: 912, 128>}, {pipeline_mode = #tpu.pipeline_mode<synchronous>, transform_indices = @transform_2, window_bounds = array<i64: 16, 128>}, {pipeline_mode = #tpu.pipeline_mode<synchronous>, transform_indices = @transform_3, window_bounds = array<i64: 1, 768>}, {pipeline_mode = #tpu.pipeline_mode<synchronous>, transform_indices = @transform_4, window_bounds = array<i64: 384, 384>}, {transform_indices = @transform_5, window_bounds = array<i64: 1, 16, 128>}]} {
    %c0 = arith.constant 0 : index
    %c0_0 = arith.constant 0 : index
    %c0_1 = arith.constant 0 : index
    %0 = vector.load %arg1[%c0, %c0_0, %c0_1] : memref<1x8x384xf32, #tpu.memory_space<vmem>>, vector<1x8x384xf32>
    %1 = vector.shape_cast %0 : vector<1x8x384xf32> to vector<8x384xf32>
    %c0_2 = arith.constant 0 : index
    %c0_3 = arith.constant 0 : index
    %2 = vector.load %arg4[%c0_2, %c0_3] : memref<1x768xf32, #tpu.memory_space<vmem>>, vector<1x384xf32>
    %3 = vector.broadcast %2 : vector<1x384xf32> to vector<8x384xf32>
    %4 = arith.mulf %1, %3 : vector<8x384xf32>
    %c19_i32 = arith.constant 19 : i32
    %5 = tpu.dynamic_rotate %4 by %c19_i32 dim 1 : vector<8x384xf32>, i32 -> vector<8x384xf32>
    %c18_i32 = arith.constant 18 : i32
    %6 = tpu.dynamic_rotate %4 by %c18_i32 dim 1 : vector<8x384xf32>, i32 -> vector<8x384xf32>
    %c17_i32 = arith.constant 17 : i32
    %7 = tpu.dynamic_rotate %4 by %c17_i32 dim 1 : vector<8x384xf32>, i32 -> vector<8x384xf32>
    %c1_i32 = arith.constant 1 : i32
    %8 = tpu.dynamic_rotate %4 by %c1_i32 dim 1 : vector<8x384xf32>, i32 -> vector<8x384xf32>
    %c383_i32 = arith.constant 383 : i32
    %9 = tpu.dynamic_rotate %4 by %c383_i32 dim 1 : vector<8x384xf32>, i32 -> vector<8x384xf32>
    %c367_i32 = arith.constant 367 : i32
    %10 = tpu.dynamic_rotate %4 by %c367_i32 dim 1 : vector<8x384xf32>, i32 -> vector<8x384xf32>
    %c366_i32 = arith.constant 366 : i32
    %11 = tpu.dynamic_rotate %4 by %c366_i32 dim 1 : vector<8x384xf32>, i32 -> vector<8x384xf32>
    %c365_i32 = arith.constant 365 : i32
    %12 = tpu.dynamic_rotate %4 by %c365_i32 dim 1 : vector<8x384xf32>, i32 -> vector<8x384xf32>
    %13 = tpu.concatenate %5, %6, %7, %8, %4, %9, %10, %11, %12 in 0 : vector<8x384xf32>, vector<8x384xf32>, vector<8x384xf32>, vector<8x384xf32>, vector<8x384xf32>, vector<8x384xf32>, vector<8x384xf32>, vector<8x384xf32>, vector<8x384xf32> -> vector<72x384xf32>
    %14 = arith.truncf %13 : vector<72x384xf32> to vector<72x384xbf16>
    %c0_4 = arith.constant 0 : index
    %c0_5 = arith.constant 0 : index
    %15 = vector.load %arg2[%c0_4, %c0_5] : memref<912x128xbf16, #tpu.memory_space<vmem>>, vector<8x72xbf16>
    %cst = arith.constant dense<0.000000e+00> : vector<8x384xf32>
    %16 = tpu.matmul %15, %14, %cst {dimension_numbers = #tpu.dot_dimension_numbers<[1], [0], [0], [1], [0, 0, 1, 1], [], []>} : vector<8x72xbf16>, vector<72x384xbf16>, vector<8x384xf32> -> vector<8x384xf32>
    %c0_6 = arith.constant 0 : index
    %c0_7 = arith.constant 0 : index
    %17 = vector.load %arg3[%c0_6, %c0_7] : memref<16x128xf32, #tpu.memory_space<vmem>>, vector<8x1xf32>
    %18 = vector.broadcast %17 : vector<8x1xf32> to vector<8x384xf32>
    %19 = arith.addf %16, %18 : vector<8x384xf32>
    %c0_8 = arith.constant 0 : index
    %c0_9 = arith.constant 0 : index
    %20 = vector.load %arg5[%c0_8, %c0_9] : memref<384x384xbf16, #tpu.memory_space<vmem>>, vector<384x128xbf16>
    %21 = arith.truncf %19 : vector<8x384xf32> to vector<8x384xbf16>
    %cst_10 = arith.constant dense<0.000000e+00> : vector<8x128xf32>
    %22 = tpu.matmul %21, %20, %cst_10 {dimension_numbers = #tpu.dot_dimension_numbers<[1], [0], [0], [1], [0, 0, 1, 1], [], []>} : vector<8x384xbf16>, vector<384x128xbf16>, vector<8x128xf32> -> vector<8x128xf32>
    %cst_11 = arith.constant 0.000000e+00 : f32
    %23 = vector.broadcast %cst_11 : f32 to vector<8x128xf32>
    %24 = arith.cmpf oge, %22, %23 : vector<8x128xf32>
    %cst_12 = arith.constant 0.00999999977 : f32
    %25 = vector.broadcast %cst_12 : f32 to vector<8x128xf32>
    %26 = arith.mulf %25, %22 : vector<8x128xf32>
    %27 = arith.select %24, %22, %26 : vector<8x128xi1>, vector<8x128xf32>
    %c0_13 = arith.constant 0 : index
    %c384 = arith.constant 384 : index
    %28 = vector.load %arg4[%c0_13, %c384] : memref<1x768xf32, #tpu.memory_space<vmem>>, vector<1x128xf32>
    %29 = vector.broadcast %28 : vector<1x128xf32> to vector<8x128xf32>
    %30 = arith.mulf %27, %29 : vector<8x128xf32>
    %c11_i32 = arith.constant 11 : i32
    %31 = tpu.dynamic_rotate %30 by %c11_i32 dim 1 : vector<8x128xf32>, i32 -> vector<8x128xf32>
    %c10_i32 = arith.constant 10 : i32
    %32 = tpu.dynamic_rotate %30 by %c10_i32 dim 1 : vector<8x128xf32>, i32 -> vector<8x128xf32>
    %c9_i32 = arith.constant 9 : i32
    %33 = tpu.dynamic_rotate %30 by %c9_i32 dim 1 : vector<8x128xf32>, i32 -> vector<8x128xf32>
    %c1_i32_14 = arith.constant 1 : i32
    %34 = tpu.dynamic_rotate %30 by %c1_i32_14 dim 1 : vector<8x128xf32>, i32 -> vector<8x128xf32>
    %c127_i32 = arith.constant 127 : i32
    %35 = tpu.dynamic_rotate %30 by %c127_i32 dim 1 : vector<8x128xf32>, i32 -> vector<8x128xf32>
    %c119_i32 = arith.constant 119 : i32
    %36 = tpu.dynamic_rotate %30 by %c119_i32 dim 1 : vector<8x128xf32>, i32 -> vector<8x128xf32>
    %c118_i32 = arith.constant 118 : i32
    %37 = tpu.dynamic_rotate %30 by %c118_i32 dim 1 : vector<8x128xf32>, i32 -> vector<8x128xf32>
    %c117_i32 = arith.constant 117 : i32
    %38 = tpu.dynamic_rotate %30 by %c117_i32 dim 1 : vector<8x128xf32>, i32 -> vector<8x128xf32>
    %39 = tpu.concatenate %31, %32, %33, %34, %30, %35, %36, %37, %38 in 0 : vector<8x128xf32>, vector<8x128xf32>, vector<8x128xf32>, vector<8x128xf32>, vector<8x128xf32>, vector<8x128xf32>, vector<8x128xf32>, vector<8x128xf32>, vector<8x128xf32> -> vector<72x128xf32>
    %40 = arith.truncf %39 : vector<72x128xf32> to vector<72x128xbf16>
    %c16 = arith.constant 16 : index
    %c0_15 = arith.constant 0 : index
    %41 = vector.load %arg2[%c16, %c0_15] : memref<912x128xbf16, #tpu.memory_space<vmem>>, vector<8x72xbf16>
    %cst_16 = arith.constant dense<0.000000e+00> : vector<8x128xf32>
    %42 = tpu.matmul %41, %40, %cst_16 {dimension_numbers = #tpu.dot_dimension_numbers<[1], [0], [0], [1], [0, 0, 1, 1], [], []>} : vector<8x72xbf16>, vector<72x128xbf16>, vector<8x128xf32> -> vector<8x128xf32>
    %c0_17 = arith.constant 0 : index
    %c1 = arith.constant 1 : index
    %43 = vector.load %arg3[%c0_17, %c1] : memref<16x128xf32, #tpu.memory_space<vmem>>, vector<8x1xf32>
    %44 = vector.broadcast %43 : vector<8x1xf32> to vector<8x128xf32>
    %45 = arith.addf %42, %44 : vector<8x128xf32>
    %46 = arith.mulf %45, %45 : vector<8x128xf32>
    %c32 = arith.constant 32 : index
    %c0_18 = arith.constant 0 : index
    %47 = vector.load %arg2[%c32, %c0_18] : memref<912x128xbf16, #tpu.memory_space<vmem>>, vector<8x8xbf16>
    %48 = arith.truncf %46 : vector<8x128xf32> to vector<8x128xbf16>
    %cst_19 = arith.constant dense<0.000000e+00> : vector<8x128xf32>
    %49 = tpu.matmul %47, %48, %cst_19 {dimension_numbers = #tpu.dot_dimension_numbers<[1], [0], [0], [1], [0, 0, 1, 1], [], []>} : vector<8x8xbf16>, vector<8x128xbf16>, vector<8x128xf32> -> vector<8x128xf32>
    %c0_20 = arith.constant 0 : index
    %c2 = arith.constant 2 : index
    %50 = vector.load %arg3[%c0_20, %c2] : memref<16x128xf32, #tpu.memory_space<vmem>>, vector<8x1xf32>
    %51 = vector.broadcast %50 : vector<8x1xf32> to vector<8x128xf32>
    %52 = arith.addf %49, %51 : vector<8x128xf32>
    %53 = math.rsqrt %52 : vector<8x128xf32>
    %54 = arith.mulf %45, %53 : vector<8x128xf32>
    %c0_21 = arith.constant 0 : index
    %c0_22 = arith.constant 0 : index
    %55 = vector.load %arg5[%c0_21, %c0_22] : memref<384x384xbf16, #tpu.memory_space<vmem>>, vector<384x128xbf16>
    %56 = arith.truncf %1 : vector<8x384xf32> to vector<8x384xbf16>
    %cst_23 = arith.constant dense<0.000000e+00> : vector<8x128xf32>
    %57 = tpu.matmul %56, %55, %cst_23 {dimension_numbers = #tpu.dot_dimension_numbers<[1], [0], [0], [1], [0, 0, 1, 1], [], []>} : vector<8x384xbf16>, vector<384x128xbf16>, vector<8x128xf32> -> vector<8x128xf32>
    %c48 = arith.constant 48 : index
    %c0_24 = arith.constant 0 : index
    %58 = vector.load %arg2[%c48, %c0_24] : memref<912x128xbf16, #tpu.memory_space<vmem>>, vector<8x8xbf16>
    %59 = arith.truncf %57 : vector<8x128xf32> to vector<8x128xbf16>
    %cst_25 = arith.constant dense<0.000000e+00> : vector<8x128xf32>
    %60 = tpu.matmul %58, %59, %cst_25 {dimension_numbers = #tpu.dot_dimension_numbers<[1], [0], [0], [1], [0, 0, 1, 1], [], []>} : vector<8x8xbf16>, vector<8x128xbf16>, vector<8x128xf32> -> vector<8x128xf32>
    %c0_26 = arith.constant 0 : index
    %c3 = arith.constant 3 : index
    %61 = vector.load %arg3[%c0_26, %c3] : memref<16x128xf32, #tpu.memory_space<vmem>>, vector<8x1xf32>
    %62 = vector.broadcast %61 : vector<8x1xf32> to vector<8x128xf32>
    %63 = arith.addf %60, %62 : vector<8x128xf32>
    %64 = arith.addf %54, %63 : vector<8x128xf32>
    %c0_27 = arith.constant 0 : index
    %c57 = arith.constant 57 : index
    %65 = vector.load %arg3[%c0_27, %c57] : memref<16x128xf32, #tpu.memory_space<vmem>>, vector<8x1xf32>
    %66 = vector.broadcast %65 : vector<8x1xf32> to vector<8x128xf32>
    %67 = arith.mulf %64, %66 : vector<8x128xf32>
    %c0_28 = arith.constant 0 : index
    %c384_29 = arith.constant 384 : index
    %68 = vector.load %arg4[%c0_28, %c384_29] : memref<1x768xf32, #tpu.memory_space<vmem>>, vector<1x128xf32>
    %69 = vector.broadcast %68 : vector<1x128xf32> to vector<8x128xf32>
    %70 = arith.mulf %67, %69 : vector<8x128xf32>
    %c11_i32_30 = arith.constant 11 : i32
    %71 = tpu.dynamic_rotate %70 by %c11_i32_30 dim 1 : vector<8x128xf32>, i32 -> vector<8x128xf32>
    %c10_i32_31 = arith.constant 10 : i32
    %72 = tpu.dynamic_rotate %70 by %c10_i32_31 dim 1 : vector<8x128xf32>, i32 -> vector<8x128xf32>
    %c9_i32_32 = arith.constant 9 : i32
    %73 = tpu.dynamic_rotate %70 by %c9_i32_32 dim 1 : vector<8x128xf32>, i32 -> vector<8x128xf32>
    %c1_i32_33 = arith.constant 1 : i32
    %74 = tpu.dynamic_rotate %70 by %c1_i32_33 dim 1 : vector<8x128xf32>, i32 -> vector<8x128xf32>
    %c127_i32_34 = arith.constant 127 : i32
    %75 = tpu.dynamic_rotate %70 by %c127_i32_34 dim 1 : vector<8x128xf32>, i32 -> vector<8x128xf32>
    %c119_i32_35 = arith.constant 119 : i32
    %76 = tpu.dynamic_rotate %70 by %c119_i32_35 dim 1 : vector<8x128xf32>, i32 -> vector<8x128xf32>
    %c118_i32_36 = arith.constant 118 : i32
    %77 = tpu.dynamic_rotate %70 by %c118_i32_36 dim 1 : vector<8x128xf32>, i32 -> vector<8x128xf32>
    %c117_i32_37 = arith.constant 117 : i32
    %78 = tpu.dynamic_rotate %70 by %c117_i32_37 dim 1 : vector<8x128xf32>, i32 -> vector<8x128xf32>
    %79 = tpu.concatenate %71, %72, %73, %74, %70, %75, %76, %77, %78 in 0 : vector<8x128xf32>, vector<8x128xf32>, vector<8x128xf32>, vector<8x128xf32>, vector<8x128xf32>, vector<8x128xf32>, vector<8x128xf32>, vector<8x128xf32>, vector<8x128xf32> -> vector<72x128xf32>
    %80 = arith.truncf %79 : vector<72x128xf32> to vector<72x128xbf16>
    %c64 = arith.constant 64 : index
    %c0_38 = arith.constant 0 : index
    %81 = vector.load %arg2[%c64, %c0_38] : memref<912x128xbf16, #tpu.memory_space<vmem>>, vector<8x72xbf16>
    %cst_39 = arith.constant dense<0.000000e+00> : vector<8x128xf32>
    %82 = tpu.matmul %81, %80, %cst_39 {dimension_numbers = #tpu.dot_dimension_numbers<[1], [0], [0], [1], [0, 0, 1, 1], [], []>} : vector<8x72xbf16>, vector<72x128xbf16>, vector<8x128xf32> -> vector<8x128xf32>
    %c0_40 = arith.constant 0 : index
    %c4 = arith.constant 4 : index
    %83 = vector.load %arg3[%c0_40, %c4] : memref<16x128xf32, #tpu.memory_space<vmem>>, vector<8x1xf32>
    %84 = vector.broadcast %83 : vector<8x1xf32> to vector<8x128xf32>
    %85 = arith.addf %82, %84 : vector<8x128xf32>
    %cst_41 = arith.constant 0.000000e+00 : f32
    %86 = vector.broadcast %cst_41 : f32 to vector<8x128xf32>
    %87 = arith.cmpf oge, %85, %86 : vector<8x128xf32>
    %cst_42 = arith.constant 0.00999999977 : f32
    %88 = vector.broadcast %cst_42 : f32 to vector<8x128xf32>
    %89 = arith.mulf %88, %85 : vector<8x128xf32>
    %90 = arith.select %87, %85, %89 : vector<8x128xi1>, vector<8x128xf32>
    %c0_43 = arith.constant 0 : index
    %c384_44 = arith.constant 384 : index
    %91 = vector.load %arg4[%c0_43, %c384_44] : memref<1x768xf32, #tpu.memory_space<vmem>>, vector<1x128xf32>
    %92 = vector.broadcast %91 : vector<1x128xf32> to vector<8x128xf32>
    %93 = arith.mulf %90, %92 : vector<8x128xf32>
    %c11_i32_45 = arith.constant 11 : i32
    %94 = tpu.dynamic_rotate %93 by %c11_i32_45 dim 1 : vector<8x128xf32>, i32 -> vector<8x128xf32>
    %c10_i32_46 = arith.constant 10 : i32
    %95 = tpu.dynamic_rotate %93 by %c10_i32_46 dim 1 : vector<8x128xf32>, i32 -> vector<8x128xf32>
    %c9_i32_47 = arith.constant 9 : i32
    %96 = tpu.dynamic_rotate %93 by %c9_i32_47 dim 1 : vector<8x128xf32>, i32 -> vector<8x128xf32>
    %c1_i32_48 = arith.constant 1 : i32
    %97 = tpu.dynamic_rotate %93 by %c1_i32_48 dim 1 : vector<8x128xf32>, i32 -> vector<8x128xf32>
    %c127_i32_49 = arith.constant 127 : i32
    %98 = tpu.dynamic_rotate %93 by %c127_i32_49 dim 1 : vector<8x128xf32>, i32 -> vector<8x128xf32>
    %c119_i32_50 = arith.constant 119 : i32
    %99 = tpu.dynamic_rotate %93 by %c119_i32_50 dim 1 : vector<8x128xf32>, i32 -> vector<8x128xf32>
    %c118_i32_51 = arith.constant 118 : i32
    %100 = tpu.dynamic_rotate %93 by %c118_i32_51 dim 1 : vector<8x128xf32>, i32 -> vector<8x128xf32>
    %c117_i32_52 = arith.constant 117 : i32
    %101 = tpu.dynamic_rotate %93 by %c117_i32_52 dim 1 : vector<8x128xf32>, i32 -> vector<8x128xf32>
    %102 = tpu.concatenate %94, %95, %96, %97, %93, %98, %99, %100, %101 in 0 : vector<8x128xf32>, vector<8x128xf32>, vector<8x128xf32>, vector<8x128xf32>, vector<8x128xf32>, vector<8x128xf32>, vector<8x128xf32>, vector<8x128xf32>, vector<8x128xf32> -> vector<72x128xf32>
    %103 = arith.truncf %102 : vector<72x128xf32> to vector<72x128xbf16>
    %c80 = arith.constant 80 : index
    %c0_53 = arith.constant 0 : index
    %104 = vector.load %arg2[%c80, %c0_53] : memref<912x128xbf16, #tpu.memory_space<vmem>>, vector<8x72xbf16>
    %cst_54 = arith.constant dense<0.000000e+00> : vector<8x128xf32>
    %105 = tpu.matmul %104, %103, %cst_54 {dimension_numbers = #tpu.dot_dimension_numbers<[1], [0], [0], [1], [0, 0, 1, 1], [], []>} : vector<8x72xbf16>, vector<72x128xbf16>, vector<8x128xf32> -> vector<8x128xf32>
    %c0_55 = arith.constant 0 : index
    %c5 = arith.constant 5 : index
    %106 = vector.load %arg3[%c0_55, %c5] : memref<16x128xf32, #tpu.memory_space<vmem>>, vector<8x1xf32>
    %107 = vector.broadcast %106 : vector<8x1xf32> to vector<8x128xf32>
    %108 = arith.addf %105, %107 : vector<8x128xf32>
    %cst_56 = arith.constant 0.000000e+00 : f32
    %109 = vector.broadcast %cst_56 : f32 to vector<8x128xf32>
    %110 = arith.cmpf oge, %108, %109 : vector<8x128xf32>
    %cst_57 = arith.constant 0.00999999977 : f32
    %111 = vector.broadcast %cst_57 : f32 to vector<8x128xf32>
    %112 = arith.mulf %111, %108 : vector<8x128xf32>
    %113 = arith.select %110, %108, %112 : vector<8x128xi1>, vector<8x128xf32>
    %114 = arith.addf %113, %67 : vector<8x128xf32>
    %c0_58 = arith.constant 0 : index
    %c58 = arith.constant 58 : index
    %115 = vector.load %arg3[%c0_58, %c58] : memref<16x128xf32, #tpu.memory_space<vmem>>, vector<8x1xf32>
    %116 = vector.broadcast %115 : vector<8x1xf32> to vector<8x128xf32>
    %117 = arith.mulf %114, %116 : vector<8x128xf32>
    %c0_59 = arith.constant 0 : index
    %c384_60 = arith.constant 384 : index
    %118 = vector.load %arg4[%c0_59, %c384_60] : memref<1x768xf32, #tpu.memory_space<vmem>>, vector<1x128xf32>
    %119 = vector.broadcast %118 : vector<1x128xf32> to vector<8x128xf32>
    %120 = arith.mulf %117, %119 : vector<8x128xf32>
    %c11_i32_61 = arith.constant 11 : i32
    %121 = tpu.dynamic_rotate %120 by %c11_i32_61 dim 1 : vector<8x128xf32>, i32 -> vector<8x128xf32>
    %c10_i32_62 = arith.constant 10 : i32
    %122 = tpu.dynamic_rotate %120 by %c10_i32_62 dim 1 : vector<8x128xf32>, i32 -> vector<8x128xf32>
    %c9_i32_63 = arith.constant 9 : i32
    %123 = tpu.dynamic_rotate %120 by %c9_i32_63 dim 1 : vector<8x128xf32>, i32 -> vector<8x128xf32>
    %c1_i32_64 = arith.constant 1 : i32
    %124 = tpu.dynamic_rotate %120 by %c1_i32_64 dim 1 : vector<8x128xf32>, i32 -> vector<8x128xf32>
    %c127_i32_65 = arith.constant 127 : i32
    %125 = tpu.dynamic_rotate %120 by %c127_i32_65 dim 1 : vector<8x128xf32>, i32 -> vector<8x128xf32>
    %c119_i32_66 = arith.constant 119 : i32
    %126 = tpu.dynamic_rotate %120 by %c119_i32_66 dim 1 : vector<8x128xf32>, i32 -> vector<8x128xf32>
    %c118_i32_67 = arith.constant 118 : i32
    %127 = tpu.dynamic_rotate %120 by %c118_i32_67 dim 1 : vector<8x128xf32>, i32 -> vector<8x128xf32>
    %c117_i32_68 = arith.constant 117 : i32
    %128 = tpu.dynamic_rotate %120 by %c117_i32_68 dim 1 : vector<8x128xf32>, i32 -> vector<8x128xf32>
    %129 = tpu.concatenate %121, %122, %123, %124, %120, %125, %126, %127, %128 in 0 : vector<8x128xf32>, vector<8x128xf32>, vector<8x128xf32>, vector<8x128xf32>, vector<8x128xf32>, vector<8x128xf32>, vector<8x128xf32>, vector<8x128xf32>, vector<8x128xf32> -> vector<72x128xf32>
    %130 = arith.truncf %129 : vector<72x128xf32> to vector<72x128xbf16>
    %c96 = arith.constant 96 : index
    %c0_69 = arith.constant 0 : index
    %131 = vector.load %arg2[%c96, %c0_69] : memref<912x128xbf16, #tpu.memory_space<vmem>>, vector<8x72xbf16>
    %cst_70 = arith.constant dense<0.000000e+00> : vector<8x128xf32>
    %132 = tpu.matmul %131, %130, %cst_70 {dimension_numbers = #tpu.dot_dimension_numbers<[1], [0], [0], [1], [0, 0, 1, 1], [], []>} : vector<8x72xbf16>, vector<72x128xbf16>, vector<8x128xf32> -> vector<8x128xf32>
    %c0_71 = arith.constant 0 : index
    %c6 = arith.constant 6 : index
    %133 = vector.load %arg3[%c0_71, %c6] : memref<16x128xf32, #tpu.memory_space<vmem>>, vector<8x1xf32>
    %134 = vector.broadcast %133 : vector<8x1xf32> to vector<8x128xf32>
    %135 = arith.addf %132, %134 : vector<8x128xf32>
    %c0_72 = arith.constant 0 : index
    %c128 = arith.constant 128 : index
    %136 = vector.load %arg5[%c0_72, %c128] : memref<384x384xbf16, #tpu.memory_space<vmem>>, vector<128x128xbf16>
    %137 = arith.truncf %135 : vector<8x128xf32> to vector<8x128xbf16>
    %cst_73 = arith.constant dense<0.000000e+00> : vector<8x128xf32>
    %138 = tpu.matmul %137, %136, %cst_73 {dimension_numbers = #tpu.dot_dimension_numbers<[1], [0], [0], [1], [0, 0, 1, 1], [], []>} : vector<8x128xbf16>, vector<128x128xbf16>, vector<8x128xf32> -> vector<8x128xf32>
    %cst_74 = arith.constant 0.000000e+00 : f32
    %139 = vector.broadcast %cst_74 : f32 to vector<8x128xf32>
    %140 = arith.cmpf oge, %138, %139 : vector<8x128xf32>
    %cst_75 = arith.constant 0.00999999977 : f32
    %141 = vector.broadcast %cst_75 : f32 to vector<8x128xf32>
    %142 = arith.mulf %141, %138 : vector<8x128xf32>
    %143 = arith.select %140, %138, %142 : vector<8x128xi1>, vector<8x128xf32>
    %c0_76 = arith.constant 0 : index
    %c512 = arith.constant 512 : index
    %144 = vector.load %arg4[%c0_76, %c512] : memref<1x768xf32, #tpu.memory_space<vmem>>, vector<1x128xf32>
    %145 = vector.broadcast %144 : vector<1x128xf32> to vector<8x128xf32>
    %146 = arith.mulf %143, %145 : vector<8x128xf32>
    %c7_i32 = arith.constant 7 : i32
    %147 = tpu.dynamic_rotate %146 by %c7_i32 dim 1 : vector<8x128xf32>, i32 -> vector<8x128xf32>
    %c6_i32 = arith.constant 6 : i32
    %148 = tpu.dynamic_rotate %146 by %c6_i32 dim 1 : vector<8x128xf32>, i32 -> vector<8x128xf32>
    %c5_i32 = arith.constant 5 : i32
    %149 = tpu.dynamic_rotate %146 by %c5_i32 dim 1 : vector<8x128xf32>, i32 -> vector<8x128xf32>
    %c1_i32_77 = arith.constant 1 : i32
    %150 = tpu.dynamic_rotate %146 by %c1_i32_77 dim 1 : vector<8x128xf32>, i32 -> vector<8x128xf32>
    %c127_i32_78 = arith.constant 127 : i32
    %151 = tpu.dynamic_rotate %146 by %c127_i32_78 dim 1 : vector<8x128xf32>, i32 -> vector<8x128xf32>
    %c123_i32 = arith.constant 123 : i32
    %152 = tpu.dynamic_rotate %146 by %c123_i32 dim 1 : vector<8x128xf32>, i32 -> vector<8x128xf32>
    %c122_i32 = arith.constant 122 : i32
    %153 = tpu.dynamic_rotate %146 by %c122_i32 dim 1 : vector<8x128xf32>, i32 -> vector<8x128xf32>
    %c121_i32 = arith.constant 121 : i32
    %154 = tpu.dynamic_rotate %146 by %c121_i32 dim 1 : vector<8x128xf32>, i32 -> vector<8x128xf32>
    %155 = tpu.concatenate %147, %148, %149, %150, %146, %151, %152, %153, %154 in 0 : vector<8x128xf32>, vector<8x128xf32>, vector<8x128xf32>, vector<8x128xf32>, vector<8x128xf32>, vector<8x128xf32>, vector<8x128xf32>, vector<8x128xf32>, vector<8x128xf32> -> vector<72x128xf32>
    %156 = arith.truncf %155 : vector<72x128xf32> to vector<72x128xbf16>
    %c112 = arith.constant 112 : index
    %c0_79 = arith.constant 0 : index
    %157 = vector.load %arg2[%c112, %c0_79] : memref<912x128xbf16, #tpu.memory_space<vmem>>, vector<8x72xbf16>
    %cst_80 = arith.constant dense<0.000000e+00> : vector<8x128xf32>
    %158 = tpu.matmul %157, %156, %cst_80 {dimension_numbers = #tpu.dot_dimension_numbers<[1], [0], [0], [1], [0, 0, 1, 1], [], []>} : vector<8x72xbf16>, vector<72x128xbf16>, vector<8x128xf32> -> vector<8x128xf32>
    %c0_81 = arith.constant 0 : index
    %c7 = arith.constant 7 : index
    %159 = vector.load %arg3[%c0_81, %c7] : memref<16x128xf32, #tpu.memory_space<vmem>>, vector<8x1xf32>
    %160 = vector.broadcast %159 : vector<8x1xf32> to vector<8x128xf32>
    %161 = arith.addf %158, %160 : vector<8x128xf32>
    %162 = arith.mulf %161, %161 : vector<8x128xf32>
    %c128_82 = arith.constant 128 : index
    %c0_83 = arith.constant 0 : index
    %163 = vector.load %arg2[%c128_82, %c0_83] : memref<912x128xbf16, #tpu.memory_space<vmem>>, vector<8x8xbf16>
    %164 = arith.truncf %162 : vector<8x128xf32> to vector<8x128xbf16>
    %cst_84 = arith.constant dense<0.000000e+00> : vector<8x128xf32>
    %165 = tpu.matmul %163, %164, %cst_84 {dimension_numbers = #tpu.dot_dimension_numbers<[1], [0], [0], [1], [0, 0, 1, 1], [], []>} : vector<8x8xbf16>, vector<8x128xbf16>, vector<8x128xf32> -> vector<8x128xf32>
    %c0_85 = arith.constant 0 : index
    %c8 = arith.constant 8 : index
    %166 = vector.load %arg3[%c0_85, %c8] : memref<16x128xf32, #tpu.memory_space<vmem>>, vector<8x1xf32>
    %167 = vector.broadcast %166 : vector<8x1xf32> to vector<8x128xf32>
    %168 = arith.addf %165, %167 : vector<8x128xf32>
    %169 = math.rsqrt %168 : vector<8x128xf32>
    %170 = arith.mulf %161, %169 : vector<8x128xf32>
    %c0_86 = arith.constant 0 : index
    %c128_87 = arith.constant 128 : index
    %171 = vector.load %arg5[%c0_86, %c128_87] : memref<384x384xbf16, #tpu.memory_space<vmem>>, vector<128x128xbf16>
    %172 = arith.truncf %117 : vector<8x128xf32> to vector<8x128xbf16>
    %cst_88 = arith.constant dense<0.000000e+00> : vector<8x128xf32>
    %173 = tpu.matmul %172, %171, %cst_88 {dimension_numbers = #tpu.dot_dimension_numbers<[1], [0], [0], [1], [0, 0, 1, 1], [], []>} : vector<8x128xbf16>, vector<128x128xbf16>, vector<8x128xf32> -> vector<8x128xf32>
    %c144 = arith.constant 144 : index
    %c0_89 = arith.constant 0 : index
    %174 = vector.load %arg2[%c144, %c0_89] : memref<912x128xbf16, #tpu.memory_space<vmem>>, vector<8x8xbf16>
    %175 = arith.truncf %173 : vector<8x128xf32> to vector<8x128xbf16>
    %cst_90 = arith.constant dense<0.000000e+00> : vector<8x128xf32>
    %176 = tpu.matmul %174, %175, %cst_90 {dimension_numbers = #tpu.dot_dimension_numbers<[1], [0], [0], [1], [0, 0, 1, 1], [], []>} : vector<8x8xbf16>, vector<8x128xbf16>, vector<8x128xf32> -> vector<8x128xf32>
    %c0_91 = arith.constant 0 : index
    %c9 = arith.constant 9 : index
    %177 = vector.load %arg3[%c0_91, %c9] : memref<16x128xf32, #tpu.memory_space<vmem>>, vector<8x1xf32>
    %178 = vector.broadcast %177 : vector<8x1xf32> to vector<8x128xf32>
    %179 = arith.addf %176, %178 : vector<8x128xf32>
    %180 = arith.addf %170, %179 : vector<8x128xf32>
    %c160 = arith.constant 160 : index
    %c0_92 = arith.constant 0 : index
    %181 = vector.load %arg2[%c160, %c0_92] : memref<912x128xbf16, #tpu.memory_space<vmem>>, vector<8x8xbf16>
    %182 = arith.truncf %180 : vector<8x128xf32> to vector<8x128xbf16>
    %cst_93 = arith.constant dense<0.000000e+00> : vector<8x128xf32>
    %183 = tpu.matmul %181, %182, %cst_93 {dimension_numbers = #tpu.dot_dimension_numbers<[1], [0], [0], [1], [0, 0, 1, 1], [], []>} : vector<8x8xbf16>, vector<8x128xbf16>, vector<8x128xf32> -> vector<8x128xf32>
    %c0_94 = arith.constant 0 : index
    %c10 = arith.constant 10 : index
    %184 = vector.load %arg3[%c0_94, %c10] : memref<16x128xf32, #tpu.memory_space<vmem>>, vector<8x1xf32>
    %185 = vector.broadcast %184 : vector<8x1xf32> to vector<8x128xf32>
    %186 = arith.addf %183, %185 : vector<8x128xf32>
    %cst_95 = arith.constant 0.000000e+00 : f32
    %187 = vector.broadcast %cst_95 : f32 to vector<8x128xf32>
    %188 = arith.maximumf %186, %187 : vector<8x128xf32>
    %c0_96 = arith.constant 0 : index
    %c512_97 = arith.constant 512 : index
    %189 = vector.load %arg4[%c0_96, %c512_97] : memref<1x768xf32, #tpu.memory_space<vmem>>, vector<1x128xf32>
    %190 = vector.broadcast %189 : vector<1x128xf32> to vector<8x128xf32>
    %191 = arith.mulf %188, %190 : vector<8x128xf32>
    %c7_i32_98 = arith.constant 7 : i32
    %192 = tpu.dynamic_rotate %191 by %c7_i32_98 dim 1 : vector<8x128xf32>, i32 -> vector<8x128xf32>
    %c6_i32_99 = arith.constant 6 : i32
    %193 = tpu.dynamic_rotate %191 by %c6_i32_99 dim 1 : vector<8x128xf32>, i32 -> vector<8x128xf32>
    %c5_i32_100 = arith.constant 5 : i32
    %194 = tpu.dynamic_rotate %191 by %c5_i32_100 dim 1 : vector<8x128xf32>, i32 -> vector<8x128xf32>
    %c1_i32_101 = arith.constant 1 : i32
    %195 = tpu.dynamic_rotate %191 by %c1_i32_101 dim 1 : vector<8x128xf32>, i32 -> vector<8x128xf32>
    %c127_i32_102 = arith.constant 127 : i32
    %196 = tpu.dynamic_rotate %191 by %c127_i32_102 dim 1 : vector<8x128xf32>, i32 -> vector<8x128xf32>
    %c123_i32_103 = arith.constant 123 : i32
    %197 = tpu.dynamic_rotate %191 by %c123_i32_103 dim 1 : vector<8x128xf32>, i32 -> vector<8x128xf32>
    %c122_i32_104 = arith.constant 122 : i32
    %198 = tpu.dynamic_rotate %191 by %c122_i32_104 dim 1 : vector<8x128xf32>, i32 -> vector<8x128xf32>
    %c121_i32_105 = arith.constant 121 : i32
    %199 = tpu.dynamic_rotate %191 by %c121_i32_105 dim 1 : vector<8x128xf32>, i32 -> vector<8x128xf32>
    %200 = tpu.concatenate %192, %193, %194, %195, %191, %196, %197, %198, %199 in 0 : vector<8x128xf32>, vector<8x128xf32>, vector<8x128xf32>, vector<8x128xf32>, vector<8x128xf32>, vector<8x128xf32>, vector<8x128xf32>, vector<8x128xf32>, vector<8x128xf32> -> vector<72x128xf32>
    %201 = arith.truncf %200 : vector<72x128xf32> to vector<72x128xbf16>
    %c176 = arith.constant 176 : index
    %c0_106 = arith.constant 0 : index
    %202 = vector.load %arg2[%c176, %c0_106] : memref<912x128xbf16, #tpu.memory_space<vmem>>, vector<8x72xbf16>
    %cst_107 = arith.constant dense<0.000000e+00> : vector<8x128xf32>
    %203 = tpu.matmul %202, %201, %cst_107 {dimension_numbers = #tpu.dot_dimension_numbers<[1], [0], [0], [1], [0, 0, 1, 1], [], []>} : vector<8x72xbf16>, vector<72x128xbf16>, vector<8x128xf32> -> vector<8x128xf32>
    %c0_108 = arith.constant 0 : index
    %c11 = arith.constant 11 : index
    %204 = vector.load %arg3[%c0_108, %c11] : memref<16x128xf32, #tpu.memory_space<vmem>>, vector<8x1xf32>
    %205 = vector.broadcast %204 : vector<8x1xf32> to vector<8x128xf32>
    %206 = arith.addf %203, %205 : vector<8x128xf32>
    %cst_109 = arith.constant 0.000000e+00 : f32
    %207 = vector.broadcast %cst_109 : f32 to vector<8x128xf32>
    %208 = arith.maximumf %206, %207 : vector<8x128xf32>
    %c192 = arith.constant 192 : index
    %c0_110 = arith.constant 0 : index
    %209 = vector.load %arg2[%c192, %c0_110] : memref<912x128xbf16, #tpu.memory_space<vmem>>, vector<8x8xbf16>
    %210 = arith.truncf %208 : vector<8x128xf32> to vector<8x128xbf16>
    %cst_111 = arith.constant dense<0.000000e+00> : vector<8x128xf32>
    %211 = tpu.matmul %209, %210, %cst_111 {dimension_numbers = #tpu.dot_dimension_numbers<[1], [0], [0], [1], [0, 0, 1, 1], [], []>} : vector<8x8xbf16>, vector<8x128xbf16>, vector<8x128xf32> -> vector<8x128xf32>
    %c0_112 = arith.constant 0 : index
    %c12 = arith.constant 12 : index
    %212 = vector.load %arg3[%c0_112, %c12] : memref<16x128xf32, #tpu.memory_space<vmem>>, vector<8x1xf32>
    %213 = vector.broadcast %212 : vector<8x1xf32> to vector<8x128xf32>
    %214 = arith.addf %211, %213 : vector<8x128xf32>
    %215 = arith.addf %214, %180 : vector<8x128xf32>
    %cst_113 = arith.constant 0.000000e+00 : f32
    %216 = vector.broadcast %cst_113 : f32 to vector<8x128xf32>
    %217 = arith.maximumf %215, %216 : vector<8x128xf32>
    %c208 = arith.constant 208 : index
    %c0_114 = arith.constant 0 : index
    %218 = vector.load %arg2[%c208, %c0_114] : memref<912x128xbf16, #tpu.memory_space<vmem>>, vector<8x8xbf16>
    %219 = arith.truncf %217 : vector<8x128xf32> to vector<8x128xbf16>
    %cst_115 = arith.constant dense<0.000000e+00> : vector<8x128xf32>
    %220 = tpu.matmul %218, %219, %cst_115 {dimension_numbers = #tpu.dot_dimension_numbers<[1], [0], [0], [1], [0, 0, 1, 1], [], []>} : vector<8x8xbf16>, vector<8x128xbf16>, vector<8x128xf32> -> vector<8x128xf32>
    %c0_116 = arith.constant 0 : index
    %c13 = arith.constant 13 : index
    %221 = vector.load %arg3[%c0_116, %c13] : memref<16x128xf32, #tpu.memory_space<vmem>>, vector<8x1xf32>
    %222 = vector.broadcast %221 : vector<8x1xf32> to vector<8x128xf32>
    %223 = arith.addf %220, %222 : vector<8x128xf32>
    %cst_117 = arith.constant 0.000000e+00 : f32
    %224 = vector.broadcast %cst_117 : f32 to vector<8x128xf32>
    %225 = arith.maximumf %223, %224 : vector<8x128xf32>
    %c0_118 = arith.constant 0 : index
    %c512_119 = arith.constant 512 : index
    %226 = vector.load %arg4[%c0_118, %c512_119] : memref<1x768xf32, #tpu.memory_space<vmem>>, vector<1x128xf32>
    %227 = vector.broadcast %226 : vector<1x128xf32> to vector<8x128xf32>
    %228 = arith.mulf %225, %227 : vector<8x128xf32>
    %c7_i32_120 = arith.constant 7 : i32
    %229 = tpu.dynamic_rotate %228 by %c7_i32_120 dim 1 : vector<8x128xf32>, i32 -> vector<8x128xf32>
    %c6_i32_121 = arith.constant 6 : i32
    %230 = tpu.dynamic_rotate %228 by %c6_i32_121 dim 1 : vector<8x128xf32>, i32 -> vector<8x128xf32>
    %c5_i32_122 = arith.constant 5 : i32
    %231 = tpu.dynamic_rotate %228 by %c5_i32_122 dim 1 : vector<8x128xf32>, i32 -> vector<8x128xf32>
    %c1_i32_123 = arith.constant 1 : i32
    %232 = tpu.dynamic_rotate %228 by %c1_i32_123 dim 1 : vector<8x128xf32>, i32 -> vector<8x128xf32>
    %c127_i32_124 = arith.constant 127 : i32
    %233 = tpu.dynamic_rotate %228 by %c127_i32_124 dim 1 : vector<8x128xf32>, i32 -> vector<8x128xf32>
    %c123_i32_125 = arith.constant 123 : i32
    %234 = tpu.dynamic_rotate %228 by %c123_i32_125 dim 1 : vector<8x128xf32>, i32 -> vector<8x128xf32>
    %c122_i32_126 = arith.constant 122 : i32
    %235 = tpu.dynamic_rotate %228 by %c122_i32_126 dim 1 : vector<8x128xf32>, i32 -> vector<8x128xf32>
    %c121_i32_127 = arith.constant 121 : i32
    %236 = tpu.dynamic_rotate %228 by %c121_i32_127 dim 1 : vector<8x128xf32>, i32 -> vector<8x128xf32>
    %237 = tpu.concatenate %229, %230, %231, %232, %228, %233, %234, %235, %236 in 0 : vector<8x128xf32>, vector<8x128xf32>, vector<8x128xf32>, vector<8x128xf32>, vector<8x128xf32>, vector<8x128xf32>, vector<8x128xf32>, vector<8x128xf32>, vector<8x128xf32> -> vector<72x128xf32>
    %238 = arith.truncf %237 : vector<72x128xf32> to vector<72x128xbf16>
    %c224 = arith.constant 224 : index
    %c0_128 = arith.constant 0 : index
    %239 = vector.load %arg2[%c224, %c0_128] : memref<912x128xbf16, #tpu.memory_space<vmem>>, vector<8x72xbf16>
    %cst_129 = arith.constant dense<0.000000e+00> : vector<8x128xf32>
    %240 = tpu.matmul %239, %238, %cst_129 {dimension_numbers = #tpu.dot_dimension_numbers<[1], [0], [0], [1], [0, 0, 1, 1], [], []>} : vector<8x72xbf16>, vector<72x128xbf16>, vector<8x128xf32> -> vector<8x128xf32>
    %c0_130 = arith.constant 0 : index
    %c14 = arith.constant 14 : index
    %241 = vector.load %arg3[%c0_130, %c14] : memref<16x128xf32, #tpu.memory_space<vmem>>, vector<8x1xf32>
    %242 = vector.broadcast %241 : vector<8x1xf32> to vector<8x128xf32>
    %243 = arith.addf %240, %242 : vector<8x128xf32>
    %cst_131 = arith.constant 0.000000e+00 : f32
    %244 = vector.broadcast %cst_131 : f32 to vector<8x128xf32>
    %245 = arith.maximumf %243, %244 : vector<8x128xf32>
    %c240 = arith.constant 240 : index
    %c0_132 = arith.constant 0 : index
    %246 = vector.load %arg2[%c240, %c0_132] : memref<912x128xbf16, #tpu.memory_space<vmem>>, vector<8x8xbf16>
    %247 = arith.truncf %245 : vector<8x128xf32> to vector<8x128xbf16>
    %cst_133 = arith.constant dense<0.000000e+00> : vector<8x128xf32>
    %248 = tpu.matmul %246, %247, %cst_133 {dimension_numbers = #tpu.dot_dimension_numbers<[1], [0], [0], [1], [0, 0, 1, 1], [], []>} : vector<8x8xbf16>, vector<8x128xbf16>, vector<8x128xf32> -> vector<8x128xf32>
    %c0_134 = arith.constant 0 : index
    %c15 = arith.constant 15 : index
    %249 = vector.load %arg3[%c0_134, %c15] : memref<16x128xf32, #tpu.memory_space<vmem>>, vector<8x1xf32>
    %250 = vector.broadcast %249 : vector<8x1xf32> to vector<8x128xf32>
    %251 = arith.addf %248, %250 : vector<8x128xf32>
    %252 = arith.addf %251, %217 : vector<8x128xf32>
    %cst_135 = arith.constant 0.000000e+00 : f32
    %253 = vector.broadcast %cst_135 : f32 to vector<8x128xf32>
    %254 = arith.maximumf %252, %253 : vector<8x128xf32>
    %c256 = arith.constant 256 : index
    %c0_136 = arith.constant 0 : index
    %255 = vector.load %arg2[%c256, %c0_136] : memref<912x128xbf16, #tpu.memory_space<vmem>>, vector<8x8xbf16>
    %256 = arith.truncf %254 : vector<8x128xf32> to vector<8x128xbf16>
    %cst_137 = arith.constant dense<0.000000e+00> : vector<8x128xf32>
    %257 = tpu.matmul %255, %256, %cst_137 {dimension_numbers = #tpu.dot_dimension_numbers<[1], [0], [0], [1], [0, 0, 1, 1], [], []>} : vector<8x8xbf16>, vector<8x128xbf16>, vector<8x128xf32> -> vector<8x128xf32>
    %c0_138 = arith.constant 0 : index
    %c16_139 = arith.constant 16 : index
    %258 = vector.load %arg3[%c0_138, %c16_139] : memref<16x128xf32, #tpu.memory_space<vmem>>, vector<8x1xf32>
    %259 = vector.broadcast %258 : vector<8x1xf32> to vector<8x128xf32>
    %260 = arith.addf %257, %259 : vector<8x128xf32>
    %cst_140 = arith.constant 0.000000e+00 : f32
    %261 = vector.broadcast %cst_140 : f32 to vector<8x128xf32>
    %262 = arith.maximumf %260, %261 : vector<8x128xf32>
    %c0_141 = arith.constant 0 : index
    %c512_142 = arith.constant 512 : index
    %263 = vector.load %arg4[%c0_141, %c512_142] : memref<1x768xf32, #tpu.memory_space<vmem>>, vector<1x128xf32>
    %264 = vector.broadcast %263 : vector<1x128xf32> to vector<8x128xf32>
    %265 = arith.mulf %262, %264 : vector<8x128xf32>
    %c7_i32_143 = arith.constant 7 : i32
    %266 = tpu.dynamic_rotate %265 by %c7_i32_143 dim 1 : vector<8x128xf32>, i32 -> vector<8x128xf32>
    %c6_i32_144 = arith.constant 6 : i32
    %267 = tpu.dynamic_rotate %265 by %c6_i32_144 dim 1 : vector<8x128xf32>, i32 -> vector<8x128xf32>
    %c5_i32_145 = arith.constant 5 : i32
    %268 = tpu.dynamic_rotate %265 by %c5_i32_145 dim 1 : vector<8x128xf32>, i32 -> vector<8x128xf32>
    %c1_i32_146 = arith.constant 1 : i32
    %269 = tpu.dynamic_rotate %265 by %c1_i32_146 dim 1 : vector<8x128xf32>, i32 -> vector<8x128xf32>
    %c127_i32_147 = arith.constant 127 : i32
    %270 = tpu.dynamic_rotate %265 by %c127_i32_147 dim 1 : vector<8x128xf32>, i32 -> vector<8x128xf32>
    %c123_i32_148 = arith.constant 123 : i32
    %271 = tpu.dynamic_rotate %265 by %c123_i32_148 dim 1 : vector<8x128xf32>, i32 -> vector<8x128xf32>
    %c122_i32_149 = arith.constant 122 : i32
    %272 = tpu.dynamic_rotate %265 by %c122_i32_149 dim 1 : vector<8x128xf32>, i32 -> vector<8x128xf32>
    %c121_i32_150 = arith.constant 121 : i32
    %273 = tpu.dynamic_rotate %265 by %c121_i32_150 dim 1 : vector<8x128xf32>, i32 -> vector<8x128xf32>
    %274 = tpu.concatenate %266, %267, %268, %269, %265, %270, %271, %272, %273 in 0 : vector<8x128xf32>, vector<8x128xf32>, vector<8x128xf32>, vector<8x128xf32>, vector<8x128xf32>, vector<8x128xf32>, vector<8x128xf32>, vector<8x128xf32>, vector<8x128xf32> -> vector<72x128xf32>
    %275 = arith.truncf %274 : vector<72x128xf32> to vector<72x128xbf16>
    %c272 = arith.constant 272 : index
    %c0_151 = arith.constant 0 : index
    %276 = vector.load %arg2[%c272, %c0_151] : memref<912x128xbf16, #tpu.memory_space<vmem>>, vector<8x72xbf16>
    %cst_152 = arith.constant dense<0.000000e+00> : vector<8x128xf32>
    %277 = tpu.matmul %276, %275, %cst_152 {dimension_numbers = #tpu.dot_dimension_numbers<[1], [0], [0], [1], [0, 0, 1, 1], [], []>} : vector<8x72xbf16>, vector<72x128xbf16>, vector<8x128xf32> -> vector<8x128xf32>
    %c0_153 = arith.constant 0 : index
    %c17 = arith.constant 17 : index
    %278 = vector.load %arg3[%c0_153, %c17] : memref<16x128xf32, #tpu.memory_space<vmem>>, vector<8x1xf32>
    %279 = vector.broadcast %278 : vector<8x1xf32> to vector<8x128xf32>
    %280 = arith.addf %277, %279 : vector<8x128xf32>
    %cst_154 = arith.constant 0.000000e+00 : f32
    %281 = vector.broadcast %cst_154 : f32 to vector<8x128xf32>
    %282 = arith.maximumf %280, %281 : vector<8x128xf32>
    %c288 = arith.constant 288 : index
    %c0_155 = arith.constant 0 : index
    %283 = vector.load %arg2[%c288, %c0_155] : memref<912x128xbf16, #tpu.memory_space<vmem>>, vector<8x8xbf16>
    %284 = arith.truncf %282 : vector<8x128xf32> to vector<8x128xbf16>
    %cst_156 = arith.constant dense<0.000000e+00> : vector<8x128xf32>
    %285 = tpu.matmul %283, %284, %cst_156 {dimension_numbers = #tpu.dot_dimension_numbers<[1], [0], [0], [1], [0, 0, 1, 1], [], []>} : vector<8x8xbf16>, vector<8x128xbf16>, vector<8x128xf32> -> vector<8x128xf32>
    %c0_157 = arith.constant 0 : index
    %c18 = arith.constant 18 : index
    %286 = vector.load %arg3[%c0_157, %c18] : memref<16x128xf32, #tpu.memory_space<vmem>>, vector<8x1xf32>
    %287 = vector.broadcast %286 : vector<8x1xf32> to vector<8x128xf32>
    %288 = arith.addf %285, %287 : vector<8x128xf32>
    %289 = arith.addf %288, %254 : vector<8x128xf32>
    %cst_158 = arith.constant 0.000000e+00 : f32
    %290 = vector.broadcast %cst_158 : f32 to vector<8x128xf32>
    %291 = arith.maximumf %289, %290 : vector<8x128xf32>
    %c304 = arith.constant 304 : index
    %c0_159 = arith.constant 0 : index
    %292 = vector.load %arg2[%c304, %c0_159] : memref<912x128xbf16, #tpu.memory_space<vmem>>, vector<8x8xbf16>
    %293 = arith.truncf %180 : vector<8x128xf32> to vector<8x128xbf16>
    %cst_160 = arith.constant dense<0.000000e+00> : vector<8x128xf32>
    %294 = tpu.matmul %292, %293, %cst_160 {dimension_numbers = #tpu.dot_dimension_numbers<[1], [0], [0], [1], [0, 0, 1, 1], [], []>} : vector<8x8xbf16>, vector<8x128xbf16>, vector<8x128xf32> -> vector<8x128xf32>
    %c0_161 = arith.constant 0 : index
    %c19 = arith.constant 19 : index
    %295 = vector.load %arg3[%c0_161, %c19] : memref<16x128xf32, #tpu.memory_space<vmem>>, vector<8x1xf32>
    %296 = vector.broadcast %295 : vector<8x1xf32> to vector<8x128xf32>
    %297 = arith.addf %294, %296 : vector<8x128xf32>
    %cst_162 = arith.constant 0.000000e+00 : f32
    %298 = vector.broadcast %cst_162 : f32 to vector<8x128xf32>
    %299 = arith.maximumf %297, %298 : vector<8x128xf32>
    %c0_163 = arith.constant 0 : index
    %c512_164 = arith.constant 512 : index
    %300 = vector.load %arg4[%c0_163, %c512_164] : memref<1x768xf32, #tpu.memory_space<vmem>>, vector<1x128xf32>
    %301 = vector.broadcast %300 : vector<1x128xf32> to vector<8x128xf32>
    %302 = arith.mulf %299, %301 : vector<8x128xf32>
    %c7_i32_165 = arith.constant 7 : i32
    %303 = tpu.dynamic_rotate %302 by %c7_i32_165 dim 1 : vector<8x128xf32>, i32 -> vector<8x128xf32>
    %c6_i32_166 = arith.constant 6 : i32
    %304 = tpu.dynamic_rotate %302 by %c6_i32_166 dim 1 : vector<8x128xf32>, i32 -> vector<8x128xf32>
    %c5_i32_167 = arith.constant 5 : i32
    %305 = tpu.dynamic_rotate %302 by %c5_i32_167 dim 1 : vector<8x128xf32>, i32 -> vector<8x128xf32>
    %c1_i32_168 = arith.constant 1 : i32
    %306 = tpu.dynamic_rotate %302 by %c1_i32_168 dim 1 : vector<8x128xf32>, i32 -> vector<8x128xf32>
    %c127_i32_169 = arith.constant 127 : i32
    %307 = tpu.dynamic_rotate %302 by %c127_i32_169 dim 1 : vector<8x128xf32>, i32 -> vector<8x128xf32>
    %c123_i32_170 = arith.constant 123 : i32
    %308 = tpu.dynamic_rotate %302 by %c123_i32_170 dim 1 : vector<8x128xf32>, i32 -> vector<8x128xf32>
    %c122_i32_171 = arith.constant 122 : i32
    %309 = tpu.dynamic_rotate %302 by %c122_i32_171 dim 1 : vector<8x128xf32>, i32 -> vector<8x128xf32>
    %c121_i32_172 = arith.constant 121 : i32
    %310 = tpu.dynamic_rotate %302 by %c121_i32_172 dim 1 : vector<8x128xf32>, i32 -> vector<8x128xf32>
    %311 = tpu.concatenate %303, %304, %305, %306, %302, %307, %308, %309, %310 in 0 : vector<8x128xf32>, vector<8x128xf32>, vector<8x128xf32>, vector<8x128xf32>, vector<8x128xf32>, vector<8x128xf32>, vector<8x128xf32>, vector<8x128xf32>, vector<8x128xf32> -> vector<72x128xf32>
    %312 = arith.truncf %311 : vector<72x128xf32> to vector<72x128xbf16>
    %c320 = arith.constant 320 : index
    %c0_173 = arith.constant 0 : index
    %313 = vector.load %arg2[%c320, %c0_173] : memref<912x128xbf16, #tpu.memory_space<vmem>>, vector<8x72xbf16>
    %cst_174 = arith.constant dense<0.000000e+00> : vector<8x128xf32>
    %314 = tpu.matmul %313, %312, %cst_174 {dimension_numbers = #tpu.dot_dimension_numbers<[1], [0], [0], [1], [0, 0, 1, 1], [], []>} : vector<8x72xbf16>, vector<72x128xbf16>, vector<8x128xf32> -> vector<8x128xf32>
    %c0_175 = arith.constant 0 : index
    %c20 = arith.constant 20 : index
    %315 = vector.load %arg3[%c0_175, %c20] : memref<16x128xf32, #tpu.memory_space<vmem>>, vector<8x1xf32>
    %316 = vector.broadcast %315 : vector<8x1xf32> to vector<8x128xf32>
    %317 = arith.addf %314, %316 : vector<8x128xf32>
    %cst_176 = arith.constant 0.000000e+00 : f32
    %318 = vector.broadcast %cst_176 : f32 to vector<8x128xf32>
    %319 = arith.maximumf %317, %318 : vector<8x128xf32>
    %c336 = arith.constant 336 : index
    %c0_177 = arith.constant 0 : index
    %320 = vector.load %arg2[%c336, %c0_177] : memref<912x128xbf16, #tpu.memory_space<vmem>>, vector<8x8xbf16>
    %321 = arith.truncf %319 : vector<8x128xf32> to vector<8x128xbf16>
    %cst_178 = arith.constant dense<0.000000e+00> : vector<8x128xf32>
    %322 = tpu.matmul %320, %321, %cst_178 {dimension_numbers = #tpu.dot_dimension_numbers<[1], [0], [0], [1], [0, 0, 1, 1], [], []>} : vector<8x8xbf16>, vector<8x128xbf16>, vector<8x128xf32> -> vector<8x128xf32>
    %c0_179 = arith.constant 0 : index
    %c21 = arith.constant 21 : index
    %323 = vector.load %arg3[%c0_179, %c21] : memref<16x128xf32, #tpu.memory_space<vmem>>, vector<8x1xf32>
    %324 = vector.broadcast %323 : vector<8x1xf32> to vector<8x128xf32>
    %325 = arith.addf %322, %324 : vector<8x128xf32>
    %326 = arith.addf %325, %180 : vector<8x128xf32>
    %cst_180 = arith.constant 0.000000e+00 : f32
    %327 = vector.broadcast %cst_180 : f32 to vector<8x128xf32>
    %328 = arith.maximumf %326, %327 : vector<8x128xf32>
    %c352 = arith.constant 352 : index
    %c0_181 = arith.constant 0 : index
    %329 = vector.load %arg2[%c352, %c0_181] : memref<912x128xbf16, #tpu.memory_space<vmem>>, vector<8x8xbf16>
    %330 = arith.truncf %328 : vector<8x128xf32> to vector<8x128xbf16>
    %cst_182 = arith.constant dense<0.000000e+00> : vector<8x128xf32>
    %331 = tpu.matmul %329, %330, %cst_182 {dimension_numbers = #tpu.dot_dimension_numbers<[1], [0], [0], [1], [0, 0, 1, 1], [], []>} : vector<8x8xbf16>, vector<8x128xbf16>, vector<8x128xf32> -> vector<8x128xf32>
    %c0_183 = arith.constant 0 : index
    %c22 = arith.constant 22 : index
    %332 = vector.load %arg3[%c0_183, %c22] : memref<16x128xf32, #tpu.memory_space<vmem>>, vector<8x1xf32>
    %333 = vector.broadcast %332 : vector<8x1xf32> to vector<8x128xf32>
    %334 = arith.addf %331, %333 : vector<8x128xf32>
    %cst_184 = arith.constant 0.000000e+00 : f32
    %335 = vector.broadcast %cst_184 : f32 to vector<8x128xf32>
    %336 = arith.maximumf %334, %335 : vector<8x128xf32>
    %c0_185 = arith.constant 0 : index
    %c512_186 = arith.constant 512 : index
    %337 = vector.load %arg4[%c0_185, %c512_186] : memref<1x768xf32, #tpu.memory_space<vmem>>, vector<1x128xf32>
    %338 = vector.broadcast %337 : vector<1x128xf32> to vector<8x128xf32>
    %339 = arith.mulf %336, %338 : vector<8x128xf32>
    %c7_i32_187 = arith.constant 7 : i32
    %340 = tpu.dynamic_rotate %339 by %c7_i32_187 dim 1 : vector<8x128xf32>, i32 -> vector<8x128xf32>
    %c6_i32_188 = arith.constant 6 : i32
    %341 = tpu.dynamic_rotate %339 by %c6_i32_188 dim 1 : vector<8x128xf32>, i32 -> vector<8x128xf32>
    %c5_i32_189 = arith.constant 5 : i32
    %342 = tpu.dynamic_rotate %339 by %c5_i32_189 dim 1 : vector<8x128xf32>, i32 -> vector<8x128xf32>
    %c1_i32_190 = arith.constant 1 : i32
    %343 = tpu.dynamic_rotate %339 by %c1_i32_190 dim 1 : vector<8x128xf32>, i32 -> vector<8x128xf32>
    %c127_i32_191 = arith.constant 127 : i32
    %344 = tpu.dynamic_rotate %339 by %c127_i32_191 dim 1 : vector<8x128xf32>, i32 -> vector<8x128xf32>
    %c123_i32_192 = arith.constant 123 : i32
    %345 = tpu.dynamic_rotate %339 by %c123_i32_192 dim 1 : vector<8x128xf32>, i32 -> vector<8x128xf32>
    %c122_i32_193 = arith.constant 122 : i32
    %346 = tpu.dynamic_rotate %339 by %c122_i32_193 dim 1 : vector<8x128xf32>, i32 -> vector<8x128xf32>
    %c121_i32_194 = arith.constant 121 : i32
    %347 = tpu.dynamic_rotate %339 by %c121_i32_194 dim 1 : vector<8x128xf32>, i32 -> vector<8x128xf32>
    %348 = tpu.concatenate %340, %341, %342, %343, %339, %344, %345, %346, %347 in 0 : vector<8x128xf32>, vector<8x128xf32>, vector<8x128xf32>, vector<8x128xf32>, vector<8x128xf32>, vector<8x128xf32>, vector<8x128xf32>, vector<8x128xf32>, vector<8x128xf32> -> vector<72x128xf32>
    %349 = arith.truncf %348 : vector<72x128xf32> to vector<72x128xbf16>
    %c368 = arith.constant 368 : index
    %c0_195 = arith.constant 0 : index
    %350 = vector.load %arg2[%c368, %c0_195] : memref<912x128xbf16, #tpu.memory_space<vmem>>, vector<8x72xbf16>
    %cst_196 = arith.constant dense<0.000000e+00> : vector<8x128xf32>
    %351 = tpu.matmul %350, %349, %cst_196 {dimension_numbers = #tpu.dot_dimension_numbers<[1], [0], [0], [1], [0, 0, 1, 1], [], []>} : vector<8x72xbf16>, vector<72x128xbf16>, vector<8x128xf32> -> vector<8x128xf32>
    %c0_197 = arith.constant 0 : index
    %c23 = arith.constant 23 : index
    %352 = vector.load %arg3[%c0_197, %c23] : memref<16x128xf32, #tpu.memory_space<vmem>>, vector<8x1xf32>
    %353 = vector.broadcast %352 : vector<8x1xf32> to vector<8x128xf32>
    %354 = arith.addf %351, %353 : vector<8x128xf32>
    %cst_198 = arith.constant 0.000000e+00 : f32
    %355 = vector.broadcast %cst_198 : f32 to vector<8x128xf32>
    %356 = arith.maximumf %354, %355 : vector<8x128xf32>
    %c384_199 = arith.constant 384 : index
    %c0_200 = arith.constant 0 : index
    %357 = vector.load %arg2[%c384_199, %c0_200] : memref<912x128xbf16, #tpu.memory_space<vmem>>, vector<8x8xbf16>
    %358 = arith.truncf %356 : vector<8x128xf32> to vector<8x128xbf16>
    %cst_201 = arith.constant dense<0.000000e+00> : vector<8x128xf32>
    %359 = tpu.matmul %357, %358, %cst_201 {dimension_numbers = #tpu.dot_dimension_numbers<[1], [0], [0], [1], [0, 0, 1, 1], [], []>} : vector<8x8xbf16>, vector<8x128xbf16>, vector<8x128xf32> -> vector<8x128xf32>
    %c0_202 = arith.constant 0 : index
    %c24 = arith.constant 24 : index
    %360 = vector.load %arg3[%c0_202, %c24] : memref<16x128xf32, #tpu.memory_space<vmem>>, vector<8x1xf32>
    %361 = vector.broadcast %360 : vector<8x1xf32> to vector<8x128xf32>
    %362 = arith.addf %359, %361 : vector<8x128xf32>
    %363 = arith.addf %362, %328 : vector<8x128xf32>
    %cst_203 = arith.constant 0.000000e+00 : f32
    %364 = vector.broadcast %cst_203 : f32 to vector<8x128xf32>
    %365 = arith.maximumf %363, %364 : vector<8x128xf32>
    %c400 = arith.constant 400 : index
    %c0_204 = arith.constant 0 : index
    %366 = vector.load %arg2[%c400, %c0_204] : memref<912x128xbf16, #tpu.memory_space<vmem>>, vector<8x8xbf16>
    %367 = arith.truncf %365 : vector<8x128xf32> to vector<8x128xbf16>
    %cst_205 = arith.constant dense<0.000000e+00> : vector<8x128xf32>
    %368 = tpu.matmul %366, %367, %cst_205 {dimension_numbers = #tpu.dot_dimension_numbers<[1], [0], [0], [1], [0, 0, 1, 1], [], []>} : vector<8x8xbf16>, vector<8x128xbf16>, vector<8x128xf32> -> vector<8x128xf32>
    %c0_206 = arith.constant 0 : index
    %c25 = arith.constant 25 : index
    %369 = vector.load %arg3[%c0_206, %c25] : memref<16x128xf32, #tpu.memory_space<vmem>>, vector<8x1xf32>
    %370 = vector.broadcast %369 : vector<8x1xf32> to vector<8x128xf32>
    %371 = arith.addf %368, %370 : vector<8x128xf32>
    %cst_207 = arith.constant 0.000000e+00 : f32
    %372 = vector.broadcast %cst_207 : f32 to vector<8x128xf32>
    %373 = arith.maximumf %371, %372 : vector<8x128xf32>
    %c0_208 = arith.constant 0 : index
    %c512_209 = arith.constant 512 : index
    %374 = vector.load %arg4[%c0_208, %c512_209] : memref<1x768xf32, #tpu.memory_space<vmem>>, vector<1x128xf32>
    %375 = vector.broadcast %374 : vector<1x128xf32> to vector<8x128xf32>
    %376 = arith.mulf %373, %375 : vector<8x128xf32>
    %c7_i32_210 = arith.constant 7 : i32
    %377 = tpu.dynamic_rotate %376 by %c7_i32_210 dim 1 : vector<8x128xf32>, i32 -> vector<8x128xf32>
    %c6_i32_211 = arith.constant 6 : i32
    %378 = tpu.dynamic_rotate %376 by %c6_i32_211 dim 1 : vector<8x128xf32>, i32 -> vector<8x128xf32>
    %c5_i32_212 = arith.constant 5 : i32
    %379 = tpu.dynamic_rotate %376 by %c5_i32_212 dim 1 : vector<8x128xf32>, i32 -> vector<8x128xf32>
    %c1_i32_213 = arith.constant 1 : i32
    %380 = tpu.dynamic_rotate %376 by %c1_i32_213 dim 1 : vector<8x128xf32>, i32 -> vector<8x128xf32>
    %c127_i32_214 = arith.constant 127 : i32
    %381 = tpu.dynamic_rotate %376 by %c127_i32_214 dim 1 : vector<8x128xf32>, i32 -> vector<8x128xf32>
    %c123_i32_215 = arith.constant 123 : i32
    %382 = tpu.dynamic_rotate %376 by %c123_i32_215 dim 1 : vector<8x128xf32>, i32 -> vector<8x128xf32>
    %c122_i32_216 = arith.constant 122 : i32
    %383 = tpu.dynamic_rotate %376 by %c122_i32_216 dim 1 : vector<8x128xf32>, i32 -> vector<8x128xf32>
    %c121_i32_217 = arith.constant 121 : i32
    %384 = tpu.dynamic_rotate %376 by %c121_i32_217 dim 1 : vector<8x128xf32>, i32 -> vector<8x128xf32>
    %385 = tpu.concatenate %377, %378, %379, %380, %376, %381, %382, %383, %384 in 0 : vector<8x128xf32>, vector<8x128xf32>, vector<8x128xf32>, vector<8x128xf32>, vector<8x128xf32>, vector<8x128xf32>, vector<8x128xf32>, vector<8x128xf32>, vector<8x128xf32> -> vector<72x128xf32>
    %386 = arith.truncf %385 : vector<72x128xf32> to vector<72x128xbf16>
    %c416 = arith.constant 416 : index
    %c0_218 = arith.constant 0 : index
    %387 = vector.load %arg2[%c416, %c0_218] : memref<912x128xbf16, #tpu.memory_space<vmem>>, vector<8x72xbf16>
    %cst_219 = arith.constant dense<0.000000e+00> : vector<8x128xf32>
    %388 = tpu.matmul %387, %386, %cst_219 {dimension_numbers = #tpu.dot_dimension_numbers<[1], [0], [0], [1], [0, 0, 1, 1], [], []>} : vector<8x72xbf16>, vector<72x128xbf16>, vector<8x128xf32> -> vector<8x128xf32>
    %c0_220 = arith.constant 0 : index
    %c26 = arith.constant 26 : index
    %389 = vector.load %arg3[%c0_220, %c26] : memref<16x128xf32, #tpu.memory_space<vmem>>, vector<8x1xf32>
    %390 = vector.broadcast %389 : vector<8x1xf32> to vector<8x128xf32>
    %391 = arith.addf %388, %390 : vector<8x128xf32>
    %cst_221 = arith.constant 0.000000e+00 : f32
    %392 = vector.broadcast %cst_221 : f32 to vector<8x128xf32>
    %393 = arith.maximumf %391, %392 : vector<8x128xf32>
    %c432 = arith.constant 432 : index
    %c0_222 = arith.constant 0 : index
    %394 = vector.load %arg2[%c432, %c0_222] : memref<912x128xbf16, #tpu.memory_space<vmem>>, vector<8x8xbf16>
    %395 = arith.truncf %393 : vector<8x128xf32> to vector<8x128xbf16>
    %cst_223 = arith.constant dense<0.000000e+00> : vector<8x128xf32>
    %396 = tpu.matmul %394, %395, %cst_223 {dimension_numbers = #tpu.dot_dimension_numbers<[1], [0], [0], [1], [0, 0, 1, 1], [], []>} : vector<8x8xbf16>, vector<8x128xbf16>, vector<8x128xf32> -> vector<8x128xf32>
    %c0_224 = arith.constant 0 : index
    %c27 = arith.constant 27 : index
    %397 = vector.load %arg3[%c0_224, %c27] : memref<16x128xf32, #tpu.memory_space<vmem>>, vector<8x1xf32>
    %398 = vector.broadcast %397 : vector<8x1xf32> to vector<8x128xf32>
    %399 = arith.addf %396, %398 : vector<8x128xf32>
    %400 = arith.addf %399, %365 : vector<8x128xf32>
    %cst_225 = arith.constant 0.000000e+00 : f32
    %401 = vector.broadcast %cst_225 : f32 to vector<8x128xf32>
    %402 = arith.maximumf %400, %401 : vector<8x128xf32>
    %c448 = arith.constant 448 : index
    %c0_226 = arith.constant 0 : index
    %403 = vector.load %arg2[%c448, %c0_226] : memref<912x128xbf16, #tpu.memory_space<vmem>>, vector<8x8xbf16>
    %404 = arith.truncf %402 : vector<8x128xf32> to vector<8x128xbf16>
    %cst_227 = arith.constant dense<0.000000e+00> : vector<8x128xf32>
    %405 = tpu.matmul %403, %404, %cst_227 {dimension_numbers = #tpu.dot_dimension_numbers<[1], [0], [0], [1], [0, 0, 1, 1], [], []>} : vector<8x8xbf16>, vector<8x128xbf16>, vector<8x128xf32> -> vector<8x128xf32>
    %c0_228 = arith.constant 0 : index
    %c28 = arith.constant 28 : index
    %406 = vector.load %arg3[%c0_228, %c28] : memref<16x128xf32, #tpu.memory_space<vmem>>, vector<8x1xf32>
    %407 = vector.broadcast %406 : vector<8x1xf32> to vector<8x128xf32>
    %408 = arith.addf %405, %407 : vector<8x128xf32>
    %cst_229 = arith.constant 0.000000e+00 : f32
    %409 = vector.broadcast %cst_229 : f32 to vector<8x128xf32>
    %410 = arith.subf %409, %408 : vector<8x128xf32>
    %411 = math.exp %410 : vector<8x128xf32>
    %cst_230 = arith.constant 1.000000e+00 : f32
    %412 = vector.broadcast %cst_230 : f32 to vector<8x128xf32>
    %413 = arith.addf %412, %411 : vector<8x128xf32>
    %414 = tpu.reciprocal %413 {approx = true} : vector<8x128xf32> -> vector<8x128xf32>
    %415 = arith.mulf %291, %414 : vector<8x128xf32>
    %416 = arith.addf %415, %180 : vector<8x128xf32>
    %c0_231 = arith.constant 0 : index
    %c512_232 = arith.constant 512 : index
    %417 = vector.load %arg4[%c0_231, %c512_232] : memref<1x768xf32, #tpu.memory_space<vmem>>, vector<1x128xf32>
    %418 = vector.broadcast %417 : vector<1x128xf32> to vector<8x128xf32>
    %419 = arith.mulf %416, %418 : vector<8x128xf32>
    %c7_i32_233 = arith.constant 7 : i32
    %420 = tpu.dynamic_rotate %419 by %c7_i32_233 dim 1 : vector<8x128xf32>, i32 -> vector<8x128xf32>
    %c6_i32_234 = arith.constant 6 : i32
    %421 = tpu.dynamic_rotate %419 by %c6_i32_234 dim 1 : vector<8x128xf32>, i32 -> vector<8x128xf32>
    %c5_i32_235 = arith.constant 5 : i32
    %422 = tpu.dynamic_rotate %419 by %c5_i32_235 dim 1 : vector<8x128xf32>, i32 -> vector<8x128xf32>
    %c1_i32_236 = arith.constant 1 : i32
    %423 = tpu.dynamic_rotate %419 by %c1_i32_236 dim 1 : vector<8x128xf32>, i32 -> vector<8x128xf32>
    %c127_i32_237 = arith.constant 127 : i32
    %424 = tpu.dynamic_rotate %419 by %c127_i32_237 dim 1 : vector<8x128xf32>, i32 -> vector<8x128xf32>
    %c123_i32_238 = arith.constant 123 : i32
    %425 = tpu.dynamic_rotate %419 by %c123_i32_238 dim 1 : vector<8x128xf32>, i32 -> vector<8x128xf32>
    %c122_i32_239 = arith.constant 122 : i32
    %426 = tpu.dynamic_rotate %419 by %c122_i32_239 dim 1 : vector<8x128xf32>, i32 -> vector<8x128xf32>
    %c121_i32_240 = arith.constant 121 : i32
    %427 = tpu.dynamic_rotate %419 by %c121_i32_240 dim 1 : vector<8x128xf32>, i32 -> vector<8x128xf32>
    %428 = tpu.concatenate %420, %421, %422, %423, %419, %424, %425, %426, %427 in 0 : vector<8x128xf32>, vector<8x128xf32>, vector<8x128xf32>, vector<8x128xf32>, vector<8x128xf32>, vector<8x128xf32>, vector<8x128xf32>, vector<8x128xf32>, vector<8x128xf32> -> vector<72x128xf32>
    %429 = arith.truncf %428 : vector<72x128xf32> to vector<72x128xbf16>
    %c464 = arith.constant 464 : index
    %c0_241 = arith.constant 0 : index
    %430 = vector.load %arg2[%c464, %c0_241] : memref<912x128xbf16, #tpu.memory_space<vmem>>, vector<8x72xbf16>
    %cst_242 = arith.constant dense<0.000000e+00> : vector<8x128xf32>
    %431 = tpu.matmul %430, %429, %cst_242 {dimension_numbers = #tpu.dot_dimension_numbers<[1], [0], [0], [1], [0, 0, 1, 1], [], []>} : vector<8x72xbf16>, vector<72x128xbf16>, vector<8x128xf32> -> vector<8x128xf32>
    %c0_243 = arith.constant 0 : index
    %c29 = arith.constant 29 : index
    %432 = vector.load %arg3[%c0_243, %c29] : memref<16x128xf32, #tpu.memory_space<vmem>>, vector<8x1xf32>
    %433 = vector.broadcast %432 : vector<8x1xf32> to vector<8x128xf32>
    %434 = arith.addf %431, %433 : vector<8x128xf32>
    %cst_244 = arith.constant 0.000000e+00 : f32
    %435 = vector.broadcast %cst_244 : f32 to vector<8x128xf32>
    %436 = arith.cmpf oge, %434, %435 : vector<8x128xf32>
    %cst_245 = arith.constant 0.00999999977 : f32
    %437 = vector.broadcast %cst_245 : f32 to vector<8x128xf32>
    %438 = arith.mulf %437, %434 : vector<8x128xf32>
    %439 = arith.select %436, %434, %438 : vector<8x128xi1>, vector<8x128xf32>
    %c0_246 = arith.constant 0 : index
    %c512_247 = arith.constant 512 : index
    %440 = vector.load %arg4[%c0_246, %c512_247] : memref<1x768xf32, #tpu.memory_space<vmem>>, vector<1x128xf32>
    %441 = vector.broadcast %440 : vector<1x128xf32> to vector<8x128xf32>
    %442 = arith.mulf %439, %441 : vector<8x128xf32>
    %c7_i32_248 = arith.constant 7 : i32
    %443 = tpu.dynamic_rotate %442 by %c7_i32_248 dim 1 : vector<8x128xf32>, i32 -> vector<8x128xf32>
    %c6_i32_249 = arith.constant 6 : i32
    %444 = tpu.dynamic_rotate %442 by %c6_i32_249 dim 1 : vector<8x128xf32>, i32 -> vector<8x128xf32>
    %c5_i32_250 = arith.constant 5 : i32
    %445 = tpu.dynamic_rotate %442 by %c5_i32_250 dim 1 : vector<8x128xf32>, i32 -> vector<8x128xf32>
    %c1_i32_251 = arith.constant 1 : i32
    %446 = tpu.dynamic_rotate %442 by %c1_i32_251 dim 1 : vector<8x128xf32>, i32 -> vector<8x128xf32>
    %c127_i32_252 = arith.constant 127 : i32
    %447 = tpu.dynamic_rotate %442 by %c127_i32_252 dim 1 : vector<8x128xf32>, i32 -> vector<8x128xf32>
    %c123_i32_253 = arith.constant 123 : i32
    %448 = tpu.dynamic_rotate %442 by %c123_i32_253 dim 1 : vector<8x128xf32>, i32 -> vector<8x128xf32>
    %c122_i32_254 = arith.constant 122 : i32
    %449 = tpu.dynamic_rotate %442 by %c122_i32_254 dim 1 : vector<8x128xf32>, i32 -> vector<8x128xf32>
    %c121_i32_255 = arith.constant 121 : i32
    %450 = tpu.dynamic_rotate %442 by %c121_i32_255 dim 1 : vector<8x128xf32>, i32 -> vector<8x128xf32>
    %451 = tpu.concatenate %443, %444, %445, %446, %442, %447, %448, %449, %450 in 0 : vector<8x128xf32>, vector<8x128xf32>, vector<8x128xf32>, vector<8x128xf32>, vector<8x128xf32>, vector<8x128xf32>, vector<8x128xf32>, vector<8x128xf32>, vector<8x128xf32> -> vector<72x128xf32>
    %452 = arith.truncf %451 : vector<72x128xf32> to vector<72x128xbf16>
    %c480 = arith.constant 480 : index
    %c0_256 = arith.constant 0 : index
    %453 = vector.load %arg2[%c480, %c0_256] : memref<912x128xbf16, #tpu.memory_space<vmem>>, vector<8x72xbf16>
    %cst_257 = arith.constant dense<0.000000e+00> : vector<8x128xf32>
    %454 = tpu.matmul %453, %452, %cst_257 {dimension_numbers = #tpu.dot_dimension_numbers<[1], [0], [0], [1], [0, 0, 1, 1], [], []>} : vector<8x72xbf16>, vector<72x128xbf16>, vector<8x128xf32> -> vector<8x128xf32>
    %c0_258 = arith.constant 0 : index
    %c30 = arith.constant 30 : index
    %455 = vector.load %arg3[%c0_258, %c30] : memref<16x128xf32, #tpu.memory_space<vmem>>, vector<8x1xf32>
    %456 = vector.broadcast %455 : vector<8x1xf32> to vector<8x128xf32>
    %457 = arith.addf %454, %456 : vector<8x128xf32>
    %cst_259 = arith.constant 0.000000e+00 : f32
    %458 = vector.broadcast %cst_259 : f32 to vector<8x128xf32>
    %459 = arith.cmpf oge, %457, %458 : vector<8x128xf32>
    %cst_260 = arith.constant 0.00999999977 : f32
    %460 = vector.broadcast %cst_260 : f32 to vector<8x128xf32>
    %461 = arith.mulf %460, %457 : vector<8x128xf32>
    %462 = arith.select %459, %457, %461 : vector<8x128xi1>, vector<8x128xf32>
    %463 = arith.addf %462, %416 : vector<8x128xf32>
    %c0_261 = arith.constant 0 : index
    %c59 = arith.constant 59 : index
    %464 = vector.load %arg3[%c0_261, %c59] : memref<16x128xf32, #tpu.memory_space<vmem>>, vector<8x1xf32>
    %465 = vector.broadcast %464 : vector<8x1xf32> to vector<8x128xf32>
    %466 = arith.mulf %463, %465 : vector<8x128xf32>
    %c0_262 = arith.constant 0 : index
    %c512_263 = arith.constant 512 : index
    %467 = vector.load %arg4[%c0_262, %c512_263] : memref<1x768xf32, #tpu.memory_space<vmem>>, vector<1x128xf32>
    %468 = vector.broadcast %467 : vector<1x128xf32> to vector<8x128xf32>
    %469 = arith.mulf %466, %468 : vector<8x128xf32>
    %c7_i32_264 = arith.constant 7 : i32
    %470 = tpu.dynamic_rotate %469 by %c7_i32_264 dim 1 : vector<8x128xf32>, i32 -> vector<8x128xf32>
    %c6_i32_265 = arith.constant 6 : i32
    %471 = tpu.dynamic_rotate %469 by %c6_i32_265 dim 1 : vector<8x128xf32>, i32 -> vector<8x128xf32>
    %c5_i32_266 = arith.constant 5 : i32
    %472 = tpu.dynamic_rotate %469 by %c5_i32_266 dim 1 : vector<8x128xf32>, i32 -> vector<8x128xf32>
    %c1_i32_267 = arith.constant 1 : i32
    %473 = tpu.dynamic_rotate %469 by %c1_i32_267 dim 1 : vector<8x128xf32>, i32 -> vector<8x128xf32>
    %c127_i32_268 = arith.constant 127 : i32
    %474 = tpu.dynamic_rotate %469 by %c127_i32_268 dim 1 : vector<8x128xf32>, i32 -> vector<8x128xf32>
    %c123_i32_269 = arith.constant 123 : i32
    %475 = tpu.dynamic_rotate %469 by %c123_i32_269 dim 1 : vector<8x128xf32>, i32 -> vector<8x128xf32>
    %c122_i32_270 = arith.constant 122 : i32
    %476 = tpu.dynamic_rotate %469 by %c122_i32_270 dim 1 : vector<8x128xf32>, i32 -> vector<8x128xf32>
    %c121_i32_271 = arith.constant 121 : i32
    %477 = tpu.dynamic_rotate %469 by %c121_i32_271 dim 1 : vector<8x128xf32>, i32 -> vector<8x128xf32>
    %478 = tpu.concatenate %470, %471, %472, %473, %469, %474, %475, %476, %477 in 0 : vector<8x128xf32>, vector<8x128xf32>, vector<8x128xf32>, vector<8x128xf32>, vector<8x128xf32>, vector<8x128xf32>, vector<8x128xf32>, vector<8x128xf32>, vector<8x128xf32> -> vector<72x128xf32>
    %479 = arith.truncf %478 : vector<72x128xf32> to vector<72x128xbf16>
    %c496 = arith.constant 496 : index
    %c0_272 = arith.constant 0 : index
    %480 = vector.load %arg2[%c496, %c0_272] : memref<912x128xbf16, #tpu.memory_space<vmem>>, vector<8x72xbf16>
    %cst_273 = arith.constant dense<0.000000e+00> : vector<8x128xf32>
    %481 = tpu.matmul %480, %479, %cst_273 {dimension_numbers = #tpu.dot_dimension_numbers<[1], [0], [0], [1], [0, 0, 1, 1], [], []>} : vector<8x72xbf16>, vector<72x128xbf16>, vector<8x128xf32> -> vector<8x128xf32>
    %c0_274 = arith.constant 0 : index
    %c31 = arith.constant 31 : index
    %482 = vector.load %arg3[%c0_274, %c31] : memref<16x128xf32, #tpu.memory_space<vmem>>, vector<8x1xf32>
    %483 = vector.broadcast %482 : vector<8x1xf32> to vector<8x128xf32>
    %484 = arith.addf %481, %483 : vector<8x128xf32>
    %c0_275 = arith.constant 0 : index
    %c256_276 = arith.constant 256 : index
    %485 = vector.load %arg5[%c0_275, %c256_276] : memref<384x384xbf16, #tpu.memory_space<vmem>>, vector<128x128xbf16>
    %486 = arith.truncf %484 : vector<8x128xf32> to vector<8x128xbf16>
    %cst_277 = arith.constant dense<0.000000e+00> : vector<8x128xf32>
    %487 = tpu.matmul %486, %485, %cst_277 {dimension_numbers = #tpu.dot_dimension_numbers<[1], [0], [0], [1], [0, 0, 1, 1], [], []>} : vector<8x128xbf16>, vector<128x128xbf16>, vector<8x128xf32> -> vector<8x128xf32>
    %cst_278 = arith.constant 0.000000e+00 : f32
    %488 = vector.broadcast %cst_278 : f32 to vector<8x128xf32>
    %489 = arith.cmpf oge, %487, %488 : vector<8x128xf32>
    %cst_279 = arith.constant 0.00999999977 : f32
    %490 = vector.broadcast %cst_279 : f32 to vector<8x128xf32>
    %491 = arith.mulf %490, %487 : vector<8x128xf32>
    %492 = arith.select %489, %487, %491 : vector<8x128xi1>, vector<8x128xf32>
    %c0_280 = arith.constant 0 : index
    %c640 = arith.constant 640 : index
    %493 = vector.load %arg4[%c0_280, %c640] : memref<1x768xf32, #tpu.memory_space<vmem>>, vector<1x128xf32>
    %494 = vector.broadcast %493 : vector<1x128xf32> to vector<8x128xf32>
    %495 = arith.mulf %492, %494 : vector<8x128xf32>
    %c5_i32_281 = arith.constant 5 : i32
    %496 = tpu.dynamic_rotate %495 by %c5_i32_281 dim 1 : vector<8x128xf32>, i32 -> vector<8x128xf32>
    %c4_i32 = arith.constant 4 : i32
    %497 = tpu.dynamic_rotate %495 by %c4_i32 dim 1 : vector<8x128xf32>, i32 -> vector<8x128xf32>
    %c3_i32 = arith.constant 3 : i32
    %498 = tpu.dynamic_rotate %495 by %c3_i32 dim 1 : vector<8x128xf32>, i32 -> vector<8x128xf32>
    %c1_i32_282 = arith.constant 1 : i32
    %499 = tpu.dynamic_rotate %495 by %c1_i32_282 dim 1 : vector<8x128xf32>, i32 -> vector<8x128xf32>
    %c127_i32_283 = arith.constant 127 : i32
    %500 = tpu.dynamic_rotate %495 by %c127_i32_283 dim 1 : vector<8x128xf32>, i32 -> vector<8x128xf32>
    %c125_i32 = arith.constant 125 : i32
    %501 = tpu.dynamic_rotate %495 by %c125_i32 dim 1 : vector<8x128xf32>, i32 -> vector<8x128xf32>
    %c124_i32 = arith.constant 124 : i32
    %502 = tpu.dynamic_rotate %495 by %c124_i32 dim 1 : vector<8x128xf32>, i32 -> vector<8x128xf32>
    %c123_i32_284 = arith.constant 123 : i32
    %503 = tpu.dynamic_rotate %495 by %c123_i32_284 dim 1 : vector<8x128xf32>, i32 -> vector<8x128xf32>
    %504 = tpu.concatenate %496, %497, %498, %499, %495, %500, %501, %502, %503 in 0 : vector<8x128xf32>, vector<8x128xf32>, vector<8x128xf32>, vector<8x128xf32>, vector<8x128xf32>, vector<8x128xf32>, vector<8x128xf32>, vector<8x128xf32>, vector<8x128xf32> -> vector<72x128xf32>
    %505 = arith.truncf %504 : vector<72x128xf32> to vector<72x128xbf16>
    %c512_285 = arith.constant 512 : index
    %c0_286 = arith.constant 0 : index
    %506 = vector.load %arg2[%c512_285, %c0_286] : memref<912x128xbf16, #tpu.memory_space<vmem>>, vector<8x72xbf16>
    %cst_287 = arith.constant dense<0.000000e+00> : vector<8x128xf32>
    %507 = tpu.matmul %506, %505, %cst_287 {dimension_numbers = #tpu.dot_dimension_numbers<[1], [0], [0], [1], [0, 0, 1, 1], [], []>} : vector<8x72xbf16>, vector<72x128xbf16>, vector<8x128xf32> -> vector<8x128xf32>
    %c0_288 = arith.constant 0 : index
    %c32_289 = arith.constant 32 : index
    %508 = vector.load %arg3[%c0_288, %c32_289] : memref<16x128xf32, #tpu.memory_space<vmem>>, vector<8x1xf32>
    %509 = vector.broadcast %508 : vector<8x1xf32> to vector<8x128xf32>
    %510 = arith.addf %507, %509 : vector<8x128xf32>
    %511 = arith.mulf %510, %510 : vector<8x128xf32>
    %c528 = arith.constant 528 : index
    %c0_290 = arith.constant 0 : index
    %512 = vector.load %arg2[%c528, %c0_290] : memref<912x128xbf16, #tpu.memory_space<vmem>>, vector<8x8xbf16>
    %513 = arith.truncf %511 : vector<8x128xf32> to vector<8x128xbf16>
    %cst_291 = arith.constant dense<0.000000e+00> : vector<8x128xf32>
    %514 = tpu.matmul %512, %513, %cst_291 {dimension_numbers = #tpu.dot_dimension_numbers<[1], [0], [0], [1], [0, 0, 1, 1], [], []>} : vector<8x8xbf16>, vector<8x128xbf16>, vector<8x128xf32> -> vector<8x128xf32>
    %c0_292 = arith.constant 0 : index
    %c33 = arith.constant 33 : index
    %515 = vector.load %arg3[%c0_292, %c33] : memref<16x128xf32, #tpu.memory_space<vmem>>, vector<8x1xf32>
    %516 = vector.broadcast %515 : vector<8x1xf32> to vector<8x128xf32>
    %517 = arith.addf %514, %516 : vector<8x128xf32>
    %518 = math.rsqrt %517 : vector<8x128xf32>
    %519 = arith.mulf %510, %518 : vector<8x128xf32>
    %c0_293 = arith.constant 0 : index
    %c256_294 = arith.constant 256 : index
    %520 = vector.load %arg5[%c0_293, %c256_294] : memref<384x384xbf16, #tpu.memory_space<vmem>>, vector<128x128xbf16>
    %521 = arith.truncf %466 : vector<8x128xf32> to vector<8x128xbf16>
    %cst_295 = arith.constant dense<0.000000e+00> : vector<8x128xf32>
    %522 = tpu.matmul %521, %520, %cst_295 {dimension_numbers = #tpu.dot_dimension_numbers<[1], [0], [0], [1], [0, 0, 1, 1], [], []>} : vector<8x128xbf16>, vector<128x128xbf16>, vector<8x128xf32> -> vector<8x128xf32>
    %c544 = arith.constant 544 : index
    %c0_296 = arith.constant 0 : index
    %523 = vector.load %arg2[%c544, %c0_296] : memref<912x128xbf16, #tpu.memory_space<vmem>>, vector<8x8xbf16>
    %524 = arith.truncf %522 : vector<8x128xf32> to vector<8x128xbf16>
    %cst_297 = arith.constant dense<0.000000e+00> : vector<8x128xf32>
    %525 = tpu.matmul %523, %524, %cst_297 {dimension_numbers = #tpu.dot_dimension_numbers<[1], [0], [0], [1], [0, 0, 1, 1], [], []>} : vector<8x8xbf16>, vector<8x128xbf16>, vector<8x128xf32> -> vector<8x128xf32>
    %c0_298 = arith.constant 0 : index
    %c34 = arith.constant 34 : index
    %526 = vector.load %arg3[%c0_298, %c34] : memref<16x128xf32, #tpu.memory_space<vmem>>, vector<8x1xf32>
    %527 = vector.broadcast %526 : vector<8x1xf32> to vector<8x128xf32>
    %528 = arith.addf %525, %527 : vector<8x128xf32>
    %529 = arith.addf %519, %528 : vector<8x128xf32>
    %c0_299 = arith.constant 0 : index
    %c60 = arith.constant 60 : index
    %530 = vector.load %arg3[%c0_299, %c60] : memref<16x128xf32, #tpu.memory_space<vmem>>, vector<8x1xf32>
    %531 = vector.broadcast %530 : vector<8x1xf32> to vector<8x128xf32>
    %532 = arith.mulf %529, %531 : vector<8x128xf32>
    %c0_300 = arith.constant 0 : index
    %c640_301 = arith.constant 640 : index
    %533 = vector.load %arg4[%c0_300, %c640_301] : memref<1x768xf32, #tpu.memory_space<vmem>>, vector<1x128xf32>
    %534 = vector.broadcast %533 : vector<1x128xf32> to vector<8x128xf32>
    %535 = arith.mulf %532, %534 : vector<8x128xf32>
    %c5_i32_302 = arith.constant 5 : i32
    %536 = tpu.dynamic_rotate %535 by %c5_i32_302 dim 1 : vector<8x128xf32>, i32 -> vector<8x128xf32>
    %c4_i32_303 = arith.constant 4 : i32
    %537 = tpu.dynamic_rotate %535 by %c4_i32_303 dim 1 : vector<8x128xf32>, i32 -> vector<8x128xf32>
    %c3_i32_304 = arith.constant 3 : i32
    %538 = tpu.dynamic_rotate %535 by %c3_i32_304 dim 1 : vector<8x128xf32>, i32 -> vector<8x128xf32>
    %c1_i32_305 = arith.constant 1 : i32
    %539 = tpu.dynamic_rotate %535 by %c1_i32_305 dim 1 : vector<8x128xf32>, i32 -> vector<8x128xf32>
    %c127_i32_306 = arith.constant 127 : i32
    %540 = tpu.dynamic_rotate %535 by %c127_i32_306 dim 1 : vector<8x128xf32>, i32 -> vector<8x128xf32>
    %c125_i32_307 = arith.constant 125 : i32
    %541 = tpu.dynamic_rotate %535 by %c125_i32_307 dim 1 : vector<8x128xf32>, i32 -> vector<8x128xf32>
    %c124_i32_308 = arith.constant 124 : i32
    %542 = tpu.dynamic_rotate %535 by %c124_i32_308 dim 1 : vector<8x128xf32>, i32 -> vector<8x128xf32>
    %c123_i32_309 = arith.constant 123 : i32
    %543 = tpu.dynamic_rotate %535 by %c123_i32_309 dim 1 : vector<8x128xf32>, i32 -> vector<8x128xf32>
    %544 = tpu.concatenate %536, %537, %538, %539, %535, %540, %541, %542, %543 in 0 : vector<8x128xf32>, vector<8x128xf32>, vector<8x128xf32>, vector<8x128xf32>, vector<8x128xf32>, vector<8x128xf32>, vector<8x128xf32>, vector<8x128xf32>, vector<8x128xf32> -> vector<72x128xf32>
    %545 = arith.truncf %544 : vector<72x128xf32> to vector<72x128xbf16>
    %c560 = arith.constant 560 : index
    %c0_310 = arith.constant 0 : index
    %546 = vector.load %arg2[%c560, %c0_310] : memref<912x128xbf16, #tpu.memory_space<vmem>>, vector<8x72xbf16>
    %cst_311 = arith.constant dense<0.000000e+00> : vector<8x128xf32>
    %547 = tpu.matmul %546, %545, %cst_311 {dimension_numbers = #tpu.dot_dimension_numbers<[1], [0], [0], [1], [0, 0, 1, 1], [], []>} : vector<8x72xbf16>, vector<72x128xbf16>, vector<8x128xf32> -> vector<8x128xf32>
    %c0_312 = arith.constant 0 : index
    %c35 = arith.constant 35 : index
    %548 = vector.load %arg3[%c0_312, %c35] : memref<16x128xf32, #tpu.memory_space<vmem>>, vector<8x1xf32>
    %549 = vector.broadcast %548 : vector<8x1xf32> to vector<8x128xf32>
    %550 = arith.addf %547, %549 : vector<8x128xf32>
    %cst_313 = arith.constant 0.000000e+00 : f32
    %551 = vector.broadcast %cst_313 : f32 to vector<8x128xf32>
    %552 = arith.cmpf oge, %550, %551 : vector<8x128xf32>
    %cst_314 = arith.constant 0.00999999977 : f32
    %553 = vector.broadcast %cst_314 : f32 to vector<8x128xf32>
    %554 = arith.mulf %553, %550 : vector<8x128xf32>
    %555 = arith.select %552, %550, %554 : vector<8x128xi1>, vector<8x128xf32>
    %c0_315 = arith.constant 0 : index
    %c640_316 = arith.constant 640 : index
    %556 = vector.load %arg4[%c0_315, %c640_316] : memref<1x768xf32, #tpu.memory_space<vmem>>, vector<1x128xf32>
    %557 = vector.broadcast %556 : vector<1x128xf32> to vector<8x128xf32>
    %558 = arith.mulf %555, %557 : vector<8x128xf32>
    %c5_i32_317 = arith.constant 5 : i32
    %559 = tpu.dynamic_rotate %558 by %c5_i32_317 dim 1 : vector<8x128xf32>, i32 -> vector<8x128xf32>
    %c4_i32_318 = arith.constant 4 : i32
    %560 = tpu.dynamic_rotate %558 by %c4_i32_318 dim 1 : vector<8x128xf32>, i32 -> vector<8x128xf32>
    %c3_i32_319 = arith.constant 3 : i32
    %561 = tpu.dynamic_rotate %558 by %c3_i32_319 dim 1 : vector<8x128xf32>, i32 -> vector<8x128xf32>
    %c1_i32_320 = arith.constant 1 : i32
    %562 = tpu.dynamic_rotate %558 by %c1_i32_320 dim 1 : vector<8x128xf32>, i32 -> vector<8x128xf32>
    %c127_i32_321 = arith.constant 127 : i32
    %563 = tpu.dynamic_rotate %558 by %c127_i32_321 dim 1 : vector<8x128xf32>, i32 -> vector<8x128xf32>
    %c125_i32_322 = arith.constant 125 : i32
    %564 = tpu.dynamic_rotate %558 by %c125_i32_322 dim 1 : vector<8x128xf32>, i32 -> vector<8x128xf32>
    %c124_i32_323 = arith.constant 124 : i32
    %565 = tpu.dynamic_rotate %558 by %c124_i32_323 dim 1 : vector<8x128xf32>, i32 -> vector<8x128xf32>
    %c123_i32_324 = arith.constant 123 : i32
    %566 = tpu.dynamic_rotate %558 by %c123_i32_324 dim 1 : vector<8x128xf32>, i32 -> vector<8x128xf32>
    %567 = tpu.concatenate %559, %560, %561, %562, %558, %563, %564, %565, %566 in 0 : vector<8x128xf32>, vector<8x128xf32>, vector<8x128xf32>, vector<8x128xf32>, vector<8x128xf32>, vector<8x128xf32>, vector<8x128xf32>, vector<8x128xf32>, vector<8x128xf32> -> vector<72x128xf32>
    %568 = arith.truncf %567 : vector<72x128xf32> to vector<72x128xbf16>
    %c576 = arith.constant 576 : index
    %c0_325 = arith.constant 0 : index
    %569 = vector.load %arg2[%c576, %c0_325] : memref<912x128xbf16, #tpu.memory_space<vmem>>, vector<8x72xbf16>
    %cst_326 = arith.constant dense<0.000000e+00> : vector<8x128xf32>
    %570 = tpu.matmul %569, %568, %cst_326 {dimension_numbers = #tpu.dot_dimension_numbers<[1], [0], [0], [1], [0, 0, 1, 1], [], []>} : vector<8x72xbf16>, vector<72x128xbf16>, vector<8x128xf32> -> vector<8x128xf32>
    %c0_327 = arith.constant 0 : index
    %c36 = arith.constant 36 : index
    %571 = vector.load %arg3[%c0_327, %c36] : memref<16x128xf32, #tpu.memory_space<vmem>>, vector<8x1xf32>
    %572 = vector.broadcast %571 : vector<8x1xf32> to vector<8x128xf32>
    %573 = arith.addf %570, %572 : vector<8x128xf32>
    %cst_328 = arith.constant 0.000000e+00 : f32
    %574 = vector.broadcast %cst_328 : f32 to vector<8x128xf32>
    %575 = arith.cmpf oge, %573, %574 : vector<8x128xf32>
    %cst_329 = arith.constant 0.00999999977 : f32
    %576 = vector.broadcast %cst_329 : f32 to vector<8x128xf32>
    %577 = arith.mulf %576, %573 : vector<8x128xf32>
    %578 = arith.select %575, %573, %577 : vector<8x128xi1>, vector<8x128xf32>
    %579 = arith.addf %578, %532 : vector<8x128xf32>
    %c0_330 = arith.constant 0 : index
    %c61 = arith.constant 61 : index
    %580 = vector.load %arg3[%c0_330, %c61] : memref<16x128xf32, #tpu.memory_space<vmem>>, vector<8x1xf32>
    %581 = vector.broadcast %580 : vector<8x1xf32> to vector<8x128xf32>
    %582 = arith.mulf %579, %581 : vector<8x128xf32>
    %c0_331 = arith.constant 0 : index
    %c640_332 = arith.constant 640 : index
    %583 = vector.load %arg4[%c0_331, %c640_332] : memref<1x768xf32, #tpu.memory_space<vmem>>, vector<1x128xf32>
    %584 = vector.broadcast %583 : vector<1x128xf32> to vector<8x128xf32>
    %585 = arith.mulf %582, %584 : vector<8x128xf32>
    %c5_i32_333 = arith.constant 5 : i32
    %586 = tpu.dynamic_rotate %585 by %c5_i32_333 dim 1 : vector<8x128xf32>, i32 -> vector<8x128xf32>
    %c4_i32_334 = arith.constant 4 : i32
    %587 = tpu.dynamic_rotate %585 by %c4_i32_334 dim 1 : vector<8x128xf32>, i32 -> vector<8x128xf32>
    %c3_i32_335 = arith.constant 3 : i32
    %588 = tpu.dynamic_rotate %585 by %c3_i32_335 dim 1 : vector<8x128xf32>, i32 -> vector<8x128xf32>
    %c1_i32_336 = arith.constant 1 : i32
    %589 = tpu.dynamic_rotate %585 by %c1_i32_336 dim 1 : vector<8x128xf32>, i32 -> vector<8x128xf32>
    %c127_i32_337 = arith.constant 127 : i32
    %590 = tpu.dynamic_rotate %585 by %c127_i32_337 dim 1 : vector<8x128xf32>, i32 -> vector<8x128xf32>
    %c125_i32_338 = arith.constant 125 : i32
    %591 = tpu.dynamic_rotate %585 by %c125_i32_338 dim 1 : vector<8x128xf32>, i32 -> vector<8x128xf32>
    %c124_i32_339 = arith.constant 124 : i32
    %592 = tpu.dynamic_rotate %585 by %c124_i32_339 dim 1 : vector<8x128xf32>, i32 -> vector<8x128xf32>
    %c123_i32_340 = arith.constant 123 : i32
    %593 = tpu.dynamic_rotate %585 by %c123_i32_340 dim 1 : vector<8x128xf32>, i32 -> vector<8x128xf32>
    %594 = tpu.concatenate %586, %587, %588, %589, %585, %590, %591, %592, %593 in 0 : vector<8x128xf32>, vector<8x128xf32>, vector<8x128xf32>, vector<8x128xf32>, vector<8x128xf32>, vector<8x128xf32>, vector<8x128xf32>, vector<8x128xf32>, vector<8x128xf32> -> vector<72x128xf32>
    %595 = arith.truncf %594 : vector<72x128xf32> to vector<72x128xbf16>
    %c592 = arith.constant 592 : index
    %c0_341 = arith.constant 0 : index
    %596 = vector.load %arg2[%c592, %c0_341] : memref<912x128xbf16, #tpu.memory_space<vmem>>, vector<16x72xbf16>
    %cst_342 = arith.constant dense<0.000000e+00> : vector<16x128xf32>
    %597 = tpu.matmul %596, %595, %cst_342 {dimension_numbers = #tpu.dot_dimension_numbers<[1], [0], [0], [1], [0, 0, 1, 1], [], []>} : vector<16x72xbf16>, vector<72x128xbf16>, vector<16x128xf32> -> vector<16x128xf32>
    %c0_343 = arith.constant 0 : index
    %c37 = arith.constant 37 : index
    %598 = vector.load %arg3[%c0_343, %c37] : memref<16x128xf32, #tpu.memory_space<vmem>>, vector<16x1xf32>
    %599 = vector.broadcast %598 : vector<16x1xf32> to vector<16x128xf32>
    %600 = arith.addf %597, %599 : vector<16x128xf32>
    %c608 = arith.constant 608 : index
    %c0_344 = arith.constant 0 : index
    %601 = vector.load %arg2[%c608, %c0_344] : memref<912x128xbf16, #tpu.memory_space<vmem>>, vector<8x16xbf16>
    %602 = arith.truncf %600 : vector<16x128xf32> to vector<16x128xbf16>
    %cst_345 = arith.constant dense<0.000000e+00> : vector<8x128xf32>
    %603 = tpu.matmul %601, %602, %cst_345 {dimension_numbers = #tpu.dot_dimension_numbers<[1], [0], [0], [1], [0, 0, 1, 1], [], []>} : vector<8x16xbf16>, vector<16x128xbf16>, vector<8x128xf32> -> vector<8x128xf32>
    %c0_346 = arith.constant 0 : index
    %c38 = arith.constant 38 : index
    %604 = vector.load %arg3[%c0_346, %c38] : memref<16x128xf32, #tpu.memory_space<vmem>>, vector<8x1xf32>
    %605 = vector.broadcast %604 : vector<8x1xf32> to vector<8x128xf32>
    %606 = arith.addf %603, %605 : vector<8x128xf32>
    %cst_347 = arith.constant 0.000000e+00 : f32
    %607 = vector.broadcast %cst_347 : f32 to vector<8x128xf32>
    %608 = arith.maximumf %606, %607 : vector<8x128xf32>
    %c624 = arith.constant 624 : index
    %c0_348 = arith.constant 0 : index
    %609 = vector.load %arg2[%c624, %c0_348] : memref<912x128xbf16, #tpu.memory_space<vmem>>, vector<8x8xbf16>
    %610 = arith.truncf %608 : vector<8x128xf32> to vector<8x128xbf16>
    %cst_349 = arith.constant dense<0.000000e+00> : vector<8x128xf32>
    %611 = tpu.matmul %609, %610, %cst_349 {dimension_numbers = #tpu.dot_dimension_numbers<[1], [0], [0], [1], [0, 0, 1, 1], [], []>} : vector<8x8xbf16>, vector<8x128xbf16>, vector<8x128xf32> -> vector<8x128xf32>
    %c0_350 = arith.constant 0 : index
    %c39 = arith.constant 39 : index
    %612 = vector.load %arg3[%c0_350, %c39] : memref<16x128xf32, #tpu.memory_space<vmem>>, vector<8x1xf32>
    %613 = vector.broadcast %612 : vector<8x1xf32> to vector<8x128xf32>
    %614 = arith.addf %611, %613 : vector<8x128xf32>
    %cst_351 = arith.constant 0.000000e+00 : f32
    %615 = vector.broadcast %cst_351 : f32 to vector<8x128xf32>
    %616 = arith.maximumf %614, %615 : vector<8x128xf32>
    %c640_352 = arith.constant 640 : index
    %c0_353 = arith.constant 0 : index
    %617 = vector.load %arg2[%c640_352, %c0_353] : memref<912x128xbf16, #tpu.memory_space<vmem>>, vector<16x8xbf16>
    %618 = arith.truncf %616 : vector<8x128xf32> to vector<8x128xbf16>
    %cst_354 = arith.constant dense<0.000000e+00> : vector<16x128xf32>
    %619 = tpu.matmul %617, %618, %cst_354 {dimension_numbers = #tpu.dot_dimension_numbers<[1], [0], [0], [1], [0, 0, 1, 1], [], []>} : vector<16x8xbf16>, vector<8x128xbf16>, vector<16x128xf32> -> vector<16x128xf32>
    %c0_355 = arith.constant 0 : index
    %c40 = arith.constant 40 : index
    %620 = vector.load %arg3[%c0_355, %c40] : memref<16x128xf32, #tpu.memory_space<vmem>>, vector<16x1xf32>
    %621 = vector.broadcast %620 : vector<16x1xf32> to vector<16x128xf32>
    %622 = arith.addf %619, %621 : vector<16x128xf32>
    %623 = arith.addf %622, %600 : vector<16x128xf32>
    %cst_356 = arith.constant 0.000000e+00 : f32
    %624 = vector.broadcast %cst_356 : f32 to vector<16x128xf32>
    %625 = arith.maximumf %623, %624 : vector<16x128xf32>
    %c656 = arith.constant 656 : index
    %c0_357 = arith.constant 0 : index
    %626 = vector.load %arg2[%c656, %c0_357] : memref<912x128xbf16, #tpu.memory_space<vmem>>, vector<8x16xbf16>
    %627 = arith.truncf %625 : vector<16x128xf32> to vector<16x128xbf16>
    %cst_358 = arith.constant dense<0.000000e+00> : vector<8x128xf32>
    %628 = tpu.matmul %626, %627, %cst_358 {dimension_numbers = #tpu.dot_dimension_numbers<[1], [0], [0], [1], [0, 0, 1, 1], [], []>} : vector<8x16xbf16>, vector<16x128xbf16>, vector<8x128xf32> -> vector<8x128xf32>
    %c0_359 = arith.constant 0 : index
    %c41 = arith.constant 41 : index
    %629 = vector.load %arg3[%c0_359, %c41] : memref<16x128xf32, #tpu.memory_space<vmem>>, vector<8x1xf32>
    %630 = vector.broadcast %629 : vector<8x1xf32> to vector<8x128xf32>
    %631 = arith.addf %628, %630 : vector<8x128xf32>
    %cst_360 = arith.constant 0.000000e+00 : f32
    %632 = vector.broadcast %cst_360 : f32 to vector<8x128xf32>
    %633 = arith.maximumf %631, %632 : vector<8x128xf32>
    %c672 = arith.constant 672 : index
    %c0_361 = arith.constant 0 : index
    %634 = vector.load %arg2[%c672, %c0_361] : memref<912x128xbf16, #tpu.memory_space<vmem>>, vector<8x8xbf16>
    %635 = arith.truncf %633 : vector<8x128xf32> to vector<8x128xbf16>
    %cst_362 = arith.constant dense<0.000000e+00> : vector<8x128xf32>
    %636 = tpu.matmul %634, %635, %cst_362 {dimension_numbers = #tpu.dot_dimension_numbers<[1], [0], [0], [1], [0, 0, 1, 1], [], []>} : vector<8x8xbf16>, vector<8x128xbf16>, vector<8x128xf32> -> vector<8x128xf32>
    %c0_363 = arith.constant 0 : index
    %c42 = arith.constant 42 : index
    %637 = vector.load %arg3[%c0_363, %c42] : memref<16x128xf32, #tpu.memory_space<vmem>>, vector<8x1xf32>
    %638 = vector.broadcast %637 : vector<8x1xf32> to vector<8x128xf32>
    %639 = arith.addf %636, %638 : vector<8x128xf32>
    %cst_364 = arith.constant 0.000000e+00 : f32
    %640 = vector.broadcast %cst_364 : f32 to vector<8x128xf32>
    %641 = arith.maximumf %639, %640 : vector<8x128xf32>
    %c688 = arith.constant 688 : index
    %c0_365 = arith.constant 0 : index
    %642 = vector.load %arg2[%c688, %c0_365] : memref<912x128xbf16, #tpu.memory_space<vmem>>, vector<16x8xbf16>
    %643 = arith.truncf %641 : vector<8x128xf32> to vector<8x128xbf16>
    %cst_366 = arith.constant dense<0.000000e+00> : vector<16x128xf32>
    %644 = tpu.matmul %642, %643, %cst_366 {dimension_numbers = #tpu.dot_dimension_numbers<[1], [0], [0], [1], [0, 0, 1, 1], [], []>} : vector<16x8xbf16>, vector<8x128xbf16>, vector<16x128xf32> -> vector<16x128xf32>
    %c0_367 = arith.constant 0 : index
    %c43 = arith.constant 43 : index
    %645 = vector.load %arg3[%c0_367, %c43] : memref<16x128xf32, #tpu.memory_space<vmem>>, vector<16x1xf32>
    %646 = vector.broadcast %645 : vector<16x1xf32> to vector<16x128xf32>
    %647 = arith.addf %644, %646 : vector<16x128xf32>
    %648 = arith.addf %647, %625 : vector<16x128xf32>
    %cst_368 = arith.constant 0.000000e+00 : f32
    %649 = vector.broadcast %cst_368 : f32 to vector<16x128xf32>
    %650 = arith.maximumf %648, %649 : vector<16x128xf32>
    %c704 = arith.constant 704 : index
    %c0_369 = arith.constant 0 : index
    %651 = vector.load %arg2[%c704, %c0_369] : memref<912x128xbf16, #tpu.memory_space<vmem>>, vector<8x16xbf16>
    %652 = arith.truncf %650 : vector<16x128xf32> to vector<16x128xbf16>
    %cst_370 = arith.constant dense<0.000000e+00> : vector<8x128xf32>
    %653 = tpu.matmul %651, %652, %cst_370 {dimension_numbers = #tpu.dot_dimension_numbers<[1], [0], [0], [1], [0, 0, 1, 1], [], []>} : vector<8x16xbf16>, vector<16x128xbf16>, vector<8x128xf32> -> vector<8x128xf32>
    %c0_371 = arith.constant 0 : index
    %c44 = arith.constant 44 : index
    %654 = vector.load %arg3[%c0_371, %c44] : memref<16x128xf32, #tpu.memory_space<vmem>>, vector<8x1xf32>
    %655 = vector.broadcast %654 : vector<8x1xf32> to vector<8x128xf32>
    %656 = arith.addf %653, %655 : vector<8x128xf32>
    %cst_372 = arith.constant 0.000000e+00 : f32
    %657 = vector.broadcast %cst_372 : f32 to vector<8x128xf32>
    %658 = arith.maximumf %656, %657 : vector<8x128xf32>
    %c720 = arith.constant 720 : index
    %c0_373 = arith.constant 0 : index
    %659 = vector.load %arg2[%c720, %c0_373] : memref<912x128xbf16, #tpu.memory_space<vmem>>, vector<8x8xbf16>
    %660 = arith.truncf %658 : vector<8x128xf32> to vector<8x128xbf16>
    %cst_374 = arith.constant dense<0.000000e+00> : vector<8x128xf32>
    %661 = tpu.matmul %659, %660, %cst_374 {dimension_numbers = #tpu.dot_dimension_numbers<[1], [0], [0], [1], [0, 0, 1, 1], [], []>} : vector<8x8xbf16>, vector<8x128xbf16>, vector<8x128xf32> -> vector<8x128xf32>
    %c0_375 = arith.constant 0 : index
    %c45 = arith.constant 45 : index
    %662 = vector.load %arg3[%c0_375, %c45] : memref<16x128xf32, #tpu.memory_space<vmem>>, vector<8x1xf32>
    %663 = vector.broadcast %662 : vector<8x1xf32> to vector<8x128xf32>
    %664 = arith.addf %661, %663 : vector<8x128xf32>
    %cst_376 = arith.constant 0.000000e+00 : f32
    %665 = vector.broadcast %cst_376 : f32 to vector<8x128xf32>
    %666 = arith.maximumf %664, %665 : vector<8x128xf32>
    %c736 = arith.constant 736 : index
    %c0_377 = arith.constant 0 : index
    %667 = vector.load %arg2[%c736, %c0_377] : memref<912x128xbf16, #tpu.memory_space<vmem>>, vector<16x8xbf16>
    %668 = arith.truncf %666 : vector<8x128xf32> to vector<8x128xbf16>
    %cst_378 = arith.constant dense<0.000000e+00> : vector<16x128xf32>
    %669 = tpu.matmul %667, %668, %cst_378 {dimension_numbers = #tpu.dot_dimension_numbers<[1], [0], [0], [1], [0, 0, 1, 1], [], []>} : vector<16x8xbf16>, vector<8x128xbf16>, vector<16x128xf32> -> vector<16x128xf32>
    %c0_379 = arith.constant 0 : index
    %c46 = arith.constant 46 : index
    %670 = vector.load %arg3[%c0_379, %c46] : memref<16x128xf32, #tpu.memory_space<vmem>>, vector<16x1xf32>
    %671 = vector.broadcast %670 : vector<16x1xf32> to vector<16x128xf32>
    %672 = arith.addf %669, %671 : vector<16x128xf32>
    %673 = arith.addf %672, %650 : vector<16x128xf32>
    %cst_380 = arith.constant 0.000000e+00 : f32
    %674 = vector.broadcast %cst_380 : f32 to vector<16x128xf32>
    %675 = arith.maximumf %673, %674 : vector<16x128xf32>
    %c752 = arith.constant 752 : index
    %c0_381 = arith.constant 0 : index
    %676 = vector.load %arg2[%c752, %c0_381] : memref<912x128xbf16, #tpu.memory_space<vmem>>, vector<8x16xbf16>
    %677 = arith.truncf %600 : vector<16x128xf32> to vector<16x128xbf16>
    %cst_382 = arith.constant dense<0.000000e+00> : vector<8x128xf32>
    %678 = tpu.matmul %676, %677, %cst_382 {dimension_numbers = #tpu.dot_dimension_numbers<[1], [0], [0], [1], [0, 0, 1, 1], [], []>} : vector<8x16xbf16>, vector<16x128xbf16>, vector<8x128xf32> -> vector<8x128xf32>
    %c0_383 = arith.constant 0 : index
    %c47 = arith.constant 47 : index
    %679 = vector.load %arg3[%c0_383, %c47] : memref<16x128xf32, #tpu.memory_space<vmem>>, vector<8x1xf32>
    %680 = vector.broadcast %679 : vector<8x1xf32> to vector<8x128xf32>
    %681 = arith.addf %678, %680 : vector<8x128xf32>
    %cst_384 = arith.constant 0.000000e+00 : f32
    %682 = vector.broadcast %cst_384 : f32 to vector<8x128xf32>
    %683 = arith.maximumf %681, %682 : vector<8x128xf32>
    %c768 = arith.constant 768 : index
    %c0_385 = arith.constant 0 : index
    %684 = vector.load %arg2[%c768, %c0_385] : memref<912x128xbf16, #tpu.memory_space<vmem>>, vector<8x8xbf16>
    %685 = arith.truncf %683 : vector<8x128xf32> to vector<8x128xbf16>
    %cst_386 = arith.constant dense<0.000000e+00> : vector<8x128xf32>
    %686 = tpu.matmul %684, %685, %cst_386 {dimension_numbers = #tpu.dot_dimension_numbers<[1], [0], [0], [1], [0, 0, 1, 1], [], []>} : vector<8x8xbf16>, vector<8x128xbf16>, vector<8x128xf32> -> vector<8x128xf32>
    %c0_387 = arith.constant 0 : index
    %c48_388 = arith.constant 48 : index
    %687 = vector.load %arg3[%c0_387, %c48_388] : memref<16x128xf32, #tpu.memory_space<vmem>>, vector<8x1xf32>
    %688 = vector.broadcast %687 : vector<8x1xf32> to vector<8x128xf32>
    %689 = arith.addf %686, %688 : vector<8x128xf32>
    %cst_389 = arith.constant 0.000000e+00 : f32
    %690 = vector.broadcast %cst_389 : f32 to vector<8x128xf32>
    %691 = arith.maximumf %689, %690 : vector<8x128xf32>
    %c784 = arith.constant 784 : index
    %c0_390 = arith.constant 0 : index
    %692 = vector.load %arg2[%c784, %c0_390] : memref<912x128xbf16, #tpu.memory_space<vmem>>, vector<16x8xbf16>
    %693 = arith.truncf %691 : vector<8x128xf32> to vector<8x128xbf16>
    %cst_391 = arith.constant dense<0.000000e+00> : vector<16x128xf32>
    %694 = tpu.matmul %692, %693, %cst_391 {dimension_numbers = #tpu.dot_dimension_numbers<[1], [0], [0], [1], [0, 0, 1, 1], [], []>} : vector<16x8xbf16>, vector<8x128xbf16>, vector<16x128xf32> -> vector<16x128xf32>
    %c0_392 = arith.constant 0 : index
    %c49 = arith.constant 49 : index
    %695 = vector.load %arg3[%c0_392, %c49] : memref<16x128xf32, #tpu.memory_space<vmem>>, vector<16x1xf32>
    %696 = vector.broadcast %695 : vector<16x1xf32> to vector<16x128xf32>
    %697 = arith.addf %694, %696 : vector<16x128xf32>
    %698 = arith.addf %697, %600 : vector<16x128xf32>
    %cst_393 = arith.constant 0.000000e+00 : f32
    %699 = vector.broadcast %cst_393 : f32 to vector<16x128xf32>
    %700 = arith.maximumf %698, %699 : vector<16x128xf32>
    %c800 = arith.constant 800 : index
    %c0_394 = arith.constant 0 : index
    %701 = vector.load %arg2[%c800, %c0_394] : memref<912x128xbf16, #tpu.memory_space<vmem>>, vector<8x16xbf16>
    %702 = arith.truncf %700 : vector<16x128xf32> to vector<16x128xbf16>
    %cst_395 = arith.constant dense<0.000000e+00> : vector<8x128xf32>
    %703 = tpu.matmul %701, %702, %cst_395 {dimension_numbers = #tpu.dot_dimension_numbers<[1], [0], [0], [1], [0, 0, 1, 1], [], []>} : vector<8x16xbf16>, vector<16x128xbf16>, vector<8x128xf32> -> vector<8x128xf32>
    %c0_396 = arith.constant 0 : index
    %c50 = arith.constant 50 : index
    %704 = vector.load %arg3[%c0_396, %c50] : memref<16x128xf32, #tpu.memory_space<vmem>>, vector<8x1xf32>
    %705 = vector.broadcast %704 : vector<8x1xf32> to vector<8x128xf32>
    %706 = arith.addf %703, %705 : vector<8x128xf32>
    %cst_397 = arith.constant 0.000000e+00 : f32
    %707 = vector.broadcast %cst_397 : f32 to vector<8x128xf32>
    %708 = arith.maximumf %706, %707 : vector<8x128xf32>
    %c816 = arith.constant 816 : index
    %c0_398 = arith.constant 0 : index
    %709 = vector.load %arg2[%c816, %c0_398] : memref<912x128xbf16, #tpu.memory_space<vmem>>, vector<8x8xbf16>
    %710 = arith.truncf %708 : vector<8x128xf32> to vector<8x128xbf16>
    %cst_399 = arith.constant dense<0.000000e+00> : vector<8x128xf32>
    %711 = tpu.matmul %709, %710, %cst_399 {dimension_numbers = #tpu.dot_dimension_numbers<[1], [0], [0], [1], [0, 0, 1, 1], [], []>} : vector<8x8xbf16>, vector<8x128xbf16>, vector<8x128xf32> -> vector<8x128xf32>
    %c0_400 = arith.constant 0 : index
    %c51 = arith.constant 51 : index
    %712 = vector.load %arg3[%c0_400, %c51] : memref<16x128xf32, #tpu.memory_space<vmem>>, vector<8x1xf32>
    %713 = vector.broadcast %712 : vector<8x1xf32> to vector<8x128xf32>
    %714 = arith.addf %711, %713 : vector<8x128xf32>
    %cst_401 = arith.constant 0.000000e+00 : f32
    %715 = vector.broadcast %cst_401 : f32 to vector<8x128xf32>
    %716 = arith.maximumf %714, %715 : vector<8x128xf32>
    %c832 = arith.constant 832 : index
    %c0_402 = arith.constant 0 : index
    %717 = vector.load %arg2[%c832, %c0_402] : memref<912x128xbf16, #tpu.memory_space<vmem>>, vector<16x8xbf16>
    %718 = arith.truncf %716 : vector<8x128xf32> to vector<8x128xbf16>
    %cst_403 = arith.constant dense<0.000000e+00> : vector<16x128xf32>
    %719 = tpu.matmul %717, %718, %cst_403 {dimension_numbers = #tpu.dot_dimension_numbers<[1], [0], [0], [1], [0, 0, 1, 1], [], []>} : vector<16x8xbf16>, vector<8x128xbf16>, vector<16x128xf32> -> vector<16x128xf32>
    %c0_404 = arith.constant 0 : index
    %c52 = arith.constant 52 : index
    %720 = vector.load %arg3[%c0_404, %c52] : memref<16x128xf32, #tpu.memory_space<vmem>>, vector<16x1xf32>
    %721 = vector.broadcast %720 : vector<16x1xf32> to vector<16x128xf32>
    %722 = arith.addf %719, %721 : vector<16x128xf32>
    %723 = arith.addf %722, %700 : vector<16x128xf32>
    %cst_405 = arith.constant 0.000000e+00 : f32
    %724 = vector.broadcast %cst_405 : f32 to vector<16x128xf32>
    %725 = arith.maximumf %723, %724 : vector<16x128xf32>
    %c848 = arith.constant 848 : index
    %c0_406 = arith.constant 0 : index
    %726 = vector.load %arg2[%c848, %c0_406] : memref<912x128xbf16, #tpu.memory_space<vmem>>, vector<8x16xbf16>
    %727 = arith.truncf %725 : vector<16x128xf32> to vector<16x128xbf16>
    %cst_407 = arith.constant dense<0.000000e+00> : vector<8x128xf32>
    %728 = tpu.matmul %726, %727, %cst_407 {dimension_numbers = #tpu.dot_dimension_numbers<[1], [0], [0], [1], [0, 0, 1, 1], [], []>} : vector<8x16xbf16>, vector<16x128xbf16>, vector<8x128xf32> -> vector<8x128xf32>
    %c0_408 = arith.constant 0 : index
    %c53 = arith.constant 53 : index
    %729 = vector.load %arg3[%c0_408, %c53] : memref<16x128xf32, #tpu.memory_space<vmem>>, vector<8x1xf32>
    %730 = vector.broadcast %729 : vector<8x1xf32> to vector<8x128xf32>
    %731 = arith.addf %728, %730 : vector<8x128xf32>
    %cst_409 = arith.constant 0.000000e+00 : f32
    %732 = vector.broadcast %cst_409 : f32 to vector<8x128xf32>
    %733 = arith.maximumf %731, %732 : vector<8x128xf32>
    %c864 = arith.constant 864 : index
    %c0_410 = arith.constant 0 : index
    %734 = vector.load %arg2[%c864, %c0_410] : memref<912x128xbf16, #tpu.memory_space<vmem>>, vector<8x8xbf16>
    %735 = arith.truncf %733 : vector<8x128xf32> to vector<8x128xbf16>
    %cst_411 = arith.constant dense<0.000000e+00> : vector<8x128xf32>
    %736 = tpu.matmul %734, %735, %cst_411 {dimension_numbers = #tpu.dot_dimension_numbers<[1], [0], [0], [1], [0, 0, 1, 1], [], []>} : vector<8x8xbf16>, vector<8x128xbf16>, vector<8x128xf32> -> vector<8x128xf32>
    %c0_412 = arith.constant 0 : index
    %c54 = arith.constant 54 : index
    %737 = vector.load %arg3[%c0_412, %c54] : memref<16x128xf32, #tpu.memory_space<vmem>>, vector<8x1xf32>
    %738 = vector.broadcast %737 : vector<8x1xf32> to vector<8x128xf32>
    %739 = arith.addf %736, %738 : vector<8x128xf32>
    %cst_413 = arith.constant 0.000000e+00 : f32
    %740 = vector.broadcast %cst_413 : f32 to vector<8x128xf32>
    %741 = arith.maximumf %739, %740 : vector<8x128xf32>
    %c880 = arith.constant 880 : index
    %c0_414 = arith.constant 0 : index
    %742 = vector.load %arg2[%c880, %c0_414] : memref<912x128xbf16, #tpu.memory_space<vmem>>, vector<16x8xbf16>
    %743 = arith.truncf %741 : vector<8x128xf32> to vector<8x128xbf16>
    %cst_415 = arith.constant dense<0.000000e+00> : vector<16x128xf32>
    %744 = tpu.matmul %742, %743, %cst_415 {dimension_numbers = #tpu.dot_dimension_numbers<[1], [0], [0], [1], [0, 0, 1, 1], [], []>} : vector<16x8xbf16>, vector<8x128xbf16>, vector<16x128xf32> -> vector<16x128xf32>
    %c0_416 = arith.constant 0 : index
    %c55 = arith.constant 55 : index
    %745 = vector.load %arg3[%c0_416, %c55] : memref<16x128xf32, #tpu.memory_space<vmem>>, vector<16x1xf32>
    %746 = vector.broadcast %745 : vector<16x1xf32> to vector<16x128xf32>
    %747 = arith.addf %744, %746 : vector<16x128xf32>
    %748 = arith.addf %747, %725 : vector<16x128xf32>
    %cst_417 = arith.constant 0.000000e+00 : f32
    %749 = vector.broadcast %cst_417 : f32 to vector<16x128xf32>
    %750 = arith.maximumf %748, %749 : vector<16x128xf32>
    %c896 = arith.constant 896 : index
    %c0_418 = arith.constant 0 : index
    %751 = vector.load %arg2[%c896, %c0_418] : memref<912x128xbf16, #tpu.memory_space<vmem>>, vector<16x16xbf16>
    %752 = arith.truncf %750 : vector<16x128xf32> to vector<16x128xbf16>
    %cst_419 = arith.constant dense<0.000000e+00> : vector<16x128xf32>
    %753 = tpu.matmul %751, %752, %cst_419 {dimension_numbers = #tpu.dot_dimension_numbers<[1], [0], [0], [1], [0, 0, 1, 1], [], []>} : vector<16x16xbf16>, vector<16x128xbf16>, vector<16x128xf32> -> vector<16x128xf32>
    %c0_420 = arith.constant 0 : index
    %c56 = arith.constant 56 : index
    %754 = vector.load %arg3[%c0_420, %c56] : memref<16x128xf32, #tpu.memory_space<vmem>>, vector<16x1xf32>
    %755 = vector.broadcast %754 : vector<16x1xf32> to vector<16x128xf32>
    %756 = arith.addf %753, %755 : vector<16x128xf32>
    %cst_421 = arith.constant 0.000000e+00 : f32
    %757 = vector.broadcast %cst_421 : f32 to vector<16x128xf32>
    %758 = arith.subf %757, %756 : vector<16x128xf32>
    %759 = math.exp %758 : vector<16x128xf32>
    %cst_422 = arith.constant 1.000000e+00 : f32
    %760 = vector.broadcast %cst_422 : f32 to vector<16x128xf32>
    %761 = arith.addf %760, %759 : vector<16x128xf32>
    %762 = tpu.reciprocal %761 {approx = true} : vector<16x128xf32> -> vector<16x128xf32>
    %763 = arith.mulf %675, %762 : vector<16x128xf32>
    %764 = arith.addf %763, %600 : vector<16x128xf32>
    %c0_423 = arith.constant 0 : index
    %c0_424 = arith.constant 0 : index
    %c0_425 = arith.constant 0 : index
    %765 = vector.load %arg6[%c0_423, %c0_424, %c0_425] : memref<1x16x128xf32, #tpu.memory_space<vmem>>, vector<1x16x128xf32>
    %766 = vector.shape_cast %765 : vector<1x16x128xf32> to vector<16x128xf32>
    %767 = vector.shape_cast %764 : vector<16x128xf32> to vector<1x16x128xf32>
    tpu.vector_store %arg6[%c0_423, %c0_424, %c0_425], %767 {strides = array<i32>} : memref<1x16x128xf32, #tpu.memory_space<vmem>>, vector<1x16x128xf32>,
    return
  }
  func.func @transform_0(%arg0: i32) -> (i32, i32, i32) {
    %c0_i32 = arith.constant 0 : i32
    %c0_i32_0 = arith.constant 0 : i32
    %c0_i32_1 = arith.constant 0 : i32
    return %arg0, %c0_i32, %c0_i32_0 : i32, i32, i32
  }
  func.func @transform_1(%arg0: i32) -> (i32, i32) {
    %c0_i32 = arith.constant 0 : i32
    %c0_i32_0 = arith.constant 0 : i32
    %c0_i32_1 = arith.constant 0 : i32
    return %c0_i32, %c0_i32_0 : i32, i32
  }
  func.func @transform_2(%arg0: i32) -> (i32, i32) {
    %c0_i32 = arith.constant 0 : i32
    %c0_i32_0 = arith.constant 0 : i32
    %c0_i32_1 = arith.constant 0 : i32
    return %c0_i32, %c0_i32_0 : i32, i32
  }
  func.func @transform_3(%arg0: i32) -> (i32, i32) {
    %c0_i32 = arith.constant 0 : i32
    %c0_i32_0 = arith.constant 0 : i32
    %c0_i32_1 = arith.constant 0 : i32
    return %c0_i32, %c0_i32_0 : i32, i32
  }
  func.func @transform_4(%arg0: i32) -> (i32, i32) {
    %c0_i32 = arith.constant 0 : i32
    %c0_i32_0 = arith.constant 0 : i32
    %c0_i32_1 = arith.constant 0 : i32
    return %c0_i32, %c0_i32_0 : i32, i32
  }
  func.func @transform_5(%arg0: i32) -> (i32, i32, i32) {
    %c0_i32 = arith.constant 0 : i32
    %c0_i32_0 = arith.constant 0 : i32
    %c0_i32_1 = arith.constant 0 : i32
    return %arg0, %c0_i32, %c0_i32_0 : i32, i32, i32
  }
}

</mosaic_0001>

<llo_original>
// kernel: enc_forward.1
$region0: #{enc_forward.1}
  #allocation0 [shape = 'u32[]', space=smem, size = 0x4, offset = 0x4, fixed_abs, tag = 'smem constant byte address 0x4 - core index']
  #allocation1 [shape = 'u32[144,128]{1,0:T(1,128)}', space=vmem, size = 0x12000, scoped, tag = 'internal scratch']
  %s0 = inlined_call_operand.vmem [shape: f32[2,8,384], index: 0, kind: input, shape index: {}]
  %s1 = inlined_call_operand.vmem [shape: bf16[912,128], index: 1, kind: input, shape index: {}]
  %s2 = inlined_call_operand.vmem [shape: f32[16,128], index: 2, kind: input, shape index: {}]
  %s3 = inlined_call_operand.vmem [shape: f32[1,768], index: 3, kind: input, shape index: {}]
  %s4 = inlined_call_operand.vmem [shape: bf16[384,384], index: 4, kind: input, shape index: {}]
  %s5 = inlined_call_operand.vmem [shape: f32[2,16,128], index: 5, kind: output, shape index: {}]
  %s6 = sld [smem:[#allocation0]]
  $region53: #{enc_forward.1} parent=0
    _
  %s8 = ssub.s32 1, %s6
  %s9 = scalar_select 0, %s8, %s6
  loop: start=0, step=1, limit=4
  $region2: #{enc_forward.1} parent=0 // loop_pre_header
    _
  $region3: #{enc_forward.1} parent=0 // loop_header
    %s11 = sphi 0, %s15
    %p12 = scmp.ge.s32.totalorder %s11, 4
    %s21 = sphi 0, %s23
    %s24 = sphi 0, %s21
    %s25 = sphi 0, %s24
    %s41 = sphi 0, %s25
    %s45 = sphi 0, %s45
    %s47 = sphi 0, %s45
    %s48 = sphi 0, %s47
    %s62 = sphi 0, %s48
    %s66 = sphi 0, %s66
    %s68 = sphi 0, %s66
    %s69 = sphi 0, %s68
    %s83 = sphi 0, %s69
    %s87 = sphi 0, %s87
    %s89 = sphi 0, %s87
    %s90 = sphi 0, %s89
    %s104 = sphi 0, %s90
    %s108 = sphi 0, %s108
    %s110 = sphi 0, %s108
    %s111 = sphi 0, %s110
    %s125 = sphi 0, %s111
    %s131 = sphi 0, %s133
    %s134 = sphi 0, %s131
    %s135 = sphi 0, %s134
    %s151 = sphi 0, %s135
  $region4: #{enc_forward.1} parent=0 // loop_header_branch
    %14 = sbr.rel (%p12) target = $region8
  $region5: #{enc_forward.1} parent=0 // loop_body
    %s16 = ssub.s32 %s11, 1
    %s17 = ssub.s32 %s11, 2
    %s18 = sadd.s32 %s11, 1
    %s19 = ssub.s32 %s11, %s18
    %p20 = scmp.eq.s32.totalorder %s19, 0
    %s22 = sadd.s32 %s21, 1
    %s23 = scalar_select %p20, %s21, %s22
    %p26 = pneg %p20
    %p27 = scmp.eq.s32.totalorder %s11, 1
    %p28 = por %p26, %p27
    %p29 = scmp.ne.s32.totalorder %s21, %s24
    %p30 = scmp.eq.s32.totalorder %s11, 0
    %p31 = por %p29, %p30
    %p32 = scmp.ne.s32.totalorder %s21, %s24
    %p33 = scmp.eq.s32.totalorder %s16, 1
    %p34 = por %p32, %p33
    %p35 = scmp.ne.s32.totalorder %s24, %s25
    %p36 = scmp.eq.s32.totalorder %s16, 0
    %p37 = por %p35, %p36
    %p38 = scmp.ne.s32.totalorder %s24, %s25
    %p39 = scmp.eq.s32.totalorder %s17, 1
    %p40 = por %p38, %p39
    %p42 = scmp.ne.s32.totalorder %s25, %s41
    %p43 = scmp.eq.s32.totalorder %s17, 0
    %p44 = por %p42, %p43
    %s46 = sadd.s32 %s45, 1
    %p49 = scmp.eq.s32.totalorder %s11, 1
    %p50 = scmp.ne.s32.totalorder %s45, %s47
    %p51 = scmp.eq.s32.totalorder %s11, 0
    %p52 = por %p50, %p51
    %p53 = scmp.ne.s32.totalorder %s45, %s47
    %p54 = scmp.eq.s32.totalorder %s16, 1
    %p55 = por %p53, %p54
    %p56 = scmp.ne.s32.totalorder %s47, %s48
    %p57 = scmp.eq.s32.totalorder %s16, 0
    %p58 = por %p56, %p57
    %p59 = scmp.ne.s32.totalorder %s47, %s48
    %p60 = scmp.eq.s32.totalorder %s17, 1
    %p61 = por %p59, %p60
    %p63 = scmp.ne.s32.totalorder %s48, %s62
    %p64 = scmp.eq.s32.totalorder %s17, 0
    %p65 = por %p63, %p64
    %s67 = sadd.s32 %s66, 1
    %p70 = scmp.eq.s32.totalorder %s11, 1
    %p71 = scmp.ne.s32.totalorder %s66, %s68
    %p72 = scmp.eq.s32.totalorder %s11, 0
    %p73 = por %p71, %p72
    %p74 = scmp.ne.s32.totalorder %s66, %s68
    %p75 = scmp.eq.s32.totalorder %s16, 1
    %p76 = por %p74, %p75
    %p77 = scmp.ne.s32.totalorder %s68, %s69
    %p78 = scmp.eq.s32.totalorder %s16, 0
    %p79 = por %p77, %p78
    %p80 = scmp.ne.s32.totalorder %s68, %s69
    %p81 = scmp.eq.s32.totalorder %s17, 1
    %p82 = por %p80, %p81
    %p84 = scmp.ne.s32.totalorder %s69, %s83
    %p85 = scmp.eq.s32.totalorder %s17, 0
    %p86 = por %p84, %p85
    %s88 = sadd.s32 %s87, 1
    %p91 = scmp.eq.s32.totalorder %s11, 1
    %p92 = scmp.ne.s32.totalorder %s87, %s89
    %p93 = scmp.eq.s32.totalorder %s11, 0
    %p94 = por %p92, %p93
    %p95 = scmp.ne.s32.totalorder %s87, %s89
    %p96 = scmp.eq.s32.totalorder %s16, 1
    %p97 = por %p95, %p96
    %p98 = scmp.ne.s32.totalorder %s89, %s90
    %p99 = scmp.eq.s32.totalorder %s16, 0
    %p100 = por %p98, %p99
    %p101 = scmp.ne.s32.totalorder %s89, %s90
    %p102 = scmp.eq.s32.totalorder %s17, 1
    %p103 = por %p101, %p102
    %p105 = scmp.ne.s32.totalorder %s90, %s104
    %p106 = scmp.eq.s32.totalorder %s17, 0
    %p107 = por %p105, %p106
    %s109 = sadd.s32 %s108, 1
    %p112 = scmp.eq.s32.totalorder %s11, 1
    %p113 = scmp.ne.s32.totalorder %s108, %s110
    %p114 = scmp.eq.s32.totalorder %s11, 0
    %p115 = por %p113, %p114
    %p116 = scmp.ne.s32.totalorder %s108, %s110
    %p117 = scmp.eq.s32.totalorder %s16, 1
    %p118 = por %p116, %p117
    %p119 = scmp.ne.s32.totalorder %s110, %s111
    %p120 = scmp.eq.s32.totalorder %s16, 0
    %p121 = por %p119, %p120
    %p122 = scmp.ne.s32.totalorder %s110, %s111
    %p123 = scmp.eq.s32.totalorder %s17, 1
    %p124 = por %p122, %p123
    %p126 = scmp.ne.s32.totalorder %s111, %s125
    %p127 = scmp.eq.s32.totalorder %s17, 0
    %p128 = por %p126, %p127
    %s129 = ssub.s32 %s11, %s18
    %p130 = scmp.eq.s32.totalorder %s129, 0
    %s132 = sadd.s32 %s131, 1
    %s133 = scalar_select %p130, %s131, %s132
    %p136 = pneg %p130
    %p137 = scmp.eq.s32.totalorder %s11, 1
    %p138 = por %p136, %p137
    %p139 = scmp.ne.s32.totalorder %s131, %s134
    %p140 = scmp.eq.s32.totalorder %s11, 0
    %p141 = por %p139, %p140
    %p142 = scmp.ne.s32.totalorder %s131, %s134
    %p143 = scmp.eq.s32.totalorder %s16, 1
    %p144 = por %p142, %p143
    %p145 = scmp.ne.s32.totalorder %s134, %s135
    %p146 = scmp.eq.s32.totalorder %s16, 0
    %p147 = por %p145, %p146
    %p148 = scmp.ne.s32.totalorder %s134, %s135
    %p149 = scmp.eq.s32.totalorder %s17, 1
    %p150 = por %p148, %p149
    %p152 = scmp.ne.s32.totalorder %s135, %s151
    %p153 = scmp.eq.s32.totalorder %s17, 0
    %p154 = por %p152, %p153
    %p155 = scmp.le.s32.totalorder 1, %s11
    %p156 = scmp.lt.s32.totalorder %s11, 3
    %p157 = pnand %p155, %p156
    %p158 = pneg %p157
    // Predicated region
    $region9: #{enc_forward.1} parent=5 // pred_check
      _
    $region10: #{enc_forward.1} parent=5 // pred_check_branch
      %160 = sbr.rel (%p157) target = $region12
    $region11: #{enc_forward.1} parent=5 // pred_region
      %s161 = ssub.s32 %s11, 1
      // Predicated region
      $region13: #{enc_forward.1} parent=11 // pred_check
        %p162 = pneg %p58
      $region14: #{enc_forward.1} parent=11 // pred_check_branch
        %164 = sbr.rel (%p162) target = $region16
      $region15: #{enc_forward.1} parent=11 // pred_region
        _
      $region16: #{enc_forward.1} parent=11 // pred_fallthru
        _
      // Predicated region
      $region17: #{enc_forward.1} parent=11 // pred_check
        %p165 = pneg %p79
      $region18: #{enc_forward.1} parent=11 // pred_check_branch
        %167 = sbr.rel (%p165) target = $region20
      $region19: #{enc_forward.1} parent=11 // pred_region
        _
      $region20: #{enc_forward.1} parent=11 // pred_fallthru
        _
      // Predicated region
      $region21: #{enc_forward.1} parent=11 // pred_check
        %p168 = pneg %p100
      $region22: #{enc_forward.1} parent=11 // pred_check_branch
        %170 = sbr.rel (%p168) target = $region24
      $region23: #{enc_forward.1} parent=11 // pred_region
        _
      $region24: #{enc_forward.1} parent=11 // pred_fallthru
        _
      // Predicated region
      $region25: #{enc_forward.1} parent=11 // pred_check
        %p171 = pneg %p121
      $region26: #{enc_forward.1} parent=11 // pred_check_branch
        %173 = sbr.rel (%p171) target = $region28
      $region27: #{enc_forward.1} parent=11 // pred_region
        _
      $region28: #{enc_forward.1} parent=11 // pred_fallthru
        _
    $region12: #{enc_forward.1} parent=5 // pred_fallthru
      _
    %p174 = scmp.lt.s32.totalorder %s11, 2
    // Predicated region
    $region29: #{enc_forward.1} parent=5 // pred_check
      %p175 = pneg %p174
    $region30: #{enc_forward.1} parent=5 // pred_check_branch
      %177 = sbr.rel (%p175) target = $region32
    $region31: #{enc_forward.1} parent=5 // pred_region
      // Predicated region
      $region33: #{enc_forward.1} parent=31 // pred_check
        %p178 = pneg %p31
      $region34: #{enc_forward.1} parent=31 // pred_check_branch
        %180 = sbr.rel (%p178) target = $region36
      $region35: #{enc_forward.1} parent=31 // pred_region
        %p181 = scmp.lt.s32.totalorder %s11, 1
        %s182 = scalar_select %p181, %s11, 1
        %s183 = smul.addr %s182, 3
        %s184 = smul.addr %s183, 8
        %s185 = scalar_lea.vmem %s0, %s184
      $region36: #{enc_forward.1} parent=31 // pred_fallthru
        _
    $region32: #{enc_forward.1} parent=5 // pred_fallthru
      _
    %p186 = scmp.le.s32.totalorder 1, %s11
    %p187 = scmp.lt.s32.totalorder %s11, 3
    %p188 = pnand %p186, %p187
    %p189 = pneg %p188
    // Predicated region
    $region37: #{enc_forward.1} parent=5 // pred_check
      _
    $region38: #{enc_forward.1} parent=5 // pred_check_branch
      %191 = sbr.rel (%p188) target = $region40
    $region39: #{enc_forward.1} parent=5 // pred_region
      %s192 = ssub.s32 %s11, 1
      %p193 = scmp.lt.s32.totalorder %s16, 1
      %s194 = scalar_select %p193, %s16, 1
      %s195 = smul.addr %s194, 3
      %s196 = smul.addr %s195, 8
      %s197 = scalar_lea.vmem %s0, %s196
      %p198 = pneg %p37
      %p199 = pneg %p34
      %p200 = pneg %p58
      %p201 = pneg %p55
      %p202 = pneg %p79
      %p203 = pneg %p76
      %p204 = pneg %p100
      %p205 = pneg %p97
      %p206 = pneg %p121
      %p207 = pneg %p118
      %p208 = pneg %p147
      %p209 = pneg %p144
      %p210 = scmp.lt.s32.totalorder %s16, 1
      %s211 = scalar_select %p210, %s16, 1
      %s212 = smul.addr %s211, 2
      %s213 = smul.addr %s212, 8
      %s214 = scalar_lea.vmem %s5, %s213
      %p215 = scmp.lt.s32.totalorder %s16, 1
      %s216 = scalar_select %p215, %s16, 1
      %s217 = smul.addr %s216, 3
      %s218 = smul.addr %s217, 8
      %s219 = scalar_lea.vmem %s0, %s218
      %p220 = scmp.lt.s32.totalorder %s16, 1
      %s221 = scalar_select %p220, %s16, 1
      %s222 = smul.addr %s221, 2
      %s223 = smul.addr %s222, 8
      %s224 = scalar_lea.vmem %s5, %s223
      %v226 = vld [vmem:[%s219] sm:$0xff]
      %v227 = vld [vmem:[%s219 + $0x8] sm:$0xff]
      %v228 = vld [vmem:[%s219 + $0x10] sm:$0xff]
      %v229 = vld [vmem:[%s3] sm:$0x7]
      %v231 = vlaneseq
      %v232 = vshrl.u32 %v231, 7
      %v233 = vsub.s32 0, %v232
      %v234 = vrot.slane %v229, %v233
      %v235 = vlaneseq
      %v236 = vshrl.u32 %v235, 7
      %v237 = vsub.s32 1, %v236
      %v238 = vrot.slane %v229, %v237
      %v239 = vlaneseq
      %v240 = vshrl.u32 %v239, 7
      %v241 = vsub.s32 2, %v240
      %v242 = vrot.slane %v229, %v241
      %v246 = vmul.f32 %v226, %v234
      %v247 = vmul.f32 %v227, %v238
      %v248 = vmul.f32 %v228, %v242
      %249 = vrot.lane.b32.xlu0 %v246, 19
      %v250 = vpop.permute.xlu0 %249
      %251 = vrot.lane.b32.xlu0 %v247, 19
      %v252 = vpop.permute.xlu0 %251
      %253 = vrot.lane.b32.xlu0 %v248, 19
      %v254 = vpop.permute.xlu0 %253
      %v255 = vlaneseq
      %v256 = vand.u32 %v255, 127
      %vm257 = vcmp.lt.s32.totalorder %v256, 19
      %v258 = vsel %vm257, %v252, %v254
      %v259 = vsel %vm257, %v250, %v252
      %v260 = vsel %vm257, %v254, %v250
      %261 = vrot.lane.b32.xlu0 %v246, 18
      %v262 = vpop.permute.xlu0 %261
      %263 = vrot.lane.b32.xlu0 %v247, 18
      %v264 = vpop.permute.xlu0 %263
      %265 = vrot.lane.b32.xlu0 %v248, 18
      %v266 = vpop.permute.xlu0 %265
      %vm267 = vcmp.lt.s32.totalorder %v256, 18
      %v268 = vsel %vm267, %v264, %v266
      %v269 = vsel %vm267, %v262, %v264
      %v270 = vsel %vm267, %v266, %v262
      %271 = vrot.lane.b32.xlu0 %v246, 17
      %v272 = vpop.permute.xlu0 %271
      %273 = vrot.lane.b32.xlu0 %v247, 17
      %v274 = vpop.permute.xlu0 %273
      %275 = vrot.lane.b32.xlu0 %v248, 17
      %v276 = vpop.permute.xlu0 %275
      %vm277 = vcmp.lt.s32.totalorder %v256, 17
      %v278 = vsel %vm277, %v274, %v276
      %v279 = vsel %vm277, %v272, %v274
      %v280 = vsel %vm277, %v276, %v272
      %281 = vrot.lane.b32.xlu0 %v246, 1
      %v282 = vpop.permute.xlu0 %281
      %283 = vrot.lane.b32.xlu0 %v247, 1
      %v284 = vpop.permute.xlu0 %283
      %285 = vrot.lane.b32.xlu0 %v248, 1
      %v286 = vpop.permute.xlu0 %285
      %vm287 = vcmp.lt.s32.totalorder %v256, 1
      %v288 = vsel %vm287, %v284, %v286
      %v289 = vsel %vm287, %v282, %v284
      %v290 = vsel %vm287, %v286, %v282
      %291 = vrot.lane.b32.xlu0 %v246, 127
      %v292 = vpop.permute.xlu0 %291
      %293 = vrot.lane.b32.xlu0 %v247, 127
      %v294 = vpop.permute.xlu0 %293
      %295 = vrot.lane.b32.xlu0 %v248, 127
      %v296 = vpop.permute.xlu0 %295
      %vm297 = vcmp.lt.s32.totalorder %v256, 127
      %v298 = vsel %vm297, %v294, %v296
      %v299 = vsel %vm297, %v292, %v294
      %v300 = vsel %vm297, %v296, %v292
      %301 = vrot.lane.b32.xlu0 %v246, 111
      %v302 = vpop.permute.xlu0 %301
      %303 = vrot.lane.b32.xlu0 %v247, 111
      %v304 = vpop.permute.xlu0 %303
      %305 = vrot.lane.b32.xlu0 %v248, 111
      %v306 = vpop.permute.xlu0 %305
      %vm307 = vcmp.lt.s32.totalorder %v256, 111
      %v308 = vsel %vm307, %v304, %v306
      %v309 = vsel %vm307, %v302, %v304
      %v310 = vsel %vm307, %v306, %v302
      %311 = vrot.lane.b32.xlu0 %v246, 110
      %v312 = vpop.permute.xlu0 %311
      %313 = vrot.lane.b32.xlu0 %v247, 110
      %v314 = vpop.permute.xlu0 %313
      %315 = vrot.lane.b32.xlu0 %v248, 110
      %v316 = vpop.permute.xlu0 %315
      %vm317 = vcmp.lt.s32.totalorder %v256, 110
      %v318 = vsel %vm317, %v314, %v316
      %v319 = vsel %vm317, %v312, %v314
      %v320 = vsel %vm317, %v316, %v312
      %321 = vrot.lane.b32.xlu0 %v246, 109
      %v322 = vpop.permute.xlu0 %321
      %323 = vrot.lane.b32.xlu0 %v247, 109
      %v324 = vpop.permute.xlu0 %323
      %325 = vrot.lane.b32.xlu0 %v248, 109
      %v326 = vpop.permute.xlu0 %325
      %vm327 = vcmp.lt.s32.totalorder %v256, 109
      %v328 = vsel %vm327, %v324, %v326
      %v329 = vsel %vm327, %v322, %v324
      %v330 = vsel %vm327, %v326, %v322
      %v331 = vpack.c.bf16 %v270, %v260
      %v332 = vpack.c.bf16 %v269, %v259
      %v333 = vpack.c.bf16 %v268, %v258
      %v334 = vpack.c.bf16 %v290, %v280
      %v335 = vpack.c.bf16 %v289, %v279
      %v336 = vpack.c.bf16 %v288, %v278
      %v337 = vpack.c.bf16 %v299, %v246
      %v338 = vpack.c.bf16 %v298, %v247
      %v339 = vpack.c.bf16 %v300, %v248
      %v340 = vpack.c.bf16 %v319, %v309
      %v341 = vpack.c.bf16 %v318, %v308
      %v342 = vpack.c.bf16 %v320, %v310
      %v343 = vpack.c.bf16 %v329, %v329
      %v344 = vpack.c.bf16 %v328, %v328
      %v345 = vpack.c.bf16 %v330, %v330
      %v346 = vld [vmem:[%s1] sm:$0xf]
      %v347 = vld [vmem:[%s2] sm:$0xff]
      %349 = vset.pattern.permute.xlu0 0
      %350 = vperm.xlu0 %349, %v347
      %v351 = vpop.permute.xlu0 %350
      %vm353 = vcmask 588800
      %v355 = vsel %vm353, %v346, 0
      %vm357 = vcmask 1043456
      %v359 = vsel %vm357, %v343, 0
      %v362 = vsel %vm357, %v344, 0
      %v365 = vsel %vm357, %v345, 0
      %367 = vmatprep.subr.bf16.mxu0 %v332
      %368 = vmatpush1.bf16.msra.mxu0 %v331
      %369 = vmatprep.subr.bf16.mxu0 %v335
      %370 = vmatpush1.bf16.msra.mxu0 %v334
      %371 = vmatprep.subr.bf16.mxu0 %v338
      %372 = vmatpush1.bf16.msra.mxu0 %v337
      %373 = vmatprep.subr.bf16.mxu0 %v341
      %374 = vmatpush1.bf16.msra.mxu0 %v340
      %375 = vmatprep.subr.bf16.mxu0 %v362
      %376 = vmatpush1.bf16.msra.mxu0 %v359
      %377 = vmatprep.subr.bf16.mxu0 0
      %378 = vmatpush1.bf16.msra.mxu0 0
      %379 = vmatprep.subr.bf16.mxu0 0
      %380 = vmatpush1.bf16.msra.mxu0 0
      %381 = vmatprep.subr.bf16.mxu0 0
      %382 = vmatpush1.bf16.msra.mxu0 0
      %383 = vmatprep.subr.bf16.mxu0 0
      %384 = vmatpush1.bf16.msra.mxu0 0
      %385 = vmatprep.subr.bf16.mxu0 0
      %386 = vmatpush1.bf16.msra.mxu0 0
      %387 = vmatprep.subr.bf16.mxu0 0
      %388 = vmatpush1.bf16.msra.mxu0 0
      %389 = vmatprep.subr.bf16.mxu0 0
      %390 = vmatpush1.bf16.msra.mxu0 0
      %391 = vmatprep.subr.bf16.mxu0 0
      %392 = vmatpush1.bf16.msra.mxu0 0
      %393 = vmatprep.subr.bf16.mxu0 0
      %394 = vmatpush1.bf16.msra.mxu0 0
      %395 = vmatprep.subr.bf16.mxu0 0
      %396 = vmatpush1.bf16.msra.mxu0 0
      %397 = vmatprep.subr.bf16.mxu0 0
      %398 = vmatpush1.bf16.msra.mxu0 0
      %399 = vmatprep.mubr.bf16.mxu0 0
      %400 = vmatmul.mubr.bf16.gmra.mrb[0].mxu0 %v355
      %v401 = vpop.f32.mrb[0].mxu0
      %v402 = vadd.f32 %v351, %v401
      %v403 = vpop.f32.mrb[0].mxu0
      %v404 = vadd.f32 %v351, %v403
      %v405 = vpop.f32.mrb[0].mxu0
      %v406 = vpop.f32.mrb[0].mxu0
      %407 = vdwg.mxu0
      %408 = vmatprep.subr.bf16.mxu0 0
      %409 = vmatpush1.bf16.msra.mxu0 %v333
      %410 = vmatprep.subr.bf16.mxu0 0
      %411 = vmatpush1.bf16.msra.mxu0 %v336
      %412 = vmatprep.subr.bf16.mxu0 0
      %413 = vmatpush1.bf16.msra.mxu0 %v339
      %414 = vmatprep.subr.bf16.mxu0 0
      %415 = vmatpush1.bf16.msra.mxu0 %v342
      %416 = vmatprep.subr.bf16.mxu0 0
      %417 = vmatpush1.bf16.msra.mxu0 %v365
      %418 = vmatprep.subr.bf16.mxu0 0
      %419 = vmatpush1.bf16.msra.mxu0 0
      %420 = vmatprep.subr.bf16.mxu0 0
      %421 = vmatpush1.bf16.msra.mxu0 0
      %422 = vmatprep.subr.bf16.mxu0 0
      %423 = vmatpush1.bf16.msra.mxu0 0
      %424 = vmatprep.subr.bf16.mxu0 0
      %425 = vmatpush1.bf16.msra.mxu0 0
      %426 = vmatprep.subr.bf16.mxu0 0
      %427 = vmatpush1.bf16.msra.mxu0 0
      %428 = vmatprep.subr.bf16.mxu0 0
      %429 = vmatpush1.bf16.msra.mxu0 0
      %430 = vmatprep.subr.bf16.mxu0 0
      %431 = vmatpush1.bf16.msra.mxu0 0
      %432 = vmatprep.subr.bf16.mxu0 0
      %433 = vmatpush1.bf16.msra.mxu0 0
      %434 = vmatprep.subr.bf16.mxu0 0
      %435 = vmatpush1.bf16.msra.mxu0 0
      %436 = vmatprep.subr.bf16.mxu0 0
      %437 = vmatpush1.bf16.msra.mxu0 0
      %438 = vmatprep.subr.bf16.mxu0 0
      %439 = vmatpush1.bf16.msra.mxu0 0
      %440 = vmatprep.mubr.bf16.mxu0 0
      %441 = vmatmul.mubr.bf16.gmra.mrb[0].mxu0 %v355
      %v442 = vpop.f32.mrb[0].mxu0
      %v443 = vadd.f32 %v351, %v442
      %v444 = vpop.f32.mrb[0].mxu0
      %v445 = vpop.f32.mrb[0].mxu0
      %v446 = vpop.f32.mrb[0].mxu0
      %447 = vdwg.mxu0
      %v448 = vld [vmem:[%s4] sm:$0xf]
      %v449 = vld [vmem:[%s4 + $0xc] sm:$0xf]
      %v450 = vld [vmem:[%s4 + $0x18] sm:$0xf]
      %v451 = vld [vmem:[%s4 + $0x24] sm:$0xf]
      %v452 = vld [vmem:[%s4 + $0x30] sm:$0xf]
      %v453 = vld [vmem:[%s4 + $0x3c] sm:$0xf]
      %v454 = vld [vmem:[%s4 + $0x48] sm:$0xf]
      %v455 = vld [vmem:[%s4 + $0x54] sm:$0xf]
      %v456 = vld [vmem:[%s4 + $0x60] sm:$0xf]
      %v457 = vld [vmem:[%s4 + $0x6c] sm:$0xf]
      %v458 = vld [vmem:[%s4 + $0x78] sm:$0xf]
      %v459 = vld [vmem:[%s4 + $0x84] sm:$0xf]
      %v460 = vld [vmem:[%s4 + $0x90] sm:$0xf]
      %v461 = vld [vmem:[%s4 + $0x9c] sm:$0xf]
      %v462 = vld [vmem:[%s4 + $0xa8] sm:$0xf]
      %v463 = vld [vmem:[%s4 + $0xb4] sm:$0xf]
      %v464 = vld [vmem:[%s4 + $0xc0] sm:$0xf]
      %v465 = vld [vmem:[%s4 + $0xcc] sm:$0xf]
      %v466 = vld [vmem:[%s4 + $0xd8] sm:$0xf]
      %v467 = vld [vmem:[%s4 + $0xe4] sm:$0xf]
      %v468 = vld [vmem:[%s4 + $0xf0] sm:$0xf]
      %v469 = vld [vmem:[%s4 + $0xfc] sm:$0xf]
      %v470 = vld [vmem:[%s4 + $0x108] sm:$0xf]
      %v471 = vld [vmem:[%s4 + $0x114] sm:$0xf]
      %v472 = vld [vmem:[%s4 + $0x120] sm:$0xf]
      %v473 = vld [vmem:[%s4 + $0x12c] sm:$0xf]
      %v474 = vld [vmem:[%s4 + $0x138] sm:$0xf]
      %v475 = vld [vmem:[%s4 + $0x144] sm:$0xf]
      %v476 = vld [vmem:[%s4 + $0x150] sm:$0xf]
      %v477 = vld [vmem:[%s4 + $0x15c] sm:$0xf]
      %v478 = vld [vmem:[%s4 + $0x168] sm:$0xf]
      %v479 = vld [vmem:[%s4 + $0x174] sm:$0xf]
      %v480 = vld [vmem:[%s4 + $0x180] sm:$0xf]
      %v481 = vld [vmem:[%s4 + $0x18c] sm:$0xf]
      %v482 = vld [vmem:[%s4 + $0x198] sm:$0xf]
      %v483 = vld [vmem:[%s4 + $0x1a4] sm:$0xf]
      %v484 = vld [vmem:[%s4 + $0x1b0] sm:$0xf]
      %v485 = vld [vmem:[%s4 + $0x1bc] sm:$0xf]
      %v486 = vld [vmem:[%s4 + $0x1c8] sm:$0xf]
      %v487 = vld [vmem:[%s4 + $0x1d4] sm:$0xf]
      %v488 = vld [vmem:[%s4 + $0x1e0] sm:$0xf]
      %v489 = vld [vmem:[%s4 + $0x1ec] sm:$0xf]
      %v490 = vld [vmem:[%s4 + $0x1f8] sm:$0xf]
      %v491 = vld [vmem:[%s4 + $0x204] sm:$0xf]
      %v492 = vld [vmem:[%s4 + $0x210] sm:$0xf]
      %v493 = vld [vmem:[%s4 + $0x21c] sm:$0xf]
      %v494 = vld [vmem:[%s4 + $0x228] sm:$0xf]
      %v495 = vld [vmem:[%s4 + $0x234] sm:$0xf]
      %v496 = vpack.c.bf16 %v402, %v402
      %v497 = vpack.c.bf16 %v404, %v404
      %v498 = vpack.c.bf16 %v443, %v443
      %v547 = vunpack.c.l.b16 %v448
      %v548 = vunpack.c.l.b16 %v449
      %v549 = vunpack.c.l.b16 %v450
      %v550 = vunpack.c.l.b16 %v451
      %v551 = vunpack.c.l.b16 %v452
      %v552 = vunpack.c.l.b16 %v453
      %v553 = vunpack.c.l.b16 %v454
      %v554 = vunpack.c.l.b16 %v455
      %v555 = vunpack.c.l.b16 %v456
      %v556 = vunpack.c.l.b16 %v457
      %v557 = vunpack.c.l.b16 %v458
      %v558 = vunpack.c.l.b16 %v459
      %v559 = vunpack.c.l.b16 %v460
      %v560 = vunpack.c.l.b16 %v461
      %v561 = vunpack.c.l.b16 %v462
      %v562 = vunpack.c.l.b16 %v463
      %v563 = vunpack.c.l.b16 %v464
      %v564 = vunpack.c.l.b16 %v465
      %v565 = vunpack.c.l.b16 %v466
      %v566 = vunpack.c.l.b16 %v467
      %v567 = vunpack.c.l.b16 %v468
      %v568 = vunpack.c.l.b16 %v469
      %v569 = vunpack.c.l.b16 %v470
      %v570 = vunpack.c.l.b16 %v471
      %v571 = vunpack.c.l.b16 %v472
      %v572 = vunpack.c.l.b16 %v473
      %v573 = vunpack.c.l.b16 %v474
      %v574 = vunpack.c.l.b16 %v475
      %v575 = vunpack.c.l.b16 %v476
      %v576 = vunpack.c.l.b16 %v477
      %v577 = vunpack.c.l.b16 %v478
      %v578 = vunpack.c.l.b16 %v479
      %v579 = vunpack.c.l.b16 %v480
      %v580 = vunpack.c.l.b16 %v481
      %v581 = vunpack.c.l.b16 %v482
      %v582 = vunpack.c.l.b16 %v483
      %v583 = vunpack.c.l.b16 %v484
      %v584 = vunpack.c.l.b16 %v485
      %v585 = vunpack.c.l.b16 %v486
      %v586 = vunpack.c.l.b16 %v487
      %v587 = vunpack.c.l.b16 %v488
      %v588 = vunpack.c.l.b16 %v489
      %v589 = vunpack.c.l.b16 %v490
      %v590 = vunpack.c.l.b16 %v491
      %v591 = vunpack.c.l.b16 %v492
      %v592 = vunpack.c.l.b16 %v493
      %v593 = vunpack.c.l.b16 %v494
      %v594 = vunpack.c.l.b16 %v495
      %v595 = vpack.c.b16 %v548, %v547
      %v596 = vpack.c.b16 %v550, %v549
      %v597 = vpack.c.b16 %v552, %v551
      %v598 = vpack.c.b16 %v554, %v553
      %v599 = vpack.c.b16 %v556, %v555
      %v600 = vpack.c.b16 %v558, %v557
      %v601 = vpack.c.b16 %v560, %v559
      %v602 = vpack.c.b16 %v562, %v561
      %v603 = vpack.c.b16 %v564, %v563
      %v604 = vpack.c.b16 %v566, %v565
      %v605 = vpack.c.b16 %v568, %v567
      %v606 = vpack.c.b16 %v570, %v569
      %v607 = vpack.c.b16 %v572, %v571
      %v608 = vpack.c.b16 %v574, %v573
      %v609 = vpack.c.b16 %v576, %v575
      %v610 = vpack.c.b16 %v578, %v577
      %v611 = vpack.c.b16 %v580, %v579
      %v612 = vpack.c.b16 %v582, %v581
      %v613 = vpack.c.b16 %v584, %v583
      %v614 = vpack.c.b16 %v586, %v585
      %v615 = vpack.c.b16 %v588, %v587
      %v616 = vpack.c.b16 %v590, %v589
      %v617 = vpack.c.b16 %v592, %v591
      %v618 = vpack.c.b16 %v594, %v593
      %643 = vmatprep.subr.bf16.mxu0 0
      %644 = vmatpush1.bf16.msra.mxu0 %v595
      %645 = vmatprep.subr.bf16.mxu0 0
      %646 = vmatpush1.bf16.msra.mxu0 %v596
      %647 = vmatprep.subr.bf16.mxu0 0
      %648 = vmatpush1.bf16.msra.mxu0 %v597
      %649 = vmatprep.subr.bf16.mxu0 0
      %650 = vmatpush1.bf16.msra.mxu0 %v598
      %651 = vmatprep.subr.bf16.mxu0 0
      %652 = vmatpush1.bf16.msra.mxu0 %v599
      %653 = vmatprep.subr.bf16.mxu0 0
      %654 = vmatpush1.bf16.msra.mxu0 %v600
      %655 = vmatprep.subr.bf16.mxu0 0
      %656 = vmatpush1.bf16.msra.mxu0 %v601
      %657 = vmatprep.subr.bf16.mxu0 0
      %658 = vmatpush1.bf16.msra.mxu0 %v602
      %659 = vmatprep.subr.bf16.mxu0 0
      %660 = vmatpush1.bf16.msra.mxu0 %v603
      %661 = vmatprep.subr.bf16.mxu0 0
      %662 = vmatpush1.bf16.msra.mxu0 %v604
      %663 = vmatprep.subr.bf16.mxu0 0
      %664 = vmatpush1.bf16.msra.mxu0 %v605
      %665 = vmatprep.subr.bf16.mxu0 0
      %666 = vmatpush1.bf16.msra.mxu0 %v606
      %667 = vmatprep.subr.bf16.mxu0 0
      %668 = vmatpush1.bf16.msra.mxu0 %v607
      %669 = vmatprep.subr.bf16.mxu0 0
      %670 = vmatpush1.bf16.msra.mxu0 %v608
      %671 = vmatprep.subr.bf16.mxu0 0
      %672 = vmatpush1.bf16.msra.mxu0 %v609
      %673 = vmatprep.subr.bf16.mxu0 0
      %674 = vmatpush1.bf16.msra.mxu0 %v610
      %675 = vmatprep.mubr.bf16.mxu0 %v497
      %676 = vmatmul.mubr.bf16.gmra.mrb[0].mxu0 %v496
      %v677 = vpop.f32.mrb[0].mxu0
      %v678 = vadd.f32 0.0, %v677
      %v679 = vpop.f32.mrb[0].mxu0
      %v680 = vpop.f32.mrb[0].mxu0
      %v681 = vpop.f32.mrb[0].mxu0
      %682 = vdwg.mxu0
      %683 = vmatprep.subr.bf16.mxu0 0
      %684 = vmatpush1.bf16.msra.mxu0 %v611
      %685 = vmatprep.subr.bf16.mxu0 0
      %686 = vmatpush1.bf16.msra.mxu0 %v612
      %687 = vmatprep.subr.bf16.mxu0 0
      %688 = vmatpush1.bf16.msra.mxu0 %v613
      %689 = vmatprep.subr.bf16.mxu0 0
      %690 = vmatpush1.bf16.msra.mxu0 %v614
      %691 = vmatprep.subr.bf16.mxu0 0
      %692 = vmatpush1.bf16.msra.mxu0 %v615
      %693 = vmatprep.subr.bf16.mxu0 0
      %694 = vmatpush1.bf16.msra.mxu0 %v616
      %695 = vmatprep.subr.bf16.mxu0 0
      %696 = vmatpush1.bf16.msra.mxu0 %v617
      %697 = vmatprep.subr.bf16.mxu0 0
      %698 = vmatpush1.bf16.msra.mxu0 %v618
      %699 = vmatprep.subr.bf16.mxu0 0
      %700 = vmatpush1.bf16.msra.mxu0 0
      %701 = vmatprep.subr.bf16.mxu0 0
      %702 = vmatpush1.bf16.msra.mxu0 0
      %703 = vmatprep.subr.bf16.mxu0 0
      %704 = vmatpush1.bf16.msra.mxu0 0
      %705 = vmatprep.subr.bf16.mxu0 0
      %706 = vmatpush1.bf16.msra.mxu0 0
      %707 = vmatprep.subr.bf16.mxu0 0
      %708 = vmatpush1.bf16.msra.mxu0 0
      %709 = vmatprep.subr.bf16.mxu0 0
      %710 = vmatpush1.bf16.msra.mxu0 0
      %711 = vmatprep.subr.bf16.mxu0 0
      %712 = vmatpush1.bf16.msra.mxu0 0
      %713 = vmatprep.subr.bf16.mxu0 0
      %714 = vmatpush1.bf16.msra.mxu0 0
      %715 = vmatprep.mubr.bf16.mxu0 0
      %716 = vmatmul.mubr.bf16.gmra.mrb[0].mxu0 %v498
      %v717 = vpop.f32.mrb[0].mxu0
      %v718 = vadd.f32 %v678, %v717
      %v719 = vpop.f32.mrb[0].mxu0
      %v720 = vpop.f32.mrb[0].mxu0
      %v721 = vpop.f32.mrb[0].mxu0
      %722 = vdwg.mxu0
      %vm723 = vcmp.ge.f32.partialorder %v718, 0.0
      %v724 = vmul.f32 %v718, 0.01
      %v725 = vsel %vm723, %v718, %v724
      %v726 = vld [vmem:[%s3 + $0x3] sm:$0x1]
      %v728 = vlaneseq
      %v729 = vshrl.u32 %v728, 7
      %v730 = vsub.s32 0, %v729
      %v731 = vrot.slane %v726, %v730
      %v733 = vmul.f32 %v725, %v731
      %734 = vrot.lane.b32.xlu0 %v733, 11
      %v735 = vpop.permute.xlu0 %734
      %736 = vrot.lane.b32.xlu0 %v733, 10
      %v737 = vpop.permute.xlu0 %736
      %738 = vrot.lane.b32.xlu0 %v733, 9
      %v739 = vpop.permute.xlu0 %738
      %740 = vrot.lane.b32.xlu0 %v733, 1
      %v741 = vpop.permute.xlu0 %740
      %742 = vrot.lane.b32.xlu0 %v733, 127
      %v743 = vpop.permute.xlu0 %742
      %744 = vrot.lane.b32.xlu0 %v733, 119
      %v745 = vpop.permute.xlu0 %744
      %746 = vrot.lane.b32.xlu0 %v733, 118
      %v747 = vpop.permute.xlu0 %746
      %748 = vrot.lane.b32.xlu0 %v733, 117
      %v749 = vpop.permute.xlu0 %748
      %v750 = vpack.c.bf16 %v737, %v735
      %v751 = vpack.c.bf16 %v741, %v739
      %v752 = vpack.c.bf16 %v743, %v733
      %v753 = vpack.c.bf16 %v747, %v745
      %v754 = vpack.c.bf16 %v749, %v749
      %v755 = vld [vmem:[%s1 + $0x8] sm:$0xf]
      %756 = vset.pattern.permute.xlu0 1
      %757 = vperm.xlu0 %756, %v347
      %v758 = vpop.permute.xlu0 %757
      %v761 = vsel %vm353, %v755, 0
      %v764 = vsel %vm357, %v754, 0
      %766 = vmatprep.subr.bf16.mxu0 0
      %767 = vmatpush1.bf16.msra.mxu0 %v750
      %768 = vmatprep.subr.bf16.mxu0 0
      %769 = vmatpush1.bf16.msra.mxu0 %v751
      %770 = vmatprep.subr.bf16.mxu0 0
      %771 = vmatpush1.bf16.msra.mxu0 %v752
      %772 = vmatprep.subr.bf16.mxu0 0
      %773 = vmatpush1.bf16.msra.mxu0 %v753
      %774 = vmatprep.subr.bf16.mxu0 0
      %775 = vmatpush1.bf16.msra.mxu0 %v764
      %776 = vmatprep.subr.bf16.mxu0 0
      %777 = vmatpush1.bf16.msra.mxu0 0
      %778 = vmatprep.subr.bf16.mxu0 0
      %779 = vmatpush1.bf16.msra.mxu0 0
      %780 = vmatprep.subr.bf16.mxu0 0
      %781 = vmatpush1.bf16.msra.mxu0 0
      %782 = vmatprep.subr.bf16.mxu0 0
      %783 = vmatpush1.bf16.msra.mxu0 0
      %784 = vmatprep.subr.bf16.mxu0 0
      %785 = vmatpush1.bf16.msra.mxu0 0
      %786 = vmatprep.subr.bf16.mxu0 0
      %787 = vmatpush1.bf16.msra.mxu0 0
      %788 = vmatprep.subr.bf16.mxu0 0
      %789 = vmatpush1.bf16.msra.mxu0 0
      %790 = vmatprep.subr.bf16.mxu0 0
      %791 = vmatpush1.bf16.msra.mxu0 0
      %792 = vmatprep.subr.bf16.mxu0 0
      %793 = vmatpush1.bf16.msra.mxu0 0
      %794 = vmatprep.subr.bf16.mxu0 0
      %795 = vmatpush1.bf16.msra.mxu0 0
      %796 = vmatprep.subr.bf16.mxu0 0
      %797 = vmatpush1.bf16.msra.mxu0 0
      %798 = vmatprep.mubr.bf16.mxu0 0
      %799 = vmatmul.mubr.bf16.gmra.mrb[0].mxu0 %v761
      %v800 = vpop.f32.mrb[0].mxu0
      %v801 = vadd.f32 %v758, %v800
      %v802 = vpop.f32.mrb[0].mxu0
      %v803 = vpop.f32.mrb[0].mxu0
      %v804 = vpop.f32.mrb[0].mxu0
      %805 = vdwg.mxu0
      %v806 = vmul.f32 %v801, %v801
      %v807 = vld [vmem:[%s1 + $0x10] sm:$0xf]
      %v808 = vpack.c.bf16 %v806, %v806
      %809 = vset.pattern.permute.xlu0 2
      %810 = vperm.xlu0 %809, %v347
      %v811 = vpop.permute.xlu0 %810
      %vm813 = vcmask 64512
      %v815 = vsel %vm813, %v807, 0
      %v818 = vsel %vm357, %v808, 0
      %820 = vmatprep.subr.bf16.mxu0 0
      %821 = vmatpush1.bf16.msra.mxu0 %v818
      %822 = vmatprep.subr.bf16.mxu0 0
      %823 = vmatpush1.bf16.msra.mxu0 0
      %824 = vmatprep.subr.bf16.mxu0 0
      %825 = vmatpush1.bf16.msra.mxu0 0
      %826 = vmatprep.subr.bf16.mxu0 0
      %827 = vmatpush1.bf16.msra.mxu0 0
      %828 = vmatprep.subr.bf16.mxu0 0
      %829 = vmatpush1.bf16.msra.mxu0 0
      %830 = vmatprep.subr.bf16.mxu0 0
      %831 = vmatpush1.bf16.msra.mxu0 0
      %832 = vmatprep.subr.bf16.mxu0 0
      %833 = vmatpush1.bf16.msra.mxu0 0
      %834 = vmatprep.subr.bf16.mxu0 0
      %835 = vmatpush1.bf16.msra.mxu0 0
      %836 = vmatprep.subr.bf16.mxu0 0
      %837 = vmatpush1.bf16.msra.mxu0 0
      %838 = vmatprep.subr.bf16.mxu0 0
      %839 = vmatpush1.bf16.msra.mxu0 0
      %840 = vmatprep.subr.bf16.mxu0 0
      %841 = vmatpush1.bf16.msra.mxu0 0
      %842 = vmatprep.subr.bf16.mxu0 0
      %843 = vmatpush1.bf16.msra.mxu0 0
      %844 = vmatprep.subr.bf16.mxu0 0
      %845 = vmatpush1.bf16.msra.mxu0 0
      %846 = vmatprep.subr.bf16.mxu0 0
      %847 = vmatpush1.bf16.msra.mxu0 0
      %848 = vmatprep.subr.bf16.mxu0 0
      %849 = vmatpush1.bf16.msra.mxu0 0
      %850 = vmatprep.subr.bf16.mxu0 0
      %851 = vmatpush1.bf16.msra.mxu0 0
      %852 = vmatprep.mubr.bf16.mxu0 0
      %853 = vmatmul.mubr.bf16.gmra.mrb[0].mxu0 %v815
      %v854 = vpop.f32.mrb[0].mxu0
      %v855 = vadd.f32 %v811, %v854
      %v856 = vpop.f32.mrb[0].mxu0
      %v857 = vpop.f32.mrb[0].mxu0
      %v858 = vpop.f32.mrb[0].mxu0
      %859 = vdwg.mxu0
      %v860 = vrsqrt.pop %v855
      %v861 = vmul.f32 %v801, %v860
      %v862 = vpack.c.bf16 %v226, %v226
      %v863 = vpack.c.bf16 %v227, %v227
      %v864 = vpack.c.bf16 %v228, %v228
      %865 = vmatprep.subr.bf16.mxu0 0
      %866 = vmatpush1.bf16.msra.mxu0 %v595
      %867 = vmatprep.subr.bf16.mxu0 0
      %868 = vmatpush1.bf16.msra.mxu0 %v596
      %869 = vmatprep.subr.bf16.mxu0 0
      %870 = vmatpush1.bf16.msra.mxu0 %v597
      %871 = vmatprep.subr.bf16.mxu0 0
      %872 = vmatpush1.bf16.msra.mxu0 %v598
      %873 = vmatprep.subr.bf16.mxu0 0
      %874 = vmatpush1.bf16.msra.mxu0 %v599
      %875 = vmatprep.subr.bf16.mxu0 0
      %876 = vmatpush1.bf16.msra.mxu0 %v600
      %877 = vmatprep.subr.bf16.mxu0 0
      %878 = vmatpush1.bf16.msra.mxu0 %v601
      %879 = vmatprep.subr.bf16.mxu0 0
      %880 = vmatpush1.bf16.msra.mxu0 %v602
      %881 = vmatprep.subr.bf16.mxu0 0
      %882 = vmatpush1.bf16.msra.mxu0 %v603
      %883 = vmatprep.subr.bf16.mxu0 0
      %884 = vmatpush1.bf16.msra.mxu0 %v604
      %885 = vmatprep.subr.bf16.mxu0 0
      %886 = vmatpush1.bf16.msra.mxu0 %v605
      %887 = vmatprep.subr.bf16.mxu0 0
      %888 = vmatpush1.bf16.msra.mxu0 %v606
      %889 = vmatprep.subr.bf16.mxu0 0
      %890 = vmatpush1.bf16.msra.mxu0 %v607
      %891 = vmatprep.subr.bf16.mxu0 0
      %892 = vmatpush1.bf16.msra.mxu0 %v608
      %893 = vmatprep.subr.bf16.mxu0 0
      %894 = vmatpush1.bf16.msra.mxu0 %v609
      %895 = vmatprep.subr.bf16.mxu0 0
      %896 = vmatpush1.bf16.msra.mxu0 %v610
      %897 = vmatprep.mubr.bf16.mxu0 %v863
      %898 = vmatmul.mubr.bf16.gmra.mrb[0].mxu0 %v862
      %v899 = vpop.f32.mrb[0].mxu0
      %v900 = vadd.f32 0.0, %v899
      %v901 = vpop.f32.mrb[0].mxu0
      %v902 = vpop.f32.mrb[0].mxu0
      %v903 = vpop.f32.mrb[0].mxu0
      %904 = vdwg.mxu0
      %905 = vmatprep.subr.bf16.mxu0 0
      %906 = vmatpush1.bf16.msra.mxu0 %v611
      %907 = vmatprep.subr.bf16.mxu0 0
      %908 = vmatpush1.bf16.msra.mxu0 %v612
      %909 = vmatprep.subr.bf16.mxu0 0
      %910 = vmatpush1.bf16.msra.mxu0 %v613
      %911 = vmatprep.subr.bf16.mxu0 0
      %912 = vmatpush1.bf16.msra.mxu0 %v614
      %913 = vmatprep.subr.bf16.mxu0 0
      %914 = vmatpush1.bf16.msra.mxu0 %v615
      %915 = vmatprep.subr.bf16.mxu0 0
      %916 = vmatpush1.bf16.msra.mxu0 %v616
      %917 = vmatprep.subr.bf16.mxu0 0
      %918 = vmatpush1.bf16.msra.mxu0 %v617
      %919 = vmatprep.subr.bf16.mxu0 0
      %920 = vmatpush1.bf16.msra.mxu0 %v618
      %921 = vmatprep.subr.bf16.mxu0 0
      %922 = vmatpush1.bf16.msra.mxu0 0
      %923 = vmatprep.subr.bf16.mxu0 0
      %924 = vmatpush1.bf16.msra.mxu0 0
      %925 = vmatprep.subr.bf16.mxu0 0
      %926 = vmatpush1.bf16.msra.mxu0 0
      %927 = vmatprep.subr.bf16.mxu0 0
      %928 = vmatpush1.bf16.msra.mxu0 0
      %929 = vmatprep.subr.bf16.mxu0 0
      %930 = vmatpush1.bf16.msra.mxu0 0
      %931 = vmatprep.subr.bf16.mxu0 0
      %932 = vmatpush1.bf16.msra.mxu0 0
      %933 = vmatprep.subr.bf16.mxu0 0
      %934 = vmatpush1.bf16.msra.mxu0 0
      %935 = vmatprep.subr.bf16.mxu0 0
      %936 = vmatpush1.bf16.msra.mxu0 0
      %937 = vmatprep.mubr.bf16.mxu0 0
      %938 = vmatmul.mubr.bf16.gmra.mrb[0].mxu0 %v864
      %v939 = vpop.f32.mrb[0].mxu0
      %v940 = vadd.f32 %v900, %v939
      %v941 = vpop.f32.mrb[0].mxu0
      %v942 = vpop.f32.mrb[0].mxu0
      %v943 = vpop.f32.mrb[0].mxu0
      %944 = vdwg.mxu0
      %v945 = vld [vmem:[%s1 + $0x18] sm:$0xf]
      %v946 = vpack.c.bf16 %v940, %v940
      %947 = vset.pattern.permute.xlu0 3
      %948 = vperm.xlu0 %947, %v347
      %v949 = vpop.permute.xlu0 %948
      %v952 = vsel %vm813, %v945, 0
      %v955 = vsel %vm357, %v946, 0
      %957 = vmatprep.subr.bf16.mxu0 0
      %958 = vmatpush1.bf16.msra.mxu0 %v955
      %959 = vmatprep.subr.bf16.mxu0 0
      %960 = vmatpush1.bf16.msra.mxu0 0
      %961 = vmatprep.subr.bf16.mxu0 0
      %962 = vmatpush1.bf16.msra.mxu0 0
      %963 = vmatprep.subr.bf16.mxu0 0
      %964 = vmatpush1.bf16.msra.mxu0 0
      %965 = vmatprep.subr.bf16.mxu0 0
      %966 = vmatpush1.bf16.msra.mxu0 0
      %967 = vmatprep.subr.bf16.mxu0 0
      %968 = vmatpush1.bf16.msra.mxu0 0
      %969 = vmatprep.subr.bf16.mxu0 0
      %970 = vmatpush1.bf16.msra.mxu0 0
      %971 = vmatprep.subr.bf16.mxu0 0
      %972 = vmatpush1.bf16.msra.mxu0 0
      %973 = vmatprep.subr.bf16.mxu0 0
      %974 = vmatpush1.bf16.msra.mxu0 0
      %975 = vmatprep.subr.bf16.mxu0 0
      %976 = vmatpush1.bf16.msra.mxu0 0
      %977 = vmatprep.subr.bf16.mxu0 0
      %978 = vmatpush1.bf16.msra.mxu0 0
      %979 = vmatprep.subr.bf16.mxu0 0
      %980 = vmatpush1.bf16.msra.mxu0 0
      %981 = vmatprep.subr.bf16.mxu0 0
      %982 = vmatpush1.bf16.msra.mxu0 0
      %983 = vmatprep.subr.bf16.mxu0 0
      %984 = vmatpush1.bf16.msra.mxu0 0
      %985 = vmatprep.subr.bf16.mxu0 0
      %986 = vmatpush1.bf16.msra.mxu0 0
      %987 = vmatprep.subr.bf16.mxu0 0
      %988 = vmatpush1.bf16.msra.mxu0 0
      %989 = vmatprep.mubr.bf16.mxu0 0
      %990 = vmatmul.mubr.bf16.gmra.mrb[0].mxu0 %v952
      %v991 = vpop.f32.mrb[0].mxu0
      %v992 = vadd.f32 %v949, %v991
      %v993 = vpop.f32.mrb[0].mxu0
      %v994 = vpop.f32.mrb[0].mxu0
      %v995 = vpop.f32.mrb[0].mxu0
      %996 = vdwg.mxu0
      %v997 = vadd.f32 %v861, %v992
      %998 = vset.pattern.permute.xlu0 57
      %999 = vperm.xlu0 %998, %v347
      %v1000 = vpop.permute.xlu0 %999
      %v1002 = vmul.f32 %v997, %v1000
      %v1003 = vmul.f32 %v1002, %v731
      %1004 = vrot.lane.b32.xlu0 %v1003, 11
      %v1005 = vpop.permute.xlu0 %1004
      %1006 = vrot.lane.b32.xlu0 %v1003, 10
      %v1007 = vpop.permute.xlu0 %1006
      %1008 = vrot.lane.b32.xlu0 %v1003, 9
      %v1009 = vpop.permute.xlu0 %1008
      %1010 = vrot.lane.b32.xlu0 %v1003, 1
      %v1011 = vpop.permute.xlu0 %1010
      %1012 = vrot.lane.b32.xlu0 %v1003, 127
      %v1013 = vpop.permute.xlu0 %1012
      %1014 = vrot.lane.b32.xlu0 %v1003, 119
      %v1015 = vpop.permute.xlu0 %1014
      %1016 = vrot.lane.b32.xlu0 %v1003, 118
      %v1017 = vpop.permute.xlu0 %1016
      %1018 = vrot.lane.b32.xlu0 %v1003, 117
      %v1019 = vpop.permute.xlu0 %1018
      %v1020 = vpack.c.bf16 %v1007, %v1005
      %v1021 = vpack.c.bf16 %v1011, %v1009
      %v1022 = vpack.c.bf16 %v1013, %v1003
      %v1023 = vpack.c.bf16 %v1017, %v1015
      %v1024 = vpack.c.bf16 %v1019, %v1019
      %v1025 = vld [vmem:[%s1 + $0x20] sm:$0xf]
      %1026 = vset.pattern.permute.xlu0 4
      %1027 = vperm.xlu0 %1026, %v347
      %v1028 = vpop.permute.xlu0 %1027
      %v1031 = vsel %vm353, %v1025, 0
      %v1034 = vsel %vm357, %v1024, 0
      %1036 = vmatprep.subr.bf16.mxu0 0
      %1037 = vmatpush1.bf16.msra.mxu0 %v1020
      %1038 = vmatprep.subr.bf16.mxu0 0
      %1039 = vmatpush1.bf16.msra.mxu0 %v1021
      %1040 = vmatprep.subr.bf16.mxu0 0
      %1041 = vmatpush1.bf16.msra.mxu0 %v1022
      %1042 = vmatprep.subr.bf16.mxu0 0
      %1043 = vmatpush1.bf16.msra.mxu0 %v1023
      %1044 = vmatprep.subr.bf16.mxu0 0
      %1045 = vmatpush1.bf16.msra.mxu0 %v1034
      %1046 = vmatprep.subr.bf16.mxu0 0
      %1047 = vmatpush1.bf16.msra.mxu0 0
      %1048 = vmatprep.subr.bf16.mxu0 0
      %1049 = vmatpush1.bf16.msra.mxu0 0
      %1050 = vmatprep.subr.bf16.mxu0 0
      %1051 = vmatpush1.bf16.msra.mxu0 0
      %1052 = vmatprep.subr.bf16.mxu0 0
      %1053 = vmatpush1.bf16.msra.mxu0 0
      %1054 = vmatprep.subr.bf16.mxu0 0
      %1055 = vmatpush1.bf16.msra.mxu0 0
      %1056 = vmatprep.subr.bf16.mxu0 0
      %1057 = vmatpush1.bf16.msra.mxu0 0
      %1058 = vmatprep.subr.bf16.mxu0 0
      %1059 = vmatpush1.bf16.msra.mxu0 0
      %1060 = vmatprep.subr.bf16.mxu0 0
      %1061 = vmatpush1.bf16.msra.mxu0 0
      %1062 = vmatprep.subr.bf16.mxu0 0
      %1063 = vmatpush1.bf16.msra.mxu0 0
      %1064 = vmatprep.subr.bf16.mxu0 0
      %1065 = vmatpush1.bf16.msra.mxu0 0
      %1066 = vmatprep.subr.bf16.mxu0 0
      %1067 = vmatpush1.bf16.msra.mxu0 0
      %1068 = vmatprep.mubr.bf16.mxu0 0
      %1069 = vmatmul.mubr.bf16.gmra.mrb[0].mxu0 %v1031
      %v1070 = vpop.f32.mrb[0].mxu0
      %v1071 = vadd.f32 %v1028, %v1070
      %v1072 = vpop.f32.mrb[0].mxu0
      %v1073 = vpop.f32.mrb[0].mxu0
      %v1074 = vpop.f32.mrb[0].mxu0
      %1075 = vdwg.mxu0
      %vm1076 = vcmp.ge.f32.partialorder %v1071, 0.0
      %v1077 = vmul.f32 %v1071, 0.01
      %v1078 = vsel %vm1076, %v1071, %v1077
      %v1079 = vmul.f32 %v1078, %v731
      %1080 = vrot.lane.b32.xlu0 %v1079, 11
      %v1081 = vpop.permute.xlu0 %1080
      %1082 = vrot.lane.b32.xlu0 %v1079, 10
      %v1083 = vpop.permute.xlu0 %1082
      %1084 = vrot.lane.b32.xlu0 %v1079, 9
      %v1085 = vpop.permute.xlu0 %1084
      %1086 = vrot.lane.b32.xlu0 %v1079, 1
      %v1087 = vpop.permute.xlu0 %1086
      %1088 = vrot.lane.b32.xlu0 %v1079, 127
      %v1089 = vpop.permute.xlu0 %1088
      %1090 = vrot.lane.b32.xlu0 %v1079, 119
      %v1091 = vpop.permute.xlu0 %1090
      %1092 = vrot.lane.b32.xlu0 %v1079, 118
      %v1093 = vpop.permute.xlu0 %1092
      %1094 = vrot.lane.b32.xlu0 %v1079, 117
      %v1095 = vpop.permute.xlu0 %1094
      %v1096 = vpack.c.bf16 %v1083, %v1081
      %v1097 = vpack.c.bf16 %v1087, %v1085
      %v1098 = vpack.c.bf16 %v1089, %v1079
      %v1099 = vpack.c.bf16 %v1093, %v1091
      %v1100 = vpack.c.bf16 %v1095, %v1095
      %v1101 = vld [vmem:[%s1 + $0x28] sm:$0xf]
      %1102 = vset.pattern.permute.xlu0 5
      %1103 = vperm.xlu0 %1102, %v347
      %v1104 = vpop.permute.xlu0 %1103
      %v1107 = vsel %vm353, %v1101, 0
      %v1110 = vsel %vm357, %v1100, 0
      %1112 = vmatprep.subr.bf16.mxu0 0
      %1113 = vmatpush1.bf16.msra.mxu0 %v1096
      %1114 = vmatprep.subr.bf16.mxu0 0
      %1115 = vmatpush1.bf16.msra.mxu0 %v1097
      %1116 = vmatprep.subr.bf16.mxu0 0
      %1117 = vmatpush1.bf16.msra.mxu0 %v1098
      %1118 = vmatprep.subr.bf16.mxu0 0
      %1119 = vmatpush1.bf16.msra.mxu0 %v1099
      %1120 = vmatprep.subr.bf16.mxu0 0
      %1121 = vmatpush1.bf16.msra.mxu0 %v1110
      %1122 = vmatprep.subr.bf16.mxu0 0
      %1123 = vmatpush1.bf16.msra.mxu0 0
      %1124 = vmatprep.subr.bf16.mxu0 0
      %1125 = vmatpush1.bf16.msra.mxu0 0
      %1126 = vmatprep.subr.bf16.mxu0 0
      %1127 = vmatpush1.bf16.msra.mxu0 0
      %1128 = vmatprep.subr.bf16.mxu0 0
      %1129 = vmatpush1.bf16.msra.mxu0 0
      %1130 = vmatprep.subr.bf16.mxu0 0
      %1131 = vmatpush1.bf16.msra.mxu0 0
      %1132 = vmatprep.subr.bf16.mxu0 0
      %1133 = vmatpush1.bf16.msra.mxu0 0
      %1134 = vmatprep.subr.bf16.mxu0 0
      %1135 = vmatpush1.bf16.msra.mxu0 0
      %1136 = vmatprep.subr.bf16.mxu0 0
      %1137 = vmatpush1.bf16.msra.mxu0 0
      %1138 = vmatprep.subr.bf16.mxu0 0
      %1139 = vmatpush1.bf16.msra.mxu0 0
      %1140 = vmatprep.subr.bf16.mxu0 0
      %1141 = vmatpush1.bf16.msra.mxu0 0
      %1142 = vmatprep.subr.bf16.mxu0 0
      %1143 = vmatpush1.bf16.msra.mxu0 0
      %1144 = vmatprep.mubr.bf16.mxu0 0
      %1145 = vmatmul.mubr.bf16.gmra.mrb[0].mxu0 %v1107
      %v1146 = vpop.f32.mrb[0].mxu0
      %v1147 = vadd.f32 %v1104, %v1146
      %v1148 = vpop.f32.mrb[0].mxu0
      %v1149 = vpop.f32.mrb[0].mxu0
      %v1150 = vpop.f32.mrb[0].mxu0
      %1151 = vdwg.mxu0
      %vm1152 = vcmp.ge.f32.partialorder %v1147, 0.0
      %v1153 = vmul.f32 %v1147, 0.01
      %v1154 = vsel %vm1152, %v1147, %v1153
      %v1155 = vadd.f32 %v1154, %v1002
      %1156 = vset.pattern.permute.xlu0 58
      %1157 = vperm.xlu0 %1156, %v347
      %v1158 = vpop.permute.xlu0 %1157
      %v1160 = vmul.f32 %v1155, %v1158
      %v1161 = vmul.f32 %v1160, %v731
      %1162 = vrot.lane.b32.xlu0 %v1161, 11
      %v1163 = vpop.permute.xlu0 %1162
      %1164 = vrot.lane.b32.xlu0 %v1161, 10
      %v1165 = vpop.permute.xlu0 %1164
      %1166 = vrot.lane.b32.xlu0 %v1161, 9
      %v1167 = vpop.permute.xlu0 %1166
      %1168 = vrot.lane.b32.xlu0 %v1161, 1
      %v1169 = vpop.permute.xlu0 %1168
      %1170 = vrot.lane.b32.xlu0 %v1161, 127
      %v1171 = vpop.permute.xlu0 %1170
      %1172 = vrot.lane.b32.xlu0 %v1161, 119
      %v1173 = vpop.permute.xlu0 %1172
      %1174 = vrot.lane.b32.xlu0 %v1161, 118
      %v1175 = vpop.permute.xlu0 %1174
      %1176 = vrot.lane.b32.xlu0 %v1161, 117
      %v1177 = vpop.permute.xlu0 %1176
      %v1178 = vpack.c.bf16 %v1165, %v1163
      %v1179 = vpack.c.bf16 %v1169, %v1167
      %v1180 = vpack.c.bf16 %v1171, %v1161
      %v1181 = vpack.c.bf16 %v1175, %v1173
      %v1182 = vpack.c.bf16 %v1177, %v1177
      %v1183 = vld [vmem:[%s1 + $0x30] sm:$0xf]
      %1184 = vset.pattern.permute.xlu0 6
      %1185 = vperm.xlu0 %1184, %v347
      %v1186 = vpop.permute.xlu0 %1185
      %v1189 = vsel %vm353, %v1183, 0
      %v1192 = vsel %vm357, %v1182, 0
      %1194 = vmatprep.subr.bf16.mxu0 0
      %1195 = vmatpush1.bf16.msra.mxu0 %v1178
      %1196 = vmatprep.subr.bf16.mxu0 0
      %1197 = vmatpush1.bf16.msra.mxu0 %v1179
      %1198 = vmatprep.subr.bf16.mxu0 0
      %1199 = vmatpush1.bf16.msra.mxu0 %v1180
      %1200 = vmatprep.subr.bf16.mxu0 0
      %1201 = vmatpush1.bf16.msra.mxu0 %v1181
      %1202 = vmatprep.subr.bf16.mxu0 0
      %1203 = vmatpush1.bf16.msra.mxu0 %v1192
      %1204 = vmatprep.subr.bf16.mxu0 0
      %1205 = vmatpush1.bf16.msra.mxu0 0
      %1206 = vmatprep.subr.bf16.mxu0 0
      %1207 = vmatpush1.bf16.msra.mxu0 0
      %1208 = vmatprep.subr.bf16.mxu0 0
      %1209 = vmatpush1.bf16.msra.mxu0 0
      %1210 = vmatprep.subr.bf16.mxu0 0
      %1211 = vmatpush1.bf16.msra.mxu0 0
      %1212 = vmatprep.subr.bf16.mxu0 0
      %1213 = vmatpush1.bf16.msra.mxu0 0
      %1214 = vmatprep.subr.bf16.mxu0 0
      %1215 = vmatpush1.bf16.msra.mxu0 0
      %1216 = vmatprep.subr.bf16.mxu0 0
      %1217 = vmatpush1.bf16.msra.mxu0 0
      %1218 = vmatprep.subr.bf16.mxu0 0
      %1219 = vmatpush1.bf16.msra.mxu0 0
      %1220 = vmatprep.subr.bf16.mxu0 0
      %1221 = vmatpush1.bf16.msra.mxu0 0
      %1222 = vmatprep.subr.bf16.mxu0 0
      %1223 = vmatpush1.bf16.msra.mxu0 0
      %1224 = vmatprep.subr.bf16.mxu0 0
      %1225 = vmatpush1.bf16.msra.mxu0 0
      %1226 = vmatprep.mubr.bf16.mxu0 0
      %1227 = vmatmul.mubr.bf16.gmra.mrb[0].mxu0 %v1189
      %v1228 = vpop.f32.mrb[0].mxu0
      %v1229 = vadd.f32 %v1186, %v1228
      %v1230 = vpop.f32.mrb[0].mxu0
      %v1231 = vpop.f32.mrb[0].mxu0
      %v1232 = vpop.f32.mrb[0].mxu0
      %1233 = vdwg.mxu0
      %v1234 = vld [vmem:[%s4 + $0x4] sm:$0xf]
      %v1235 = vld [vmem:[%s4 + $0x10] sm:$0xf]
      %v1236 = vld [vmem:[%s4 + $0x1c] sm:$0xf]
      %v1237 = vld [vmem:[%s4 + $0x28] sm:$0xf]
      %v1238 = vld [vmem:[%s4 + $0x34] sm:$0xf]
      %v1239 = vld [vmem:[%s4 + $0x40] sm:$0xf]
      %v1240 = vld [vmem:[%s4 + $0x4c] sm:$0xf]
      %v1241 = vld [vmem:[%s4 + $0x58] sm:$0xf]
      %v1242 = vld [vmem:[%s4 + $0x64] sm:$0xf]
      %v1243 = vld [vmem:[%s4 + $0x70] sm:$0xf]
      %v1244 = vld [vmem:[%s4 + $0x7c] sm:$0xf]
      %v1245 = vld [vmem:[%s4 + $0x88] sm:$0xf]
      %v1246 = vld [vmem:[%s4 + $0x94] sm:$0xf]
      %v1247 = vld [vmem:[%s4 + $0xa0] sm:$0xf]
      %v1248 = vld [vmem:[%s4 + $0xac] sm:$0xf]
      %v1249 = vld [vmem:[%s4 + $0xb8] sm:$0xf]
      %v1250 = vpack.c.bf16 %v1229, %v1229
      %v1267 = vunpack.c.l.b16 %v1234
      %v1268 = vunpack.c.l.b16 %v1235
      %v1269 = vunpack.c.l.b16 %v1236
      %v1270 = vunpack.c.l.b16 %v1237
      %v1271 = vunpack.c.l.b16 %v1238
      %v1272 = vunpack.c.l.b16 %v1239
      %v1273 = vunpack.c.l.b16 %v1240
      %v1274 = vunpack.c.l.b16 %v1241
      %v1275 = vunpack.c.l.b16 %v1242
      %v1276 = vunpack.c.l.b16 %v1243
      %v1277 = vunpack.c.l.b16 %v1244
      %v1278 = vunpack.c.l.b16 %v1245
      %v1279 = vunpack.c.l.b16 %v1246
      %v1280 = vunpack.c.l.b16 %v1247
      %v1281 = vunpack.c.l.b16 %v1248
      %v1282 = vunpack.c.l.b16 %v1249
      %v1283 = vpack.c.b16 %v1268, %v1267
      %v1284 = vpack.c.b16 %v1270, %v1269
      %v1285 = vpack.c.b16 %v1272, %v1271
      %v1286 = vpack.c.b16 %v1274, %v1273
      %v1287 = vpack.c.b16 %v1276, %v1275
      %v1288 = vpack.c.b16 %v1278, %v1277
      %v1289 = vpack.c.b16 %v1280, %v1279
      %v1290 = vpack.c.b16 %v1282, %v1281
      %1299 = vmatprep.subr.bf16.mxu0 0
      %1300 = vmatpush1.bf16.msra.mxu0 %v1283
      %1301 = vmatprep.subr.bf16.mxu0 0
      %1302 = vmatpush1.bf16.msra.mxu0 %v1284
      %1303 = vmatprep.subr.bf16.mxu0 0
      %1304 = vmatpush1.bf16.msra.mxu0 %v1285
      %1305 = vmatprep.subr.bf16.mxu0 0
      %1306 = vmatpush1.bf16.msra.mxu0 %v1286
      %1307 = vmatprep.subr.bf16.mxu0 0
      %1308 = vmatpush1.bf16.msra.mxu0 %v1287
      %1309 = vmatprep.subr.bf16.mxu0 0
      %1310 = vmatpush1.bf16.msra.mxu0 %v1288
      %1311 = vmatprep.subr.bf16.mxu0 0
      %1312 = vmatpush1.bf16.msra.mxu0 %v1289
      %1313 = vmatprep.subr.bf16.mxu0 0
      %1314 = vmatpush1.bf16.msra.mxu0 %v1290
      %1315 = vmatprep.subr.bf16.mxu0 0
      %1316 = vmatpush1.bf16.msra.mxu0 0
      %1317 = vmatprep.subr.bf16.mxu0 0
      %1318 = vmatpush1.bf16.msra.mxu0 0
      %1319 = vmatprep.subr.bf16.mxu0 0
      %1320 = vmatpush1.bf16.msra.mxu0 0
      %1321 = vmatprep.subr.bf16.mxu0 0
      %1322 = vmatpush1.bf16.msra.mxu0 0
      %1323 = vmatprep.subr.bf16.mxu0 0
      %1324 = vmatpush1.bf16.msra.mxu0 0
      %1325 = vmatprep.subr.bf16.mxu0 0
      %1326 = vmatpush1.bf16.msra.mxu0 0
      %1327 = vmatprep.subr.bf16.mxu0 0
      %1328 = vmatpush1.bf16.msra.mxu0 0
      %1329 = vmatprep.subr.bf16.mxu0 0
      %1330 = vmatpush1.bf16.msra.mxu0 0
      %1331 = vmatprep.mubr.bf16.mxu0 0
      %1332 = vmatmul.mubr.bf16.gmra.mrb[0].mxu0 %v1250
      %v1333 = vpop.f32.mrb[0].mxu0
      %v1334 = vadd.f32 0.0, %v1333
      %v1335 = vpop.f32.mrb[0].mxu0
      %v1336 = vpop.f32.mrb[0].mxu0
      %v1337 = vpop.f32.mrb[0].mxu0
      %1338 = vdwg.mxu0
      %vm1339 = vcmp.ge.f32.partialorder %v1334, 0.0
      %v1340 = vmul.f32 %v1334, 0.01
      %v1341 = vsel %vm1339, %v1334, %v1340
      %v1342 = vld [vmem:[%s3 + $0x4] sm:$0x1]
      %v1344 = vlaneseq
      %v1345 = vshrl.u32 %v1344, 7
      %v1346 = vsub.s32 0, %v1345
      %v1347 = vrot.slane %v1342, %v1346
      %v1349 = vmul.f32 %v1341, %v1347
      %1350 = vrot.lane.b32.xlu0 %v1349, 7
      %v1351 = vpop.permute.xlu0 %1350
      %1352 = vrot.lane.b32.xlu0 %v1349, 6
      %v1353 = vpop.permute.xlu0 %1352
      %1354 = vrot.lane.b32.xlu0 %v1349, 5
      %v1355 = vpop.permute.xlu0 %1354
      %1356 = vrot.lane.b32.xlu0 %v1349, 1
      %v1357 = vpop.permute.xlu0 %1356
      %1358 = vrot.lane.b32.xlu0 %v1349, 127
      %v1359 = vpop.permute.xlu0 %1358
      %1360 = vrot.lane.b32.xlu0 %v1349, 123
      %v1361 = vpop.permute.xlu0 %1360
      %1362 = vrot.lane.b32.xlu0 %v1349, 122
      %v1363 = vpop.permute.xlu0 %1362
      %1364 = vrot.lane.b32.xlu0 %v1349, 121
      %v1365 = vpop.permute.xlu0 %1364
      %v1366 = vpack.c.bf16 %v1353, %v1351
      %v1367 = vpack.c.bf16 %v1357, %v1355
      %v1368 = vpack.c.bf16 %v1359, %v1349
      %v1369 = vpack.c.bf16 %v1363, %v1361
      %v1370 = vpack.c.bf16 %v1365, %v1365
      %v1371 = vld [vmem:[%s1 + $0x38] sm:$0xf]
      %1372 = vset.pattern.permute.xlu0 7
      %1373 = vperm.xlu0 %1372, %v347
      %v1374 = vpop.permute.xlu0 %1373
      %v1377 = vsel %vm353, %v1371, 0
      %v1380 = vsel %vm357, %v1370, 0
      %1382 = vmatprep.subr.bf16.mxu0 0
      %1383 = vmatpush1.bf16.msra.mxu0 %v1366
      %1384 = vmatprep.subr.bf16.mxu0 0
      %1385 = vmatpush1.bf16.msra.mxu0 %v1367
      %1386 = vmatprep.subr.bf16.mxu0 0
      %1387 = vmatpush1.bf16.msra.mxu0 %v1368
      %1388 = vmatprep.subr.bf16.mxu0 0
      %1389 = vmatpush1.bf16.msra.mxu0 %v1369
      %1390 = vmatprep.subr.bf16.mxu0 0
      %1391 = vmatpush1.bf16.msra.mxu0 %v1380
      %1392 = vmatprep.subr.bf16.mxu0 0
      %1393 = vmatpush1.bf16.msra.mxu0 0
      %1394 = vmatprep.subr.bf16.mxu0 0
      %1395 = vmatpush1.bf16.msra.mxu0 0
      %1396 = vmatprep.subr.bf16.mxu0 0
      %1397 = vmatpush1.bf16.msra.mxu0 0
      %1398 = vmatprep.subr.bf16.mxu0 0
      %1399 = vmatpush1.bf16.msra.mxu0 0
      %1400 = vmatprep.subr.bf16.mxu0 0
      %1401 = vmatpush1.bf16.msra.mxu0 0
      %1402 = vmatprep.subr.bf16.mxu0 0
      %1403 = vmatpush1.bf16.msra.mxu0 0
      %1404 = vmatprep.subr.bf16.mxu0 0
      %1405 = vmatpush1.bf16.msra.mxu0 0
      %1406 = vmatprep.subr.bf16.mxu0 0
      %1407 = vmatpush1.bf16.msra.mxu0 0
      %1408 = vmatprep.subr.bf16.mxu0 0
      %1409 = vmatpush1.bf16.msra.mxu0 0
      %1410 = vmatprep.subr.bf16.mxu0 0
      %1411 = vmatpush1.bf16.msra.mxu0 0
      %1412 = vmatprep.subr.bf16.mxu0 0
      %1413 = vmatpush1.bf16.msra.mxu0 0
      %1414 = vmatprep.mubr.bf16.mxu0 0
      %1415 = vmatmul.mubr.bf16.gmra.mrb[0].mxu0 %v1377
      %v1416 = vpop.f32.mrb[0].mxu0
      %v1417 = vadd.f32 %v1374, %v1416
      %v1418 = vpop.f32.mrb[0].mxu0
      %v1419 = vpop.f32.mrb[0].mxu0
      %v1420 = vpop.f32.mrb[0].mxu0
      %1421 = vdwg.mxu0
      %v1422 = vmul.f32 %v1417, %v1417
      %v1423 = vld [vmem:[%s1 + $0x40] sm:$0xf]
      %v1424 = vpack.c.bf16 %v1422, %v1422
      %1425 = vset.pattern.permute.xlu0 8
      %1426 = vperm.xlu0 %1425, %v347
      %v1427 = vpop.permute.xlu0 %1426
      %v1430 = vsel %vm813, %v1423, 0
      %v1433 = vsel %vm357, %v1424, 0
      %1435 = vmatprep.subr.bf16.mxu0 0
      %1436 = vmatpush1.bf16.msra.mxu0 %v1433
      %1437 = vmatprep.subr.bf16.mxu0 0
      %1438 = vmatpush1.bf16.msra.mxu0 0
      %1439 = vmatprep.subr.bf16.mxu0 0
      %1440 = vmatpush1.bf16.msra.mxu0 0
      %1441 = vmatprep.subr.bf16.mxu0 0
      %1442 = vmatpush1.bf16.msra.mxu0 0
      %1443 = vmatprep.subr.bf16.mxu0 0
      %1444 = vmatpush1.bf16.msra.mxu0 0
      %1445 = vmatprep.subr.bf16.mxu0 0
      %1446 = vmatpush1.bf16.msra.mxu0 0
      %1447 = vmatprep.subr.bf16.mxu0 0
      %1448 = vmatpush1.bf16.msra.mxu0 0
      %1449 = vmatprep.subr.bf16.mxu0 0
      %1450 = vmatpush1.bf16.msra.mxu0 0
      %1451 = vmatprep.subr.bf16.mxu0 0
      %1452 = vmatpush1.bf16.msra.mxu0 0
      %1453 = vmatprep.subr.bf16.mxu0 0
      %1454 = vmatpush1.bf16.msra.mxu0 0
      %1455 = vmatprep.subr.bf16.mxu0 0
      %1456 = vmatpush1.bf16.msra.mxu0 0
      %1457 = vmatprep.subr.bf16.mxu0 0
      %1458 = vmatpush1.bf16.msra.mxu0 0
      %1459 = vmatprep.subr.bf16.mxu0 0
      %1460 = vmatpush1.bf16.msra.mxu0 0
      %1461 = vmatprep.subr.bf16.mxu0 0
      %1462 = vmatpush1.bf16.msra.mxu0 0
      %1463 = vmatprep.subr.bf16.mxu0 0
      %1464 = vmatpush1.bf16.msra.mxu0 0
      %1465 = vmatprep.subr.bf16.mxu0 0
      %1466 = vmatpush1.bf16.msra.mxu0 0
      %1467 = vmatprep.mubr.bf16.mxu0 0
      %1468 = vmatmul.mubr.bf16.gmra.mrb[0].mxu0 %v1430
      %v1469 = vpop.f32.mrb[0].mxu0
      %v1470 = vadd.f32 %v1427, %v1469
      %v1471 = vpop.f32.mrb[0].mxu0
      %v1472 = vpop.f32.mrb[0].mxu0
      %v1473 = vpop.f32.mrb[0].mxu0
      %1474 = vdwg.mxu0
      %v1475 = vrsqrt.pop %v1470
      %v1476 = vmul.f32 %v1417, %v1475
      %v1477 = vpack.c.bf16 %v1160, %v1160
      %1478 = vmatprep.subr.bf16.mxu0 0
      %1479 = vmatpush1.bf16.msra.mxu0 %v1283
      %1480 = vmatprep.subr.bf16.mxu0 0
      %1481 = vmatpush1.bf16.msra.mxu0 %v1284
      %1482 = vmatprep.subr.bf16.mxu0 0
      %1483 = vmatpush1.bf16.msra.mxu0 %v1285
      %1484 = vmatprep.subr.bf16.mxu0 0
      %1485 = vmatpush1.bf16.msra.mxu0 %v1286
      %1486 = vmatprep.subr.bf16.mxu0 0
      %1487 = vmatpush1.bf16.msra.mxu0 %v1287
      %1488 = vmatprep.subr.bf16.mxu0 0
      %1489 = vmatpush1.bf16.msra.mxu0 %v1288
      %1490 = vmatprep.subr.bf16.mxu0 0
      %1491 = vmatpush1.bf16.msra.mxu0 %v1289
      %1492 = vmatprep.subr.bf16.mxu0 0
      %1493 = vmatpush1.bf16.msra.mxu0 %v1290
      %1494 = vmatprep.subr.bf16.mxu0 0
      %1495 = vmatpush1.bf16.msra.mxu0 0
      %1496 = vmatprep.subr.bf16.mxu0 0
      %1497 = vmatpush1.bf16.msra.mxu0 0
      %1498 = vmatprep.subr.bf16.mxu0 0
      %1499 = vmatpush1.bf16.msra.mxu0 0
      %1500 = vmatprep.subr.bf16.mxu0 0
      %1501 = vmatpush1.bf16.msra.mxu0 0
      %1502 = vmatprep.subr.bf16.mxu0 0
      %1503 = vmatpush1.bf16.msra.mxu0 0
      %1504 = vmatprep.subr.bf16.mxu0 0
      %1505 = vmatpush1.bf16.msra.mxu0 0
      %1506 = vmatprep.subr.bf16.mxu0 0
      %1507 = vmatpush1.bf16.msra.mxu0 0
      %1508 = vmatprep.subr.bf16.mxu0 0
      %1509 = vmatpush1.bf16.msra.mxu0 0
      %1510 = vmatprep.mubr.bf16.mxu0 0
      %1511 = vmatmul.mubr.bf16.gmra.mrb[0].mxu0 %v1477
      %v1512 = vpop.f32.mrb[0].mxu0
      %v1513 = vadd.f32 0.0, %v1512
      %v1514 = vpop.f32.mrb[0].mxu0
      %v1515 = vpop.f32.mrb[0].mxu0
      %v1516 = vpop.f32.mrb[0].mxu0
      %1517 = vdwg.mxu0
      %v1518 = vld [vmem:[%s1 + $0x48] sm:$0xf]
      %v1519 = vpack.c.bf16 %v1513, %v1513
      %1520 = vset.pattern.permute.xlu0 9
      %1521 = vperm.xlu0 %1520, %v347
      %v1522 = vpop.permute.xlu0 %1521
      %v1525 = vsel %vm813, %v1518, 0
      %v1528 = vsel %vm357, %v1519, 0
      %1530 = vmatprep.subr.bf16.mxu0 0
      %1531 = vmatpush1.bf16.msra.mxu0 %v1528
      %1532 = vmatprep.subr.bf16.mxu0 0
      %1533 = vmatpush1.bf16.msra.mxu0 0
      %1534 = vmatprep.subr.bf16.mxu0 0
      %1535 = vmatpush1.bf16.msra.mxu0 0
      %1536 = vmatprep.subr.bf16.mxu0 0
      %1537 = vmatpush1.bf16.msra.mxu0 0
      %1538 = vmatprep.subr.bf16.mxu0 0
      %1539 = vmatpush1.bf16.msra.mxu0 0
      %1540 = vmatprep.subr.bf16.mxu0 0
      %1541 = vmatpush1.bf16.msra.mxu0 0
      %1542 = vmatprep.subr.bf16.mxu0 0
      %1543 = vmatpush1.bf16.msra.mxu0 0
      %1544 = vmatprep.subr.bf16.mxu0 0
      %1545 = vmatpush1.bf16.msra.mxu0 0
      %1546 = vmatprep.subr.bf16.mxu0 0
      %1547 = vmatpush1.bf16.msra.mxu0 0
      %1548 = vmatprep.subr.bf16.mxu0 0
      %1549 = vmatpush1.bf16.msra.mxu0 0
      %1550 = vmatprep.subr.bf16.mxu0 0
      %1551 = vmatpush1.bf16.msra.mxu0 0
      %1552 = vmatprep.subr.bf16.mxu0 0
      %1553 = vmatpush1.bf16.msra.mxu0 0
      %1554 = vmatprep.subr.bf16.mxu0 0
      %1555 = vmatpush1.bf16.msra.mxu0 0
      %1556 = vmatprep.subr.bf16.mxu0 0
      %1557 = vmatpush1.bf16.msra.mxu0 0
      %1558 = vmatprep.subr.bf16.mxu0 0
      %1559 = vmatpush1.bf16.msra.mxu0 0
      %1560 = vmatprep.subr.bf16.mxu0 0
      %1561 = vmatpush1.bf16.msra.mxu0 0
      %1562 = vmatprep.mubr.bf16.mxu0 0
      %1563 = vmatmul.mubr.bf16.gmra.mrb[0].mxu0 %v1525
      %v1564 = vpop.f32.mrb[0].mxu0
      %v1565 = vadd.f32 %v1522, %v1564
      %v1566 = vpop.f32.mrb[0].mxu0
      %v1567 = vpop.f32.mrb[0].mxu0
      %v1568 = vpop.f32.mrb[0].mxu0
      %1569 = vdwg.mxu0
      %v1570 = vadd.f32 %v1476, %v1565
      %v1571 = vld [vmem:[%s1 + $0x50] sm:$0xf]
      %v1572 = vpack.c.bf16 %v1570, %v1570
      %1573 = vset.pattern.permute.xlu0 10
      %1574 = vperm.xlu0 %1573, %v347
      %v1575 = vpop.permute.xlu0 %1574
      %v1578 = vsel %vm813, %v1571, 0
      %v1581 = vsel %vm357, %v1572, 0
      %1583 = vmatprep.subr.bf16.mxu0 0
      %1584 = vmatpush1.bf16.msra.mxu0 %v1581
      %1585 = vmatprep.subr.bf16.mxu0 0
      %1586 = vmatpush1.bf16.msra.mxu0 0
      %1587 = vmatprep.subr.bf16.mxu0 0
      %1588 = vmatpush1.bf16.msra.mxu0 0
      %1589 = vmatprep.subr.bf16.mxu0 0
      %1590 = vmatpush1.bf16.msra.mxu0 0
      %1591 = vmatprep.subr.bf16.mxu0 0
      %1592 = vmatpush1.bf16.msra.mxu0 0
      %1593 = vmatprep.subr.bf16.mxu0 0
      %1594 = vmatpush1.bf16.msra.mxu0 0
      %1595 = vmatprep.subr.bf16.mxu0 0
      %1596 = vmatpush1.bf16.msra.mxu0 0
      %1597 = vmatprep.subr.bf16.mxu0 0
      %1598 = vmatpush1.bf16.msra.mxu0 0
      %1599 = vmatprep.subr.bf16.mxu0 0
      %1600 = vmatpush1.bf16.msra.mxu0 0
      %1601 = vmatprep.subr.bf16.mxu0 0
      %1602 = vmatpush1.bf16.msra.mxu0 0
      %1603 = vmatprep.subr.bf16.mxu0 0
      %1604 = vmatpush1.bf16.msra.mxu0 0
      %1605 = vmatprep.subr.bf16.mxu0 0
      %1606 = vmatpush1.bf16.msra.mxu0 0
      %1607 = vmatprep.subr.bf16.mxu0 0
      %1608 = vmatpush1.bf16.msra.mxu0 0
      %1609 = vmatprep.subr.bf16.mxu0 0
      %1610 = vmatpush1.bf16.msra.mxu0 0
      %1611 = vmatprep.subr.bf16.mxu0 0
      %1612 = vmatpush1.bf16.msra.mxu0 0
      %1613 = vmatprep.subr.bf16.mxu0 0
      %1614 = vmatpush1.bf16.msra.mxu0 0
      %1615 = vmatprep.mubr.bf16.mxu0 0
      %1616 = vmatmul.mubr.bf16.gmra.mrb[0].mxu0 %v1578
      %v1617 = vpop.f32.mrb[0].mxu0
      %v1618 = vadd.f32 %v1575, %v1617
      %v1619 = vpop.f32.mrb[0].mxu0
      %v1620 = vpop.f32.mrb[0].mxu0
      %v1621 = vpop.f32.mrb[0].mxu0
      %1622 = vdwg.mxu0
      %v1623 = vmax.f32 %v1618, 0.0
      %v1624 = vmul.f32 %v1623, %v1347
      %1625 = vrot.lane.b32.xlu0 %v1624, 7
      %v1626 = vpop.permute.xlu0 %1625
      %1627 = vrot.lane.b32.xlu0 %v1624, 6
      %v1628 = vpop.permute.xlu0 %1627
      %1629 = vrot.lane.b32.xlu0 %v1624, 5
      %v1630 = vpop.permute.xlu0 %1629
      %1631 = vrot.lane.b32.xlu0 %v1624, 1
      %v1632 = vpop.permute.xlu0 %1631
      %1633 = vrot.lane.b32.xlu0 %v1624, 127
      %v1634 = vpop.permute.xlu0 %1633
      %1635 = vrot.lane.b32.xlu0 %v1624, 123
      %v1636 = vpop.permute.xlu0 %1635
      %1637 = vrot.lane.b32.xlu0 %v1624, 122
      %v1638 = vpop.permute.xlu0 %1637
      %1639 = vrot.lane.b32.xlu0 %v1624, 121
      %v1640 = vpop.permute.xlu0 %1639
      %v1641 = vpack.c.bf16 %v1628, %v1626
      %v1642 = vpack.c.bf16 %v1632, %v1630
      %v1643 = vpack.c.bf16 %v1634, %v1624
      %v1644 = vpack.c.bf16 %v1638, %v1636
      %v1645 = vpack.c.bf16 %v1640, %v1640
      %v1646 = vld [vmem:[%s1 + $0x58] sm:$0xf]
      %1647 = vset.pattern.permute.xlu0 11
      %1648 = vperm.xlu0 %1647, %v347
      %v1649 = vpop.permute.xlu0 %1648
      %v1652 = vsel %vm353, %v1646, 0
      %v1655 = vsel %vm357, %v1645, 0
      %1657 = vmatprep.subr.bf16.mxu0 0
      %1658 = vmatpush1.bf16.msra.mxu0 %v1641
      %1659 = vmatprep.subr.bf16.mxu0 0
      %1660 = vmatpush1.bf16.msra.mxu0 %v1642
      %1661 = vmatprep.subr.bf16.mxu0 0
      %1662 = vmatpush1.bf16.msra.mxu0 %v1643
      %1663 = vmatprep.subr.bf16.mxu0 0
      %1664 = vmatpush1.bf16.msra.mxu0 %v1644
      %1665 = vmatprep.subr.bf16.mxu0 0
      %1666 = vmatpush1.bf16.msra.mxu0 %v1655
      %1667 = vmatprep.subr.bf16.mxu0 0
      %1668 = vmatpush1.bf16.msra.mxu0 0
      %1669 = vmatprep.subr.bf16.mxu0 0
      %1670 = vmatpush1.bf16.msra.mxu0 0
      %1671 = vmatprep.subr.bf16.mxu0 0
      %1672 = vmatpush1.bf16.msra.mxu0 0
      %1673 = vmatprep.subr.bf16.mxu0 0
      %1674 = vmatpush1.bf16.msra.mxu0 0
      %1675 = vmatprep.subr.bf16.mxu0 0
      %1676 = vmatpush1.bf16.msra.mxu0 0
      %1677 = vmatprep.subr.bf16.mxu0 0
      %1678 = vmatpush1.bf16.msra.mxu0 0
      %1679 = vmatprep.subr.bf16.mxu0 0
      %1680 = vmatpush1.bf16.msra.mxu0 0
      %1681 = vmatprep.subr.bf16.mxu0 0
      %1682 = vmatpush1.bf16.msra.mxu0 0
      %1683 = vmatprep.subr.bf16.mxu0 0
      %1684 = vmatpush1.bf16.msra.mxu0 0
      %1685 = vmatprep.subr.bf16.mxu0 0
      %1686 = vmatpush1.bf16.msra.mxu0 0
      %1687 = vmatprep.subr.bf16.mxu0 0
      %1688 = vmatpush1.bf16.msra.mxu0 0
      %1689 = vmatprep.mubr.bf16.mxu0 0
      %1690 = vmatmul.mubr.bf16.gmra.mrb[0].mxu0 %v1652
      %v1691 = vpop.f32.mrb[0].mxu0
      %v1692 = vadd.f32 %v1649, %v1691
      %v1693 = vpop.f32.mrb[0].mxu0
      %v1694 = vpop.f32.mrb[0].mxu0
      %v1695 = vpop.f32.mrb[0].mxu0
      %1696 = vdwg.mxu0
      %v1697 = vmax.f32 %v1692, 0.0
      %v1698 = vld [vmem:[%s1 + $0x60] sm:$0xf]
      %v1699 = vpack.c.bf16 %v1697, %v1697
      %1700 = vset.pattern.permute.xlu0 12
      %1701 = vperm.xlu0 %1700, %v347
      %v1702 = vpop.permute.xlu0 %1701
      %v1705 = vsel %vm813, %v1698, 0
      %v1708 = vsel %vm357, %v1699, 0
      %1710 = vmatprep.subr.bf16.mxu0 0
      %1711 = vmatpush1.bf16.msra.mxu0 %v1708
      %1712 = vmatprep.subr.bf16.mxu0 0
      %1713 = vmatpush1.bf16.msra.mxu0 0
      %1714 = vmatprep.subr.bf16.mxu0 0
      %1715 = vmatpush1.bf16.msra.mxu0 0
      %1716 = vmatprep.subr.bf16.mxu0 0
      %1717 = vmatpush1.bf16.msra.mxu0 0
      %1718 = vmatprep.subr.bf16.mxu0 0
      %1719 = vmatpush1.bf16.msra.mxu0 0
      %1720 = vmatprep.subr.bf16.mxu0 0
      %1721 = vmatpush1.bf16.msra.mxu0 0
      %1722 = vmatprep.subr.bf16.mxu0 0
      %1723 = vmatpush1.bf16.msra.mxu0 0
      %1724 = vmatprep.subr.bf16.mxu0 0
      %1725 = vmatpush1.bf16.msra.mxu0 0
      %1726 = vmatprep.subr.bf16.mxu0 0
      %1727 = vmatpush1.bf16.msra.mxu0 0
      %1728 = vmatprep.subr.bf16.mxu0 0
      %1729 = vmatpush1.bf16.msra.mxu0 0
      %1730 = vmatprep.subr.bf16.mxu0 0
      %1731 = vmatpush1.bf16.msra.mxu0 0
      %1732 = vmatprep.subr.bf16.mxu0 0
      %1733 = vmatpush1.bf16.msra.mxu0 0
      %1734 = vmatprep.subr.bf16.mxu0 0
      %1735 = vmatpush1.bf16.msra.mxu0 0
      %1736 = vmatprep.subr.bf16.mxu0 0
      %1737 = vmatpush1.bf16.msra.mxu0 0
      %1738 = vmatprep.subr.bf16.mxu0 0
      %1739 = vmatpush1.bf16.msra.mxu0 0
      %1740 = vmatprep.subr.bf16.mxu0 0
      %1741 = vmatpush1.bf16.msra.mxu0 0
      %1742 = vmatprep.mubr.bf16.mxu0 0
      %1743 = vmatmul.mubr.bf16.gmra.mrb[0].mxu0 %v1705
      %v1744 = vpop.f32.mrb[0].mxu0
      %v1745 = vadd.f32 %v1702, %v1744
      %v1746 = vpop.f32.mrb[0].mxu0
      %v1747 = vpop.f32.mrb[0].mxu0
      %v1748 = vpop.f32.mrb[0].mxu0
      %1749 = vdwg.mxu0
      %v1750 = vadd.f32 %v1745, %v1570
      %v1751 = vmax.f32 %v1750, 0.0
      %v1752 = vld [vmem:[%s1 + $0x68] sm:$0xf]
      %v1753 = vpack.c.bf16 %v1751, %v1751
      %1754 = vset.pattern.permute.xlu0 13
      %1755 = vperm.xlu0 %1754, %v347
      %v1756 = vpop.permute.xlu0 %1755
      %v1759 = vsel %vm813, %v1752, 0
      %v1762 = vsel %vm357, %v1753, 0
      %1764 = vmatprep.subr.bf16.mxu0 0
      %1765 = vmatpush1.bf16.msra.mxu0 %v1762
      %1766 = vmatprep.subr.bf16.mxu0 0
      %1767 = vmatpush1.bf16.msra.mxu0 0
      %1768 = vmatprep.subr.bf16.mxu0 0
      %1769 = vmatpush1.bf16.msra.mxu0 0
      %1770 = vmatprep.subr.bf16.mxu0 0
      %1771 = vmatpush1.bf16.msra.mxu0 0
      %1772 = vmatprep.subr.bf16.mxu0 0
      %1773 = vmatpush1.bf16.msra.mxu0 0
      %1774 = vmatprep.subr.bf16.mxu0 0
      %1775 = vmatpush1.bf16.msra.mxu0 0
      %1776 = vmatprep.subr.bf16.mxu0 0
      %1777 = vmatpush1.bf16.msra.mxu0 0
      %1778 = vmatprep.subr.bf16.mxu0 0
      %1779 = vmatpush1.bf16.msra.mxu0 0
      %1780 = vmatprep.subr.bf16.mxu0 0
      %1781 = vmatpush1.bf16.msra.mxu0 0
      %1782 = vmatprep.subr.bf16.mxu0 0
      %1783 = vmatpush1.bf16.msra.mxu0 0
      %1784 = vmatprep.subr.bf16.mxu0 0
      %1785 = vmatpush1.bf16.msra.mxu0 0
      %1786 = vmatprep.subr.bf16.mxu0 0
      %1787 = vmatpush1.bf16.msra.mxu0 0
      %1788 = vmatprep.subr.bf16.mxu0 0
      %1789 = vmatpush1.bf16.msra.mxu0 0
      %1790 = vmatprep.subr.bf16.mxu0 0
      %1791 = vmatpush1.bf16.msra.mxu0 0
      %1792 = vmatprep.subr.bf16.mxu0 0
      %1793 = vmatpush1.bf16.msra.mxu0 0
      %1794 = vmatprep.subr.bf16.mxu0 0
      %1795 = vmatpush1.bf16.msra.mxu0 0
      %1796 = vmatprep.mubr.bf16.mxu0 0
      %1797 = vmatmul.mubr.bf16.gmra.mrb[0].mxu0 %v1759
      %v1798 = vpop.f32.mrb[0].mxu0
      %v1799 = vadd.f32 %v1756, %v1798
      %v1800 = vpop.f32.mrb[0].mxu0
      %v1801 = vpop.f32.mrb[0].mxu0
      %v1802 = vpop.f32.mrb[0].mxu0
      %1803 = vdwg.mxu0
      %v1804 = vmax.f32 %v1799, 0.0
      %v1805 = vmul.f32 %v1804, %v1347
      %1806 = vrot.lane.b32.xlu0 %v1805, 7
      %v1807 = vpop.permute.xlu0 %1806
      %1808 = vrot.lane.b32.xlu0 %v1805, 6
      %v1809 = vpop.permute.xlu0 %1808
      %1810 = vrot.lane.b32.xlu0 %v1805, 5
      %v1811 = vpop.permute.xlu0 %1810
      %1812 = vrot.lane.b32.xlu0 %v1805, 1
      %v1813 = vpop.permute.xlu0 %1812
      %1814 = vrot.lane.b32.xlu0 %v1805, 127
      %v1815 = vpop.permute.xlu0 %1814
      %1816 = vrot.lane.b32.xlu0 %v1805, 123
      %v1817 = vpop.permute.xlu0 %1816
      %1818 = vrot.lane.b32.xlu0 %v1805, 122
      %v1819 = vpop.permute.xlu0 %1818
      %1820 = vrot.lane.b32.xlu0 %v1805, 121
      %v1821 = vpop.permute.xlu0 %1820
      %v1822 = vpack.c.bf16 %v1809, %v1807
      %v1823 = vpack.c.bf16 %v1813, %v1811
      %v1824 = vpack.c.bf16 %v1815, %v1805
      %v1825 = vpack.c.bf16 %v1819, %v1817
      %v1826 = vpack.c.bf16 %v1821, %v1821
      %v1827 = vld [vmem:[%s1 + $0x70] sm:$0xf]
      %1828 = vset.pattern.permute.xlu0 14
      %1829 = vperm.xlu0 %1828, %v347
      %v1830 = vpop.permute.xlu0 %1829
      %v1833 = vsel %vm353, %v1827, 0
      %v1836 = vsel %vm357, %v1826, 0
      %1838 = vmatprep.subr.bf16.mxu0 0
      %1839 = vmatpush1.bf16.msra.mxu0 %v1822
      %1840 = vmatprep.subr.bf16.mxu0 0
      %1841 = vmatpush1.bf16.msra.mxu0 %v1823
      %1842 = vmatprep.subr.bf16.mxu0 0
      %1843 = vmatpush1.bf16.msra.mxu0 %v1824
      %1844 = vmatprep.subr.bf16.mxu0 0
      %1845 = vmatpush1.bf16.msra.mxu0 %v1825
      %1846 = vmatprep.subr.bf16.mxu0 0
      %1847 = vmatpush1.bf16.msra.mxu0 %v1836
      %1848 = vmatprep.subr.bf16.mxu0 0
      %1849 = vmatpush1.bf16.msra.mxu0 0
      %1850 = vmatprep.subr.bf16.mxu0 0
      %1851 = vmatpush1.bf16.msra.mxu0 0
      %1852 = vmatprep.subr.bf16.mxu0 0
      %1853 = vmatpush1.bf16.msra.mxu0 0
      %1854 = vmatprep.subr.bf16.mxu0 0
      %1855 = vmatpush1.bf16.msra.mxu0 0
      %1856 = vmatprep.subr.bf16.mxu0 0
      %1857 = vmatpush1.bf16.msra.mxu0 0
      %1858 = vmatprep.subr.bf16.mxu0 0
      %1859 = vmatpush1.bf16.msra.mxu0 0
      %1860 = vmatprep.subr.bf16.mxu0 0
      %1861 = vmatpush1.bf16.msra.mxu0 0
      %1862 = vmatprep.subr.bf16.mxu0 0
      %1863 = vmatpush1.bf16.msra.mxu0 0
      %1864 = vmatprep.subr.bf16.mxu0 0
      %1865 = vmatpush1.bf16.msra.mxu0 0
      %1866 = vmatprep.subr.bf16.mxu0 0
      %1867 = vmatpush1.bf16.msra.mxu0 0
      %1868 = vmatprep.subr.bf16.mxu0 0
      %1869 = vmatpush1.bf16.msra.mxu0 0
      %1870 = vmatprep.mubr.bf16.mxu0 0
      %1871 = vmatmul.mubr.bf16.gmra.mrb[0].mxu0 %v1833
      %v1872 = vpop.f32.mrb[0].mxu0
      %v1873 = vadd.f32 %v1830, %v1872
      %v1874 = vpop.f32.mrb[0].mxu0
      %v1875 = vpop.f32.mrb[0].mxu0
      %v1876 = vpop.f32.mrb[0].mxu0
      %1877 = vdwg.mxu0
      %v1878 = vmax.f32 %v1873, 0.0
      %v1879 = vld [vmem:[%s1 + $0x78] sm:$0xf]
      %v1880 = vpack.c.bf16 %v1878, %v1878
      %1881 = vset.pattern.permute.xlu0 15
      %1882 = vperm.xlu0 %1881, %v347
      %v1883 = vpop.permute.xlu0 %1882
      %v1886 = vsel %vm813, %v1879, 0
      %v1889 = vsel %vm357, %v1880, 0
      %1891 = vmatprep.subr.bf16.mxu0 0
      %1892 = vmatpush1.bf16.msra.mxu0 %v1889
      %1893 = vmatprep.subr.bf16.mxu0 0
      %1894 = vmatpush1.bf16.msra.mxu0 0
      %1895 = vmatprep.subr.bf16.mxu0 0
      %1896 = vmatpush1.bf16.msra.mxu0 0
      %1897 = vmatprep.subr.bf16.mxu0 0
      %1898 = vmatpush1.bf16.msra.mxu0 0
      %1899 = vmatprep.subr.bf16.mxu0 0
      %1900 = vmatpush1.bf16.msra.mxu0 0
      %1901 = vmatprep.subr.bf16.mxu0 0
      %1902 = vmatpush1.bf16.msra.mxu0 0
      %1903 = vmatprep.subr.bf16.mxu0 0
      %1904 = vmatpush1.bf16.msra.mxu0 0
      %1905 = vmatprep.subr.bf16.mxu0 0
      %1906 = vmatpush1.bf16.msra.mxu0 0
      %1907 = vmatprep.subr.bf16.mxu0 0
      %1908 = vmatpush1.bf16.msra.mxu0 0
      %1909 = vmatprep.subr.bf16.mxu0 0
      %1910 = vmatpush1.bf16.msra.mxu0 0
      %1911 = vmatprep.subr.bf16.mxu0 0
      %1912 = vmatpush1.bf16.msra.mxu0 0
      %1913 = vmatprep.subr.bf16.mxu0 0
      %1914 = vmatpush1.bf16.msra.mxu0 0
      %1915 = vmatprep.subr.bf16.mxu0 0
      %1916 = vmatpush1.bf16.msra.mxu0 0
      %1917 = vmatprep.subr.bf16.mxu0 0
      %1918 = vmatpush1.bf16.msra.mxu0 0
      %1919 = vmatprep.subr.bf16.mxu0 0
      %1920 = vmatpush1.bf16.msra.mxu0 0
      %1921 = vmatprep.subr.bf16.mxu0 0
      %1922 = vmatpush1.bf16.msra.mxu0 0
      %1923 = vmatprep.mubr.bf16.mxu0 0
      %1924 = vmatmul.mubr.bf16.gmra.mrb[0].mxu0 %v1886
      %v1925 = vpop.f32.mrb[0].mxu0
      %v1926 = vadd.f32 %v1883, %v1925
      %v1927 = vpop.f32.mrb[0].mxu0
      %v1928 = vpop.f32.mrb[0].mxu0
      %v1929 = vpop.f32.mrb[0].mxu0
      %1930 = vdwg.mxu0
      %v1931 = vadd.f32 %v1926, %v1751
      %v1932 = vmax.f32 %v1931, 0.0
      %v1933 = vld [vmem:[%s1 + $0x80] sm:$0xf]
      %v1934 = vpack.c.bf16 %v1932, %v1932
      %1935 = vset.pattern.permute.xlu0 16
      %1936 = vperm.xlu0 %1935, %v347
      %v1937 = vpop.permute.xlu0 %1936
      %v1940 = vsel %vm813, %v1933, 0
      %v1943 = vsel %vm357, %v1934, 0
      %1945 = vmatprep.subr.bf16.mxu0 0
      %1946 = vmatpush1.bf16.msra.mxu0 %v1943
      %1947 = vmatprep.subr.bf16.mxu0 0
      %1948 = vmatpush1.bf16.msra.mxu0 0
      %1949 = vmatprep.subr.bf16.mxu0 0
      %1950 = vmatpush1.bf16.msra.mxu0 0
      %1951 = vmatprep.subr.bf16.mxu0 0
      %1952 = vmatpush1.bf16.msra.mxu0 0
      %1953 = vmatprep.subr.bf16.mxu0 0
      %1954 = vmatpush1.bf16.msra.mxu0 0
      %1955 = vmatprep.subr.bf16.mxu0 0
      %1956 = vmatpush1.bf16.msra.mxu0 0
      %1957 = vmatprep.subr.bf16.mxu0 0
      %1958 = vmatpush1.bf16.msra.mxu0 0
      %1959 = vmatprep.subr.bf16.mxu0 0
      %1960 = vmatpush1.bf16.msra.mxu0 0
      %1961 = vmatprep.subr.bf16.mxu0 0
      %1962 = vmatpush1.bf16.msra.mxu0 0
      %1963 = vmatprep.subr.bf16.mxu0 0
      %1964 = vmatpush1.bf16.msra.mxu0 0
      %1965 = vmatprep.subr.bf16.mxu0 0
      %1966 = vmatpush1.bf16.msra.mxu0 0
      %1967 = vmatprep.subr.bf16.mxu0 0
      %1968 = vmatpush1.bf16.msra.mxu0 0
      %1969 = vmatprep.subr.bf16.mxu0 0
      %1970 = vmatpush1.bf16.msra.mxu0 0
      %1971 = vmatprep.subr.bf16.mxu0 0
      %1972 = vmatpush1.bf16.msra.mxu0 0
      %1973 = vmatprep.subr.bf16.mxu0 0
      %1974 = vmatpush1.bf16.msra.mxu0 0
      %1975 = vmatprep.subr.bf16.mxu0 0
      %1976 = vmatpush1.bf16.msra.mxu0 0
      %1977 = vmatprep.mubr.bf16.mxu0 0
      %1978 = vmatmul.mubr.bf16.gmra.mrb[0].mxu0 %v1940
      %v1979 = vpop.f32.mrb[0].mxu0
      %v1980 = vadd.f32 %v1937, %v1979
      %v1981 = vpop.f32.mrb[0].mxu0
      %v1982 = vpop.f32.mrb[0].mxu0
      %v1983 = vpop.f32.mrb[0].mxu0
      %1984 = vdwg.mxu0
      %v1985 = vmax.f32 %v1980, 0.0
      %v1986 = vmul.f32 %v1985, %v1347
      %1987 = vrot.lane.b32.xlu0 %v1986, 7
      %v1988 = vpop.permute.xlu0 %1987
      %1989 = vrot.lane.b32.xlu0 %v1986, 6
      %v1990 = vpop.permute.xlu0 %1989
      %1991 = vrot.lane.b32.xlu0 %v1986, 5
      %v1992 = vpop.permute.xlu0 %1991
      %1993 = vrot.lane.b32.xlu0 %v1986, 1
      %v1994 = vpop.permute.xlu0 %1993
      %1995 = vrot.lane.b32.xlu0 %v1986, 127
      %v1996 = vpop.permute.xlu0 %1995
      %1997 = vrot.lane.b32.xlu0 %v1986, 123
      %v1998 = vpop.permute.xlu0 %1997
      %1999 = vrot.lane.b32.xlu0 %v1986, 122
      %v2000 = vpop.permute.xlu0 %1999
      %2001 = vrot.lane.b32.xlu0 %v1986, 121
      %v2002 = vpop.permute.xlu0 %2001
      %v2003 = vpack.c.bf16 %v1990, %v1988
      %v2004 = vpack.c.bf16 %v1994, %v1992
      %v2005 = vpack.c.bf16 %v1996, %v1986
      %v2006 = vpack.c.bf16 %v2000, %v1998
      %v2007 = vpack.c.bf16 %v2002, %v2002
      %v2008 = vld [vmem:[%s1 + $0x88] sm:$0xf]
      %2009 = vset.pattern.permute.xlu0 17
      %2010 = vperm.xlu0 %2009, %v347
      %v2011 = vpop.permute.xlu0 %2010
      %v2014 = vsel %vm353, %v2008, 0
      %v2017 = vsel %vm357, %v2007, 0
      %2019 = vmatprep.subr.bf16.mxu0 0
      %2020 = vmatpush1.bf16.msra.mxu0 %v2003
      %2021 = vmatprep.subr.bf16.mxu0 0
      %2022 = vmatpush1.bf16.msra.mxu0 %v2004
      %2023 = vmatprep.subr.bf16.mxu0 0
      %2024 = vmatpush1.bf16.msra.mxu0 %v2005
      %2025 = vmatprep.subr.bf16.mxu0 0
      %2026 = vmatpush1.bf16.msra.mxu0 %v2006
      %2027 = vmatprep.subr.bf16.mxu0 0
      %2028 = vmatpush1.bf16.msra.mxu0 %v2017
      %2029 = vmatprep.subr.bf16.mxu0 0
      %2030 = vmatpush1.bf16.msra.mxu0 0
      %2031 = vmatprep.subr.bf16.mxu0 0
      %2032 = vmatpush1.bf16.msra.mxu0 0
      %2033 = vmatprep.subr.bf16.mxu0 0
      %2034 = vmatpush1.bf16.msra.mxu0 0
      %2035 = vmatprep.subr.bf16.mxu0 0
      %2036 = vmatpush1.bf16.msra.mxu0 0
      %2037 = vmatprep.subr.bf16.mxu0 0
      %2038 = vmatpush1.bf16.msra.mxu0 0
      %2039 = vmatprep.subr.bf16.mxu0 0
      %2040 = vmatpush1.bf16.msra.mxu0 0
      %2041 = vmatprep.subr.bf16.mxu0 0
      %2042 = vmatpush1.bf16.msra.mxu0 0
      %2043 = vmatprep.subr.bf16.mxu0 0
      %2044 = vmatpush1.bf16.msra.mxu0 0
      %2045 = vmatprep.subr.bf16.mxu0 0
      %2046 = vmatpush1.bf16.msra.mxu0 0
      %2047 = vmatprep.subr.bf16.mxu0 0
      %2048 = vmatpush1.bf16.msra.mxu0 0
      %2049 = vmatprep.subr.bf16.mxu0 0
      %2050 = vmatpush1.bf16.msra.mxu0 0
      %2051 = vmatprep.mubr.bf16.mxu0 0
      %2052 = vmatmul.mubr.bf16.gmra.mrb[0].mxu0 %v2014
      %v2053 = vpop.f32.mrb[0].mxu0
      %v2054 = vadd.f32 %v2011, %v2053
      %v2055 = vpop.f32.mrb[0].mxu0
      %v2056 = vpop.f32.mrb[0].mxu0
      %v2057 = vpop.f32.mrb[0].mxu0
      %2058 = vdwg.mxu0
      %v2059 = vmax.f32 %v2054, 0.0
      %v2060 = vld [vmem:[%s1 + $0x90] sm:$0xf]
      %v2061 = vpack.c.bf16 %v2059, %v2059
      %2062 = vset.pattern.permute.xlu0 18
      %2063 = vperm.xlu0 %2062, %v347
      %v2064 = vpop.permute.xlu0 %2063
      %v2067 = vsel %vm813, %v2060, 0
      %v2070 = vsel %vm357, %v2061, 0
      %2072 = vmatprep.subr.bf16.mxu0 0
      %2073 = vmatpush1.bf16.msra.mxu0 %v2070
      %2074 = vmatprep.subr.bf16.mxu0 0
      %2075 = vmatpush1.bf16.msra.mxu0 0
      %2076 = vmatprep.subr.bf16.mxu0 0
      %2077 = vmatpush1.bf16.msra.mxu0 0
      %2078 = vmatprep.subr.bf16.mxu0 0
      %2079 = vmatpush1.bf16.msra.mxu0 0
      %2080 = vmatprep.subr.bf16.mxu0 0
      %2081 = vmatpush1.bf16.msra.mxu0 0
      %2082 = vmatprep.subr.bf16.mxu0 0
      %2083 = vmatpush1.bf16.msra.mxu0 0
      %2084 = vmatprep.subr.bf16.mxu0 0
      %2085 = vmatpush1.bf16.msra.mxu0 0
      %2086 = vmatprep.subr.bf16.mxu0 0
      %2087 = vmatpush1.bf16.msra.mxu0 0
      %2088 = vmatprep.subr.bf16.mxu0 0
      %2089 = vmatpush1.bf16.msra.mxu0 0
      %2090 = vmatprep.subr.bf16.mxu0 0
      %2091 = vmatpush1.bf16.msra.mxu0 0
      %2092 = vmatprep.subr.bf16.mxu0 0
      %2093 = vmatpush1.bf16.msra.mxu0 0
      %2094 = vmatprep.subr.bf16.mxu0 0
      %2095 = vmatpush1.bf16.msra.mxu0 0
      %2096 = vmatprep.subr.bf16.mxu0 0
      %2097 = vmatpush1.bf16.msra.mxu0 0
      %2098 = vmatprep.subr.bf16.mxu0 0
      %2099 = vmatpush1.bf16.msra.mxu0 0
      %2100 = vmatprep.subr.bf16.mxu0 0
      %2101 = vmatpush1.bf16.msra.mxu0 0
      %2102 = vmatprep.subr.bf16.mxu0 0
      %2103 = vmatpush1.bf16.msra.mxu0 0
      %2104 = vmatprep.mubr.bf16.mxu0 0
      %2105 = vmatmul.mubr.bf16.gmra.mrb[0].mxu0 %v2067
      %v2106 = vpop.f32.mrb[0].mxu0
      %v2107 = vadd.f32 %v2064, %v2106
      %v2108 = vpop.f32.mrb[0].mxu0
      %v2109 = vpop.f32.mrb[0].mxu0
      %v2110 = vpop.f32.mrb[0].mxu0
      %2111 = vdwg.mxu0
      %v2112 = vadd.f32 %v2107, %v1932
      %v2113 = vmax.f32 %v2112, 0.0
      %v2114 = vld [vmem:[%s1 + $0x98] sm:$0xf]
      %2115 = vset.pattern.permute.xlu0 19
      %2116 = vperm.xlu0 %2115, %v347
      %v2117 = vpop.permute.xlu0 %2116
      %v2120 = vsel %vm813, %v2114, 0
      %2122 = vmatprep.subr.bf16.mxu0 0
      %2123 = vmatpush1.bf16.msra.mxu0 %v1581
      %2124 = vmatprep.subr.bf16.mxu0 0
      %2125 = vmatpush1.bf16.msra.mxu0 0
      %2126 = vmatprep.subr.bf16.mxu0 0
      %2127 = vmatpush1.bf16.msra.mxu0 0
      %2128 = vmatprep.subr.bf16.mxu0 0
      %2129 = vmatpush1.bf16.msra.mxu0 0
      %2130 = vmatprep.subr.bf16.mxu0 0
      %2131 = vmatpush1.bf16.msra.mxu0 0
      %2132 = vmatprep.subr.bf16.mxu0 0
      %2133 = vmatpush1.bf16.msra.mxu0 0
      %2134 = vmatprep.subr.bf16.mxu0 0
      %2135 = vmatpush1.bf16.msra.mxu0 0
      %2136 = vmatprep.subr.bf16.mxu0 0
      %2137 = vmatpush1.bf16.msra.mxu0 0
      %2138 = vmatprep.subr.bf16.mxu0 0
      %2139 = vmatpush1.bf16.msra.mxu0 0
      %2140 = vmatprep.subr.bf16.mxu0 0
      %2141 = vmatpush1.bf16.msra.mxu0 0
      %2142 = vmatprep.subr.bf16.mxu0 0
      %2143 = vmatpush1.bf16.msra.mxu0 0
      %2144 = vmatprep.subr.bf16.mxu0 0
      %2145 = vmatpush1.bf16.msra.mxu0 0
      %2146 = vmatprep.subr.bf16.mxu0 0
      %2147 = vmatpush1.bf16.msra.mxu0 0
      %2148 = vmatprep.subr.bf16.mxu0 0
      %2149 = vmatpush1.bf16.msra.mxu0 0
      %2150 = vmatprep.subr.bf16.mxu0 0
      %2151 = vmatpush1.bf16.msra.mxu0 0
      %2152 = vmatprep.subr.bf16.mxu0 0
      %2153 = vmatpush1.bf16.msra.mxu0 0
      %2154 = vmatprep.mubr.bf16.mxu0 0
      %2155 = vmatmul.mubr.bf16.gmra.mrb[0].mxu0 %v2120
      %v2156 = vpop.f32.mrb[0].mxu0
      %v2157 = vadd.f32 %v2117, %v2156
      %v2158 = vpop.f32.mrb[0].mxu0
      %v2159 = vpop.f32.mrb[0].mxu0
      %v2160 = vpop.f32.mrb[0].mxu0
      %2161 = vdwg.mxu0
      %v2162 = vmax.f32 %v2157, 0.0
      %v2163 = vmul.f32 %v2162, %v1347
      %2164 = vrot.lane.b32.xlu0 %v2163, 7
      %v2165 = vpop.permute.xlu0 %2164
      %2166 = vrot.lane.b32.xlu0 %v2163, 6
      %v2167 = vpop.permute.xlu0 %2166
      %2168 = vrot.lane.b32.xlu0 %v2163, 5
      %v2169 = vpop.permute.xlu0 %2168
      %2170 = vrot.lane.b32.xlu0 %v2163, 1
      %v2171 = vpop.permute.xlu0 %2170
      %2172 = vrot.lane.b32.xlu0 %v2163, 127
      %v2173 = vpop.permute.xlu0 %2172
      %2174 = vrot.lane.b32.xlu0 %v2163, 123
      %v2175 = vpop.permute.xlu0 %2174
      %2176 = vrot.lane.b32.xlu0 %v2163, 122
      %v2177 = vpop.permute.xlu0 %2176
      %2178 = vrot.lane.b32.xlu0 %v2163, 121
      %v2179 = vpop.permute.xlu0 %2178
      %v2180 = vpack.c.bf16 %v2167, %v2165
      %v2181 = vpack.c.bf16 %v2171, %v2169
      %v2182 = vpack.c.bf16 %v2173, %v2163
      %v2183 = vpack.c.bf16 %v2177, %v2175
      %v2184 = vpack.c.bf16 %v2179, %v2179
      %v2185 = vld [vmem:[%s1 + $0xa0] sm:$0xf]
      %2186 = vset.pattern.permute.xlu0 20
      %2187 = vperm.xlu0 %2186, %v347
      %v2188 = vpop.permute.xlu0 %2187
      %v2191 = vsel %vm353, %v2185, 0
      %v2194 = vsel %vm357, %v2184, 0
      %2196 = vmatprep.subr.bf16.mxu0 0
      %2197 = vmatpush1.bf16.msra.mxu0 %v2180
      %2198 = vmatprep.subr.bf16.mxu0 0
      %2199 = vmatpush1.bf16.msra.mxu0 %v2181
      %2200 = vmatprep.subr.bf16.mxu0 0
      %2201 = vmatpush1.bf16.msra.mxu0 %v2182
      %2202 = vmatprep.subr.bf16.mxu0 0
      %2203 = vmatpush1.bf16.msra.mxu0 %v2183
      %2204 = vmatprep.subr.bf16.mxu0 0
      %2205 = vmatpush1.bf16.msra.mxu0 %v2194
      %2206 = vmatprep.subr.bf16.mxu0 0
      %2207 = vmatpush1.bf16.msra.mxu0 0
      %2208 = vmatprep.subr.bf16.mxu0 0
      %2209 = vmatpush1.bf16.msra.mxu0 0
      %2210 = vmatprep.subr.bf16.mxu0 0
      %2211 = vmatpush1.bf16.msra.mxu0 0
      %2212 = vmatprep.subr.bf16.mxu0 0
      %2213 = vmatpush1.bf16.msra.mxu0 0
      %2214 = vmatprep.subr.bf16.mxu0 0
      %2215 = vmatpush1.bf16.msra.mxu0 0
      %2216 = vmatprep.subr.bf16.mxu0 0
      %2217 = vmatpush1.bf16.msra.mxu0 0
      %2218 = vmatprep.subr.bf16.mxu0 0
      %2219 = vmatpush1.bf16.msra.mxu0 0
      %2220 = vmatprep.subr.bf16.mxu0 0
      %2221 = vmatpush1.bf16.msra.mxu0 0
      %2222 = vmatprep.subr.bf16.mxu0 0
      %2223 = vmatpush1.bf16.msra.mxu0 0
      %2224 = vmatprep.subr.bf16.mxu0 0
      %2225 = vmatpush1.bf16.msra.mxu0 0
      %2226 = vmatprep.subr.bf16.mxu0 0
      %2227 = vmatpush1.bf16.msra.mxu0 0
      %2228 = vmatprep.mubr.bf16.mxu0 0
      %2229 = vmatmul.mubr.bf16.gmra.mrb[0].mxu0 %v2191
      %v2230 = vpop.f32.mrb[0].mxu0
      %v2231 = vadd.f32 %v2188, %v2230
      %v2232 = vpop.f32.mrb[0].mxu0
      %v2233 = vpop.f32.mrb[0].mxu0
      %v2234 = vpop.f32.mrb[0].mxu0
      %2235 = vdwg.mxu0
      %v2236 = vmax.f32 %v2231, 0.0
      %v2237 = vld [vmem:[%s1 + $0xa8] sm:$0xf]
      %v2238 = vpack.c.bf16 %v2236, %v2236
      %2239 = vset.pattern.permute.xlu0 21
      %2240 = vperm.xlu0 %2239, %v347
      %v2241 = vpop.permute.xlu0 %2240
      %v2244 = vsel %vm813, %v2237, 0
      %v2247 = vsel %vm357, %v2238, 0
      %2249 = vmatprep.subr.bf16.mxu0 0
      %2250 = vmatpush1.bf16.msra.mxu0 %v2247
      %2251 = vmatprep.subr.bf16.mxu0 0
      %2252 = vmatpush1.bf16.msra.mxu0 0
      %2253 = vmatprep.subr.bf16.mxu0 0
      %2254 = vmatpush1.bf16.msra.mxu0 0
      %2255 = vmatprep.subr.bf16.mxu0 0
      %2256 = vmatpush1.bf16.msra.mxu0 0
      %2257 = vmatprep.subr.bf16.mxu0 0
      %2258 = vmatpush1.bf16.msra.mxu0 0
      %2259 = vmatprep.subr.bf16.mxu0 0
      %2260 = vmatpush1.bf16.msra.mxu0 0
      %2261 = vmatprep.subr.bf16.mxu0 0
      %2262 = vmatpush1.bf16.msra.mxu0 0
      %2263 = vmatprep.subr.bf16.mxu0 0
      %2264 = vmatpush1.bf16.msra.mxu0 0
      %2265 = vmatprep.subr.bf16.mxu0 0
      %2266 = vmatpush1.bf16.msra.mxu0 0
      %2267 = vmatprep.subr.bf16.mxu0 0
      %2268 = vmatpush1.bf16.msra.mxu0 0
      %2269 = vmatprep.subr.bf16.mxu0 0
      %2270 = vmatpush1.bf16.msra.mxu0 0
      %2271 = vmatprep.subr.bf16.mxu0 0
      %2272 = vmatpush1.bf16.msra.mxu0 0
      %2273 = vmatprep.subr.bf16.mxu0 0
      %2274 = vmatpush1.bf16.msra.mxu0 0
      %2275 = vmatprep.subr.bf16.mxu0 0
      %2276 = vmatpush1.bf16.msra.mxu0 0
      %2277 = vmatprep.subr.bf16.mxu0 0
      %2278 = vmatpush1.bf16.msra.mxu0 0
      %2279 = vmatprep.subr.bf16.mxu0 0
      %2280 = vmatpush1.bf16.msra.mxu0 0
      %2281 = vmatprep.mubr.bf16.mxu0 0
      %2282 = vmatmul.mubr.bf16.gmra.mrb[0].mxu0 %v2244
      %v2283 = vpop.f32.mrb[0].mxu0
      %v2284 = vadd.f32 %v2241, %v2283
      %v2285 = vpop.f32.mrb[0].mxu0
      %v2286 = vpop.f32.mrb[0].mxu0
      %v2287 = vpop.f32.mrb[0].mxu0
      %2288 = vdwg.mxu0
      %v2289 = vadd.f32 %v2284, %v1570
      %v2290 = vmax.f32 %v2289, 0.0
      %v2291 = vld [vmem:[%s1 + $0xb0] sm:$0xf]
      %v2292 = vpack.c.bf16 %v2290, %v2290
      %2293 = vset.pattern.permute.xlu0 22
      %2294 = vperm.xlu0 %2293, %v347
      %v2295 = vpop.permute.xlu0 %2294
      %v2298 = vsel %vm813, %v2291, 0
      %v2301 = vsel %vm357, %v2292, 0
      %2303 = vmatprep.subr.bf16.mxu0 0
      %2304 = vmatpush1.bf16.msra.mxu0 %v2301
      %2305 = vmatprep.subr.bf16.mxu0 0
      %2306 = vmatpush1.bf16.msra.mxu0 0
      %2307 = vmatprep.subr.bf16.mxu0 0
      %2308 = vmatpush1.bf16.msra.mxu0 0
      %2309 = vmatprep.subr.bf16.mxu0 0
      %2310 = vmatpush1.bf16.msra.mxu0 0
      %2311 = vmatprep.subr.bf16.mxu0 0
      %2312 = vmatpush1.bf16.msra.mxu0 0
      %2313 = vmatprep.subr.bf16.mxu0 0
      %2314 = vmatpush1.bf16.msra.mxu0 0
      %2315 = vmatprep.subr.bf16.mxu0 0
      %2316 = vmatpush1.bf16.msra.mxu0 0
      %2317 = vmatprep.subr.bf16.mxu0 0
      %2318 = vmatpush1.bf16.msra.mxu0 0
      %2319 = vmatprep.subr.bf16.mxu0 0
      %2320 = vmatpush1.bf16.msra.mxu0 0
      %2321 = vmatprep.subr.bf16.mxu0 0
      %2322 = vmatpush1.bf16.msra.mxu0 0
      %2323 = vmatprep.subr.bf16.mxu0 0
      %2324 = vmatpush1.bf16.msra.mxu0 0
      %2325 = vmatprep.subr.bf16.mxu0 0
      %2326 = vmatpush1.bf16.msra.mxu0 0
      %2327 = vmatprep.subr.bf16.mxu0 0
      %2328 = vmatpush1.bf16.msra.mxu0 0
      %2329 = vmatprep.subr.bf16.mxu0 0
      %2330 = vmatpush1.bf16.msra.mxu0 0
      %2331 = vmatprep.subr.bf16.mxu0 0
      %2332 = vmatpush1.bf16.msra.mxu0 0
      %2333 = vmatprep.subr.bf16.mxu0 0
      %2334 = vmatpush1.bf16.msra.mxu0 0
      %2335 = vmatprep.mubr.bf16.mxu0 0
      %2336 = vmatmul.mubr.bf16.gmra.mrb[0].mxu0 %v2298
      %v2337 = vpop.f32.mrb[0].mxu0
      %v2338 = vadd.f32 %v2295, %v2337
      %v2339 = vpop.f32.mrb[0].mxu0
      %v2340 = vpop.f32.mrb[0].mxu0
      %v2341 = vpop.f32.mrb[0].mxu0
      %2342 = vdwg.mxu0
      %v2343 = vmax.f32 %v2338, 0.0
      %v2344 = vmul.f32 %v2343, %v1347
      %2345 = vrot.lane.b32.xlu0 %v2344, 7
      %v2346 = vpop.permute.xlu0 %2345
      %2347 = vrot.lane.b32.xlu0 %v2344, 6
      %v2348 = vpop.permute.xlu0 %2347
      %2349 = vrot.lane.b32.xlu0 %v2344, 5
      %v2350 = vpop.permute.xlu0 %2349
      %2351 = vrot.lane.b32.xlu0 %v2344, 1
      %v2352 = vpop.permute.xlu0 %2351
      %2353 = vrot.lane.b32.xlu0 %v2344, 127
      %v2354 = vpop.permute.xlu0 %2353
      %2355 = vrot.lane.b32.xlu0 %v2344, 123
      %v2356 = vpop.permute.xlu0 %2355
      %2357 = vrot.lane.b32.xlu0 %v2344, 122
      %v2358 = vpop.permute.xlu0 %2357
      %2359 = vrot.lane.b32.xlu0 %v2344, 121
      %v2360 = vpop.permute.xlu0 %2359
      %v2361 = vpack.c.bf16 %v2348, %v2346
      %v2362 = vpack.c.bf16 %v2352, %v2350
      %v2363 = vpack.c.bf16 %v2354, %v2344
      %v2364 = vpack.c.bf16 %v2358, %v2356
      %v2365 = vpack.c.bf16 %v2360, %v2360
      %v2366 = vld [vmem:[%s1 + $0xb8] sm:$0xf]
      %2367 = vset.pattern.permute.xlu0 23
      %2368 = vperm.xlu0 %2367, %v347
      %v2369 = vpop.permute.xlu0 %2368
      %v2372 = vsel %vm353, %v2366, 0
      %v2375 = vsel %vm357, %v2365, 0
      %2377 = vmatprep.subr.bf16.mxu0 0
      %2378 = vmatpush1.bf16.msra.mxu0 %v2361
      %2379 = vmatprep.subr.bf16.mxu0 0
      %2380 = vmatpush1.bf16.msra.mxu0 %v2362
      %2381 = vmatprep.subr.bf16.mxu0 0
      %2382 = vmatpush1.bf16.msra.mxu0 %v2363
      %2383 = vmatprep.subr.bf16.mxu0 0
      %2384 = vmatpush1.bf16.msra.mxu0 %v2364
      %2385 = vmatprep.subr.bf16.mxu0 0
      %2386 = vmatpush1.bf16.msra.mxu0 %v2375
      %2387 = vmatprep.subr.bf16.mxu0 0
      %2388 = vmatpush1.bf16.msra.mxu0 0
      %2389 = vmatprep.subr.bf16.mxu0 0
      %2390 = vmatpush1.bf16.msra.mxu0 0
      %2391 = vmatprep.subr.bf16.mxu0 0
      %2392 = vmatpush1.bf16.msra.mxu0 0
      %2393 = vmatprep.subr.bf16.mxu0 0
      %2394 = vmatpush1.bf16.msra.mxu0 0
      %2395 = vmatprep.subr.bf16.mxu0 0
      %2396 = vmatpush1.bf16.msra.mxu0 0
      %2397 = vmatprep.subr.bf16.mxu0 0
      %2398 = vmatpush1.bf16.msra.mxu0 0
      %2399 = vmatprep.subr.bf16.mxu0 0
      %2400 = vmatpush1.bf16.msra.mxu0 0
      %2401 = vmatprep.subr.bf16.mxu0 0
      %2402 = vmatpush1.bf16.msra.mxu0 0
      %2403 = vmatprep.subr.bf16.mxu0 0
      %2404 = vmatpush1.bf16.msra.mxu0 0
      %2405 = vmatprep.subr.bf16.mxu0 0
      %2406 = vmatpush1.bf16.msra.mxu0 0
      %2407 = vmatprep.subr.bf16.mxu0 0
      %2408 = vmatpush1.bf16.msra.mxu0 0
      %2409 = vmatprep.mubr.bf16.mxu0 0
      %2410 = vmatmul.mubr.bf16.gmra.mrb[0].mxu0 %v2372
      %v2411 = vpop.f32.mrb[0].mxu0
      %v2412 = vadd.f32 %v2369, %v2411
      %v2413 = vpop.f32.mrb[0].mxu0
      %v2414 = vpop.f32.mrb[0].mxu0
      %v2415 = vpop.f32.mrb[0].mxu0
      %2416 = vdwg.mxu0
      %v2417 = vmax.f32 %v2412, 0.0
      %v2418 = vld [vmem:[%s1 + $0xc0] sm:$0xf]
      %v2419 = vpack.c.bf16 %v2417, %v2417
      %2420 = vset.pattern.permute.xlu0 24
      %2421 = vperm.xlu0 %2420, %v347
      %v2422 = vpop.permute.xlu0 %2421
      %v2425 = vsel %vm813, %v2418, 0
      %v2428 = vsel %vm357, %v2419, 0
      %2430 = vmatprep.subr.bf16.mxu0 0
      %2431 = vmatpush1.bf16.msra.mxu0 %v2428
      %2432 = vmatprep.subr.bf16.mxu0 0
      %2433 = vmatpush1.bf16.msra.mxu0 0
      %2434 = vmatprep.subr.bf16.mxu0 0
      %2435 = vmatpush1.bf16.msra.mxu0 0
      %2436 = vmatprep.subr.bf16.mxu0 0
      %2437 = vmatpush1.bf16.msra.mxu0 0
      %2438 = vmatprep.subr.bf16.mxu0 0
      %2439 = vmatpush1.bf16.msra.mxu0 0
      %2440 = vmatprep.subr.bf16.mxu0 0
      %2441 = vmatpush1.bf16.msra.mxu0 0
      %2442 = vmatprep.subr.bf16.mxu0 0
      %2443 = vmatpush1.bf16.msra.mxu0 0
      %2444 = vmatprep.subr.bf16.mxu0 0
      %2445 = vmatpush1.bf16.msra.mxu0 0
      %2446 = vmatprep.subr.bf16.mxu0 0
      %2447 = vmatpush1.bf16.msra.mxu0 0
      %2448 = vmatprep.subr.bf16.mxu0 0
      %2449 = vmatpush1.bf16.msra.mxu0 0
      %2450 = vmatprep.subr.bf16.mxu0 0
      %2451 = vmatpush1.bf16.msra.mxu0 0
      %2452 = vmatprep.subr.bf16.mxu0 0
      %2453 = vmatpush1.bf16.msra.mxu0 0
      %2454 = vmatprep.subr.bf16.mxu0 0
      %2455 = vmatpush1.bf16.msra.mxu0 0
      %2456 = vmatprep.subr.bf16.mxu0 0
      %2457 = vmatpush1.bf16.msra.mxu0 0
      %2458 = vmatprep.subr.bf16.mxu0 0
      %2459 = vmatpush1.bf16.msra.mxu0 0
      %2460 = vmatprep.subr.bf16.mxu0 0
      %2461 = vmatpush1.bf16.msra.mxu0 0
      %2462 = vmatprep.mubr.bf16.mxu0 0
      %2463 = vmatmul.mubr.bf16.gmra.mrb[0].mxu0 %v2425
      %v2464 = vpop.f32.mrb[0].mxu0
      %v2465 = vadd.f32 %v2422, %v2464
      %v2466 = vpop.f32.mrb[0].mxu0
      %v2467 = vpop.f32.mrb[0].mxu0
      %v2468 = vpop.f32.mrb[0].mxu0
      %2469 = vdwg.mxu0
      %v2470 = vadd.f32 %v2465, %v2290
      %v2471 = vmax.f32 %v2470, 0.0
      %v2472 = vld [vmem:[%s1 + $0xc8] sm:$0xf]
      %v2473 = vpack.c.bf16 %v2471, %v2471
      %2474 = vset.pattern.permute.xlu0 25
      %2475 = vperm.xlu0 %2474, %v347
      %v2476 = vpop.permute.xlu0 %2475
      %v2479 = vsel %vm813, %v2472, 0
      %v2482 = vsel %vm357, %v2473, 0
      %2484 = vmatprep.subr.bf16.mxu0 0
      %2485 = vmatpush1.bf16.msra.mxu0 %v2482
      %2486 = vmatprep.subr.bf16.mxu0 0
      %2487 = vmatpush1.bf16.msra.mxu0 0
      %2488 = vmatprep.subr.bf16.mxu0 0
      %2489 = vmatpush1.bf16.msra.mxu0 0
      %2490 = vmatprep.subr.bf16.mxu0 0
      %2491 = vmatpush1.bf16.msra.mxu0 0
      %2492 = vmatprep.subr.bf16.mxu0 0
      %2493 = vmatpush1.bf16.msra.mxu0 0
      %2494 = vmatprep.subr.bf16.mxu0 0
      %2495 = vmatpush1.bf16.msra.mxu0 0
      %2496 = vmatprep.subr.bf16.mxu0 0
      %2497 = vmatpush1.bf16.msra.mxu0 0
      %2498 = vmatprep.subr.bf16.mxu0 0
      %2499 = vmatpush1.bf16.msra.mxu0 0
      %2500 = vmatprep.subr.bf16.mxu0 0
      %2501 = vmatpush1.bf16.msra.mxu0 0
      %2502 = vmatprep.subr.bf16.mxu0 0
      %2503 = vmatpush1.bf16.msra.mxu0 0
      %2504 = vmatprep.subr.bf16.mxu0 0
      %2505 = vmatpush1.bf16.msra.mxu0 0
      %2506 = vmatprep.subr.bf16.mxu0 0
      %2507 = vmatpush1.bf16.msra.mxu0 0
      %2508 = vmatprep.subr.bf16.mxu0 0
      %2509 = vmatpush1.bf16.msra.mxu0 0
      %2510 = vmatprep.subr.bf16.mxu0 0
      %2511 = vmatpush1.bf16.msra.mxu0 0
      %2512 = vmatprep.subr.bf16.mxu0 0
      %2513 = vmatpush1.bf16.msra.mxu0 0
      %2514 = vmatprep.subr.bf16.mxu0 0
      %2515 = vmatpush1.bf16.msra.mxu0 0
      %2516 = vmatprep.mubr.bf16.mxu0 0
      %2517 = vmatmul.mubr.bf16.gmra.mrb[0].mxu0 %v2479
      %v2518 = vpop.f32.mrb[0].mxu0
      %v2519 = vadd.f32 %v2476, %v2518
      %v2520 = vpop.f32.mrb[0].mxu0
      %v2521 = vpop.f32.mrb[0].mxu0
      %v2522 = vpop.f32.mrb[0].mxu0
      %2523 = vdwg.mxu0
      %v2524 = vmax.f32 %v2519, 0.0
      %v2525 = vmul.f32 %v2524, %v1347
      %2526 = vrot.lane.b32.xlu0 %v2525, 7
      %v2527 = vpop.permute.xlu0 %2526
      %2528 = vrot.lane.b32.xlu0 %v2525, 6
      %v2529 = vpop.permute.xlu0 %2528
      %2530 = vrot.lane.b32.xlu0 %v2525, 5
      %v2531 = vpop.permute.xlu0 %2530
      %2532 = vrot.lane.b32.xlu0 %v2525, 1
      %v2533 = vpop.permute.xlu0 %2532
      %2534 = vrot.lane.b32.xlu0 %v2525, 127
      %v2535 = vpop.permute.xlu0 %2534
      %2536 = vrot.lane.b32.xlu0 %v2525, 123
      %v2537 = vpop.permute.xlu0 %2536
      %2538 = vrot.lane.b32.xlu0 %v2525, 122
      %v2539 = vpop.permute.xlu0 %2538
      %2540 = vrot.lane.b32.xlu0 %v2525, 121
      %v2541 = vpop.permute.xlu0 %2540
      %v2542 = vpack.c.bf16 %v2529, %v2527
      %v2543 = vpack.c.bf16 %v2533, %v2531
      %v2544 = vpack.c.bf16 %v2535, %v2525
      %v2545 = vpack.c.bf16 %v2539, %v2537
      %v2546 = vpack.c.bf16 %v2541, %v2541
      %v2547 = vld [vmem:[%s1 + $0xd0] sm:$0xf]
      %2548 = vset.pattern.permute.xlu0 26
      %2549 = vperm.xlu0 %2548, %v347
      %v2550 = vpop.permute.xlu0 %2549
      %v2553 = vsel %vm353, %v2547, 0
      %v2556 = vsel %vm357, %v2546, 0
      %2558 = vmatprep.subr.bf16.mxu0 0
      %2559 = vmatpush1.bf16.msra.mxu0 %v2542
      %2560 = vmatprep.subr.bf16.mxu0 0
      %2561 = vmatpush1.bf16.msra.mxu0 %v2543
      %2562 = vmatprep.subr.bf16.mxu0 0
      %2563 = vmatpush1.bf16.msra.mxu0 %v2544
      %2564 = vmatprep.subr.bf16.mxu0 0
      %2565 = vmatpush1.bf16.msra.mxu0 %v2545
      %2566 = vmatprep.subr.bf16.mxu0 0
      %2567 = vmatpush1.bf16.msra.mxu0 %v2556
      %2568 = vmatprep.subr.bf16.mxu0 0
      %2569 = vmatpush1.bf16.msra.mxu0 0
      %2570 = vmatprep.subr.bf16.mxu0 0
      %2571 = vmatpush1.bf16.msra.mxu0 0
      %2572 = vmatprep.subr.bf16.mxu0 0
      %2573 = vmatpush1.bf16.msra.mxu0 0
      %2574 = vmatprep.subr.bf16.mxu0 0
      %2575 = vmatpush1.bf16.msra.mxu0 0
      %2576 = vmatprep.subr.bf16.mxu0 0
      %2577 = vmatpush1.bf16.msra.mxu0 0
      %2578 = vmatprep.subr.bf16.mxu0 0
      %2579 = vmatpush1.bf16.msra.mxu0 0
      %2580 = vmatprep.subr.bf16.mxu0 0
      %2581 = vmatpush1.bf16.msra.mxu0 0
      %2582 = vmatprep.subr.bf16.mxu0 0
      %2583 = vmatpush1.bf16.msra.mxu0 0
      %2584 = vmatprep.subr.bf16.mxu0 0
      %2585 = vmatpush1.bf16.msra.mxu0 0
      %2586 = vmatprep.subr.bf16.mxu0 0
      %2587 = vmatpush1.bf16.msra.mxu0 0
      %2588 = vmatprep.subr.bf16.mxu0 0
      %2589 = vmatpush1.bf16.msra.mxu0 0
      %2590 = vmatprep.mubr.bf16.mxu0 0
      %2591 = vmatmul.mubr.bf16.gmra.mrb[0].mxu0 %v2553
      %v2592 = vpop.f32.mrb[0].mxu0
      %v2593 = vadd.f32 %v2550, %v2592
      %v2594 = vpop.f32.mrb[0].mxu0
      %v2595 = vpop.f32.mrb[0].mxu0
      %v2596 = vpop.f32.mrb[0].mxu0
      %2597 = vdwg.mxu0
      %v2598 = vmax.f32 %v2593, 0.0
      %v2599 = vld [vmem:[%s1 + $0xd8] sm:$0xf]
      %v2600 = vpack.c.bf16 %v2598, %v2598
      %2601 = vset.pattern.permute.xlu0 27
      %2602 = vperm.xlu0 %2601, %v347
      %v2603 = vpop.permute.xlu0 %2602
      %v2606 = vsel %vm813, %v2599, 0
      %v2609 = vsel %vm357, %v2600, 0
      %2611 = vmatprep.subr.bf16.mxu0 0
      %2612 = vmatpush1.bf16.msra.mxu0 %v2609
      %2613 = vmatprep.subr.bf16.mxu0 0
      %2614 = vmatpush1.bf16.msra.mxu0 0
      %2615 = vmatprep.subr.bf16.mxu0 0
      %2616 = vmatpush1.bf16.msra.mxu0 0
      %2617 = vmatprep.subr.bf16.mxu0 0
      %2618 = vmatpush1.bf16.msra.mxu0 0
      %2619 = vmatprep.subr.bf16.mxu0 0
      %2620 = vmatpush1.bf16.msra.mxu0 0
      %2621 = vmatprep.subr.bf16.mxu0 0
      %2622 = vmatpush1.bf16.msra.mxu0 0
      %2623 = vmatprep.subr.bf16.mxu0 0
      %2624 = vmatpush1.bf16.msra.mxu0 0
      %2625 = vmatprep.subr.bf16.mxu0 0
      %2626 = vmatpush1.bf16.msra.mxu0 0
      %2627 = vmatprep.subr.bf16.mxu0 0
      %2628 = vmatpush1.bf16.msra.mxu0 0
      %2629 = vmatprep.subr.bf16.mxu0 0
      %2630 = vmatpush1.bf16.msra.mxu0 0
      %2631 = vmatprep.subr.bf16.mxu0 0
      %2632 = vmatpush1.bf16.msra.mxu0 0
      %2633 = vmatprep.subr.bf16.mxu0 0
      %2634 = vmatpush1.bf16.msra.mxu0 0
      %2635 = vmatprep.subr.bf16.mxu0 0
      %2636 = vmatpush1.bf16.msra.mxu0 0
      %2637 = vmatprep.subr.bf16.mxu0 0
      %2638 = vmatpush1.bf16.msra.mxu0 0
      %2639 = vmatprep.subr.bf16.mxu0 0
      %2640 = vmatpush1.bf16.msra.mxu0 0
      %2641 = vmatprep.subr.bf16.mxu0 0
      %2642 = vmatpush1.bf16.msra.mxu0 0
      %2643 = vmatprep.mubr.bf16.mxu0 0
      %2644 = vmatmul.mubr.bf16.gmra.mrb[0].mxu0 %v2606
      %v2645 = vpop.f32.mrb[0].mxu0
      %v2646 = vadd.f32 %v2603, %v2645
      %v2647 = vpop.f32.mrb[0].mxu0
      %v2648 = vpop.f32.mrb[0].mxu0
      %v2649 = vpop.f32.mrb[0].mxu0
      %2650 = vdwg.mxu0
      %v2651 = vadd.f32 %v2646, %v2471
      %v2652 = vmax.f32 %v2651, 0.0
      %v2653 = vld [vmem:[%s1 + $0xe0] sm:$0xf]
      %v2654 = vpack.c.bf16 %v2652, %v2652
      %2655 = vset.pattern.permute.xlu0 28
      %2656 = vperm.xlu0 %2655, %v347
      %v2657 = vpop.permute.xlu0 %2656
      %v2660 = vsel %vm813, %v2653, 0
      %v2663 = vsel %vm357, %v2654, 0
      %2665 = vmatprep.subr.bf16.mxu0 0
      %2666 = vmatpush1.bf16.msra.mxu0 %v2663
      %2667 = vmatprep.subr.bf16.mxu0 0
      %2668 = vmatpush1.bf16.msra.mxu0 0
      %2669 = vmatprep.subr.bf16.mxu0 0
      %2670 = vmatpush1.bf16.msra.mxu0 0
      %2671 = vmatprep.subr.bf16.mxu0 0
      %2672 = vmatpush1.bf16.msra.mxu0 0
      %2673 = vmatprep.subr.bf16.mxu0 0
      %2674 = vmatpush1.bf16.msra.mxu0 0
      %2675 = vmatprep.subr.bf16.mxu0 0
      %2676 = vmatpush1.bf16.msra.mxu0 0
      %2677 = vmatprep.subr.bf16.mxu0 0
      %2678 = vmatpush1.bf16.msra.mxu0 0
      %2679 = vmatprep.subr.bf16.mxu0 0
      %2680 = vmatpush1.bf16.msra.mxu0 0
      %2681 = vmatprep.subr.bf16.mxu0 0
      %2682 = vmatpush1.bf16.msra.mxu0 0
      %2683 = vmatprep.subr.bf16.mxu0 0
      %2684 = vmatpush1.bf16.msra.mxu0 0
      %2685 = vmatprep.subr.bf16.mxu0 0
      %2686 = vmatpush1.bf16.msra.mxu0 0
      %2687 = vmatprep.subr.bf16.mxu0 0
      %2688 = vmatpush1.bf16.msra.mxu0 0
      %2689 = vmatprep.subr.bf16.mxu0 0
      %2690 = vmatpush1.bf16.msra.mxu0 0
      %2691 = vmatprep.subr.bf16.mxu0 0
      %2692 = vmatpush1.bf16.msra.mxu0 0
      %2693 = vmatprep.subr.bf16.mxu0 0
      %2694 = vmatpush1.bf16.msra.mxu0 0
      %2695 = vmatprep.subr.bf16.mxu0 0
      %2696 = vmatpush1.bf16.msra.mxu0 0
      %2697 = vmatprep.mubr.bf16.mxu0 0
      %2698 = vmatmul.mubr.bf16.gmra.mrb[0].mxu0 %v2660
      %v2699 = vpop.f32.mrb[0].mxu0
      %v2700 = vadd.f32 %v2657, %v2699
      %v2701 = vpop.f32.mrb[0].mxu0
      %v2702 = vpop.f32.mrb[0].mxu0
      %v2703 = vpop.f32.mrb[0].mxu0
      %2704 = vdwg.mxu0
      %v2705 = vsub.f32 0.0, %v2700
      %v2706 = vmul.f32 %v2705, 1.442695
      %v2707 = vpow.pop %v2706
      %v2708 = vadd.f32 %v2707, 1.0
      %v2709 = vrcp.pop %v2708
      %v2710 = vmul.f32 %v2113, %v2709
      %v2711 = vadd.f32 %v2710, %v1570
      %v2712 = vmul.f32 %v2711, %v1347
      %2713 = vrot.lane.b32.xlu0 %v2712, 7
      %v2714 = vpop.permute.xlu0 %2713
      %2715 = vrot.lane.b32.xlu0 %v2712, 6
      %v2716 = vpop.permute.xlu0 %2715
      %2717 = vrot.lane.b32.xlu0 %v2712, 5
      %v2718 = vpop.permute.xlu0 %2717
      %2719 = vrot.lane.b32.xlu0 %v2712, 1
      %v2720 = vpop.permute.xlu0 %2719
      %2721 = vrot.lane.b32.xlu0 %v2712, 127
      %v2722 = vpop.permute.xlu0 %2721
      %2723 = vrot.lane.b32.xlu0 %v2712, 123
      %v2724 = vpop.permute.xlu0 %2723
      %2725 = vrot.lane.b32.xlu0 %v2712, 122
      %v2726 = vpop.permute.xlu0 %2725
      %2727 = vrot.lane.b32.xlu0 %v2712, 121
      %v2728 = vpop.permute.xlu0 %2727
      %v2729 = vpack.c.bf16 %v2716, %v2714
      %v2730 = vpack.c.bf16 %v2720, %v2718
      %v2731 = vpack.c.bf16 %v2722, %v2712
      %v2732 = vpack.c.bf16 %v2726, %v2724
      %v2733 = vpack.c.bf16 %v2728, %v2728
      %v2734 = vld [vmem:[%s1 + $0xe8] sm:$0xf]
      %2735 = vset.pattern.permute.xlu0 29
      %2736 = vperm.xlu0 %2735, %v347
      %v2737 = vpop.permute.xlu0 %2736
      %v2740 = vsel %vm353, %v2734, 0
      %v2743 = vsel %vm357, %v2733, 0
      %2745 = vmatprep.subr.bf16.mxu0 0
      %2746 = vmatpush1.bf16.msra.mxu0 %v2729
      %2747 = vmatprep.subr.bf16.mxu0 0
      %2748 = vmatpush1.bf16.msra.mxu0 %v2730
      %2749 = vmatprep.subr.bf16.mxu0 0
      %2750 = vmatpush1.bf16.msra.mxu0 %v2731
      %2751 = vmatprep.subr.bf16.mxu0 0
      %2752 = vmatpush1.bf16.msra.mxu0 %v2732
      %2753 = vmatprep.subr.bf16.mxu0 0
      %2754 = vmatpush1.bf16.msra.mxu0 %v2743
      %2755 = vmatprep.subr.bf16.mxu0 0
      %2756 = vmatpush1.bf16.msra.mxu0 0
      %2757 = vmatprep.subr.bf16.mxu0 0
      %2758 = vmatpush1.bf16.msra.mxu0 0
      %2759 = vmatprep.subr.bf16.mxu0 0
      %2760 = vmatpush1.bf16.msra.mxu0 0
      %2761 = vmatprep.subr.bf16.mxu0 0
      %2762 = vmatpush1.bf16.msra.mxu0 0
      %2763 = vmatprep.subr.bf16.mxu0 0
      %2764 = vmatpush1.bf16.msra.mxu0 0
      %2765 = vmatprep.subr.bf16.mxu0 0
      %2766 = vmatpush1.bf16.msra.mxu0 0
      %2767 = vmatprep.subr.bf16.mxu0 0
      %2768 = vmatpush1.bf16.msra.mxu0 0
      %2769 = vmatprep.subr.bf16.mxu0 0
      %2770 = vmatpush1.bf16.msra.mxu0 0
      %2771 = vmatprep.subr.bf16.mxu0 0
      %2772 = vmatpush1.bf16.msra.mxu0 0
      %2773 = vmatprep.subr.bf16.mxu0 0
      %2774 = vmatpush1.bf16.msra.mxu0 0
      %2775 = vmatprep.subr.bf16.mxu0 0
      %2776 = vmatpush1.bf16.msra.mxu0 0
      %2777 = vmatprep.mubr.bf16.mxu0 0
      %2778 = vmatmul.mubr.bf16.gmra.mrb[0].mxu0 %v2740
      %v2779 = vpop.f32.mrb[0].mxu0
      %v2780 = vadd.f32 %v2737, %v2779
      %v2781 = vpop.f32.mrb[0].mxu0
      %v2782 = vpop.f32.mrb[0].mxu0
      %v2783 = vpop.f32.mrb[0].mxu0
      %2784 = vdwg.mxu0
      %vm2785 = vcmp.ge.f32.partialorder %v2780, 0.0
      %v2786 = vmul.f32 %v2780, 0.01
      %v2787 = vsel %vm2785, %v2780, %v2786
      %v2788 = vmul.f32 %v2787, %v1347
      %2789 = vrot.lane.b32.xlu0 %v2788, 7
      %v2790 = vpop.permute.xlu0 %2789
      %2791 = vrot.lane.b32.xlu0 %v2788, 6
      %v2792 = vpop.permute.xlu0 %2791
      %2793 = vrot.lane.b32.xlu0 %v2788, 5
      %v2794 = vpop.permute.xlu0 %2793
      %2795 = vrot.lane.b32.xlu0 %v2788, 1
      %v2796 = vpop.permute.xlu0 %2795
      %2797 = vrot.lane.b32.xlu0 %v2788, 127
      %v2798 = vpop.permute.xlu0 %2797
      %2799 = vrot.lane.b32.xlu0 %v2788, 123
      %v2800 = vpop.permute.xlu0 %2799
      %2801 = vrot.lane.b32.xlu0 %v2788, 122
      %v2802 = vpop.permute.xlu0 %2801
      %2803 = vrot.lane.b32.xlu0 %v2788, 121
      %v2804 = vpop.permute.xlu0 %2803
      %v2805 = vpack.c.bf16 %v2792, %v2790
      %v2806 = vpack.c.bf16 %v2796, %v2794
      %v2807 = vpack.c.bf16 %v2798, %v2788
      %v2808 = vpack.c.bf16 %v2802, %v2800
      %v2809 = vpack.c.bf16 %v2804, %v2804
      %v2810 = vld [vmem:[%s1 + $0xf0] sm:$0xf]
      %2811 = vset.pattern.permute.xlu0 30
      %2812 = vperm.xlu0 %2811, %v347
      %v2813 = vpop.permute.xlu0 %2812
      %v2816 = vsel %vm353, %v2810, 0
      %v2819 = vsel %vm357, %v2809, 0
      %2821 = vmatprep.subr.bf16.mxu0 0
      %2822 = vmatpush1.bf16.msra.mxu0 %v2805
      %2823 = vmatprep.subr.bf16.mxu0 0
      %2824 = vmatpush1.bf16.msra.mxu0 %v2806
      %2825 = vmatprep.subr.bf16.mxu0 0
      %2826 = vmatpush1.bf16.msra.mxu0 %v2807
      %2827 = vmatprep.subr.bf16.mxu0 0
      %2828 = vmatpush1.bf16.msra.mxu0 %v2808
      %2829 = vmatprep.subr.bf16.mxu0 0
      %2830 = vmatpush1.bf16.msra.mxu0 %v2819
      %2831 = vmatprep.subr.bf16.mxu0 0
      %2832 = vmatpush1.bf16.msra.mxu0 0
      %2833 = vmatprep.subr.bf16.mxu0 0
      %2834 = vmatpush1.bf16.msra.mxu0 0
      %2835 = vmatprep.subr.bf16.mxu0 0
      %2836 = vmatpush1.bf16.msra.mxu0 0
      %2837 = vmatprep.subr.bf16.mxu0 0
      %2838 = vmatpush1.bf16.msra.mxu0 0
      %2839 = vmatprep.subr.bf16.mxu0 0
      %2840 = vmatpush1.bf16.msra.mxu0 0
      %2841 = vmatprep.subr.bf16.mxu0 0
      %2842 = vmatpush1.bf16.msra.mxu0 0
      %2843 = vmatprep.subr.bf16.mxu0 0
      %2844 = vmatpush1.bf16.msra.mxu0 0
      %2845 = vmatprep.subr.bf16.mxu0 0
      %2846 = vmatpush1.bf16.msra.mxu0 0
      %2847 = vmatprep.subr.bf16.mxu0 0
      %2848 = vmatpush1.bf16.msra.mxu0 0
      %2849 = vmatprep.subr.bf16.mxu0 0
      %2850 = vmatpush1.bf16.msra.mxu0 0
      %2851 = vmatprep.subr.bf16.mxu0 0
      %2852 = vmatpush1.bf16.msra.mxu0 0
      %2853 = vmatprep.mubr.bf16.mxu0 0
      %2854 = vmatmul.mubr.bf16.gmra.mrb[0].mxu0 %v2816
      %v2855 = vpop.f32.mrb[0].mxu0
      %v2856 = vadd.f32 %v2813, %v2855
      %v2857 = vpop.f32.mrb[0].mxu0
      %v2858 = vpop.f32.mrb[0].mxu0
      %v2859 = vpop.f32.mrb[0].mxu0
      %2860 = vdwg.mxu0
      %vm2861 = vcmp.ge.f32.partialorder %v2856, 0.0
      %v2862 = vmul.f32 %v2856, 0.01
      %v2863 = vsel %vm2861, %v2856, %v2862
      %v2864 = vadd.f32 %v2863, %v2711
      %2865 = vset.pattern.permute.xlu0 59
      %2866 = vperm.xlu0 %2865, %v347
      %v2867 = vpop.permute.xlu0 %2866
      %v2869 = vmul.f32 %v2864, %v2867
      %v2870 = vmul.f32 %v2869, %v1347
      %2871 = vrot.lane.b32.xlu0 %v2870, 7
      %v2872 = vpop.permute.xlu0 %2871
      %2873 = vrot.lane.b32.xlu0 %v2870, 6
      %v2874 = vpop.permute.xlu0 %2873
      %2875 = vrot.lane.b32.xlu0 %v2870, 5
      %v2876 = vpop.permute.xlu0 %2875
      %2877 = vrot.lane.b32.xlu0 %v2870, 1
      %v2878 = vpop.permute.xlu0 %2877
      %2879 = vrot.lane.b32.xlu0 %v2870, 127
      %v2880 = vpop.permute.xlu0 %2879
      %2881 = vrot.lane.b32.xlu0 %v2870, 123
      %v2882 = vpop.permute.xlu0 %2881
      %2883 = vrot.lane.b32.xlu0 %v2870, 122
      %v2884 = vpop.permute.xlu0 %2883
      %2885 = vrot.lane.b32.xlu0 %v2870, 121
      %v2886 = vpop.permute.xlu0 %2885
      %v2887 = vpack.c.bf16 %v2874, %v2872
      %v2888 = vpack.c.bf16 %v2878, %v2876
      %v2889 = vpack.c.bf16 %v2880, %v2870
      %v2890 = vpack.c.bf16 %v2884, %v2882
      %v2891 = vpack.c.bf16 %v2886, %v2886
      %v2892 = vld [vmem:[%s1 + $0xf8] sm:$0xf]
      %2893 = vset.pattern.permute.xlu0 31
      %2894 = vperm.xlu0 %2893, %v347
      %v2895 = vpop.permute.xlu0 %2894
      %v2898 = vsel %vm353, %v2892, 0
      %v2901 = vsel %vm357, %v2891, 0
      %2903 = vmatprep.subr.bf16.mxu0 0
      %2904 = vmatpush1.bf16.msra.mxu0 %v2887
      %2905 = vmatprep.subr.bf16.mxu0 0
      %2906 = vmatpush1.bf16.msra.mxu0 %v2888
      %2907 = vmatprep.subr.bf16.mxu0 0
      %2908 = vmatpush1.bf16.msra.mxu0 %v2889
      %2909 = vmatprep.subr.bf16.mxu0 0
      %2910 = vmatpush1.bf16.msra.mxu0 %v2890
      %2911 = vmatprep.subr.bf16.mxu0 0
      %2912 = vmatpush1.bf16.msra.mxu0 %v2901
      %2913 = vmatprep.subr.bf16.mxu0 0
      %2914 = vmatpush1.bf16.msra.mxu0 0
      %2915 = vmatprep.subr.bf16.mxu0 0
      %2916 = vmatpush1.bf16.msra.mxu0 0
      %2917 = vmatprep.subr.bf16.mxu0 0
      %2918 = vmatpush1.bf16.msra.mxu0 0
      %2919 = vmatprep.subr.bf16.mxu0 0
      %2920 = vmatpush1.bf16.msra.mxu0 0
      %2921 = vmatprep.subr.bf16.mxu0 0
      %2922 = vmatpush1.bf16.msra.mxu0 0
      %2923 = vmatprep.subr.bf16.mxu0 0
      %2924 = vmatpush1.bf16.msra.mxu0 0
      %2925 = vmatprep.subr.bf16.mxu0 0
      %2926 = vmatpush1.bf16.msra.mxu0 0
      %2927 = vmatprep.subr.bf16.mxu0 0
      %2928 = vmatpush1.bf16.msra.mxu0 0
      %2929 = vmatprep.subr.bf16.mxu0 0
      %2930 = vmatpush1.bf16.msra.mxu0 0
      %2931 = vmatprep.subr.bf16.mxu0 0
      %2932 = vmatpush1.bf16.msra.mxu0 0
      %2933 = vmatprep.subr.bf16.mxu0 0
      %2934 = vmatpush1.bf16.msra.mxu0 0
      %2935 = vmatprep.mubr.bf16.mxu0 0
      %2936 = vmatmul.mubr.bf16.gmra.mrb[0].mxu0 %v2898
      %v2937 = vpop.f32.mrb[0].mxu0
      %v2938 = vadd.f32 %v2895, %v2937
      %v2939 = vpop.f32.mrb[0].mxu0
      %v2940 = vpop.f32.mrb[0].mxu0
      %v2941 = vpop.f32.mrb[0].mxu0
      %2942 = vdwg.mxu0
      %v2943 = vld [vmem:[%s4 + $0x8] sm:$0xf]
      %v2944 = vld [vmem:[%s4 + $0x14] sm:$0xf]
      %v2945 = vld [vmem:[%s4 + $0x20] sm:$0xf]
      %v2946 = vld [vmem:[%s4 + $0x2c] sm:$0xf]
      %v2947 = vld [vmem:[%s4 + $0x38] sm:$0xf]
      %v2948 = vld [vmem:[%s4 + $0x44] sm:$0xf]
      %v2949 = vld [vmem:[%s4 + $0x50] sm:$0xf]
      %v2950 = vld [vmem:[%s4 + $0x5c] sm:$0xf]
      %v2951 = vld [vmem:[%s4 + $0x68] sm:$0xf]
      %v2952 = vld [vmem:[%s4 + $0x74] sm:$0xf]
      %v2953 = vld [vmem:[%s4 + $0x80] sm:$0xf]
      %v2954 = vld [vmem:[%s4 + $0x8c] sm:$0xf]
      %v2955 = vld [vmem:[%s4 + $0x98] sm:$0xf]
      %v2956 = vld [vmem:[%s4 + $0xa4] sm:$0xf]
      %v2957 = vld [vmem:[%s4 + $0xb0] sm:$0xf]
      %v2958 = vld [vmem:[%s4 + $0xbc] sm:$0xf]
      %v2959 = vpack.c.bf16 %v2938, %v2938
      %v2976 = vunpack.c.l.b16 %v2943
      %v2977 = vunpack.c.l.b16 %v2944
      %v2978 = vunpack.c.l.b16 %v2945
      %v2979 = vunpack.c.l.b16 %v2946
      %v2980 = vunpack.c.l.b16 %v2947
      %v2981 = vunpack.c.l.b16 %v2948
      %v2982 = vunpack.c.l.b16 %v2949
      %v2983 = vunpack.c.l.b16 %v2950
      %v2984 = vunpack.c.l.b16 %v2951
      %v2985 = vunpack.c.l.b16 %v2952
      %v2986 = vunpack.c.l.b16 %v2953
      %v2987 = vunpack.c.l.b16 %v2954
      %v2988 = vunpack.c.l.b16 %v2955
      %v2989 = vunpack.c.l.b16 %v2956
      %v2990 = vunpack.c.l.b16 %v2957
      %v2991 = vunpack.c.l.b16 %v2958
      %v2992 = vpack.c.b16 %v2977, %v2976
      %v2993 = vpack.c.b16 %v2979, %v2978
      %v2994 = vpack.c.b16 %v2981, %v2980
      %v2995 = vpack.c.b16 %v2983, %v2982
      %v2996 = vpack.c.b16 %v2985, %v2984
      %v2997 = vpack.c.b16 %v2987, %v2986
      %v2998 = vpack.c.b16 %v2989, %v2988
      %v2999 = vpack.c.b16 %v2991, %v2990
      %3008 = vmatprep.subr.bf16.mxu0 0
      %3009 = vmatpush1.bf16.msra.mxu0 %v2992
      %3010 = vmatprep.subr.bf16.mxu0 0
      %3011 = vmatpush1.bf16.msra.mxu0 %v2993
      %3012 = vmatprep.subr.bf16.mxu0 0
      %3013 = vmatpush1.bf16.msra.mxu0 %v2994
      %3014 = vmatprep.subr.bf16.mxu0 0
      %3015 = vmatpush1.bf16.msra.mxu0 %v2995
      %3016 = vmatprep.subr.bf16.mxu0 0
      %3017 = vmatpush1.bf16.msra.mxu0 %v2996
      %3018 = vmatprep.subr.bf16.mxu0 0
      %3019 = vmatpush1.bf16.msra.mxu0 %v2997
      %3020 = vmatprep.subr.bf16.mxu0 0
      %3021 = vmatpush1.bf16.msra.mxu0 %v2998
      %3022 = vmatprep.subr.bf16.mxu0 0
      %3023 = vmatpush1.bf16.msra.mxu0 %v2999
      %3024 = vmatprep.subr.bf16.mxu0 0
      %3025 = vmatpush1.bf16.msra.mxu0 0
      %3026 = vmatprep.subr.bf16.mxu0 0
      %3027 = vmatpush1.bf16.msra.mxu0 0
      %3028 = vmatprep.subr.bf16.mxu0 0
      %3029 = vmatpush1.bf16.msra.mxu0 0
      %3030 = vmatprep.subr.bf16.mxu0 0
      %3031 = vmatpush1.bf16.msra.mxu0 0
      %3032 = vmatprep.subr.bf16.mxu0 0
      %3033 = vmatpush1.bf16.msra.mxu0 0
      %3034 = vmatprep.subr.bf16.mxu0 0
      %3035 = vmatpush1.bf16.msra.mxu0 0
      %3036 = vmatprep.subr.bf16.mxu0 0
      %3037 = vmatpush1.bf16.msra.mxu0 0
      %3038 = vmatprep.subr.bf16.mxu0 0
      %3039 = vmatpush1.bf16.msra.mxu0 0
      %3040 = vmatprep.mubr.bf16.mxu0 0
      %3041 = vmatmul.mubr.bf16.gmra.mrb[0].mxu0 %v2959
      %v3042 = vpop.f32.mrb[0].mxu0
      %v3043 = vadd.f32 0.0, %v3042
      %v3044 = vpop.f32.mrb[0].mxu0
      %v3045 = vpop.f32.mrb[0].mxu0
      %v3046 = vpop.f32.mrb[0].mxu0
      %3047 = vdwg.mxu0
      %vm3048 = vcmp.ge.f32.partialorder %v3043, 0.0
      %v3049 = vmul.f32 %v3043, 0.01
      %v3050 = vsel %vm3048, %v3043, %v3049
      %v3051 = vld [vmem:[%s3 + $0x5] sm:$0x1]
      %v3053 = vlaneseq
      %v3054 = vshrl.u32 %v3053, 7
      %v3055 = vsub.s32 0, %v3054
      %v3056 = vrot.slane %v3051, %v3055
      %v3058 = vmul.f32 %v3050, %v3056
      %3059 = vrot.lane.b32.xlu0 %v3058, 5
      %v3060 = vpop.permute.xlu0 %3059
      %3061 = vrot.lane.b32.xlu0 %v3058, 4
      %v3062 = vpop.permute.xlu0 %3061
      %3063 = vrot.lane.b32.xlu0 %v3058, 3
      %v3064 = vpop.permute.xlu0 %3063
      %3065 = vrot.lane.b32.xlu0 %v3058, 1
      %v3066 = vpop.permute.xlu0 %3065
      %3067 = vrot.lane.b32.xlu0 %v3058, 127
      %v3068 = vpop.permute.xlu0 %3067
      %3069 = vrot.lane.b32.xlu0 %v3058, 125
      %v3070 = vpop.permute.xlu0 %3069
      %3071 = vrot.lane.b32.xlu0 %v3058, 124
      %v3072 = vpop.permute.xlu0 %3071
      %3073 = vrot.lane.b32.xlu0 %v3058, 123
      %v3074 = vpop.permute.xlu0 %3073
      %v3075 = vpack.c.bf16 %v3062, %v3060
      %v3076 = vpack.c.bf16 %v3066, %v3064
      %v3077 = vpack.c.bf16 %v3068, %v3058
      %v3078 = vpack.c.bf16 %v3072, %v3070
      %v3079 = vpack.c.bf16 %v3074, %v3074
      %v3080 = vld [vmem:[%s1 + $0x100] sm:$0xf]
      %3081 = vset.pattern.permute.xlu0 32
      %3082 = vperm.xlu0 %3081, %v347
      %v3083 = vpop.permute.xlu0 %3082
      %v3086 = vsel %vm353, %v3080, 0
      %v3089 = vsel %vm357, %v3079, 0
      %3091 = vmatprep.subr.bf16.mxu0 0
      %3092 = vmatpush1.bf16.msra.mxu0 %v3075
      %3093 = vmatprep.subr.bf16.mxu0 0
      %3094 = vmatpush1.bf16.msra.mxu0 %v3076
      %3095 = vmatprep.subr.bf16.mxu0 0
      %3096 = vmatpush1.bf16.msra.mxu0 %v3077
      %3097 = vmatprep.subr.bf16.mxu0 0
      %3098 = vmatpush1.bf16.msra.mxu0 %v3078
      %3099 = vmatprep.subr.bf16.mxu0 0
      %3100 = vmatpush1.bf16.msra.mxu0 %v3089
      %3101 = vmatprep.subr.bf16.mxu0 0
      %3102 = vmatpush1.bf16.msra.mxu0 0
      %3103 = vmatprep.subr.bf16.mxu0 0
      %3104 = vmatpush1.bf16.msra.mxu0 0
      %3105 = vmatprep.subr.bf16.mxu0 0
      %3106 = vmatpush1.bf16.msra.mxu0 0
      %3107 = vmatprep.subr.bf16.mxu0 0
      %3108 = vmatpush1.bf16.msra.mxu0 0
      %3109 = vmatprep.subr.bf16.mxu0 0
      %3110 = vmatpush1.bf16.msra.mxu0 0
      %3111 = vmatprep.subr.bf16.mxu0 0
      %3112 = vmatpush1.bf16.msra.mxu0 0
      %3113 = vmatprep.subr.bf16.mxu0 0
      %3114 = vmatpush1.bf16.msra.mxu0 0
      %3115 = vmatprep.subr.bf16.mxu0 0
      %3116 = vmatpush1.bf16.msra.mxu0 0
      %3117 = vmatprep.subr.bf16.mxu0 0
      %3118 = vmatpush1.bf16.msra.mxu0 0
      %3119 = vmatprep.subr.bf16.mxu0 0
      %3120 = vmatpush1.bf16.msra.mxu0 0
      %3121 = vmatprep.subr.bf16.mxu0 0
      %3122 = vmatpush1.bf16.msra.mxu0 0
      %3123 = vmatprep.mubr.bf16.mxu0 0
      %3124 = vmatmul.mubr.bf16.gmra.mrb[0].mxu0 %v3086
      %v3125 = vpop.f32.mrb[0].mxu0
      %v3126 = vadd.f32 %v3083, %v3125
      %v3127 = vpop.f32.mrb[0].mxu0
      %v3128 = vpop.f32.mrb[0].mxu0
      %v3129 = vpop.f32.mrb[0].mxu0
      %3130 = vdwg.mxu0
      %v3131 = vmul.f32 %v3126, %v3126
      %v3132 = vld [vmem:[%s1 + $0x108] sm:$0xf]
      %v3133 = vpack.c.bf16 %v3131, %v3131
      %3134 = vset.pattern.permute.xlu0 33
      %3135 = vperm.xlu0 %3134, %v347
      %v3136 = vpop.permute.xlu0 %3135
      %v3139 = vsel %vm813, %v3132, 0
      %v3142 = vsel %vm357, %v3133, 0
      %3144 = vmatprep.subr.bf16.mxu0 0
      %3145 = vmatpush1.bf16.msra.mxu0 %v3142
      %3146 = vmatprep.subr.bf16.mxu0 0
      %3147 = vmatpush1.bf16.msra.mxu0 0
      %3148 = vmatprep.subr.bf16.mxu0 0
      %3149 = vmatpush1.bf16.msra.mxu0 0
      %3150 = vmatprep.subr.bf16.mxu0 0
      %3151 = vmatpush1.bf16.msra.mxu0 0
      %3152 = vmatprep.subr.bf16.mxu0 0
      %3153 = vmatpush1.bf16.msra.mxu0 0
      %3154 = vmatprep.subr.bf16.mxu0 0
      %3155 = vmatpush1.bf16.msra.mxu0 0
      %3156 = vmatprep.subr.bf16.mxu0 0
      %3157 = vmatpush1.bf16.msra.mxu0 0
      %3158 = vmatprep.subr.bf16.mxu0 0
      %3159 = vmatpush1.bf16.msra.mxu0 0
      %3160 = vmatprep.subr.bf16.mxu0 0
      %3161 = vmatpush1.bf16.msra.mxu0 0
      %3162 = vmatprep.subr.bf16.mxu0 0
      %3163 = vmatpush1.bf16.msra.mxu0 0
      %3164 = vmatprep.subr.bf16.mxu0 0
      %3165 = vmatpush1.bf16.msra.mxu0 0
      %3166 = vmatprep.subr.bf16.mxu0 0
      %3167 = vmatpush1.bf16.msra.mxu0 0
      %3168 = vmatprep.subr.bf16.mxu0 0
      %3169 = vmatpush1.bf16.msra.mxu0 0
      %3170 = vmatprep.subr.bf16.mxu0 0
      %3171 = vmatpush1.bf16.msra.mxu0 0
      %3172 = vmatprep.subr.bf16.mxu0 0
      %3173 = vmatpush1.bf16.msra.mxu0 0
      %3174 = vmatprep.subr.bf16.mxu0 0
      %3175 = vmatpush1.bf16.msra.mxu0 0
      %3176 = vmatprep.mubr.bf16.mxu0 0
      %3177 = vmatmul.mubr.bf16.gmra.mrb[0].mxu0 %v3139
      %v3178 = vpop.f32.mrb[0].mxu0
      %v3179 = vadd.f32 %v3136, %v3178
      %v3180 = vpop.f32.mrb[0].mxu0
      %v3181 = vpop.f32.mrb[0].mxu0
      %v3182 = vpop.f32.mrb[0].mxu0
      %3183 = vdwg.mxu0
      %v3184 = vrsqrt.pop %v3179
      %v3185 = vmul.f32 %v3126, %v3184
      %v3186 = vpack.c.bf16 %v2869, %v2869
      %3187 = vmatprep.subr.bf16.mxu0 0
      %3188 = vmatpush1.bf16.msra.mxu0 %v2992
      %3189 = vmatprep.subr.bf16.mxu0 0
      %3190 = vmatpush1.bf16.msra.mxu0 %v2993
      %3191 = vmatprep.subr.bf16.mxu0 0
      %3192 = vmatpush1.bf16.msra.mxu0 %v2994
      %3193 = vmatprep.subr.bf16.mxu0 0
      %3194 = vmatpush1.bf16.msra.mxu0 %v2995
      %3195 = vmatprep.subr.bf16.mxu0 0
      %3196 = vmatpush1.bf16.msra.mxu0 %v2996
      %3197 = vmatprep.subr.bf16.mxu0 0
      %3198 = vmatpush1.bf16.msra.mxu0 %v2997
      %3199 = vmatprep.subr.bf16.mxu0 0
      %3200 = vmatpush1.bf16.msra.mxu0 %v2998
      %3201 = vmatprep.subr.bf16.mxu0 0
      %3202 = vmatpush1.bf16.msra.mxu0 %v2999
      %3203 = vmatprep.subr.bf16.mxu0 0
      %3204 = vmatpush1.bf16.msra.mxu0 0
      %3205 = vmatprep.subr.bf16.mxu0 0
      %3206 = vmatpush1.bf16.msra.mxu0 0
      %3207 = vmatprep.subr.bf16.mxu0 0
      %3208 = vmatpush1.bf16.msra.mxu0 0
      %3209 = vmatprep.subr.bf16.mxu0 0
      %3210 = vmatpush1.bf16.msra.mxu0 0
      %3211 = vmatprep.subr.bf16.mxu0 0
      %3212 = vmatpush1.bf16.msra.mxu0 0
      %3213 = vmatprep.subr.bf16.mxu0 0
      %3214 = vmatpush1.bf16.msra.mxu0 0
      %3215 = vmatprep.subr.bf16.mxu0 0
      %3216 = vmatpush1.bf16.msra.mxu0 0
      %3217 = vmatprep.subr.bf16.mxu0 0
      %3218 = vmatpush1.bf16.msra.mxu0 0
      %3219 = vmatprep.mubr.bf16.mxu0 0
      %3220 = vmatmul.mubr.bf16.gmra.mrb[0].mxu0 %v3186
      %v3221 = vpop.f32.mrb[0].mxu0
      %v3222 = vadd.f32 0.0, %v3221
      %v3223 = vpop.f32.mrb[0].mxu0
      %v3224 = vpop.f32.mrb[0].mxu0
      %v3225 = vpop.f32.mrb[0].mxu0
      %3226 = vdwg.mxu0
      %v3227 = vld [vmem:[%s1 + $0x110] sm:$0xf]
      %v3228 = vpack.c.bf16 %v3222, %v3222
      %3229 = vset.pattern.permute.xlu0 34
      %3230 = vperm.xlu0 %3229, %v347
      %v3231 = vpop.permute.xlu0 %3230
      %v3234 = vsel %vm813, %v3227, 0
      %v3237 = vsel %vm357, %v3228, 0
      %3239 = vmatprep.subr.bf16.mxu0 0
      %3240 = vmatpush1.bf16.msra.mxu0 %v3237
      %3241 = vmatprep.subr.bf16.mxu0 0
      %3242 = vmatpush1.bf16.msra.mxu0 0
      %3243 = vmatprep.subr.bf16.mxu0 0
      %3244 = vmatpush1.bf16.msra.mxu0 0
      %3245 = vmatprep.subr.bf16.mxu0 0
      %3246 = vmatpush1.bf16.msra.mxu0 0
      %3247 = vmatprep.subr.bf16.mxu0 0
      %3248 = vmatpush1.bf16.msra.mxu0 0
      %3249 = vmatprep.subr.bf16.mxu0 0
      %3250 = vmatpush1.bf16.msra.mxu0 0
      %3251 = vmatprep.subr.bf16.mxu0 0
      %3252 = vmatpush1.bf16.msra.mxu0 0
      %3253 = vmatprep.subr.bf16.mxu0 0
      %3254 = vmatpush1.bf16.msra.mxu0 0
      %3255 = vmatprep.subr.bf16.mxu0 0
      %3256 = vmatpush1.bf16.msra.mxu0 0
      %3257 = vmatprep.subr.bf16.mxu0 0
      %3258 = vmatpush1.bf16.msra.mxu0 0
      %3259 = vmatprep.subr.bf16.mxu0 0
      %3260 = vmatpush1.bf16.msra.mxu0 0
      %3261 = vmatprep.subr.bf16.mxu0 0
      %3262 = vmatpush1.bf16.msra.mxu0 0
      %3263 = vmatprep.subr.bf16.mxu0 0
      %3264 = vmatpush1.bf16.msra.mxu0 0
      %3265 = vmatprep.subr.bf16.mxu0 0
      %3266 = vmatpush1.bf16.msra.mxu0 0
      %3267 = vmatprep.subr.bf16.mxu0 0
      %3268 = vmatpush1.bf16.msra.mxu0 0
      %3269 = vmatprep.subr.bf16.mxu0 0
      %3270 = vmatpush1.bf16.msra.mxu0 0
      %3271 = vmatprep.mubr.bf16.mxu0 0
      %3272 = vmatmul.mubr.bf16.gmra.mrb[0].mxu0 %v3234
      %v3273 = vpop.f32.mrb[0].mxu0
      %v3274 = vadd.f32 %v3231, %v3273
      %v3275 = vpop.f32.mrb[0].mxu0
      %v3276 = vpop.f32.mrb[0].mxu0
      %v3277 = vpop.f32.mrb[0].mxu0
      %3278 = vdwg.mxu0
      %v3279 = vadd.f32 %v3185, %v3274
      %3280 = vset.pattern.permute.xlu0 60
      %3281 = vperm.xlu0 %3280, %v347
      %v3282 = vpop.permute.xlu0 %3281
      %v3284 = vmul.f32 %v3279, %v3282
      %v3285 = vmul.f32 %v3284, %v3056
      %3286 = vrot.lane.b32.xlu0 %v3285, 5
      %v3287 = vpop.permute.xlu0 %3286
      %3288 = vrot.lane.b32.xlu0 %v3285, 4
      %v3289 = vpop.permute.xlu0 %3288
      %3290 = vrot.lane.b32.xlu0 %v3285, 3
      %v3291 = vpop.permute.xlu0 %3290
      %3292 = vrot.lane.b32.xlu0 %v3285, 1
      %v3293 = vpop.permute.xlu0 %3292
      %3294 = vrot.lane.b32.xlu0 %v3285, 127
      %v3295 = vpop.permute.xlu0 %3294
      %3296 = vrot.lane.b32.xlu0 %v3285, 125
      %v3297 = vpop.permute.xlu0 %3296
      %3298 = vrot.lane.b32.xlu0 %v3285, 124
      %v3299 = vpop.permute.xlu0 %3298
      %3300 = vrot.lane.b32.xlu0 %v3285, 123
      %v3301 = vpop.permute.xlu0 %3300
      %v3302 = vpack.c.bf16 %v3289, %v3287
      %v3303 = vpack.c.bf16 %v3293, %v3291
      %v3304 = vpack.c.bf16 %v3295, %v3285
      %v3305 = vpack.c.bf16 %v3299, %v3297
      %v3306 = vpack.c.bf16 %v3301, %v3301
      %v3307 = vld [vmem:[%s1 + $0x118] sm:$0xf]
      %3308 = vset.pattern.permute.xlu0 35
      %3309 = vperm.xlu0 %3308, %v347
      %v3310 = vpop.permute.xlu0 %3309
      %v3313 = vsel %vm353, %v3307, 0
      %v3316 = vsel %vm357, %v3306, 0
      %3318 = vmatprep.subr.bf16.mxu0 0
      %3319 = vmatpush1.bf16.msra.mxu0 %v3302
      %3320 = vmatprep.subr.bf16.mxu0 0
      %3321 = vmatpush1.bf16.msra.mxu0 %v3303
      %3322 = vmatprep.subr.bf16.mxu0 0
      %3323 = vmatpush1.bf16.msra.mxu0 %v3304
      %3324 = vmatprep.subr.bf16.mxu0 0
      %3325 = vmatpush1.bf16.msra.mxu0 %v3305
      %3326 = vmatprep.subr.bf16.mxu0 0
      %3327 = vmatpush1.bf16.msra.mxu0 %v3316
      %3328 = vmatprep.subr.bf16.mxu0 0
      %3329 = vmatpush1.bf16.msra.mxu0 0
      %3330 = vmatprep.subr.bf16.mxu0 0
      %3331 = vmatpush1.bf16.msra.mxu0 0
      %3332 = vmatprep.subr.bf16.mxu0 0
      %3333 = vmatpush1.bf16.msra.mxu0 0
      %3334 = vmatprep.subr.bf16.mxu0 0
      %3335 = vmatpush1.bf16.msra.mxu0 0
      %3336 = vmatprep.subr.bf16.mxu0 0
      %3337 = vmatpush1.bf16.msra.mxu0 0
      %3338 = vmatprep.subr.bf16.mxu0 0
      %3339 = vmatpush1.bf16.msra.mxu0 0
      %3340 = vmatprep.subr.bf16.mxu0 0
      %3341 = vmatpush1.bf16.msra.mxu0 0
      %3342 = vmatprep.subr.bf16.mxu0 0
      %3343 = vmatpush1.bf16.msra.mxu0 0
      %3344 = vmatprep.subr.bf16.mxu0 0
      %3345 = vmatpush1.bf16.msra.mxu0 0
      %3346 = vmatprep.subr.bf16.mxu0 0
      %3347 = vmatpush1.bf16.msra.mxu0 0
      %3348 = vmatprep.subr.bf16.mxu0 0
      %3349 = vmatpush1.bf16.msra.mxu0 0
      %3350 = vmatprep.mubr.bf16.mxu0 0
      %3351 = vmatmul.mubr.bf16.gmra.mrb[0].mxu0 %v3313
      %v3352 = vpop.f32.mrb[0].mxu0
      %v3353 = vadd.f32 %v3310, %v3352
      %v3354 = vpop.f32.mrb[0].mxu0
      %v3355 = vpop.f32.mrb[0].mxu0
      %v3356 = vpop.f32.mrb[0].mxu0
      %3357 = vdwg.mxu0
      %vm3358 = vcmp.ge.f32.partialorder %v3353, 0.0
      %v3359 = vmul.f32 %v3353, 0.01
      %v3360 = vsel %vm3358, %v3353, %v3359
      %v3361 = vmul.f32 %v3360, %v3056
      %3362 = vrot.lane.b32.xlu0 %v3361, 5
      %v3363 = vpop.permute.xlu0 %3362
      %3364 = vrot.lane.b32.xlu0 %v3361, 4
      %v3365 = vpop.permute.xlu0 %3364
      %3366 = vrot.lane.b32.xlu0 %v3361, 3
      %v3367 = vpop.permute.xlu0 %3366
      %3368 = vrot.lane.b32.xlu0 %v3361, 1
      %v3369 = vpop.permute.xlu0 %3368
      %3370 = vrot.lane.b32.xlu0 %v3361, 127
      %v3371 = vpop.permute.xlu0 %3370
      %3372 = vrot.lane.b32.xlu0 %v3361, 125
      %v3373 = vpop.permute.xlu0 %3372
      %3374 = vrot.lane.b32.xlu0 %v3361, 124
      %v3375 = vpop.permute.xlu0 %3374
      %3376 = vrot.lane.b32.xlu0 %v3361, 123
      %v3377 = vpop.permute.xlu0 %3376
      %v3378 = vpack.c.bf16 %v3365, %v3363
      %v3379 = vpack.c.bf16 %v3369, %v3367
      %v3380 = vpack.c.bf16 %v3371, %v3361
      %v3381 = vpack.c.bf16 %v3375, %v3373
      %v3382 = vpack.c.bf16 %v3377, %v3377
      %v3383 = vld [vmem:[%s1 + $0x120] sm:$0xf]
      %3384 = vset.pattern.permute.xlu0 36
      %3385 = vperm.xlu0 %3384, %v347
      %v3386 = vpop.permute.xlu0 %3385
      %v3389 = vsel %vm353, %v3383, 0
      %v3392 = vsel %vm357, %v3382, 0
      %3394 = vmatprep.subr.bf16.mxu0 0
      %3395 = vmatpush1.bf16.msra.mxu0 %v3378
      %3396 = vmatprep.subr.bf16.mxu0 0
      %3397 = vmatpush1.bf16.msra.mxu0 %v3379
      %3398 = vmatprep.subr.bf16.mxu0 0
      %3399 = vmatpush1.bf16.msra.mxu0 %v3380
      %3400 = vmatprep.subr.bf16.mxu0 0
      %3401 = vmatpush1.bf16.msra.mxu0 %v3381
      %3402 = vmatprep.subr.bf16.mxu0 0
      %3403 = vmatpush1.bf16.msra.mxu0 %v3392
      %3404 = vmatprep.subr.bf16.mxu0 0
      %3405 = vmatpush1.bf16.msra.mxu0 0
      %3406 = vmatprep.subr.bf16.mxu0 0
      %3407 = vmatpush1.bf16.msra.mxu0 0
      %3408 = vmatprep.subr.bf16.mxu0 0
      %3409 = vmatpush1.bf16.msra.mxu0 0
      %3410 = vmatprep.subr.bf16.mxu0 0
      %3411 = vmatpush1.bf16.msra.mxu0 0
      %3412 = vmatprep.subr.bf16.mxu0 0
      %3413 = vmatpush1.bf16.msra.mxu0 0
      %3414 = vmatprep.subr.bf16.mxu0 0
      %3415 = vmatpush1.bf16.msra.mxu0 0
      %3416 = vmatprep.subr.bf16.mxu0 0
      %3417 = vmatpush1.bf16.msra.mxu0 0
      %3418 = vmatprep.subr.bf16.mxu0 0
      %3419 = vmatpush1.bf16.msra.mxu0 0
      %3420 = vmatprep.subr.bf16.mxu0 0
      %3421 = vmatpush1.bf16.msra.mxu0 0
      %3422 = vmatprep.subr.bf16.mxu0 0
      %3423 = vmatpush1.bf16.msra.mxu0 0
      %3424 = vmatprep.subr.bf16.mxu0 0
      %3425 = vmatpush1.bf16.msra.mxu0 0
      %3426 = vmatprep.mubr.bf16.mxu0 0
      %3427 = vmatmul.mubr.bf16.gmra.mrb[0].mxu0 %v3389
      %v3428 = vpop.f32.mrb[0].mxu0
      %v3429 = vadd.f32 %v3386, %v3428
      %v3430 = vpop.f32.mrb[0].mxu0
      %v3431 = vpop.f32.mrb[0].mxu0
      %v3432 = vpop.f32.mrb[0].mxu0
      %3433 = vdwg.mxu0
      %vm3434 = vcmp.ge.f32.partialorder %v3429, 0.0
      %v3435 = vmul.f32 %v3429, 0.01
      %v3436 = vsel %vm3434, %v3429, %v3435
      %v3437 = vadd.f32 %v3436, %v3284
      %3438 = vset.pattern.permute.xlu0 61
      %3439 = vperm.xlu0 %3438, %v347
      %v3440 = vpop.permute.xlu0 %3439
      %v3442 = vmul.f32 %v3437, %v3440
      %v3443 = vmul.f32 %v3442, %v3056
      %3444 = vrot.lane.b32.xlu0 %v3443, 5
      %v3445 = vpop.permute.xlu0 %3444
      %3446 = vrot.lane.b32.xlu0 %v3443, 4
      %v3447 = vpop.permute.xlu0 %3446
      %3448 = vrot.lane.b32.xlu0 %v3443, 3
      %v3449 = vpop.permute.xlu0 %3448
      %3450 = vrot.lane.b32.xlu0 %v3443, 1
      %v3451 = vpop.permute.xlu0 %3450
      %3452 = vrot.lane.b32.xlu0 %v3443, 127
      %v3453 = vpop.permute.xlu0 %3452
      %3454 = vrot.lane.b32.xlu0 %v3443, 125
      %v3455 = vpop.permute.xlu0 %3454
      %3456 = vrot.lane.b32.xlu0 %v3443, 124
      %v3457 = vpop.permute.xlu0 %3456
      %3458 = vrot.lane.b32.xlu0 %v3443, 123
      %v3459 = vpop.permute.xlu0 %3458
      %v3460 = vpack.c.bf16 %v3447, %v3445
      %v3461 = vpack.c.bf16 %v3451, %v3449
      %v3462 = vpack.c.bf16 %v3453, %v3443
      %v3463 = vpack.c.bf16 %v3457, %v3455
      %v3464 = vpack.c.bf16 %v3459, %v3459
      %v3465 = vld [vmem:[%s1 + $0x128] sm:$0xf]
      %v3466 = vld [vmem:[%s1 + $0x12c] sm:$0xf]
      %v3467 = vld [vmem:[%s2] sm:$0xff]
      %v3468 = vld [vmem:[%s2 + $0x8] sm:$0xff]
      %3470 = vset.pattern.permute.xlu0 37
      %3471 = vperm.xlu0 %3470, %v3467
      %v3472 = vpop.permute.xlu0 %3471
      %3475 = vset.pattern.permute.xlu0 37
      %3476 = vperm.xlu0 %3475, %v3468
      %v3477 = vpop.permute.xlu0 %3476
      %v3481 = vunpack.c.l.b16 %v3465
      %v3482 = vunpack.c.l.b16 %v3466
      %v3483 = vpack.c.b16 %v3482, %v3481
      %v3485 = vsel %vm353, %v3483, 0
      %v3488 = vsel %vm357, %v3464, 0
      %3490 = vmatprep.subr.bf16.mxu0 0
      %3491 = vmatpush1.bf16.msra.mxu0 %v3460
      %3492 = vmatprep.subr.bf16.mxu0 0
      %3493 = vmatpush1.bf16.msra.mxu0 %v3461
      %3494 = vmatprep.subr.bf16.mxu0 0
      %3495 = vmatpush1.bf16.msra.mxu0 %v3462
      %3496 = vmatprep.subr.bf16.mxu0 0
      %3497 = vmatpush1.bf16.msra.mxu0 %v3463
      %3498 = vmatprep.subr.bf16.mxu0 0
      %3499 = vmatpush1.bf16.msra.mxu0 %v3488
      %3500 = vmatprep.subr.bf16.mxu0 0
      %3501 = vmatpush1.bf16.msra.mxu0 0
      %3502 = vmatprep.subr.bf16.mxu0 0
      %3503 = vmatpush1.bf16.msra.mxu0 0
      %3504 = vmatprep.subr.bf16.mxu0 0
      %3505 = vmatpush1.bf16.msra.mxu0 0
      %3506 = vmatprep.subr.bf16.mxu0 0
      %3507 = vmatpush1.bf16.msra.mxu0 0
      %3508 = vmatprep.subr.bf16.mxu0 0
      %3509 = vmatpush1.bf16.msra.mxu0 0
      %3510 = vmatprep.subr.bf16.mxu0 0
      %3511 = vmatpush1.bf16.msra.mxu0 0
      %3512 = vmatprep.subr.bf16.mxu0 0
      %3513 = vmatpush1.bf16.msra.mxu0 0
      %3514 = vmatprep.subr.bf16.mxu0 0
      %3515 = vmatpush1.bf16.msra.mxu0 0
      %3516 = vmatprep.subr.bf16.mxu0 0
      %3517 = vmatpush1.bf16.msra.mxu0 0
      %3518 = vmatprep.subr.bf16.mxu0 0
      %3519 = vmatpush1.bf16.msra.mxu0 0
      %3520 = vmatprep.subr.bf16.mxu0 0
      %3521 = vmatpush1.bf16.msra.mxu0 0
      %3522 = vmatprep.mubr.bf16.mxu0 0
      %3523 = vmatmul.mubr.bf16.gmra.mrb[0].mxu0 %v3485
      %v3524 = vpop.f32.mrb[0].mxu0
      %v3525 = vadd.f32 %v3472, %v3524
      %v3526 = vpop.f32.mrb[0].mxu0
      %v3527 = vpop.f32.mrb[0].mxu0
      %v3528 = vadd.f32 %v3477, %v3527
      %v3529 = vpop.f32.mrb[0].mxu0
      %3530 = vdwg.mxu0
      %v3531 = vld [vmem:[%s1 + $0x130] sm:$0xf]
      %v3532 = vpack.c.bf16 %v3528, %v3525
      %3533 = vset.pattern.permute.xlu0 38
      %3534 = vperm.xlu0 %3533, %v347
      %v3535 = vpop.permute.xlu0 %3534
      %vm3537 = vcmask 130048
      %v3539 = vsel %vm3537, %v3531, 0
      %3541 = vmatprep.subr.bf16.mxu0 0
      %3542 = vmatpush1.bf16.msra.mxu0 %v3532
      %3543 = vmatprep.subr.bf16.mxu0 0
      %3544 = vmatpush1.bf16.msra.mxu0 0
      %3545 = vmatprep.subr.bf16.mxu0 0
      %3546 = vmatpush1.bf16.msra.mxu0 0
      %3547 = vmatprep.subr.bf16.mxu0 0
      %3548 = vmatpush1.bf16.msra.mxu0 0
      %3549 = vmatprep.subr.bf16.mxu0 0
      %3550 = vmatpush1.bf16.msra.mxu0 0
      %3551 = vmatprep.subr.bf16.mxu0 0
      %3552 = vmatpush1.bf16.msra.mxu0 0
      %3553 = vmatprep.subr.bf16.mxu0 0
      %3554 = vmatpush1.bf16.msra.mxu0 0
      %3555 = vmatprep.subr.bf16.mxu0 0
      %3556 = vmatpush1.bf16.msra.mxu0 0
      %3557 = vmatprep.subr.bf16.mxu0 0
      %3558 = vmatpush1.bf16.msra.mxu0 0
      %3559 = vmatprep.subr.bf16.mxu0 0
      %3560 = vmatpush1.bf16.msra.mxu0 0
      %3561 = vmatprep.subr.bf16.mxu0 0
      %3562 = vmatpush1.bf16.msra.mxu0 0
      %3563 = vmatprep.subr.bf16.mxu0 0
      %3564 = vmatpush1.bf16.msra.mxu0 0
      %3565 = vmatprep.subr.bf16.mxu0 0
      %3566 = vmatpush1.bf16.msra.mxu0 0
      %3567 = vmatprep.subr.bf16.mxu0 0
      %3568 = vmatpush1.bf16.msra.mxu0 0
      %3569 = vmatprep.subr.bf16.mxu0 0
      %3570 = vmatpush1.bf16.msra.mxu0 0
      %3571 = vmatprep.subr.bf16.mxu0 0
      %3572 = vmatpush1.bf16.msra.mxu0 0
      %3573 = vmatprep.mubr.bf16.mxu0 0
      %3574 = vmatmul.mubr.bf16.gmra.mrb[0].mxu0 %v3539
      %v3575 = vpop.f32.mrb[0].mxu0
      %v3576 = vadd.f32 %v3535, %v3575
      %v3577 = vpop.f32.mrb[0].mxu0
      %v3578 = vpop.f32.mrb[0].mxu0
      %v3579 = vpop.f32.mrb[0].mxu0
      %3580 = vdwg.mxu0
      %v3581 = vmax.f32 %v3576, 0.0
      %v3582 = vld [vmem:[%s1 + $0x138] sm:$0xf]
      %v3583 = vpack.c.bf16 %v3581, %v3581
      %3584 = vset.pattern.permute.xlu0 39
      %3585 = vperm.xlu0 %3584, %v347
      %v3586 = vpop.permute.xlu0 %3585
      %v3589 = vsel %vm813, %v3582, 0
      %v3592 = vsel %vm357, %v3583, 0
      %3594 = vmatprep.subr.bf16.mxu0 0
      %3595 = vmatpush1.bf16.msra.mxu0 %v3592
      %3596 = vmatprep.subr.bf16.mxu0 0
      %3597 = vmatpush1.bf16.msra.mxu0 0
      %3598 = vmatprep.subr.bf16.mxu0 0
      %3599 = vmatpush1.bf16.msra.mxu0 0
      %3600 = vmatprep.subr.bf16.mxu0 0
      %3601 = vmatpush1.bf16.msra.mxu0 0
      %3602 = vmatprep.subr.bf16.mxu0 0
      %3603 = vmatpush1.bf16.msra.mxu0 0
      %3604 = vmatprep.subr.bf16.mxu0 0
      %3605 = vmatpush1.bf16.msra.mxu0 0
      %3606 = vmatprep.subr.bf16.mxu0 0
      %3607 = vmatpush1.bf16.msra.mxu0 0
      %3608 = vmatprep.subr.bf16.mxu0 0
      %3609 = vmatpush1.bf16.msra.mxu0 0
      %3610 = vmatprep.subr.bf16.mxu0 0
      %3611 = vmatpush1.bf16.msra.mxu0 0
      %3612 = vmatprep.subr.bf16.mxu0 0
      %3613 = vmatpush1.bf16.msra.mxu0 0
      %3614 = vmatprep.subr.bf16.mxu0 0
      %3615 = vmatpush1.bf16.msra.mxu0 0
      %3616 = vmatprep.subr.bf16.mxu0 0
      %3617 = vmatpush1.bf16.msra.mxu0 0
      %3618 = vmatprep.subr.bf16.mxu0 0
      %3619 = vmatpush1.bf16.msra.mxu0 0
      %3620 = vmatprep.subr.bf16.mxu0 0
      %3621 = vmatpush1.bf16.msra.mxu0 0
      %3622 = vmatprep.subr.bf16.mxu0 0
      %3623 = vmatpush1.bf16.msra.mxu0 0
      %3624 = vmatprep.subr.bf16.mxu0 0
      %3625 = vmatpush1.bf16.msra.mxu0 0
      %3626 = vmatprep.mubr.bf16.mxu0 0
      %3627 = vmatmul.mubr.bf16.gmra.mrb[0].mxu0 %v3589
      %v3628 = vpop.f32.mrb[0].mxu0
      %v3629 = vadd.f32 %v3586, %v3628
      %v3630 = vpop.f32.mrb[0].mxu0
      %v3631 = vpop.f32.mrb[0].mxu0
      %v3632 = vpop.f32.mrb[0].mxu0
      %3633 = vdwg.mxu0
      %v3634 = vmax.f32 %v3629, 0.0
      %v3635 = vld [vmem:[%s1 + $0x140] sm:$0xf]
      %v3636 = vld [vmem:[%s1 + $0x144] sm:$0xf]
      %v3637 = vpack.c.bf16 %v3634, %v3634
      %3638 = vset.pattern.permute.xlu0 40
      %3639 = vperm.xlu0 %3638, %v3467
      %v3640 = vpop.permute.xlu0 %3639
      %3642 = vset.pattern.permute.xlu0 40
      %3643 = vperm.xlu0 %3642, %v3468
      %v3644 = vpop.permute.xlu0 %3643
      %v3648 = vunpack.c.l.b16 %v3635
      %v3649 = vunpack.c.l.b16 %v3636
      %v3650 = vpack.c.b16 %v3649, %v3648
      %v3652 = vsel %vm813, %v3650, 0
      %v3655 = vsel %vm357, %v3637, 0
      %3657 = vmatprep.subr.bf16.mxu0 0
      %3658 = vmatpush1.bf16.msra.mxu0 %v3655
      %3659 = vmatprep.subr.bf16.mxu0 0
      %3660 = vmatpush1.bf16.msra.mxu0 0
      %3661 = vmatprep.subr.bf16.mxu0 0
      %3662 = vmatpush1.bf16.msra.mxu0 0
      %3663 = vmatprep.subr.bf16.mxu0 0
      %3664 = vmatpush1.bf16.msra.mxu0 0
      %3665 = vmatprep.subr.bf16.mxu0 0
      %3666 = vmatpush1.bf16.msra.mxu0 0
      %3667 = vmatprep.subr.bf16.mxu0 0
      %3668 = vmatpush1.bf16.msra.mxu0 0
      %3669 = vmatprep.subr.bf16.mxu0 0
      %3670 = vmatpush1.bf16.msra.mxu0 0
      %3671 = vmatprep.subr.bf16.mxu0 0
      %3672 = vmatpush1.bf16.msra.mxu0 0
      %3673 = vmatprep.subr.bf16.mxu0 0
      %3674 = vmatpush1.bf16.msra.mxu0 0
      %3675 = vmatprep.subr.bf16.mxu0 0
      %3676 = vmatpush1.bf16.msra.mxu0 0
      %3677 = vmatprep.subr.bf16.mxu0 0
      %3678 = vmatpush1.bf16.msra.mxu0 0
      %3679 = vmatprep.subr.bf16.mxu0 0
      %3680 = vmatpush1.bf16.msra.mxu0 0
      %3681 = vmatprep.subr.bf16.mxu0 0
      %3682 = vmatpush1.bf16.msra.mxu0 0
      %3683 = vmatprep.subr.bf16.mxu0 0
      %3684 = vmatpush1.bf16.msra.mxu0 0
      %3685 = vmatprep.subr.bf16.mxu0 0
      %3686 = vmatpush1.bf16.msra.mxu0 0
      %3687 = vmatprep.subr.bf16.mxu0 0
      %3688 = vmatpush1.bf16.msra.mxu0 0
      %3689 = vmatprep.mubr.bf16.mxu0 0
      %3690 = vmatmul.mubr.bf16.gmra.mrb[0].mxu0 %v3652
      %v3691 = vpop.f32.mrb[0].mxu0
      %v3692 = vadd.f32 %v3640, %v3691
      %v3693 = vpop.f32.mrb[0].mxu0
      %v3694 = vpop.f32.mrb[0].mxu0
      %v3695 = vadd.f32 %v3644, %v3694
      %v3696 = vpop.f32.mrb[0].mxu0
      %3697 = vdwg.mxu0
      %v3698 = vadd.f32 %v3692, %v3525
      %v3699 = vadd.f32 %v3695, %v3528
      %v3700 = vmax.f32 %v3698, 0.0
      %v3701 = vmax.f32 %v3699, 0.0
      %v3702 = vld [vmem:[%s1 + $0x148] sm:$0xf]
      %v3703 = vpack.c.bf16 %v3701, %v3700
      %3704 = vset.pattern.permute.xlu0 41
      %3705 = vperm.xlu0 %3704, %v347
      %v3706 = vpop.permute.xlu0 %3705
      %v3709 = vsel %vm3537, %v3702, 0
      %3711 = vmatprep.subr.bf16.mxu0 0
      %3712 = vmatpush1.bf16.msra.mxu0 %v3703
      %3713 = vmatprep.subr.bf16.mxu0 0
      %3714 = vmatpush1.bf16.msra.mxu0 0
      %3715 = vmatprep.subr.bf16.mxu0 0
      %3716 = vmatpush1.bf16.msra.mxu0 0
      %3717 = vmatprep.subr.bf16.mxu0 0
      %3718 = vmatpush1.bf16.msra.mxu0 0
      %3719 = vmatprep.subr.bf16.mxu0 0
      %3720 = vmatpush1.bf16.msra.mxu0 0
      %3721 = vmatprep.subr.bf16.mxu0 0
      %3722 = vmatpush1.bf16.msra.mxu0 0
      %3723 = vmatprep.subr.bf16.mxu0 0
      %3724 = vmatpush1.bf16.msra.mxu0 0
      %3725 = vmatprep.subr.bf16.mxu0 0
      %3726 = vmatpush1.bf16.msra.mxu0 0
      %3727 = vmatprep.subr.bf16.mxu0 0
      %3728 = vmatpush1.bf16.msra.mxu0 0
      %3729 = vmatprep.subr.bf16.mxu0 0
      %3730 = vmatpush1.bf16.msra.mxu0 0
      %3731 = vmatprep.subr.bf16.mxu0 0
      %3732 = vmatpush1.bf16.msra.mxu0 0
      %3733 = vmatprep.subr.bf16.mxu0 0
      %3734 = vmatpush1.bf16.msra.mxu0 0
      %3735 = vmatprep.subr.bf16.mxu0 0
      %3736 = vmatpush1.bf16.msra.mxu0 0
      %3737 = vmatprep.subr.bf16.mxu0 0
      %3738 = vmatpush1.bf16.msra.mxu0 0
      %3739 = vmatprep.subr.bf16.mxu0 0
      %3740 = vmatpush1.bf16.msra.mxu0 0
      %3741 = vmatprep.subr.bf16.mxu0 0
      %3742 = vmatpush1.bf16.msra.mxu0 0
      %3743 = vmatprep.mubr.bf16.mxu0 0
      %3744 = vmatmul.mubr.bf16.gmra.mrb[0].mxu0 %v3709
      %v3745 = vpop.f32.mrb[0].mxu0
      %v3746 = vadd.f32 %v3706, %v3745
      %v3747 = vpop.f32.mrb[0].mxu0
      %v3748 = vpop.f32.mrb[0].mxu0
      %v3749 = vpop.f32.mrb[0].mxu0
      %3750 = vdwg.mxu0
      %v3751 = vmax.f32 %v3746, 0.0
      %v3752 = vld [vmem:[%s1 + $0x150] sm:$0xf]
      %v3753 = vpack.c.bf16 %v3751, %v3751
      %3754 = vset.pattern.permute.xlu0 42
      %3755 = vperm.xlu0 %3754, %v347
      %v3756 = vpop.permute.xlu0 %3755
      %v3759 = vsel %vm813, %v3752, 0
      %v3762 = vsel %vm357, %v3753, 0
      %3764 = vmatprep.subr.bf16.mxu0 0
      %3765 = vmatpush1.bf16.msra.mxu0 %v3762
      %3766 = vmatprep.subr.bf16.mxu0 0
      %3767 = vmatpush1.bf16.msra.mxu0 0
      %3768 = vmatprep.subr.bf16.mxu0 0
      %3769 = vmatpush1.bf16.msra.mxu0 0
      %3770 = vmatprep.subr.bf16.mxu0 0
      %3771 = vmatpush1.bf16.msra.mxu0 0
      %3772 = vmatprep.subr.bf16.mxu0 0
      %3773 = vmatpush1.bf16.msra.mxu0 0
      %3774 = vmatprep.subr.bf16.mxu0 0
      %3775 = vmatpush1.bf16.msra.mxu0 0
      %3776 = vmatprep.subr.bf16.mxu0 0
      %3777 = vmatpush1.bf16.msra.mxu0 0
      %3778 = vmatprep.subr.bf16.mxu0 0
      %3779 = vmatpush1.bf16.msra.mxu0 0
      %3780 = vmatprep.subr.bf16.mxu0 0
      %3781 = vmatpush1.bf16.msra.mxu0 0
      %3782 = vmatprep.subr.bf16.mxu0 0
      %3783 = vmatpush1.bf16.msra.mxu0 0
      %3784 = vmatprep.subr.bf16.mxu0 0
      %3785 = vmatpush1.bf16.msra.mxu0 0
      %3786 = vmatprep.subr.bf16.mxu0 0
      %3787 = vmatpush1.bf16.msra.mxu0 0
      %3788 = vmatprep.subr.bf16.mxu0 0
      %3789 = vmatpush1.bf16.msra.mxu0 0
      %3790 = vmatprep.subr.bf16.mxu0 0
      %3791 = vmatpush1.bf16.msra.mxu0 0
      %3792 = vmatprep.subr.bf16.mxu0 0
      %3793 = vmatpush1.bf16.msra.mxu0 0
      %3794 = vmatprep.subr.bf16.mxu0 0
      %3795 = vmatpush1.bf16.msra.mxu0 0
      %3796 = vmatprep.mubr.bf16.mxu0 0
      %3797 = vmatmul.mubr.bf16.gmra.mrb[0].mxu0 %v3759
      %v3798 = vpop.f32.mrb[0].mxu0
      %v3799 = vadd.f32 %v3756, %v3798
      %v3800 = vpop.f32.mrb[0].mxu0
      %v3801 = vpop.f32.mrb[0].mxu0
      %v3802 = vpop.f32.mrb[0].mxu0
      %3803 = vdwg.mxu0
      %v3804 = vmax.f32 %v3799, 0.0
      %v3805 = vld [vmem:[%s1 + $0x158] sm:$0xf]
      %v3806 = vld [vmem:[%s1 + $0x15c] sm:$0xf]
      %v3807 = vpack.c.bf16 %v3804, %v3804
      %3808 = vset.pattern.permute.xlu0 43
      %3809 = vperm.xlu0 %3808, %v3467
      %v3810 = vpop.permute.xlu0 %3809
      %3812 = vset.pattern.permute.xlu0 43
      %3813 = vperm.xlu0 %3812, %v3468
      %v3814 = vpop.permute.xlu0 %3813
      %v3818 = vunpack.c.l.b16 %v3805
      %v3819 = vunpack.c.l.b16 %v3806
      %v3820 = vpack.c.b16 %v3819, %v3818
      %v3822 = vsel %vm813, %v3820, 0
      %v3825 = vsel %vm357, %v3807, 0
      %3827 = vmatprep.subr.bf16.mxu0 0
      %3828 = vmatpush1.bf16.msra.mxu0 %v3825
      %3829 = vmatprep.subr.bf16.mxu0 0
      %3830 = vmatpush1.bf16.msra.mxu0 0
      %3831 = vmatprep.subr.bf16.mxu0 0
      %3832 = vmatpush1.bf16.msra.mxu0 0
      %3833 = vmatprep.subr.bf16.mxu0 0
      %3834 = vmatpush1.bf16.msra.mxu0 0
      %3835 = vmatprep.subr.bf16.mxu0 0
      %3836 = vmatpush1.bf16.msra.mxu0 0
      %3837 = vmatprep.subr.bf16.mxu0 0
      %3838 = vmatpush1.bf16.msra.mxu0 0
      %3839 = vmatprep.subr.bf16.mxu0 0
      %3840 = vmatpush1.bf16.msra.mxu0 0
      %3841 = vmatprep.subr.bf16.mxu0 0
      %3842 = vmatpush1.bf16.msra.mxu0 0
      %3843 = vmatprep.subr.bf16.mxu0 0
      %3844 = vmatpush1.bf16.msra.mxu0 0
      %3845 = vmatprep.subr.bf16.mxu0 0
      %3846 = vmatpush1.bf16.msra.mxu0 0
      %3847 = vmatprep.subr.bf16.mxu0 0
      %3848 = vmatpush1.bf16.msra.mxu0 0
      %3849 = vmatprep.subr.bf16.mxu0 0
      %3850 = vmatpush1.bf16.msra.mxu0 0
      %3851 = vmatprep.subr.bf16.mxu0 0
      %3852 = vmatpush1.bf16.msra.mxu0 0
      %3853 = vmatprep.subr.bf16.mxu0 0
      %3854 = vmatpush1.bf16.msra.mxu0 0
      %3855 = vmatprep.subr.bf16.mxu0 0
      %3856 = vmatpush1.bf16.msra.mxu0 0
      %3857 = vmatprep.subr.bf16.mxu0 0
      %3858 = vmatpush1.bf16.msra.mxu0 0
      %3859 = vmatprep.mubr.bf16.mxu0 0
      %3860 = vmatmul.mubr.bf16.gmra.mrb[0].mxu0 %v3822
      %v3861 = vpop.f32.mrb[0].mxu0
      %v3862 = vadd.f32 %v3810, %v3861
      %v3863 = vpop.f32.mrb[0].mxu0
      %v3864 = vpop.f32.mrb[0].mxu0
      %v3865 = vadd.f32 %v3814, %v3864
      %v3866 = vpop.f32.mrb[0].mxu0
      %3867 = vdwg.mxu0
      %v3868 = vadd.f32 %v3862, %v3700
      %v3869 = vadd.f32 %v3865, %v3701
      %v3870 = vmax.f32 %v3868, 0.0
      %v3871 = vmax.f32 %v3869, 0.0
      %v3872 = vld [vmem:[%s1 + $0x160] sm:$0xf]
      %v3873 = vpack.c.bf16 %v3871, %v3870
      %3874 = vset.pattern.permute.xlu0 44
      %3875 = vperm.xlu0 %3874, %v347
      %v3876 = vpop.permute.xlu0 %3875
      %v3879 = vsel %vm3537, %v3872, 0
      %3881 = vmatprep.subr.bf16.mxu0 0
      %3882 = vmatpush1.bf16.msra.mxu0 %v3873
      %3883 = vmatprep.subr.bf16.mxu0 0
      %3884 = vmatpush1.bf16.msra.mxu0 0
      %3885 = vmatprep.subr.bf16.mxu0 0
      %3886 = vmatpush1.bf16.msra.mxu0 0
      %3887 = vmatprep.subr.bf16.mxu0 0
      %3888 = vmatpush1.bf16.msra.mxu0 0
      %3889 = vmatprep.subr.bf16.mxu0 0
      %3890 = vmatpush1.bf16.msra.mxu0 0
      %3891 = vmatprep.subr.bf16.mxu0 0
      %3892 = vmatpush1.bf16.msra.mxu0 0
      %3893 = vmatprep.subr.bf16.mxu0 0
      %3894 = vmatpush1.bf16.msra.mxu0 0
      %3895 = vmatprep.subr.bf16.mxu0 0
      %3896 = vmatpush1.bf16.msra.mxu0 0
      %3897 = vmatprep.subr.bf16.mxu0 0
      %3898 = vmatpush1.bf16.msra.mxu0 0
      %3899 = vmatprep.subr.bf16.mxu0 0
      %3900 = vmatpush1.bf16.msra.mxu0 0
      %3901 = vmatprep.subr.bf16.mxu0 0
      %3902 = vmatpush1.bf16.msra.mxu0 0
      %3903 = vmatprep.subr.bf16.mxu0 0
      %3904 = vmatpush1.bf16.msra.mxu0 0
      %3905 = vmatprep.subr.bf16.mxu0 0
      %3906 = vmatpush1.bf16.msra.mxu0 0
      %3907 = vmatprep.subr.bf16.mxu0 0
      %3908 = vmatpush1.bf16.msra.mxu0 0
      %3909 = vmatprep.subr.bf16.mxu0 0
      %3910 = vmatpush1.bf16.msra.mxu0 0
      %3911 = vmatprep.subr.bf16.mxu0 0
      %3912 = vmatpush1.bf16.msra.mxu0 0
      %3913 = vmatprep.mubr.bf16.mxu0 0
      %3914 = vmatmul.mubr.bf16.gmra.mrb[0].mxu0 %v3879
      %v3915 = vpop.f32.mrb[0].mxu0
      %v3916 = vadd.f32 %v3876, %v3915
      %v3917 = vpop.f32.mrb[0].mxu0
      %v3918 = vpop.f32.mrb[0].mxu0
      %v3919 = vpop.f32.mrb[0].mxu0
      %3920 = vdwg.mxu0
      %v3921 = vmax.f32 %v3916, 0.0
      %v3922 = vld [vmem:[%s1 + $0x168] sm:$0xf]
      %v3923 = vpack.c.bf16 %v3921, %v3921
      %3924 = vset.pattern.permute.xlu0 45
      %3925 = vperm.xlu0 %3924, %v347
      %v3926 = vpop.permute.xlu0 %3925
      %v3929 = vsel %vm813, %v3922, 0
      %v3932 = vsel %vm357, %v3923, 0
      %3934 = vmatprep.subr.bf16.mxu0 0
      %3935 = vmatpush1.bf16.msra.mxu0 %v3932
      %3936 = vmatprep.subr.bf16.mxu0 0
      %3937 = vmatpush1.bf16.msra.mxu0 0
      %3938 = vmatprep.subr.bf16.mxu0 0
      %3939 = vmatpush1.bf16.msra.mxu0 0
      %3940 = vmatprep.subr.bf16.mxu0 0
      %3941 = vmatpush1.bf16.msra.mxu0 0
      %3942 = vmatprep.subr.bf16.mxu0 0
      %3943 = vmatpush1.bf16.msra.mxu0 0
      %3944 = vmatprep.subr.bf16.mxu0 0
      %3945 = vmatpush1.bf16.msra.mxu0 0
      %3946 = vmatprep.subr.bf16.mxu0 0
      %3947 = vmatpush1.bf16.msra.mxu0 0
      %3948 = vmatprep.subr.bf16.mxu0 0
      %3949 = vmatpush1.bf16.msra.mxu0 0
      %3950 = vmatprep.subr.bf16.mxu0 0
      %3951 = vmatpush1.bf16.msra.mxu0 0
      %3952 = vmatprep.subr.bf16.mxu0 0
      %3953 = vmatpush1.bf16.msra.mxu0 0
      %3954 = vmatprep.subr.bf16.mxu0 0
      %3955 = vmatpush1.bf16.msra.mxu0 0
      %3956 = vmatprep.subr.bf16.mxu0 0
      %3957 = vmatpush1.bf16.msra.mxu0 0
      %3958 = vmatprep.subr.bf16.mxu0 0
      %3959 = vmatpush1.bf16.msra.mxu0 0
      %3960 = vmatprep.subr.bf16.mxu0 0
      %3961 = vmatpush1.bf16.msra.mxu0 0
      %3962 = vmatprep.subr.bf16.mxu0 0
      %3963 = vmatpush1.bf16.msra.mxu0 0
      %3964 = vmatprep.subr.bf16.mxu0 0
      %3965 = vmatpush1.bf16.msra.mxu0 0
      %3966 = vmatprep.mubr.bf16.mxu0 0
      %3967 = vmatmul.mubr.bf16.gmra.mrb[0].mxu0 %v3929
      %v3968 = vpop.f32.mrb[0].mxu0
      %v3969 = vadd.f32 %v3926, %v3968
      %v3970 = vpop.f32.mrb[0].mxu0
      %v3971 = vpop.f32.mrb[0].mxu0
      %v3972 = vpop.f32.mrb[0].mxu0
      %3973 = vdwg.mxu0
      %v3974 = vmax.f32 %v3969, 0.0
      %v3975 = vld [vmem:[%s1 + $0x170] sm:$0xf]
      %v3976 = vld [vmem:[%s1 + $0x174] sm:$0xf]
      %v3977 = vpack.c.bf16 %v3974, %v3974
      %3978 = vset.pattern.permute.xlu0 46
      %3979 = vperm.xlu0 %3978, %v3467
      %v3980 = vpop.permute.xlu0 %3979
      %3982 = vset.pattern.permute.xlu0 46
      %3983 = vperm.xlu0 %3982, %v3468
      %v3984 = vpop.permute.xlu0 %3983
      %v3988 = vunpack.c.l.b16 %v3975
      %v3989 = vunpack.c.l.b16 %v3976
      %v3990 = vpack.c.b16 %v3989, %v3988
      %v3992 = vsel %vm813, %v3990, 0
      %v3995 = vsel %vm357, %v3977, 0
      %3997 = vmatprep.subr.bf16.mxu0 0
      %3998 = vmatpush1.bf16.msra.mxu0 %v3995
      %3999 = vmatprep.subr.bf16.mxu0 0
      %4000 = vmatpush1.bf16.msra.mxu0 0
      %4001 = vmatprep.subr.bf16.mxu0 0
      %4002 = vmatpush1.bf16.msra.mxu0 0
      %4003 = vmatprep.subr.bf16.mxu0 0
      %4004 = vmatpush1.bf16.msra.mxu0 0
      %4005 = vmatprep.subr.bf16.mxu0 0
      %4006 = vmatpush1.bf16.msra.mxu0 0
      %4007 = vmatprep.subr.bf16.mxu0 0
      %4008 = vmatpush1.bf16.msra.mxu0 0
      %4009 = vmatprep.subr.bf16.mxu0 0
      %4010 = vmatpush1.bf16.msra.mxu0 0
      %4011 = vmatprep.subr.bf16.mxu0 0
      %4012 = vmatpush1.bf16.msra.mxu0 0
      %4013 = vmatprep.subr.bf16.mxu0 0
      %4014 = vmatpush1.bf16.msra.mxu0 0
      %4015 = vmatprep.subr.bf16.mxu0 0
      %4016 = vmatpush1.bf16.msra.mxu0 0
      %4017 = vmatprep.subr.bf16.mxu0 0
      %4018 = vmatpush1.bf16.msra.mxu0 0
      %4019 = vmatprep.subr.bf16.mxu0 0
      %4020 = vmatpush1.bf16.msra.mxu0 0
      %4021 = vmatprep.subr.bf16.mxu0 0
      %4022 = vmatpush1.bf16.msra.mxu0 0
      %4023 = vmatprep.subr.bf16.mxu0 0
      %4024 = vmatpush1.bf16.msra.mxu0 0
      %4025 = vmatprep.subr.bf16.mxu0 0
      %4026 = vmatpush1.bf16.msra.mxu0 0
      %4027 = vmatprep.subr.bf16.mxu0 0
      %4028 = vmatpush1.bf16.msra.mxu0 0
      %4029 = vmatprep.mubr.bf16.mxu0 0
      %4030 = vmatmul.mubr.bf16.gmra.mrb[0].mxu0 %v3992
      %v4031 = vpop.f32.mrb[0].mxu0
      %v4032 = vadd.f32 %v3980, %v4031
      %v4033 = vpop.f32.mrb[0].mxu0
      %v4034 = vpop.f32.mrb[0].mxu0
      %v4035 = vadd.f32 %v3984, %v4034
      %v4036 = vpop.f32.mrb[0].mxu0
      %4037 = vdwg.mxu0
      %v4038 = vadd.f32 %v4032, %v3870
      %v4039 = vadd.f32 %v4035, %v3871
      %v4040 = vmax.f32 %v4038, 0.0
      %v4041 = vmax.f32 %v4039, 0.0
      %v4042 = vld [vmem:[%s1 + $0x178] sm:$0xf]
      %4043 = vset.pattern.permute.xlu0 47
      %4044 = vperm.xlu0 %4043, %v347
      %v4045 = vpop.permute.xlu0 %4044
      %v4048 = vsel %vm3537, %v4042, 0
      %4050 = vmatprep.subr.bf16.mxu0 0
      %4051 = vmatpush1.bf16.msra.mxu0 %v3532
      %4052 = vmatprep.subr.bf16.mxu0 0
      %4053 = vmatpush1.bf16.msra.mxu0 0
      %4054 = vmatprep.subr.bf16.mxu0 0
      %4055 = vmatpush1.bf16.msra.mxu0 0
      %4056 = vmatprep.subr.bf16.mxu0 0
      %4057 = vmatpush1.bf16.msra.mxu0 0
      %4058 = vmatprep.subr.bf16.mxu0 0
      %4059 = vmatpush1.bf16.msra.mxu0 0
      %4060 = vmatprep.subr.bf16.mxu0 0
      %4061 = vmatpush1.bf16.msra.mxu0 0
      %4062 = vmatprep.subr.bf16.mxu0 0
      %4063 = vmatpush1.bf16.msra.mxu0 0
      %4064 = vmatprep.subr.bf16.mxu0 0
      %4065 = vmatpush1.bf16.msra.mxu0 0
      %4066 = vmatprep.subr.bf16.mxu0 0
      %4067 = vmatpush1.bf16.msra.mxu0 0
      %4068 = vmatprep.subr.bf16.mxu0 0
      %4069 = vmatpush1.bf16.msra.mxu0 0
      %4070 = vmatprep.subr.bf16.mxu0 0
      %4071 = vmatpush1.bf16.msra.mxu0 0
      %4072 = vmatprep.subr.bf16.mxu0 0
      %4073 = vmatpush1.bf16.msra.mxu0 0
      %4074 = vmatprep.subr.bf16.mxu0 0
      %4075 = vmatpush1.bf16.msra.mxu0 0
      %4076 = vmatprep.subr.bf16.mxu0 0
      %4077 = vmatpush1.bf16.msra.mxu0 0
      %4078 = vmatprep.subr.bf16.mxu0 0
      %4079 = vmatpush1.bf16.msra.mxu0 0
      %4080 = vmatprep.subr.bf16.mxu0 0
      %4081 = vmatpush1.bf16.msra.mxu0 0
      %4082 = vmatprep.mubr.bf16.mxu0 0
      %4083 = vmatmul.mubr.bf16.gmra.mrb[0].mxu0 %v4048
      %v4084 = vpop.f32.mrb[0].mxu0
      %v4085 = vadd.f32 %v4045, %v4084
      %v4086 = vpop.f32.mrb[0].mxu0
      %v4087 = vpop.f32.mrb[0].mxu0
      %v4088 = vpop.f32.mrb[0].mxu0
      %4089 = vdwg.mxu0
      %v4090 = vmax.f32 %v4085, 0.0
      %v4091 = vld [vmem:[%s1 + $0x180] sm:$0xf]
      %v4092 = vpack.c.bf16 %v4090, %v4090
      %4093 = vset.pattern.permute.xlu0 48
      %4094 = vperm.xlu0 %4093, %v347
      %v4095 = vpop.permute.xlu0 %4094
      %v4098 = vsel %vm813, %v4091, 0
      %v4101 = vsel %vm357, %v4092, 0
      %4103 = vmatprep.subr.bf16.mxu0 0
      %4104 = vmatpush1.bf16.msra.mxu0 %v4101
      %4105 = vmatprep.subr.bf16.mxu0 0
      %4106 = vmatpush1.bf16.msra.mxu0 0
      %4107 = vmatprep.subr.bf16.mxu0 0
      %4108 = vmatpush1.bf16.msra.mxu0 0
      %4109 = vmatprep.subr.bf16.mxu0 0
      %4110 = vmatpush1.bf16.msra.mxu0 0
      %4111 = vmatprep.subr.bf16.mxu0 0
      %4112 = vmatpush1.bf16.msra.mxu0 0
      %4113 = vmatprep.subr.bf16.mxu0 0
      %4114 = vmatpush1.bf16.msra.mxu0 0
      %4115 = vmatprep.subr.bf16.mxu0 0
      %4116 = vmatpush1.bf16.msra.mxu0 0
      %4117 = vmatprep.subr.bf16.mxu0 0
      %4118 = vmatpush1.bf16.msra.mxu0 0
      %4119 = vmatprep.subr.bf16.mxu0 0
      %4120 = vmatpush1.bf16.msra.mxu0 0
      %4121 = vmatprep.subr.bf16.mxu0 0
      %4122 = vmatpush1.bf16.msra.mxu0 0
      %4123 = vmatprep.subr.bf16.mxu0 0
      %4124 = vmatpush1.bf16.msra.mxu0 0
      %4125 = vmatprep.subr.bf16.mxu0 0
      %4126 = vmatpush1.bf16.msra.mxu0 0
      %4127 = vmatprep.subr.bf16.mxu0 0
      %4128 = vmatpush1.bf16.msra.mxu0 0
      %4129 = vmatprep.subr.bf16.mxu0 0
      %4130 = vmatpush1.bf16.msra.mxu0 0
      %4131 = vmatprep.subr.bf16.mxu0 0
      %4132 = vmatpush1.bf16.msra.mxu0 0
      %4133 = vmatprep.subr.bf16.mxu0 0
      %4134 = vmatpush1.bf16.msra.mxu0 0
      %4135 = vmatprep.mubr.bf16.mxu0 0
      %4136 = vmatmul.mubr.bf16.gmra.mrb[0].mxu0 %v4098
      %v4137 = vpop.f32.mrb[0].mxu0
      %v4138 = vadd.f32 %v4095, %v4137
      %v4139 = vpop.f32.mrb[0].mxu0
      %v4140 = vpop.f32.mrb[0].mxu0
      %v4141 = vpop.f32.mrb[0].mxu0
      %4142 = vdwg.mxu0
      %v4143 = vmax.f32 %v4138, 0.0
      %v4144 = vld [vmem:[%s1 + $0x188] sm:$0xf]
      %v4145 = vld [vmem:[%s1 + $0x18c] sm:$0xf]
      %v4146 = vpack.c.bf16 %v4143, %v4143
      %4147 = vset.pattern.permute.xlu0 49
      %4148 = vperm.xlu0 %4147, %v3467
      %v4149 = vpop.permute.xlu0 %4148
      %4151 = vset.pattern.permute.xlu0 49
      %4152 = vperm.xlu0 %4151, %v3468
      %v4153 = vpop.permute.xlu0 %4152
      %v4157 = vunpack.c.l.b16 %v4144
      %v4158 = vunpack.c.l.b16 %v4145
      %v4159 = vpack.c.b16 %v4158, %v4157
      %v4161 = vsel %vm813, %v4159, 0
      %v4164 = vsel %vm357, %v4146, 0
      %4166 = vmatprep.subr.bf16.mxu0 0
      %4167 = vmatpush1.bf16.msra.mxu0 %v4164
      %4168 = vmatprep.subr.bf16.mxu0 0
      %4169 = vmatpush1.bf16.msra.mxu0 0
      %4170 = vmatprep.subr.bf16.mxu0 0
      %4171 = vmatpush1.bf16.msra.mxu0 0
      %4172 = vmatprep.subr.bf16.mxu0 0
      %4173 = vmatpush1.bf16.msra.mxu0 0
      %4174 = vmatprep.subr.bf16.mxu0 0
      %4175 = vmatpush1.bf16.msra.mxu0 0
      %4176 = vmatprep.subr.bf16.mxu0 0
      %4177 = vmatpush1.bf16.msra.mxu0 0
      %4178 = vmatprep.subr.bf16.mxu0 0
      %4179 = vmatpush1.bf16.msra.mxu0 0
      %4180 = vmatprep.subr.bf16.mxu0 0
      %4181 = vmatpush1.bf16.msra.mxu0 0
      %4182 = vmatprep.subr.bf16.mxu0 0
      %4183 = vmatpush1.bf16.msra.mxu0 0
      %4184 = vmatprep.subr.bf16.mxu0 0
      %4185 = vmatpush1.bf16.msra.mxu0 0
      %4186 = vmatprep.subr.bf16.mxu0 0
      %4187 = vmatpush1.bf16.msra.mxu0 0
      %4188 = vmatprep.subr.bf16.mxu0 0
      %4189 = vmatpush1.bf16.msra.mxu0 0
      %4190 = vmatprep.subr.bf16.mxu0 0
      %4191 = vmatpush1.bf16.msra.mxu0 0
      %4192 = vmatprep.subr.bf16.mxu0 0
      %4193 = vmatpush1.bf16.msra.mxu0 0
      %4194 = vmatprep.subr.bf16.mxu0 0
      %4195 = vmatpush1.bf16.msra.mxu0 0
      %4196 = vmatprep.subr.bf16.mxu0 0
      %4197 = vmatpush1.bf16.msra.mxu0 0
      %4198 = vmatprep.mubr.bf16.mxu0 0
      %4199 = vmatmul.mubr.bf16.gmra.mrb[0].mxu0 %v4161
      %v4200 = vpop.f32.mrb[0].mxu0
      %v4201 = vadd.f32 %v4149, %v4200
      %v4202 = vpop.f32.mrb[0].mxu0
      %v4203 = vpop.f32.mrb[0].mxu0
      %v4204 = vadd.f32 %v4153, %v4203
      %v4205 = vpop.f32.mrb[0].mxu0
      %4206 = vdwg.mxu0
      %v4207 = vadd.f32 %v4201, %v3525
      %v4208 = vadd.f32 %v4204, %v3528
      %v4209 = vmax.f32 %v4207, 0.0
      %v4210 = vmax.f32 %v4208, 0.0
      %v4211 = vld [vmem:[%s1 + $0x190] sm:$0xf]
      %v4212 = vpack.c.bf16 %v4210, %v4209
      %4213 = vset.pattern.permute.xlu0 50
      %4214 = vperm.xlu0 %4213, %v347
      %v4215 = vpop.permute.xlu0 %4214
      %v4218 = vsel %vm3537, %v4211, 0
      %4220 = vmatprep.subr.bf16.mxu0 0
      %4221 = vmatpush1.bf16.msra.mxu0 %v4212
      %4222 = vmatprep.subr.bf16.mxu0 0
      %4223 = vmatpush1.bf16.msra.mxu0 0
      %4224 = vmatprep.subr.bf16.mxu0 0
      %4225 = vmatpush1.bf16.msra.mxu0 0
      %4226 = vmatprep.subr.bf16.mxu0 0
      %4227 = vmatpush1.bf16.msra.mxu0 0
      %4228 = vmatprep.subr.bf16.mxu0 0
      %4229 = vmatpush1.bf16.msra.mxu0 0
      %4230 = vmatprep.subr.bf16.mxu0 0
      %4231 = vmatpush1.bf16.msra.mxu0 0
      %4232 = vmatprep.subr.bf16.mxu0 0
      %4233 = vmatpush1.bf16.msra.mxu0 0
      %4234 = vmatprep.subr.bf16.mxu0 0
      %4235 = vmatpush1.bf16.msra.mxu0 0
      %4236 = vmatprep.subr.bf16.mxu0 0
      %4237 = vmatpush1.bf16.msra.mxu0 0
      %4238 = vmatprep.subr.bf16.mxu0 0
      %4239 = vmatpush1.bf16.msra.mxu0 0
      %4240 = vmatprep.subr.bf16.mxu0 0
      %4241 = vmatpush1.bf16.msra.mxu0 0
      %4242 = vmatprep.subr.bf16.mxu0 0
      %4243 = vmatpush1.bf16.msra.mxu0 0
      %4244 = vmatprep.subr.bf16.mxu0 0
      %4245 = vmatpush1.bf16.msra.mxu0 0
      %4246 = vmatprep.subr.bf16.mxu0 0
      %4247 = vmatpush1.bf16.msra.mxu0 0
      %4248 = vmatprep.subr.bf16.mxu0 0
      %4249 = vmatpush1.bf16.msra.mxu0 0
      %4250 = vmatprep.subr.bf16.mxu0 0
      %4251 = vmatpush1.bf16.msra.mxu0 0
      %4252 = vmatprep.mubr.bf16.mxu0 0
      %4253 = vmatmul.mubr.bf16.gmra.mrb[0].mxu0 %v4218
      %v4254 = vpop.f32.mrb[0].mxu0
      %v4255 = vadd.f32 %v4215, %v4254
      %v4256 = vpop.f32.mrb[0].mxu0
      %v4257 = vpop.f32.mrb[0].mxu0
      %v4258 = vpop.f32.mrb[0].mxu0
      %4259 = vdwg.mxu0
      %v4260 = vmax.f32 %v4255, 0.0
      %v4261 = vld [vmem:[%s1 + $0x198] sm:$0xf]
      %v4262 = vpack.c.bf16 %v4260, %v4260
      %4263 = vset.pattern.permute.xlu0 51
      %4264 = vperm.xlu0 %4263, %v347
      %v4265 = vpop.permute.xlu0 %4264
      %v4268 = vsel %vm813, %v4261, 0
      %v4271 = vsel %vm357, %v4262, 0
      %4273 = vmatprep.subr.bf16.mxu0 0
      %4274 = vmatpush1.bf16.msra.mxu0 %v4271
      %4275 = vmatprep.subr.bf16.mxu0 0
      %4276 = vmatpush1.bf16.msra.mxu0 0
      %4277 = vmatprep.subr.bf16.mxu0 0
      %4278 = vmatpush1.bf16.msra.mxu0 0
      %4279 = vmatprep.subr.bf16.mxu0 0
      %4280 = vmatpush1.bf16.msra.mxu0 0
      %4281 = vmatprep.subr.bf16.mxu0 0
      %4282 = vmatpush1.bf16.msra.mxu0 0
      %4283 = vmatprep.subr.bf16.mxu0 0
      %4284 = vmatpush1.bf16.msra.mxu0 0
      %4285 = vmatprep.subr.bf16.mxu0 0
      %4286 = vmatpush1.bf16.msra.mxu0 0
      %4287 = vmatprep.subr.bf16.mxu0 0
      %4288 = vmatpush1.bf16.msra.mxu0 0
      %4289 = vmatprep.subr.bf16.mxu0 0
      %4290 = vmatpush1.bf16.msra.mxu0 0
      %4291 = vmatprep.subr.bf16.mxu0 0
      %4292 = vmatpush1.bf16.msra.mxu0 0
      %4293 = vmatprep.subr.bf16.mxu0 0
      %4294 = vmatpush1.bf16.msra.mxu0 0
      %4295 = vmatprep.subr.bf16.mxu0 0
      %4296 = vmatpush1.bf16.msra.mxu0 0
      %4297 = vmatprep.subr.bf16.mxu0 0
      %4298 = vmatpush1.bf16.msra.mxu0 0
      %4299 = vmatprep.subr.bf16.mxu0 0
      %4300 = vmatpush1.bf16.msra.mxu0 0
      %4301 = vmatprep.subr.bf16.mxu0 0
      %4302 = vmatpush1.bf16.msra.mxu0 0
      %4303 = vmatprep.subr.bf16.mxu0 0
      %4304 = vmatpush1.bf16.msra.mxu0 0
      %4305 = vmatprep.mubr.bf16.mxu0 0
      %4306 = vmatmul.mubr.bf16.gmra.mrb[0].mxu0 %v4268
      %v4307 = vpop.f32.mrb[0].mxu0
      %v4308 = vadd.f32 %v4265, %v4307
      %v4309 = vpop.f32.mrb[0].mxu0
      %v4310 = vpop.f32.mrb[0].mxu0
      %v4311 = vpop.f32.mrb[0].mxu0
      %4312 = vdwg.mxu0
      %v4313 = vmax.f32 %v4308, 0.0
      %v4314 = vld [vmem:[%s1 + $0x1a0] sm:$0xf]
      %v4315 = vld [vmem:[%s1 + $0x1a4] sm:$0xf]
      %v4316 = vpack.c.bf16 %v4313, %v4313
      %4317 = vset.pattern.permute.xlu0 52
      %4318 = vperm.xlu0 %4317, %v3467
      %v4319 = vpop.permute.xlu0 %4318
      %4321 = vset.pattern.permute.xlu0 52
      %4322 = vperm.xlu0 %4321, %v3468
      %v4323 = vpop.permute.xlu0 %4322
      %v4327 = vunpack.c.l.b16 %v4314
      %v4328 = vunpack.c.l.b16 %v4315
      %v4329 = vpack.c.b16 %v4328, %v4327
      %v4331 = vsel %vm813, %v4329, 0
      %v4334 = vsel %vm357, %v4316, 0
      %4336 = vmatprep.subr.bf16.mxu0 0
      %4337 = vmatpush1.bf16.msra.mxu0 %v4334
      %4338 = vmatprep.subr.bf16.mxu0 0
      %4339 = vmatpush1.bf16.msra.mxu0 0
      %4340 = vmatprep.subr.bf16.mxu0 0
      %4341 = vmatpush1.bf16.msra.mxu0 0
      %4342 = vmatprep.subr.bf16.mxu0 0
      %4343 = vmatpush1.bf16.msra.mxu0 0
      %4344 = vmatprep.subr.bf16.mxu0 0
      %4345 = vmatpush1.bf16.msra.mxu0 0
      %4346 = vmatprep.subr.bf16.mxu0 0
      %4347 = vmatpush1.bf16.msra.mxu0 0
      %4348 = vmatprep.subr.bf16.mxu0 0
      %4349 = vmatpush1.bf16.msra.mxu0 0
      %4350 = vmatprep.subr.bf16.mxu0 0
      %4351 = vmatpush1.bf16.msra.mxu0 0
      %4352 = vmatprep.subr.bf16.mxu0 0
      %4353 = vmatpush1.bf16.msra.mxu0 0
      %4354 = vmatprep.subr.bf16.mxu0 0
      %4355 = vmatpush1.bf16.msra.mxu0 0
      %4356 = vmatprep.subr.bf16.mxu0 0
      %4357 = vmatpush1.bf16.msra.mxu0 0
      %4358 = vmatprep.subr.bf16.mxu0 0
      %4359 = vmatpush1.bf16.msra.mxu0 0
      %4360 = vmatprep.subr.bf16.mxu0 0
      %4361 = vmatpush1.bf16.msra.mxu0 0
      %4362 = vmatprep.subr.bf16.mxu0 0
      %4363 = vmatpush1.bf16.msra.mxu0 0
      %4364 = vmatprep.subr.bf16.mxu0 0
      %4365 = vmatpush1.bf16.msra.mxu0 0
      %4366 = vmatprep.subr.bf16.mxu0 0
      %4367 = vmatpush1.bf16.msra.mxu0 0
      %4368 = vmatprep.mubr.bf16.mxu0 0
      %4369 = vmatmul.mubr.bf16.gmra.mrb[0].mxu0 %v4331
      %v4370 = vpop.f32.mrb[0].mxu0
      %v4371 = vadd.f32 %v4319, %v4370
      %v4372 = vpop.f32.mrb[0].mxu0
      %v4373 = vpop.f32.mrb[0].mxu0
      %v4374 = vadd.f32 %v4323, %v4373
      %v4375 = vpop.f32.mrb[0].mxu0
      %4376 = vdwg.mxu0
      %v4377 = vadd.f32 %v4371, %v4209
      %v4378 = vadd.f32 %v4374, %v4210
      %v4379 = vmax.f32 %v4377, 0.0
      %v4380 = vmax.f32 %v4378, 0.0
      %v4381 = vld [vmem:[%s1 + $0x1a8] sm:$0xf]
      %v4382 = vpack.c.bf16 %v4380, %v4379
      %4383 = vset.pattern.permute.xlu0 53
      %4384 = vperm.xlu0 %4383, %v347
      %v4385 = vpop.permute.xlu0 %4384
      %v4388 = vsel %vm3537, %v4381, 0
      %4390 = vmatprep.subr.bf16.mxu0 0
      %4391 = vmatpush1.bf16.msra.mxu0 %v4382
      %4392 = vmatprep.subr.bf16.mxu0 0
      %4393 = vmatpush1.bf16.msra.mxu0 0
      %4394 = vmatprep.subr.bf16.mxu0 0
      %4395 = vmatpush1.bf16.msra.mxu0 0
      %4396 = vmatprep.subr.bf16.mxu0 0
      %4397 = vmatpush1.bf16.msra.mxu0 0
      %4398 = vmatprep.subr.bf16.mxu0 0
      %4399 = vmatpush1.bf16.msra.mxu0 0
      %4400 = vmatprep.subr.bf16.mxu0 0
      %4401 = vmatpush1.bf16.msra.mxu0 0
      %4402 = vmatprep.subr.bf16.mxu0 0
      %4403 = vmatpush1.bf16.msra.mxu0 0
      %4404 = vmatprep.subr.bf16.mxu0 0
      %4405 = vmatpush1.bf16.msra.mxu0 0
      %4406 = vmatprep.subr.bf16.mxu0 0
      %4407 = vmatpush1.bf16.msra.mxu0 0
      %4408 = vmatprep.subr.bf16.mxu0 0
      %4409 = vmatpush1.bf16.msra.mxu0 0
      %4410 = vmatprep.subr.bf16.mxu0 0
      %4411 = vmatpush1.bf16.msra.mxu0 0
      %4412 = vmatprep.subr.bf16.mxu0 0
      %4413 = vmatpush1.bf16.msra.mxu0 0
      %4414 = vmatprep.subr.bf16.mxu0 0
      %4415 = vmatpush1.bf16.msra.mxu0 0
      %4416 = vmatprep.subr.bf16.mxu0 0
      %4417 = vmatpush1.bf16.msra.mxu0 0
      %4418 = vmatprep.subr.bf16.mxu0 0
      %4419 = vmatpush1.bf16.msra.mxu0 0
      %4420 = vmatprep.subr.bf16.mxu0 0
      %4421 = vmatpush1.bf16.msra.mxu0 0
      %4422 = vmatprep.mubr.bf16.mxu0 0
      %4423 = vmatmul.mubr.bf16.gmra.mrb[0].mxu0 %v4388
      %v4424 = vpop.f32.mrb[0].mxu0
      %v4425 = vadd.f32 %v4385, %v4424
      %v4426 = vpop.f32.mrb[0].mxu0
      %v4427 = vpop.f32.mrb[0].mxu0
      %v4428 = vpop.f32.mrb[0].mxu0
      %4429 = vdwg.mxu0
      %v4430 = vmax.f32 %v4425, 0.0
      %v4431 = vld [vmem:[%s1 + $0x1b0] sm:$0xf]
      %v4432 = vpack.c.bf16 %v4430, %v4430
      %4433 = vset.pattern.permute.xlu0 54
      %4434 = vperm.xlu0 %4433, %v347
      %v4435 = vpop.permute.xlu0 %4434
      %v4438 = vsel %vm813, %v4431, 0
      %v4441 = vsel %vm357, %v4432, 0
      %4443 = vmatprep.subr.bf16.mxu0 0
      %4444 = vmatpush1.bf16.msra.mxu0 %v4441
      %4445 = vmatprep.subr.bf16.mxu0 0
      %4446 = vmatpush1.bf16.msra.mxu0 0
      %4447 = vmatprep.subr.bf16.mxu0 0
      %4448 = vmatpush1.bf16.msra.mxu0 0
      %4449 = vmatprep.subr.bf16.mxu0 0
      %4450 = vmatpush1.bf16.msra.mxu0 0
      %4451 = vmatprep.subr.bf16.mxu0 0
      %4452 = vmatpush1.bf16.msra.mxu0 0
      %4453 = vmatprep.subr.bf16.mxu0 0
      %4454 = vmatpush1.bf16.msra.mxu0 0
      %4455 = vmatprep.subr.bf16.mxu0 0
      %4456 = vmatpush1.bf16.msra.mxu0 0
      %4457 = vmatprep.subr.bf16.mxu0 0
      %4458 = vmatpush1.bf16.msra.mxu0 0
      %4459 = vmatprep.subr.bf16.mxu0 0
      %4460 = vmatpush1.bf16.msra.mxu0 0
      %4461 = vmatprep.subr.bf16.mxu0 0
      %4462 = vmatpush1.bf16.msra.mxu0 0
      %4463 = vmatprep.subr.bf16.mxu0 0
      %4464 = vmatpush1.bf16.msra.mxu0 0
      %4465 = vmatprep.subr.bf16.mxu0 0
      %4466 = vmatpush1.bf16.msra.mxu0 0
      %4467 = vmatprep.subr.bf16.mxu0 0
      %4468 = vmatpush1.bf16.msra.mxu0 0
      %4469 = vmatprep.subr.bf16.mxu0 0
      %4470 = vmatpush1.bf16.msra.mxu0 0
      %4471 = vmatprep.subr.bf16.mxu0 0
      %4472 = vmatpush1.bf16.msra.mxu0 0
      %4473 = vmatprep.subr.bf16.mxu0 0
      %4474 = vmatpush1.bf16.msra.mxu0 0
      %4475 = vmatprep.mubr.bf16.mxu0 0
      %4476 = vmatmul.mubr.bf16.gmra.mrb[0].mxu0 %v4438
      %v4477 = vpop.f32.mrb[0].mxu0
      %v4478 = vadd.f32 %v4435, %v4477
      %v4479 = vpop.f32.mrb[0].mxu0
      %v4480 = vpop.f32.mrb[0].mxu0
      %v4481 = vpop.f32.mrb[0].mxu0
      %4482 = vdwg.mxu0
      %v4483 = vmax.f32 %v4478, 0.0
      %v4484 = vld [vmem:[%s1 + $0x1b8] sm:$0xf]
      %v4485 = vld [vmem:[%s1 + $0x1bc] sm:$0xf]
      %v4486 = vpack.c.bf16 %v4483, %v4483
      %4487 = vset.pattern.permute.xlu0 55
      %4488 = vperm.xlu0 %4487, %v3467
      %v4489 = vpop.permute.xlu0 %4488
      %4491 = vset.pattern.permute.xlu0 55
      %4492 = vperm.xlu0 %4491, %v3468
      %v4493 = vpop.permute.xlu0 %4492
      %v4497 = vunpack.c.l.b16 %v4484
      %v4498 = vunpack.c.l.b16 %v4485
      %v4499 = vpack.c.b16 %v4498, %v4497
      %v4501 = vsel %vm813, %v4499, 0
      %v4504 = vsel %vm357, %v4486, 0
      %4506 = vmatprep.subr.bf16.mxu0 0
      %4507 = vmatpush1.bf16.msra.mxu0 %v4504
      %4508 = vmatprep.subr.bf16.mxu0 0
      %4509 = vmatpush1.bf16.msra.mxu0 0
      %4510 = vmatprep.subr.bf16.mxu0 0
      %4511 = vmatpush1.bf16.msra.mxu0 0
      %4512 = vmatprep.subr.bf16.mxu0 0
      %4513 = vmatpush1.bf16.msra.mxu0 0
      %4514 = vmatprep.subr.bf16.mxu0 0
      %4515 = vmatpush1.bf16.msra.mxu0 0
      %4516 = vmatprep.subr.bf16.mxu0 0
      %4517 = vmatpush1.bf16.msra.mxu0 0
      %4518 = vmatprep.subr.bf16.mxu0 0
      %4519 = vmatpush1.bf16.msra.mxu0 0
      %4520 = vmatprep.subr.bf16.mxu0 0
      %4521 = vmatpush1.bf16.msra.mxu0 0
      %4522 = vmatprep.subr.bf16.mxu0 0
      %4523 = vmatpush1.bf16.msra.mxu0 0
      %4524 = vmatprep.subr.bf16.mxu0 0
      %4525 = vmatpush1.bf16.msra.mxu0 0
      %4526 = vmatprep.subr.bf16.mxu0 0
      %4527 = vmatpush1.bf16.msra.mxu0 0
      %4528 = vmatprep.subr.bf16.mxu0 0
      %4529 = vmatpush1.bf16.msra.mxu0 0
      %4530 = vmatprep.subr.bf16.mxu0 0
      %4531 = vmatpush1.bf16.msra.mxu0 0
      %4532 = vmatprep.subr.bf16.mxu0 0
      %4533 = vmatpush1.bf16.msra.mxu0 0
      %4534 = vmatprep.subr.bf16.mxu0 0
      %4535 = vmatpush1.bf16.msra.mxu0 0
      %4536 = vmatprep.subr.bf16.mxu0 0
      %4537 = vmatpush1.bf16.msra.mxu0 0
      %4538 = vmatprep.mubr.bf16.mxu0 0
      %4539 = vmatmul.mubr.bf16.gmra.mrb[0].mxu0 %v4501
      %v4540 = vpop.f32.mrb[0].mxu0
      %v4541 = vadd.f32 %v4489, %v4540
      %v4542 = vpop.f32.mrb[0].mxu0
      %v4543 = vpop.f32.mrb[0].mxu0
      %v4544 = vadd.f32 %v4493, %v4543
      %v4545 = vpop.f32.mrb[0].mxu0
      %4546 = vdwg.mxu0
      %v4547 = vadd.f32 %v4541, %v4379
      %v4548 = vadd.f32 %v4544, %v4380
      %v4549 = vmax.f32 %v4547, 0.0
      %v4550 = vmax.f32 %v4548, 0.0
      %v4551 = vld [vmem:[%s1 + $0x1c0] sm:$0xf]
      %v4552 = vld [vmem:[%s1 + $0x1c4] sm:$0xf]
      %v4553 = vpack.c.bf16 %v4550, %v4549
      %4554 = vset.pattern.permute.xlu0 56
      %4555 = vperm.xlu0 %4554, %v3467
      %v4556 = vpop.permute.xlu0 %4555
      %4558 = vset.pattern.permute.xlu0 56
      %4559 = vperm.xlu0 %4558, %v3468
      %v4560 = vpop.permute.xlu0 %4559
      %v4564 = vunpack.c.l.b16 %v4551
      %v4565 = vunpack.c.l.b16 %v4552
      %v4566 = vpack.c.b16 %v4565, %v4564
      %v4568 = vsel %vm3537, %v4566, 0
      %4570 = vmatprep.subr.bf16.mxu0 0
      %4571 = vmatpush1.bf16.msra.mxu0 %v4553
      %4572 = vmatprep.subr.bf16.mxu0 0
      %4573 = vmatpush1.bf16.msra.mxu0 0
      %4574 = vmatprep.subr.bf16.mxu0 0
      %4575 = vmatpush1.bf16.msra.mxu0 0
      %4576 = vmatprep.subr.bf16.mxu0 0
      %4577 = vmatpush1.bf16.msra.mxu0 0
      %4578 = vmatprep.subr.bf16.mxu0 0
      %4579 = vmatpush1.bf16.msra.mxu0 0
      %4580 = vmatprep.subr.bf16.mxu0 0
      %4581 = vmatpush1.bf16.msra.mxu0 0
      %4582 = vmatprep.subr.bf16.mxu0 0
      %4583 = vmatpush1.bf16.msra.mxu0 0
      %4584 = vmatprep.subr.bf16.mxu0 0
      %4585 = vmatpush1.bf16.msra.mxu0 0
      %4586 = vmatprep.subr.bf16.mxu0 0
      %4587 = vmatpush1.bf16.msra.mxu0 0
      %4588 = vmatprep.subr.bf16.mxu0 0
      %4589 = vmatpush1.bf16.msra.mxu0 0
      %4590 = vmatprep.subr.bf16.mxu0 0
      %4591 = vmatpush1.bf16.msra.mxu0 0
      %4592 = vmatprep.subr.bf16.mxu0 0
      %4593 = vmatpush1.bf16.msra.mxu0 0
      %4594 = vmatprep.subr.bf16.mxu0 0
      %4595 = vmatpush1.bf16.msra.mxu0 0
      %4596 = vmatprep.subr.bf16.mxu0 0
      %4597 = vmatpush1.bf16.msra.mxu0 0
      %4598 = vmatprep.subr.bf16.mxu0 0
      %4599 = vmatpush1.bf16.msra.mxu0 0
      %4600 = vmatprep.subr.bf16.mxu0 0
      %4601 = vmatpush1.bf16.msra.mxu0 0
      %4602 = vmatprep.mubr.bf16.mxu0 0
      %4603 = vmatmul.mubr.bf16.gmra.mrb[0].mxu0 %v4568
      %v4604 = vpop.f32.mrb[0].mxu0
      %v4605 = vadd.f32 %v4556, %v4604
      %v4606 = vpop.f32.mrb[0].mxu0
      %v4607 = vpop.f32.mrb[0].mxu0
      %v4608 = vadd.f32 %v4560, %v4607
      %v4609 = vpop.f32.mrb[0].mxu0
      %4610 = vdwg.mxu0
      %v4611 = vsub.f32 0.0, %v4605
      %v4612 = vsub.f32 0.0, %v4608
      %v4613 = vmul.f32 %v4611, 1.442695
      %v4614 = vpow.pop %v4613
      %v4615 = vmul.f32 %v4612, 1.442695
      %v4616 = vpow.pop %v4615
      %v4617 = vadd.f32 %v4614, 1.0
      %v4618 = vadd.f32 %v4616, 1.0
      %v4619 = vrcp.pop %v4617
      %v4620 = vrcp.pop %v4618
      %v4621 = vmul.f32 %v4040, %v4619
      %v4622 = vmul.f32 %v4041, %v4620
      %v4623 = vadd.f32 %v4621, %v3525
      %v4624 = vadd.f32 %v4622, %v3528
      %4625 = vst [vmem:[%s224] sm:$0xff] %v4623
      %4626 = vst [vmem:[%s224 + $0x8] sm:$0xff] %v4624
      %p4627 = scmp.lt.s32.totalorder %s16, 1
      %s4628 = scalar_select %p4627, %s16, 1
      %s4629 = smul.addr %s4628, 2
      %s4630 = smul.addr %s4629, 8
      %s4631 = scalar_lea.vmem %s5, %s4630
      // Predicated region
      $region41: #{enc_forward.1} parent=39 // pred_check
        %p4632 = pneg %p144
      $region42: #{enc_forward.1} parent=39 // pred_check_branch
        %4634 = sbr.rel (%p4632) target = $region44
      $region43: #{enc_forward.1} parent=39 // pred_region
        _
      $region44: #{enc_forward.1} parent=39 // pred_fallthru
        _
    $region40: #{enc_forward.1} parent=5 // pred_fallthru
      _
    %p4635 = scmp.le.s32.totalorder 2, %s11
    // Predicated region
    $region45: #{enc_forward.1} parent=5 // pred_check
      %p4636 = pneg %p4635
    $region46: #{enc_forward.1} parent=5 // pred_check_branch
      %4638 = sbr.rel (%p4636) target = $region48
    $region47: #{enc_forward.1} parent=5 // pred_region
      %s4639 = ssub.s32 %s11, 2
      // Predicated region
      $region49: #{enc_forward.1} parent=47 // pred_check
        %p4640 = pneg %p150
      $region50: #{enc_forward.1} parent=47 // pred_check_branch
        %4642 = sbr.rel (%p4640) target = $region52
      $region51: #{enc_forward.1} parent=47 // pred_region
        %p4643 = scmp.lt.s32.totalorder %s17, 1
        %s4644 = scalar_select %p4643, %s17, 1
        %s4645 = smul.addr %s4644, 2
        %s4646 = smul.addr %s4645, 8
        %s4647 = scalar_lea.vmem %s5, %s4646
      $region52: #{enc_forward.1} parent=47 // pred_fallthru
        _
    $region48: #{enc_forward.1} parent=5 // pred_fallthru
      _
  $region6: #{enc_forward.1} parent=0 // loop_footer
    %s15 = sadd.s32 1, %s11
  $region7: #{enc_forward.1} parent=0 // loop_footer_branch
    %10 = sbr.rel target = $region3
  $region8: #{enc_forward.1} parent=0 // loop_exit
    _

</llo_original>
